<compile_context>
chip_gen: v7x
topology: tpu7x:2x2x1
jax: 0.10.0
libtpu: 0.0.40
codegen_flags: <defaults>
</compile_context>

<pallas_src>
import math

import jax
import jax.numpy as jnp
from jax.experimental import pallas as pl
from jax.experimental.pallas import tpu as pltpu

# --- small config consistent with the module's constraints (H == W == kernel_size) ---
N = 2
IN_PLANES = 8
OUT_PLANES = 8
GROUPS = 2
KS = 16                       # kernel_size == spatial H == W
GP = OUT_PLANES // GROUPS     # group_planes = 4
GPH = GP // 2                 # 2
EPS = 1e-5
GRID_B = 2                    # split the row-batch over 2 "parallel" grid steps


def axial_attention_kernel(x_ref, w_ref, qkvsb_ref, emb_ref, outb_ref, scal_ref, o_ref):
    """One grid step processes BT axial rows.

    x_ref    : (BT, C*KS)           rows flattened as (c, h) on the lane axis
    w_ref    : (C*KS, 2*OUT*KS)     qkv 1x1 conv expanded to a lane-blocked matrix
    qkvsb_ref: (2, 2*OUT*KS)        row 0: folded bn_qkv (+bn_output sv) scale, row 1: bias
    emb_ref  : (G, 2*GP, KS, KS)    [0:GPH]  q_emb * s_qr[g]
                                    [GPH:GP] k_emb^T * s_kr[g]
                                    [GP:]    v_emb * s_sve[g*GP+c]
    outb_ref : (1, OUT*KS)          combined bn_output bias (b_sv + b_sve) per channel
    scal_ref : (2, G)  (SMEM)       row 0: bn_similarity qk scale, row 1: summed bn_sim bias
    o_ref    : (BT, OUT*KS)
    """
    # qkv transform for the whole row tile: one MXU matmul.
    qkv = jnp.dot(x_ref[...], w_ref[...], preferred_element_type=jnp.float32)
    sb = qkvsb_ref[...]
    qkv = qkv * sb[0:1, :] + sb[1:2, :]          # folded bn_qkv (+ bn_output sv scale)

    outs = []
    for g in range(GROUPS):
        base = g * 2 * GP * KS
        s_qk = scal_ref[0, g]
        b_sim = scal_ref[1, g]

        # per-channel slices; lanes carry the axial position h
        q_cols = [qkv[:, base + c * KS: base + (c + 1) * KS][:, :, None]
                  for c in range(GPH)]                                    # (BT, KS, 1): i on sublanes
        k_rows = [qkv[:, base + (GPH + c) * KS: base + (GPH + c + 1) * KS][:, None, :]
                  for c in range(GPH)]                                    # (BT, 1, KS): j on lanes
        v_rows = [qkv[:, base + (GP + c) * KS: base + (GP + c + 1) * KS][:, None, :]
                  for c in range(GP)]                                     # (BT, 1, KS)

        # similarity logits[b, i, j]; bn_similarity scales are pre-folded into the
        # embedding constants (qr, kr) or applied to the tiny q factor (qk).
        acc = (q_cols[0] * s_qk) * k_rows[0]
        for c in range(1, GPH):
            acc = acc + (q_cols[c] * s_qk) * k_rows[c]
        for c in range(GPH):
            acc = acc + q_cols[c] * emb_ref[g, c][None]            # qr term
            acc = acc + k_rows[c] * emb_ref[g, GPH + c][None]      # kr term (emb pre-transposed)
        logits = acc + b_sim

        # softmax over j (lane axis)
        m = jnp.max(logits, axis=-1, keepdims=True)
        e = jnp.exp(logits - m)
        denom = jnp.sum(e, axis=-1, keepdims=True)
        r = pl.reciprocal(denom, approx=True)
        r = r * (2.0 - denom * r)                 # one Newton step: keep f32 parity with reference
        sim = e * r                               # (BT, KS, KS)

        for cv in range(GP):
            sv_c = jnp.sum(sim * v_rows[cv], axis=-1)                      # (BT, KS)
            sve_c = jnp.sum(sim * emb_ref[g, GP + cv][None], axis=-1)      # (BT, KS)
            outs.append(sv_c + sve_c)

    # single unmasked lane-dense store of the whole tile
    out = jnp.concatenate(outs, axis=-1) + outb_ref[...]
    o_ref[...] = out


def axial_attention(x, p):
    """x: NCHW (N, C, H, W) -> (N, OUT_PLANES, H, W); height-axis attention (width=False)."""
    n, c, h, w = x.shape
    b = n * w
    # x.permute(0, 3, 1, 2).reshape(N*W, C, H), flattened to lane-dense (B, C*H)
    x_flat = jnp.transpose(x, (0, 3, 1, 2)).reshape(b, c * h)

    grid_b = GRID_B if (b % GRID_B == 0 and (b // GRID_B) % 8 == 0) else 1
    bt = b // grid_b

    out_flat = pl.pallas_call(
        axial_attention_kernel,
        out_shape=jax.ShapeDtypeStruct((b, OUT_PLANES * h), jnp.float32),
        grid_spec=pltpu.PrefetchScalarGridSpec(
            num_scalar_prefetch=0,
            grid=(grid_b,),
            in_specs=[
                pl.BlockSpec((bt, c * h), lambda i: (i, 0)),
                pl.BlockSpec((c * h, 2 * OUT_PLANES * h), lambda i: (0, 0)),
                pl.BlockSpec((2, 2 * OUT_PLANES * h), lambda i: (0, 0)),
                pl.BlockSpec((GROUPS, 2 * GP, h, h), lambda i: (0, 0, 0, 0)),
                pl.BlockSpec((1, OUT_PLANES * h), lambda i: (0, 0)),
                pl.BlockSpec(memory_space=pltpu.MemorySpace.SMEM),
            ],
            out_specs=pl.BlockSpec((bt, OUT_PLANES * h), lambda i: (i, 0)),
        ),
        compiler_params=pltpu.CompilerParams(dimension_semantics=("parallel",)),
    )(x_flat, p['w_big'], p['qkv_sb'], p['emb_all'], p['out_bias_row'], p['scal_smem'])

    # (N*W, OUT*H) -> (N, W, OUT, H) -> NCHW
    out = out_flat.reshape(n, w, OUT_PLANES, h)
    return jnp.transpose(out, (0, 2, 3, 1))


def init_params(key):
    ks = jax.random.split(key, 5)
    # reset_parameters(): qkv weight ~ N(0, sqrt(1/in_planes)), relative ~ N(0, sqrt(1/group_planes))
    w_qkv = jax.random.normal(ks[0], (2 * OUT_PLANES, IN_PLANES), jnp.float32) * math.sqrt(1.0 / IN_PLANES)
    relative = jax.random.normal(ks[1], (2 * GP, 2 * KS - 1), jnp.float32) * math.sqrt(1.0 / GP)

    def bn_affine(k, nch):
        kg, kb = jax.random.split(k)
        gamma = 1.0 + 0.1 * jax.random.normal(kg, (nch,), jnp.float32)   # synthetic eval-mode BN params
        beta = 0.1 * jax.random.normal(kb, (nch,), jnp.float32)
        mean = jnp.zeros((nch,), jnp.float32)
        var = jnp.ones((nch,), jnp.float32)
        scale = gamma / jnp.sqrt(var + EPS)
        bias = beta - mean * scale
        return scale, bias

    bnq_s, bnq_b = bn_affine(ks[2], 2 * OUT_PLANES)
    bns_s, bns_b = bn_affine(ks[3], 3 * GROUPS)
    bno_s, bno_b = bn_affine(ks[4], 2 * OUT_PLANES)

    # relative -> all_embeddings via index_select (pure indexing glue)
    qi = jnp.arange(KS)[None, :]
    ki = jnp.arange(KS)[:, None]
    flat_idx = (ki - qi + KS - 1).reshape(-1)
    all_emb = relative[:, flat_idx].reshape(2 * GP, KS, KS)
    q_emb, k_emb, v_emb = all_emb[:GPH], all_emb[GPH:GP], all_emb[GP:]

    # bn_output: even channels scale the sv half, odd channels the sve half
    s0, b0 = bno_s[0::2], bno_b[0::2]
    s1, b1 = bno_s[1::2], bno_b[1::2]
    # bn_similarity channel order: [qk | qr | kr] per group
    s_qk, s_qr, s_kr = bns_s[:GROUPS], bns_s[GROUPS:2 * GROUPS], bns_s[2 * GROUPS:]
    b_sim = bns_b[:GROUPS] + bns_b[GROUPS:2 * GROUPS] + bns_b[2 * GROUPS:]

    # ---- one-time constant folding for the kernel ----
    # per-qkv-channel post-matmul scale: bn_qkv scale everywhere, plus the
    # bn_output 'sv' scale on the v rows (v only feeds sv).
    ch = jnp.arange(2 * OUT_PLANES)
    g_of = ch // (2 * GP)
    within = ch % (2 * GP)
    is_v = within >= GP
    oc = jnp.where(is_v, g_of * GP + (within - GP), 0)
    extra = jnp.where(is_v, s0[oc], 1.0)
    qkv_scale_row = jnp.repeat(bnq_s * extra, KS)
    qkv_bias_row = jnp.repeat(bnq_b * extra, KS)
    qkv_sb = jnp.stack([qkv_scale_row, qkv_bias_row], axis=0)          # (2, 2*OUT*KS)

    # expand the 1x1 conv to a lane-blocked (C*KS, 2*OUT*KS) matrix so the whole
    # row-batch qkv transform is one MXU matmul with (c, h) on the lane axis.
    eye = jnp.eye(KS, dtype=jnp.float32)
    w_big = jnp.einsum('oc,ij->cioj', w_qkv, eye).reshape(IN_PLANES * KS, 2 * OUT_PLANES * KS)

    # per-group embedding constants with bn_similarity / bn_output scales folded
    # in; k_emb is stored pre-transposed so kr needs no in-kernel transpose.
    emb_all = jnp.zeros((GROUPS, 2 * GP, KS, KS), jnp.float32)
    for g in range(GROUPS):
        emb_all = emb_all.at[g, :GPH].set(q_emb * s_qr[g])
        emb_all = emb_all.at[g, GPH:GP].set(jnp.transpose(k_emb, (0, 2, 1)) * s_kr[g])
        emb_all = emb_all.at[g, GP:].set(v_emb * s1[g * GP:(g + 1) * GP][:, None, None])

    out_bias_row = jnp.repeat(b0 + b1, KS)[None, :]                    # (1, OUT*KS)
    scal_smem = jnp.stack([s_qk, b_sim], axis=0)                       # (2, GROUPS) -> SMEM

    return dict(
        # raw module parameters (used by the pure-JAX reference)
        w_qkv=w_qkv, relative=relative,
        bnq_scale_flat=bnq_s, bnq_bias_flat=bnq_b,
        bns_scale_flat=bns_s, bns_bias_flat=bns_b,
        bno_scale=bno_s, bno_bias=bno_b,
        # folded / packed kernel constants
        w_big=w_big, qkv_sb=qkv_sb, emb_all=emb_all,
        out_bias_row=out_bias_row, scal_smem=scal_smem,
    )


def reference_forward(x, p):
    """Pure-JAX transcription of AxialAttention.forward (width=False, stride=1, eval-mode BN)."""
    Nb, C, H, W = x.shape
    B = Nb * W
    xb = jnp.transpose(x, (0, 3, 1, 2)).reshape(B, C, H)
    qkv = jnp.einsum('oc,bch->boh', p['w_qkv'], xb)
    qkv = qkv * p['bnq_scale_flat'][None, :, None] + p['bnq_bias_flat'][None, :, None]
    qkv = qkv.reshape(B, GROUPS, 2 * GP, H)
    q, k, v = qkv[:, :, :GPH], qkv[:, :, GPH:GP], qkv[:, :, GP:]
    qi = jnp.arange(KS)[None, :]
    ki = jnp.arange(KS)[:, None]
    flat_idx = (ki - qi + KS - 1).reshape(-1)
    all_emb = p['relative'][:, flat_idx].reshape(2 * GP, KS, KS)
    q_emb, k_emb, v_emb = all_emb[:GPH], all_emb[GPH:GP], all_emb[GP:]
    qr = jnp.einsum('bgci,cij->bgij', q, q_emb)
    kr = jnp.einsum('bgci,cij->bgij', k, k_emb).transpose(0, 1, 3, 2)
    qk = jnp.einsum('bgci,bgcj->bgij', q, k)
    stacked = jnp.concatenate([qk, qr, kr], axis=1)
    stacked = stacked * p['bns_scale_flat'][None, :, None, None] + p['bns_bias_flat'][None, :, None, None]
    logits = stacked.reshape(B, 3, GROUPS, H, H).sum(axis=1)
    sim = jax.nn.softmax(logits, axis=3)
    sv = jnp.einsum('bgij,bgcj->bgci', sim, v)
    sve = jnp.einsum('bgij,cij->bgci', sim, v_emb)
    so = jnp.concatenate([sv, sve], axis=-1).reshape(B, 2 * OUT_PLANES, H)
    so = so * p['bno_scale'][None, :, None] + p['bno_bias'][None, :, None]
    out = so.reshape(Nb, W, OUT_PLANES, 2, H).sum(axis=-2)
    return jnp.transpose(out, (0, 2, 3, 1))


if __name__ == "__main__":
    key = jax.random.PRNGKey(0)
    kx, kp = jax.random.split(key)
    x = jax.random.normal(kx, (N, IN_PLANES, KS, KS), jnp.float32)   # NCHW
    params = init_params(kp)

    out = axial_attention(x, params)
    out = jax.block_until_ready(out)

    ref = reference_forward(x, params)
    assert out.shape == (N, OUT_PLANES, KS, KS), out.shape
    max_err = float(jnp.max(jnp.abs(out - ref)))
    if not max_err < 1e-3:
        raise AssertionError(f"kernel/reference mismatch, max abs err = {max_err}")
    print("KERNEL_OK")
</pallas_src>

<mosaic_0001>
module attributes {stable_mosaic.version = 11 : i64} {
  func.func @axial_attention_kernel(%arg0: i32, %arg1: memref<16x128xf32, #tpu.memory_space<vmem>>, %arg2: memref<128x256xf32, #tpu.memory_space<vmem>>, %arg3: memref<2x256xf32, #tpu.memory_space<vmem>>, %arg4: memref<2x8x16x16xf32, #tpu.memory_space<vmem>>, %arg5: memref<1x128xf32, #tpu.memory_space<vmem>>, %arg6: memref<2x2xf32, #tpu.memory_space<smem>>, %arg7: memref<16x128xf32, #tpu.memory_space<vmem>>) attributes {dimension_semantics = [#tpu.dimension_semantics<parallel>], iteration_bounds = array<i64: 2>, scalar_prefetch = 0 : i64, scratch_operands = 0 : i64, tpu.core_type = #tpu.core_type<tc>, window_params = [{transform_indices = @transform_0, window_bounds = array<i64: 16, 128>}, {pipeline_mode = #tpu.pipeline_mode<synchronous>, transform_indices = @transform_1, window_bounds = array<i64: 128, 256>}, {pipeline_mode = #tpu.pipeline_mode<synchronous>, transform_indices = @transform_2, window_bounds = array<i64: 2, 256>}, {pipeline_mode = #tpu.pipeline_mode<synchronous>, transform_indices = @transform_3, window_bounds = array<i64: 2, 8, 16, 16>}, {pipeline_mode = #tpu.pipeline_mode<synchronous>, transform_indices = @transform_4, window_bounds = array<i64: 1, 128>}, {transform_indices = @transform_5, window_bounds = array<i64: 2, 2>}, {transform_indices = @transform_6, window_bounds = array<i64: 16, 128>}]} {
    %c0 = arith.constant 0 : index
    %c0_0 = arith.constant 0 : index
    %0 = vector.load %arg1[%c0, %c0_0] : memref<16x128xf32, #tpu.memory_space<vmem>>, vector<16x128xf32>
    %c0_1 = arith.constant 0 : index
    %c0_2 = arith.constant 0 : index
    %1 = vector.load %arg2[%c0_1, %c0_2] : memref<128x256xf32, #tpu.memory_space<vmem>>, vector<128x256xf32>
    %cst = arith.constant dense<0.000000e+00> : vector<16x256xf32>
    %2 = tpu.matmul %0, %1, %cst {dimension_numbers = #tpu.dot_dimension_numbers<[1], [0], [0], [1], [0, 0, 1, 1], [], []>} : vector<16x128xf32>, vector<128x256xf32>, vector<16x256xf32> -> vector<16x256xf32>
    %c0_3 = arith.constant 0 : index
    %c0_4 = arith.constant 0 : index
    %3 = vector.load %arg3[%c0_3, %c0_4] : memref<2x256xf32, #tpu.memory_space<vmem>>, vector<2x256xf32>
    %4 = vector.extract_strided_slice %3 {offsets = [0, 0], sizes = [1, 256], strides = [1, 1]} : vector<2x256xf32> to vector<1x256xf32>
    %5 = vector.broadcast %4 : vector<1x256xf32> to vector<16x256xf32>
    %6 = arith.mulf %2, %5 : vector<16x256xf32>
    %7 = vector.extract_strided_slice %3 {offsets = [1, 0], sizes = [1, 256], strides = [1, 1]} : vector<2x256xf32> to vector<1x256xf32>
    %8 = vector.broadcast %7 : vector<1x256xf32> to vector<16x256xf32>
    %9 = arith.addf %6, %8 : vector<16x256xf32>
    %c0_5 = arith.constant 0 : index
    %c0_6 = arith.constant 0 : index
    %10 = memref.load %arg6[%c0_5, %c0_6] : memref<2x2xf32, #tpu.memory_space<smem>>
    %c1 = arith.constant 1 : index
    %c0_7 = arith.constant 0 : index
    %11 = memref.load %arg6[%c1, %c0_7] : memref<2x2xf32, #tpu.memory_space<smem>>
    %12 = vector.extract_strided_slice %9 {offsets = [0, 0], sizes = [16, 16], strides = [1, 1]} : vector<16x256xf32> to vector<16x16xf32>
    %13 = vector.shape_cast %12 : vector<16x16xf32> to vector<16x16x1xf32>
    %14 = vector.extract_strided_slice %9 {offsets = [0, 16], sizes = [16, 16], strides = [1, 1]} : vector<16x256xf32> to vector<16x16xf32>
    %15 = vector.shape_cast %14 : vector<16x16xf32> to vector<16x16x1xf32>
    %16 = vector.extract_strided_slice %9 {offsets = [0, 32], sizes = [16, 16], strides = [1, 1]} : vector<16x256xf32> to vector<16x16xf32>
    %17 = vector.shape_cast %16 : vector<16x16xf32> to vector<16x1x16xf32>
    %18 = vector.extract_strided_slice %9 {offsets = [0, 48], sizes = [16, 16], strides = [1, 1]} : vector<16x256xf32> to vector<16x16xf32>
    %19 = vector.shape_cast %18 : vector<16x16xf32> to vector<16x1x16xf32>
    %20 = vector.extract_strided_slice %9 {offsets = [0, 64], sizes = [16, 16], strides = [1, 1]} : vector<16x256xf32> to vector<16x16xf32>
    %21 = vector.shape_cast %20 : vector<16x16xf32> to vector<16x1x16xf32>
    %22 = vector.extract_strided_slice %9 {offsets = [0, 80], sizes = [16, 16], strides = [1, 1]} : vector<16x256xf32> to vector<16x16xf32>
    %23 = vector.shape_cast %22 : vector<16x16xf32> to vector<16x1x16xf32>
    %24 = vector.extract_strided_slice %9 {offsets = [0, 96], sizes = [16, 16], strides = [1, 1]} : vector<16x256xf32> to vector<16x16xf32>
    %25 = vector.shape_cast %24 : vector<16x16xf32> to vector<16x1x16xf32>
    %26 = vector.extract_strided_slice %9 {offsets = [0, 112], sizes = [16, 16], strides = [1, 1]} : vector<16x256xf32> to vector<16x16xf32>
    %27 = vector.shape_cast %26 : vector<16x16xf32> to vector<16x1x16xf32>
    %28 = vector.broadcast %10 : f32 to vector<16x16x1xf32>
    %29 = arith.mulf %13, %28 : vector<16x16x1xf32>
    %30 = vector.broadcast %29 : vector<16x16x1xf32> to vector<16x16x16xf32>
    %31 = vector.broadcast %17 : vector<16x1x16xf32> to vector<16x16x16xf32>
    %32 = arith.mulf %30, %31 : vector<16x16x16xf32>
    %33 = vector.broadcast %10 : f32 to vector<16x16x1xf32>
    %34 = arith.mulf %15, %33 : vector<16x16x1xf32>
    %35 = vector.broadcast %34 : vector<16x16x1xf32> to vector<16x16x16xf32>
    %36 = vector.broadcast %19 : vector<16x1x16xf32> to vector<16x16x16xf32>
    %37 = arith.mulf %35, %36 : vector<16x16x16xf32>
    %38 = arith.addf %32, %37 : vector<16x16x16xf32>
    %c0_8 = arith.constant 0 : index
    %c0_9 = arith.constant 0 : index
    %c0_10 = arith.constant 0 : index
    %c0_11 = arith.constant 0 : index
    %39 = vector.load %arg4[%c0_8, %c0_9, %c0_10, %c0_11] : memref<2x8x16x16xf32, #tpu.memory_space<vmem>>, vector<1x1x16x16xf32>
    %40 = vector.shape_cast %39 : vector<1x1x16x16xf32> to vector<16x16xf32>
    %41 = vector.shape_cast %40 : vector<16x16xf32> to vector<1x16x16xf32>
    %42 = vector.broadcast %13 : vector<16x16x1xf32> to vector<16x16x16xf32>
    %43 = vector.broadcast %41 : vector<1x16x16xf32> to vector<16x16x16xf32>
    %44 = arith.mulf %42, %43 : vector<16x16x16xf32>
    %45 = arith.addf %38, %44 : vector<16x16x16xf32>
    %c0_12 = arith.constant 0 : index
    %c2 = arith.constant 2 : index
    %c0_13 = arith.constant 0 : index
    %c0_14 = arith.constant 0 : index
    %46 = vector.load %arg4[%c0_12, %c2, %c0_13, %c0_14] : memref<2x8x16x16xf32, #tpu.memory_space<vmem>>, vector<1x1x16x16xf32>
    %47 = vector.shape_cast %46 : vector<1x1x16x16xf32> to vector<16x16xf32>
    %48 = vector.shape_cast %47 : vector<16x16xf32> to vector<1x16x16xf32>
    %49 = vector.broadcast %17 : vector<16x1x16xf32> to vector<16x16x16xf32>
    %50 = vector.broadcast %48 : vector<1x16x16xf32> to vector<16x16x16xf32>
    %51 = arith.mulf %49, %50 : vector<16x16x16xf32>
    %52 = arith.addf %45, %51 : vector<16x16x16xf32>
    %c0_15 = arith.constant 0 : index
    %c1_16 = arith.constant 1 : index
    %c0_17 = arith.constant 0 : index
    %c0_18 = arith.constant 0 : index
    %53 = vector.load %arg4[%c0_15, %c1_16, %c0_17, %c0_18] : memref<2x8x16x16xf32, #tpu.memory_space<vmem>>, vector<1x1x16x16xf32>
    %54 = vector.shape_cast %53 : vector<1x1x16x16xf32> to vector<16x16xf32>
    %55 = vector.shape_cast %54 : vector<16x16xf32> to vector<1x16x16xf32>
    %56 = vector.broadcast %15 : vector<16x16x1xf32> to vector<16x16x16xf32>
    %57 = vector.broadcast %55 : vector<1x16x16xf32> to vector<16x16x16xf32>
    %58 = arith.mulf %56, %57 : vector<16x16x16xf32>
    %59 = arith.addf %52, %58 : vector<16x16x16xf32>
    %c0_19 = arith.constant 0 : index
    %c3 = arith.constant 3 : index
    %c0_20 = arith.constant 0 : index
    %c0_21 = arith.constant 0 : index
    %60 = vector.load %arg4[%c0_19, %c3, %c0_20, %c0_21] : memref<2x8x16x16xf32, #tpu.memory_space<vmem>>, vector<1x1x16x16xf32>
    %61 = vector.shape_cast %60 : vector<1x1x16x16xf32> to vector<16x16xf32>
    %62 = vector.shape_cast %61 : vector<16x16xf32> to vector<1x16x16xf32>
    %63 = vector.broadcast %19 : vector<16x1x16xf32> to vector<16x16x16xf32>
    %64 = vector.broadcast %62 : vector<1x16x16xf32> to vector<16x16x16xf32>
    %65 = arith.mulf %63, %64 : vector<16x16x16xf32>
    %66 = arith.addf %59, %65 : vector<16x16x16xf32>
    %67 = vector.broadcast %11 : f32 to vector<16x16x16xf32>
    %68 = arith.addf %66, %67 : vector<16x16x16xf32>
    %cst_22 = arith.constant dense<0xFF800000> : vector<16x16xf32>
    %69 = vector.multi_reduction <maximumf>, %68, %cst_22 [2] : vector<16x16x16xf32> to vector<16x16xf32>
    %70 = vector.shape_cast %69 : vector<16x16xf32> to vector<16x16x1xf32>
    %71 = vector.broadcast %70 : vector<16x16x1xf32> to vector<16x16x16xf32>
    %72 = arith.subf %68, %71 : vector<16x16x16xf32>
    %73 = math.exp %72 : vector<16x16x16xf32>
    %cst_23 = arith.constant dense<0.000000e+00> : vector<16x16xf32>
    %74 = vector.multi_reduction <add>, %73, %cst_23 [2] : vector<16x16x16xf32> to vector<16x16xf32>
    %75 = vector.shape_cast %74 : vector<16x16xf32> to vector<16x16x1xf32>
    %76 = tpu.reciprocal %75 {approx = true} : vector<16x16x1xf32> -> vector<16x16x1xf32>
    %77 = arith.mulf %75, %76 : vector<16x16x1xf32>
    %cst_24 = arith.constant 2.000000e+00 : f32
    %78 = vector.broadcast %cst_24 : f32 to vector<16x16x1xf32>
    %79 = arith.subf %78, %77 : vector<16x16x1xf32>
    %80 = arith.mulf %76, %79 : vector<16x16x1xf32>
    %81 = vector.broadcast %80 : vector<16x16x1xf32> to vector<16x16x16xf32>
    %82 = arith.mulf %73, %81 : vector<16x16x16xf32>
    %83 = vector.broadcast %21 : vector<16x1x16xf32> to vector<16x16x16xf32>
    %84 = arith.mulf %82, %83 : vector<16x16x16xf32>
    %cst_25 = arith.constant dense<0.000000e+00> : vector<16x16xf32>
    %85 = vector.multi_reduction <add>, %84, %cst_25 [2] : vector<16x16x16xf32> to vector<16x16xf32>
    %c0_26 = arith.constant 0 : index
    %c4 = arith.constant 4 : index
    %c0_27 = arith.constant 0 : index
    %c0_28 = arith.constant 0 : index
    %86 = vector.load %arg4[%c0_26, %c4, %c0_27, %c0_28] : memref<2x8x16x16xf32, #tpu.memory_space<vmem>>, vector<1x1x16x16xf32>
    %87 = vector.shape_cast %86 : vector<1x1x16x16xf32> to vector<16x16xf32>
    %88 = vector.shape_cast %87 : vector<16x16xf32> to vector<1x16x16xf32>
    %89 = vector.broadcast %88 : vector<1x16x16xf32> to vector<16x16x16xf32>
    %90 = arith.mulf %82, %89 : vector<16x16x16xf32>
    %cst_29 = arith.constant dense<0.000000e+00> : vector<16x16xf32>
    %91 = vector.multi_reduction <add>, %90, %cst_29 [2] : vector<16x16x16xf32> to vector<16x16xf32>
    %92 = arith.addf %85, %91 : vector<16x16xf32>
    %93 = vector.broadcast %23 : vector<16x1x16xf32> to vector<16x16x16xf32>
    %94 = arith.mulf %82, %93 : vector<16x16x16xf32>
    %cst_30 = arith.constant dense<0.000000e+00> : vector<16x16xf32>
    %95 = vector.multi_reduction <add>, %94, %cst_30 [2] : vector<16x16x16xf32> to vector<16x16xf32>
    %c0_31 = arith.constant 0 : index
    %c5 = arith.constant 5 : index
    %c0_32 = arith.constant 0 : index
    %c0_33 = arith.constant 0 : index
    %96 = vector.load %arg4[%c0_31, %c5, %c0_32, %c0_33] : memref<2x8x16x16xf32, #tpu.memory_space<vmem>>, vector<1x1x16x16xf32>
    %97 = vector.shape_cast %96 : vector<1x1x16x16xf32> to vector<16x16xf32>
    %98 = vector.shape_cast %97 : vector<16x16xf32> to vector<1x16x16xf32>
    %99 = vector.broadcast %98 : vector<1x16x16xf32> to vector<16x16x16xf32>
    %100 = arith.mulf %82, %99 : vector<16x16x16xf32>
    %cst_34 = arith.constant dense<0.000000e+00> : vector<16x16xf32>
    %101 = vector.multi_reduction <add>, %100, %cst_34 [2] : vector<16x16x16xf32> to vector<16x16xf32>
    %102 = arith.addf %95, %101 : vector<16x16xf32>
    %103 = vector.broadcast %25 : vector<16x1x16xf32> to vector<16x16x16xf32>
    %104 = arith.mulf %82, %103 : vector<16x16x16xf32>
    %cst_35 = arith.constant dense<0.000000e+00> : vector<16x16xf32>
    %105 = vector.multi_reduction <add>, %104, %cst_35 [2] : vector<16x16x16xf32> to vector<16x16xf32>
    %c0_36 = arith.constant 0 : index
    %c6 = arith.constant 6 : index
    %c0_37 = arith.constant 0 : index
    %c0_38 = arith.constant 0 : index
    %106 = vector.load %arg4[%c0_36, %c6, %c0_37, %c0_38] : memref<2x8x16x16xf32, #tpu.memory_space<vmem>>, vector<1x1x16x16xf32>
    %107 = vector.shape_cast %106 : vector<1x1x16x16xf32> to vector<16x16xf32>
    %108 = vector.shape_cast %107 : vector<16x16xf32> to vector<1x16x16xf32>
    %109 = vector.broadcast %108 : vector<1x16x16xf32> to vector<16x16x16xf32>
    %110 = arith.mulf %82, %109 : vector<16x16x16xf32>
    %cst_39 = arith.constant dense<0.000000e+00> : vector<16x16xf32>
    %111 = vector.multi_reduction <add>, %110, %cst_39 [2] : vector<16x16x16xf32> to vector<16x16xf32>
    %112 = arith.addf %105, %111 : vector<16x16xf32>
    %113 = vector.broadcast %27 : vector<16x1x16xf32> to vector<16x16x16xf32>
    %114 = arith.mulf %82, %113 : vector<16x16x16xf32>
    %cst_40 = arith.constant dense<0.000000e+00> : vector<16x16xf32>
    %115 = vector.multi_reduction <add>, %114, %cst_40 [2] : vector<16x16x16xf32> to vector<16x16xf32>
    %c0_41 = arith.constant 0 : index
    %c7 = arith.constant 7 : index
    %c0_42 = arith.constant 0 : index
    %c0_43 = arith.constant 0 : index
    %116 = vector.load %arg4[%c0_41, %c7, %c0_42, %c0_43] : memref<2x8x16x16xf32, #tpu.memory_space<vmem>>, vector<1x1x16x16xf32>
    %117 = vector.shape_cast %116 : vector<1x1x16x16xf32> to vector<16x16xf32>
    %118 = vector.shape_cast %117 : vector<16x16xf32> to vector<1x16x16xf32>
    %119 = vector.broadcast %118 : vector<1x16x16xf32> to vector<16x16x16xf32>
    %120 = arith.mulf %82, %119 : vector<16x16x16xf32>
    %cst_44 = arith.constant dense<0.000000e+00> : vector<16x16xf32>
    %121 = vector.multi_reduction <add>, %120, %cst_44 [2] : vector<16x16x16xf32> to vector<16x16xf32>
    %122 = arith.addf %115, %121 : vector<16x16xf32>
    %c0_45 = arith.constant 0 : index
    %c1_46 = arith.constant 1 : index
    %123 = memref.load %arg6[%c0_45, %c1_46] : memref<2x2xf32, #tpu.memory_space<smem>>
    %c1_47 = arith.constant 1 : index
    %c1_48 = arith.constant 1 : index
    %124 = memref.load %arg6[%c1_47, %c1_48] : memref<2x2xf32, #tpu.memory_space<smem>>
    %125 = vector.extract_strided_slice %9 {offsets = [0, 128], sizes = [16, 16], strides = [1, 1]} : vector<16x256xf32> to vector<16x16xf32>
    %126 = vector.shape_cast %125 : vector<16x16xf32> to vector<16x16x1xf32>
    %127 = vector.extract_strided_slice %9 {offsets = [0, 144], sizes = [16, 16], strides = [1, 1]} : vector<16x256xf32> to vector<16x16xf32>
    %128 = vector.shape_cast %127 : vector<16x16xf32> to vector<16x16x1xf32>
    %129 = vector.extract_strided_slice %9 {offsets = [0, 160], sizes = [16, 16], strides = [1, 1]} : vector<16x256xf32> to vector<16x16xf32>
    %130 = vector.shape_cast %129 : vector<16x16xf32> to vector<16x1x16xf32>
    %131 = vector.extract_strided_slice %9 {offsets = [0, 176], sizes = [16, 16], strides = [1, 1]} : vector<16x256xf32> to vector<16x16xf32>
    %132 = vector.shape_cast %131 : vector<16x16xf32> to vector<16x1x16xf32>
    %133 = vector.extract_strided_slice %9 {offsets = [0, 192], sizes = [16, 16], strides = [1, 1]} : vector<16x256xf32> to vector<16x16xf32>
    %134 = vector.shape_cast %133 : vector<16x16xf32> to vector<16x1x16xf32>
    %135 = vector.extract_strided_slice %9 {offsets = [0, 208], sizes = [16, 16], strides = [1, 1]} : vector<16x256xf32> to vector<16x16xf32>
    %136 = vector.shape_cast %135 : vector<16x16xf32> to vector<16x1x16xf32>
    %137 = vector.extract_strided_slice %9 {offsets = [0, 224], sizes = [16, 16], strides = [1, 1]} : vector<16x256xf32> to vector<16x16xf32>
    %138 = vector.shape_cast %137 : vector<16x16xf32> to vector<16x1x16xf32>
    %139 = vector.extract_strided_slice %9 {offsets = [0, 240], sizes = [16, 16], strides = [1, 1]} : vector<16x256xf32> to vector<16x16xf32>
    %140 = vector.shape_cast %139 : vector<16x16xf32> to vector<16x1x16xf32>
    %141 = vector.broadcast %123 : f32 to vector<16x16x1xf32>
    %142 = arith.mulf %126, %141 : vector<16x16x1xf32>
    %143 = vector.broadcast %142 : vector<16x16x1xf32> to vector<16x16x16xf32>
    %144 = vector.broadcast %130 : vector<16x1x16xf32> to vector<16x16x16xf32>
    %145 = arith.mulf %143, %144 : vector<16x16x16xf32>
    %146 = vector.broadcast %123 : f32 to vector<16x16x1xf32>
    %147 = arith.mulf %128, %146 : vector<16x16x1xf32>
    %148 = vector.broadcast %147 : vector<16x16x1xf32> to vector<16x16x16xf32>
    %149 = vector.broadcast %132 : vector<16x1x16xf32> to vector<16x16x16xf32>
    %150 = arith.mulf %148, %149 : vector<16x16x16xf32>
    %151 = arith.addf %145, %150 : vector<16x16x16xf32>
    %c1_49 = arith.constant 1 : index
    %c0_50 = arith.constant 0 : index
    %c0_51 = arith.constant 0 : index
    %c0_52 = arith.constant 0 : index
    %152 = vector.load %arg4[%c1_49, %c0_50, %c0_51, %c0_52] : memref<2x8x16x16xf32, #tpu.memory_space<vmem>>, vector<1x1x16x16xf32>
    %153 = vector.shape_cast %152 : vector<1x1x16x16xf32> to vector<16x16xf32>
    %154 = vector.shape_cast %153 : vector<16x16xf32> to vector<1x16x16xf32>
    %155 = vector.broadcast %126 : vector<16x16x1xf32> to vector<16x16x16xf32>
    %156 = vector.broadcast %154 : vector<1x16x16xf32> to vector<16x16x16xf32>
    %157 = arith.mulf %155, %156 : vector<16x16x16xf32>
    %158 = arith.addf %151, %157 : vector<16x16x16xf32>
    %c1_53 = arith.constant 1 : index
    %c2_54 = arith.constant 2 : index
    %c0_55 = arith.constant 0 : index
    %c0_56 = arith.constant 0 : index
    %159 = vector.load %arg4[%c1_53, %c2_54, %c0_55, %c0_56] : memref<2x8x16x16xf32, #tpu.memory_space<vmem>>, vector<1x1x16x16xf32>
    %160 = vector.shape_cast %159 : vector<1x1x16x16xf32> to vector<16x16xf32>
    %161 = vector.shape_cast %160 : vector<16x16xf32> to vector<1x16x16xf32>
    %162 = vector.broadcast %130 : vector<16x1x16xf32> to vector<16x16x16xf32>
    %163 = vector.broadcast %161 : vector<1x16x16xf32> to vector<16x16x16xf32>
    %164 = arith.mulf %162, %163 : vector<16x16x16xf32>
    %165 = arith.addf %158, %164 : vector<16x16x16xf32>
    %c1_57 = arith.constant 1 : index
    %c1_58 = arith.constant 1 : index
    %c0_59 = arith.constant 0 : index
    %c0_60 = arith.constant 0 : index
    %166 = vector.load %arg4[%c1_57, %c1_58, %c0_59, %c0_60] : memref<2x8x16x16xf32, #tpu.memory_space<vmem>>, vector<1x1x16x16xf32>
    %167 = vector.shape_cast %166 : vector<1x1x16x16xf32> to vector<16x16xf32>
    %168 = vector.shape_cast %167 : vector<16x16xf32> to vector<1x16x16xf32>
    %169 = vector.broadcast %128 : vector<16x16x1xf32> to vector<16x16x16xf32>
    %170 = vector.broadcast %168 : vector<1x16x16xf32> to vector<16x16x16xf32>
    %171 = arith.mulf %169, %170 : vector<16x16x16xf32>
    %172 = arith.addf %165, %171 : vector<16x16x16xf32>
    %c1_61 = arith.constant 1 : index
    %c3_62 = arith.constant 3 : index
    %c0_63 = arith.constant 0 : index
    %c0_64 = arith.constant 0 : index
    %173 = vector.load %arg4[%c1_61, %c3_62, %c0_63, %c0_64] : memref<2x8x16x16xf32, #tpu.memory_space<vmem>>, vector<1x1x16x16xf32>
    %174 = vector.shape_cast %173 : vector<1x1x16x16xf32> to vector<16x16xf32>
    %175 = vector.shape_cast %174 : vector<16x16xf32> to vector<1x16x16xf32>
    %176 = vector.broadcast %132 : vector<16x1x16xf32> to vector<16x16x16xf32>
    %177 = vector.broadcast %175 : vector<1x16x16xf32> to vector<16x16x16xf32>
    %178 = arith.mulf %176, %177 : vector<16x16x16xf32>
    %179 = arith.addf %172, %178 : vector<16x16x16xf32>
    %180 = vector.broadcast %124 : f32 to vector<16x16x16xf32>
    %181 = arith.addf %179, %180 : vector<16x16x16xf32>
    %cst_65 = arith.constant dense<0xFF800000> : vector<16x16xf32>
    %182 = vector.multi_reduction <maximumf>, %181, %cst_65 [2] : vector<16x16x16xf32> to vector<16x16xf32>
    %183 = vector.shape_cast %182 : vector<16x16xf32> to vector<16x16x1xf32>
    %184 = vector.broadcast %183 : vector<16x16x1xf32> to vector<16x16x16xf32>
    %185 = arith.subf %181, %184 : vector<16x16x16xf32>
    %186 = math.exp %185 : vector<16x16x16xf32>
    %cst_66 = arith.constant dense<0.000000e+00> : vector<16x16xf32>
    %187 = vector.multi_reduction <add>, %186, %cst_66 [2] : vector<16x16x16xf32> to vector<16x16xf32>
    %188 = vector.shape_cast %187 : vector<16x16xf32> to vector<16x16x1xf32>
    %189 = tpu.reciprocal %188 {approx = true} : vector<16x16x1xf32> -> vector<16x16x1xf32>
    %190 = arith.mulf %188, %189 : vector<16x16x1xf32>
    %cst_67 = arith.constant 2.000000e+00 : f32
    %191 = vector.broadcast %cst_67 : f32 to vector<16x16x1xf32>
    %192 = arith.subf %191, %190 : vector<16x16x1xf32>
    %193 = arith.mulf %189, %192 : vector<16x16x1xf32>
    %194 = vector.broadcast %193 : vector<16x16x1xf32> to vector<16x16x16xf32>
    %195 = arith.mulf %186, %194 : vector<16x16x16xf32>
    %196 = vector.broadcast %134 : vector<16x1x16xf32> to vector<16x16x16xf32>
    %197 = arith.mulf %195, %196 : vector<16x16x16xf32>
    %cst_68 = arith.constant dense<0.000000e+00> : vector<16x16xf32>
    %198 = vector.multi_reduction <add>, %197, %cst_68 [2] : vector<16x16x16xf32> to vector<16x16xf32>
    %c1_69 = arith.constant 1 : index
    %c4_70 = arith.constant 4 : index
    %c0_71 = arith.constant 0 : index
    %c0_72 = arith.constant 0 : index
    %199 = vector.load %arg4[%c1_69, %c4_70, %c0_71, %c0_72] : memref<2x8x16x16xf32, #tpu.memory_space<vmem>>, vector<1x1x16x16xf32>
    %200 = vector.shape_cast %199 : vector<1x1x16x16xf32> to vector<16x16xf32>
    %201 = vector.shape_cast %200 : vector<16x16xf32> to vector<1x16x16xf32>
    %202 = vector.broadcast %201 : vector<1x16x16xf32> to vector<16x16x16xf32>
    %203 = arith.mulf %195, %202 : vector<16x16x16xf32>
    %cst_73 = arith.constant dense<0.000000e+00> : vector<16x16xf32>
    %204 = vector.multi_reduction <add>, %203, %cst_73 [2] : vector<16x16x16xf32> to vector<16x16xf32>
    %205 = arith.addf %198, %204 : vector<16x16xf32>
    %206 = vector.broadcast %136 : vector<16x1x16xf32> to vector<16x16x16xf32>
    %207 = arith.mulf %195, %206 : vector<16x16x16xf32>
    %cst_74 = arith.constant dense<0.000000e+00> : vector<16x16xf32>
    %208 = vector.multi_reduction <add>, %207, %cst_74 [2] : vector<16x16x16xf32> to vector<16x16xf32>
    %c1_75 = arith.constant 1 : index
    %c5_76 = arith.constant 5 : index
    %c0_77 = arith.constant 0 : index
    %c0_78 = arith.constant 0 : index
    %209 = vector.load %arg4[%c1_75, %c5_76, %c0_77, %c0_78] : memref<2x8x16x16xf32, #tpu.memory_space<vmem>>, vector<1x1x16x16xf32>
    %210 = vector.shape_cast %209 : vector<1x1x16x16xf32> to vector<16x16xf32>
    %211 = vector.shape_cast %210 : vector<16x16xf32> to vector<1x16x16xf32>
    %212 = vector.broadcast %211 : vector<1x16x16xf32> to vector<16x16x16xf32>
    %213 = arith.mulf %195, %212 : vector<16x16x16xf32>
    %cst_79 = arith.constant dense<0.000000e+00> : vector<16x16xf32>
    %214 = vector.multi_reduction <add>, %213, %cst_79 [2] : vector<16x16x16xf32> to vector<16x16xf32>
    %215 = arith.addf %208, %214 : vector<16x16xf32>
    %216 = vector.broadcast %138 : vector<16x1x16xf32> to vector<16x16x16xf32>
    %217 = arith.mulf %195, %216 : vector<16x16x16xf32>
    %cst_80 = arith.constant dense<0.000000e+00> : vector<16x16xf32>
    %218 = vector.multi_reduction <add>, %217, %cst_80 [2] : vector<16x16x16xf32> to vector<16x16xf32>
    %c1_81 = arith.constant 1 : index
    %c6_82 = arith.constant 6 : index
    %c0_83 = arith.constant 0 : index
    %c0_84 = arith.constant 0 : index
    %219 = vector.load %arg4[%c1_81, %c6_82, %c0_83, %c0_84] : memref<2x8x16x16xf32, #tpu.memory_space<vmem>>, vector<1x1x16x16xf32>
    %220 = vector.shape_cast %219 : vector<1x1x16x16xf32> to vector<16x16xf32>
    %221 = vector.shape_cast %220 : vector<16x16xf32> to vector<1x16x16xf32>
    %222 = vector.broadcast %221 : vector<1x16x16xf32> to vector<16x16x16xf32>
    %223 = arith.mulf %195, %222 : vector<16x16x16xf32>
    %cst_85 = arith.constant dense<0.000000e+00> : vector<16x16xf32>
    %224 = vector.multi_reduction <add>, %223, %cst_85 [2] : vector<16x16x16xf32> to vector<16x16xf32>
    %225 = arith.addf %218, %224 : vector<16x16xf32>
    %226 = vector.broadcast %140 : vector<16x1x16xf32> to vector<16x16x16xf32>
    %227 = arith.mulf %195, %226 : vector<16x16x16xf32>
    %cst_86 = arith.constant dense<0.000000e+00> : vector<16x16xf32>
    %228 = vector.multi_reduction <add>, %227, %cst_86 [2] : vector<16x16x16xf32> to vector<16x16xf32>
    %c1_87 = arith.constant 1 : index
    %c7_88 = arith.constant 7 : index
    %c0_89 = arith.constant 0 : index
    %c0_90 = arith.constant 0 : index
    %229 = vector.load %arg4[%c1_87, %c7_88, %c0_89, %c0_90] : memref<2x8x16x16xf32, #tpu.memory_space<vmem>>, vector<1x1x16x16xf32>
    %230 = vector.shape_cast %229 : vector<1x1x16x16xf32> to vector<16x16xf32>
    %231 = vector.shape_cast %230 : vector<16x16xf32> to vector<1x16x16xf32>
    %232 = vector.broadcast %231 : vector<1x16x16xf32> to vector<16x16x16xf32>
    %233 = arith.mulf %195, %232 : vector<16x16x16xf32>
    %cst_91 = arith.constant dense<0.000000e+00> : vector<16x16xf32>
    %234 = vector.multi_reduction <add>, %233, %cst_91 [2] : vector<16x16x16xf32> to vector<16x16xf32>
    %235 = arith.addf %228, %234 : vector<16x16xf32>
    %236 = tpu.concatenate %92, %102, %112, %122, %205, %215, %225, %235 in 1 : vector<16x16xf32>, vector<16x16xf32>, vector<16x16xf32>, vector<16x16xf32>, vector<16x16xf32>, vector<16x16xf32>, vector<16x16xf32>, vector<16x16xf32> -> vector<16x128xf32>
    %c0_92 = arith.constant 0 : index
    %c0_93 = arith.constant 0 : index
    %237 = vector.load %arg5[%c0_92, %c0_93] : memref<1x128xf32, #tpu.memory_space<vmem>>, vector<1x128xf32>
    %238 = vector.broadcast %237 : vector<1x128xf32> to vector<16x128xf32>
    %239 = arith.addf %236, %238 : vector<16x128xf32>
    %c0_94 = arith.constant 0 : index
    %c0_95 = arith.constant 0 : index
    %240 = vector.load %arg7[%c0_94, %c0_95] : memref<16x128xf32, #tpu.memory_space<vmem>>, vector<16x128xf32>
    tpu.vector_store %arg7[%c0_94, %c0_95], %239 {strides = array<i32>} : memref<16x128xf32, #tpu.memory_space<vmem>>, vector<16x128xf32>,
    return
  }
  func.func @transform_0(%arg0: i32) -> (i32, i32) {
    %c0_i32 = arith.constant 0 : i32
    %c0_i32_0 = arith.constant 0 : i32
    return %arg0, %c0_i32 : i32, i32
  }
  func.func @transform_1(%arg0: i32) -> (i32, i32) {
    %c0_i32 = arith.constant 0 : i32
    %c0_i32_0 = arith.constant 0 : i32
    %c0_i32_1 = arith.constant 0 : i32
    return %c0_i32, %c0_i32_0 : i32, i32
  }
  func.func @transform_2(%arg0: i32) -> (i32, i32) {
    %c0_i32 = arith.constant 0 : i32
    %c0_i32_0 = arith.constant 0 : i32
    %c0_i32_1 = arith.constant 0 : i32
    return %c0_i32, %c0_i32_0 : i32, i32
  }
  func.func @transform_3(%arg0: i32) -> (i32, i32, i32, i32) {
    %c0_i32 = arith.constant 0 : i32
    %c0_i32_0 = arith.constant 0 : i32
    %c0_i32_1 = arith.constant 0 : i32
    %c0_i32_2 = arith.constant 0 : i32
    %c0_i32_3 = arith.constant 0 : i32
    return %c0_i32, %c0_i32_0, %c0_i32_1, %c0_i32_2 : i32, i32, i32, i32
  }
  func.func @transform_4(%arg0: i32) -> (i32, i32) {
    %c0_i32 = arith.constant 0 : i32
    %c0_i32_0 = arith.constant 0 : i32
    %c0_i32_1 = arith.constant 0 : i32
    return %c0_i32, %c0_i32_0 : i32, i32
  }
  func.func @transform_5(%arg0: i32) -> (i32, i32) {
    %c0_i32 = arith.constant 0 : i32
    %c0_i32_0 = arith.constant 0 : i32
    %c0_i32_1 = arith.constant 0 : i32
    return %c0_i32, %c0_i32_0 : i32, i32
  }
  func.func @transform_6(%arg0: i32) -> (i32, i32) {
    %c0_i32 = arith.constant 0 : i32
    %c0_i32_0 = arith.constant 0 : i32
    return %arg0, %c0_i32 : i32, i32
  }
}

</mosaic_0001>

<llo_original>
// kernel: tpu_custom_call.1
$region0: #{tpu_custom_call.1}
  #allocation0 [shape = 'u32[]', space=smem, size = 0x4, offset = 0x4, fixed_abs, tag = 'smem constant byte address 0x4 - core index']
  #allocation1 [shape = 'u32[144,128]{1,0:T(1,128)}', space=vmem, size = 0x12000, scoped, tag = 'internal scratch']
  %s0 = inlined_call_operand.hbm [shape: f32[32,128], index: 0, kind: input, shape index: {}]
  %s1 = inlined_call_operand.hbm [shape: f32[128,256], index: 1, kind: input, shape index: {}]
  %s2 = inlined_call_operand.vmem [shape: f32[2,256], index: 2, kind: input, shape index: {}]
  %s3 = inlined_call_operand.hbm [shape: f32[2,8,16,16], index: 3, kind: input, shape index: {}]
  %s4 = inlined_call_operand.vmem [shape: f32[1,128], index: 4, kind: input, shape index: {}]
  %s5 = inlined_call_operand.vmem [shape: f32[2,2], index: 5, kind: input, shape index: {}]
  %s6 = inlined_call_operand.hbm [shape: f32[32,128], index: 6, kind: output, shape index: {}]
  %s7 = sld [smem:[#allocation0]]
  $region73: #{tpu_custom_call.1} parent=0
    _
  %s9 = ssub.s32 1, %s7
  %s10 = scalar_select 0, %s9, %s7
  $region1: #{tpu_custom_call.1} parent=0
    #allocation2 [shape = 'u8[16384]{0}', space=vmem, size = 0x4000, scoped, tag = 'input window, operand 0']
    #allocation3 [shape = 's32[2]{0}', space=sflag, size = 0x8, scoped, tag = 'scoped memory for tpu_custom_call.1']
    #allocation4 [shape = 's32[2]{0}', space=sflag, size = 0x8, scoped, tag = 'scoped memory for tpu_custom_call.1']
    #allocation5 [shape = 's32[2]{0}', space=sflag, size = 0x8, scoped, tag = 'scoped memory for tpu_custom_call.1']
    #allocation6 [shape = 'u8[131072]{0}', space=vmem, size = 0x20000, scoped, tag = 'input window, operand 1, single buffered']
    #allocation7 [shape = 's32[1]{0}', space=sflag, size = 0x4, scoped, tag = 'scoped memory for tpu_custom_call.1']
    #allocation8 [shape = 'u8[131072]{0}', space=vmem, size = 0x20000, scoped, tag = 'input window, operand 3, single buffered']
    #allocation9 [shape = 'u8[1024]{0}', space=smem, size = 0x400, scoped, tag = 'input window, operand 5, single buffered']
    #allocation10 [shape = 'u8[16384]{0}', space=vmem, size = 0x4000, scoped, tag = 'output window, operand 0']
    %11 = vsyncpa [#allocation3], 0
    %s12 = scalar_lea.sflag [#allocation3], 1
    %13 = vsyncpa %s12, 0
    %14 = vsyncpa [#allocation7], 0
    %15 = vsyncpa [#allocation5], 0
    %16 = vsyncpa [#allocation4], 0
    %s17 = scalar_lea.sflag [#allocation4], 1
    %18 = vsyncpa %s17, 0
    loop: start=0, step=1, limit=4
    $region2: #{tpu_custom_call.1} parent=1 // loop_pre_header
      _
    $region3: #{tpu_custom_call.1} parent=1 // loop_header
      %s20 = sphi 0, %s24
      %p21 = scmp.ge.s32.totalorder %s20, 4
      %s30 = sphi 0, %s32
      %s33 = sphi 0, %s30
      %s34 = sphi 0, %s33
      %s50 = sphi 0, %s34
      %s54 = sphi 0, %s54
      %s56 = sphi 0, %s54
      %s57 = sphi 0, %s56
      %s71 = sphi 0, %s57
      %s75 = sphi 0, %s75
      %s77 = sphi 0, %s75
      %s78 = sphi 0, %s77
      %s92 = sphi 0, %s78
      %s96 = sphi 0, %s96
      %s98 = sphi 0, %s96
      %s99 = sphi 0, %s98
      %s113 = sphi 0, %s99
      %s117 = sphi 0, %s117
      %s119 = sphi 0, %s117
      %s120 = sphi 0, %s119
      %s134 = sphi 0, %s120
      %s138 = sphi 0, %s138
      %s140 = sphi 0, %s138
      %s141 = sphi 0, %s140
      %s155 = sphi 0, %s141
      %s161 = sphi 0, %s163
      %s164 = sphi 0, %s161
      %s165 = sphi 0, %s164
      %s181 = sphi 0, %s165
    $region4: #{tpu_custom_call.1} parent=1 // loop_header_branch
      %23 = sbr.rel (%p21) target = $region8
    $region5: #{tpu_custom_call.1} parent=1 // loop_body
      %s25 = ssub.s32 %s20, 1
      %s26 = ssub.s32 %s20, 2
      %s27 = sadd.s32 %s20, 1
      %s28 = ssub.s32 %s20, %s27
      %p29 = scmp.eq.s32.totalorder %s28, 0
      %s31 = sadd.s32 %s30, 1
      %s32 = scalar_select %p29, %s30, %s31
      %p35 = pneg %p29
      %p36 = scmp.eq.s32.totalorder %s20, 1
      %p37 = por %p35, %p36
      %p38 = scmp.ne.s32.totalorder %s30, %s33
      %p39 = scmp.eq.s32.totalorder %s20, 0
      %p40 = por %p38, %p39
      %p41 = scmp.ne.s32.totalorder %s30, %s33
      %p42 = scmp.eq.s32.totalorder %s25, 1
      %p43 = por %p41, %p42
      %p44 = scmp.ne.s32.totalorder %s33, %s34
      %p45 = scmp.eq.s32.totalorder %s25, 0
      %p46 = por %p44, %p45
      %p47 = scmp.ne.s32.totalorder %s33, %s34
      %p48 = scmp.eq.s32.totalorder %s26, 1
      %p49 = por %p47, %p48
      %p51 = scmp.ne.s32.totalorder %s34, %s50
      %p52 = scmp.eq.s32.totalorder %s26, 0
      %p53 = por %p51, %p52
      %s55 = sadd.s32 %s54, 1
      %p58 = scmp.eq.s32.totalorder %s20, 1
      %p59 = scmp.ne.s32.totalorder %s54, %s56
      %p60 = scmp.eq.s32.totalorder %s20, 0
      %p61 = por %p59, %p60
      %p62 = scmp.ne.s32.totalorder %s54, %s56
      %p63 = scmp.eq.s32.totalorder %s25, 1
      %p64 = por %p62, %p63
      %p65 = scmp.ne.s32.totalorder %s56, %s57
      %p66 = scmp.eq.s32.totalorder %s25, 0
      %p67 = por %p65, %p66
      %p68 = scmp.ne.s32.totalorder %s56, %s57
      %p69 = scmp.eq.s32.totalorder %s26, 1
      %p70 = por %p68, %p69
      %p72 = scmp.ne.s32.totalorder %s57, %s71
      %p73 = scmp.eq.s32.totalorder %s26, 0
      %p74 = por %p72, %p73
      %s76 = sadd.s32 %s75, 1
      %p79 = scmp.eq.s32.totalorder %s20, 1
      %p80 = scmp.ne.s32.totalorder %s75, %s77
      %p81 = scmp.eq.s32.totalorder %s20, 0
      %p82 = por %p80, %p81
      %p83 = scmp.ne.s32.totalorder %s75, %s77
      %p84 = scmp.eq.s32.totalorder %s25, 1
      %p85 = por %p83, %p84
      %p86 = scmp.ne.s32.totalorder %s77, %s78
      %p87 = scmp.eq.s32.totalorder %s25, 0
      %p88 = por %p86, %p87
      %p89 = scmp.ne.s32.totalorder %s77, %s78
      %p90 = scmp.eq.s32.totalorder %s26, 1
      %p91 = por %p89, %p90
      %p93 = scmp.ne.s32.totalorder %s78, %s92
      %p94 = scmp.eq.s32.totalorder %s26, 0
      %p95 = por %p93, %p94
      %s97 = sadd.s32 %s96, 1
      %p100 = scmp.eq.s32.totalorder %s20, 1
      %p101 = scmp.ne.s32.totalorder %s96, %s98
      %p102 = scmp.eq.s32.totalorder %s20, 0
      %p103 = por %p101, %p102
      %p104 = scmp.ne.s32.totalorder %s96, %s98
      %p105 = scmp.eq.s32.totalorder %s25, 1
      %p106 = por %p104, %p105
      %p107 = scmp.ne.s32.totalorder %s98, %s99
      %p108 = scmp.eq.s32.totalorder %s25, 0
      %p109 = por %p107, %p108
      %p110 = scmp.ne.s32.totalorder %s98, %s99
      %p111 = scmp.eq.s32.totalorder %s26, 1
      %p112 = por %p110, %p111
      %p114 = scmp.ne.s32.totalorder %s99, %s113
      %p115 = scmp.eq.s32.totalorder %s26, 0
      %p116 = por %p114, %p115
      %s118 = sadd.s32 %s117, 1
      %p121 = scmp.eq.s32.totalorder %s20, 1
      %p122 = scmp.ne.s32.totalorder %s117, %s119
      %p123 = scmp.eq.s32.totalorder %s20, 0
      %p124 = por %p122, %p123
      %p125 = scmp.ne.s32.totalorder %s117, %s119
      %p126 = scmp.eq.s32.totalorder %s25, 1
      %p127 = por %p125, %p126
      %p128 = scmp.ne.s32.totalorder %s119, %s120
      %p129 = scmp.eq.s32.totalorder %s25, 0
      %p130 = por %p128, %p129
      %p131 = scmp.ne.s32.totalorder %s119, %s120
      %p132 = scmp.eq.s32.totalorder %s26, 1
      %p133 = por %p131, %p132
      %p135 = scmp.ne.s32.totalorder %s120, %s134
      %p136 = scmp.eq.s32.totalorder %s26, 0
      %p137 = por %p135, %p136
      %s139 = sadd.s32 %s138, 1
      %p142 = scmp.eq.s32.totalorder %s20, 1
      %p143 = scmp.ne.s32.totalorder %s138, %s140
      %p144 = scmp.eq.s32.totalorder %s20, 0
      %p145 = por %p143, %p144
      %p146 = scmp.ne.s32.totalorder %s138, %s140
      %p147 = scmp.eq.s32.totalorder %s25, 1
      %p148 = por %p146, %p147
      %p149 = scmp.ne.s32.totalorder %s140, %s141
      %p150 = scmp.eq.s32.totalorder %s25, 0
      %p151 = por %p149, %p150
      %p152 = scmp.ne.s32.totalorder %s140, %s141
      %p153 = scmp.eq.s32.totalorder %s26, 1
      %p154 = por %p152, %p153
      %p156 = scmp.ne.s32.totalorder %s141, %s155
      %p157 = scmp.eq.s32.totalorder %s26, 0
      %p158 = por %p156, %p157
      %s159 = ssub.s32 %s20, %s27
      %p160 = scmp.eq.s32.totalorder %s159, 0
      %s162 = sadd.s32 %s161, 1
      %s163 = scalar_select %p160, %s161, %s162
      %p166 = pneg %p160
      %p167 = scmp.eq.s32.totalorder %s20, 1
      %p168 = por %p166, %p167
      %p169 = scmp.ne.s32.totalorder %s161, %s164
      %p170 = scmp.eq.s32.totalorder %s20, 0
      %p171 = por %p169, %p170
      %p172 = scmp.ne.s32.totalorder %s161, %s164
      %p173 = scmp.eq.s32.totalorder %s25, 1
      %p174 = por %p172, %p173
      %p175 = scmp.ne.s32.totalorder %s164, %s165
      %p176 = scmp.eq.s32.totalorder %s25, 0
      %p177 = por %p175, %p176
      %p178 = scmp.ne.s32.totalorder %s164, %s165
      %p179 = scmp.eq.s32.totalorder %s26, 1
      %p180 = por %p178, %p179
      %p182 = scmp.ne.s32.totalorder %s165, %s181
      %p183 = scmp.eq.s32.totalorder %s26, 0
      %p184 = por %p182, %p183
      %p185 = scmp.le.s32.totalorder 1, %s20
      %p186 = scmp.lt.s32.totalorder %s20, 3
      %p187 = pnand %p185, %p186
      %p188 = pneg %p187
      // Predicated region
      $region9: #{tpu_custom_call.1} parent=5 // pred_check
        _
      $region10: #{tpu_custom_call.1} parent=5 // pred_check_branch
        %190 = sbr.rel (%p187) target = $region12
      $region11: #{tpu_custom_call.1} parent=5 // pred_region
        %s191 = ssub.s32 %s20, 1
        // Predicated region
        $region13: #{tpu_custom_call.1} parent=11 // pred_check
          %p192 = pneg %p67
        $region14: #{tpu_custom_call.1} parent=11 // pred_check_branch
          %194 = sbr.rel (%p192) target = $region16
        $region15: #{tpu_custom_call.1} parent=11 // pred_region
          %s196 = ssub.s32 4096, 4096
          %197 = vsyncadd [#allocation7], %s196
          %s198 = sshll.u32 [#allocation6], 4
          %s199 = int_to_ptr.vmem [resolvable:$true] %s198
          %204 = dma.hbm_to_vmem [thread:$0]  %s1, 4096, %s199, [#allocation7], 256, 256, 16
        $region16: #{tpu_custom_call.1} parent=11 // pred_fallthru
          _
        // Predicated region
        $region17: #{tpu_custom_call.1} parent=11 // pred_check
          %p205 = pneg %p88
        $region18: #{tpu_custom_call.1} parent=11 // pred_check_branch
          %207 = sbr.rel (%p205) target = $region20
        $region19: #{tpu_custom_call.1} parent=11 // pred_region
          _
        $region20: #{tpu_custom_call.1} parent=11 // pred_fallthru
          _
        // Predicated region
        $region21: #{tpu_custom_call.1} parent=11 // pred_check
          %p208 = pneg %p109
        $region22: #{tpu_custom_call.1} parent=11 // pred_check_branch
          %210 = sbr.rel (%p208) target = $region24
        $region23: #{tpu_custom_call.1} parent=11 // pred_region
          %s212 = ssub.s32 4096, 4096
          %213 = vsyncadd [#allocation7], %s212
          %s214 = sshll.u32 [#allocation8], 4
          %s215 = int_to_ptr.vmem [resolvable:$true] %s214
          %220 = dma.hbm_to_vmem [thread:$0]  %s3, 4096, %s215, [#allocation7], 128, 128, 8
        $region24: #{tpu_custom_call.1} parent=11 // pred_fallthru
          _
        // Predicated region
        $region25: #{tpu_custom_call.1} parent=11 // pred_check
          %p221 = pneg %p130
        $region26: #{tpu_custom_call.1} parent=11 // pred_check_branch
          %223 = sbr.rel (%p221) target = $region28
        $region27: #{tpu_custom_call.1} parent=11 // pred_region
          _
        $region28: #{tpu_custom_call.1} parent=11 // pred_fallthru
          _
        // Predicated region
        $region29: #{tpu_custom_call.1} parent=11 // pred_check
          %p224 = pneg %p151
        $region30: #{tpu_custom_call.1} parent=11 // pred_check_branch
          %226 = sbr.rel (%p224) target = $region32
        $region31: #{tpu_custom_call.1} parent=11 // pred_region
          %s228 = ssub.s32 32, 32
          %229 = vsyncadd [#allocation5], %s228
          %s231 = sshll.u32 %s5, 4
          %s232 = int_to_ptr.vmem [resolvable:$true] %s231
          %234 = dma.vmem_to_smem %s232, 32, [#allocation9], [#allocation5]
        $region32: #{tpu_custom_call.1} parent=11 // pred_fallthru
          _
      $region12: #{tpu_custom_call.1} parent=5 // pred_fallthru
        _
      %p235 = scmp.lt.s32.totalorder %s20, 2
      // Predicated region
      $region33: #{tpu_custom_call.1} parent=5 // pred_check
        %p236 = pneg %p235
      $region34: #{tpu_custom_call.1} parent=5 // pred_check_branch
        %238 = sbr.rel (%p236) target = $region36
      $region35: #{tpu_custom_call.1} parent=5 // pred_region
        // Predicated region
        $region37: #{tpu_custom_call.1} parent=35 // pred_check
          %p239 = pneg %p40
        $region38: #{tpu_custom_call.1} parent=35 // pred_check_branch
          %241 = sbr.rel (%p239) target = $region40
        $region39: #{tpu_custom_call.1} parent=35 // pred_region
          %s242 = sand.u32 %s30, 1
          %s243 = scalar_lea.sflag [#allocation3], %s242
          %s244 = sand.u32 %s30, 1
          %s245 = smul.addr %s244, 16
          %s246 = scalar_lea.vmem [#allocation2], %s245
          %s247 = smul.u32 2, %s20
          %s249 = ssub.s32 256, 256
          %250 = vsyncadd %s243, %s249
          %s251 = smul.addr %s247, 128
          %s252 = scalar_lea.hbm %s0, %s251
          %s253 = sshll.u32 %s246, 4
          %s254 = int_to_ptr.vmem [resolvable:$true] %s253
          %259 = dma.hbm_to_vmem [thread:$0]  %s252, 256, %s254, %s243, 128, 128, 8
        $region40: #{tpu_custom_call.1} parent=35 // pred_fallthru
          _
      $region36: #{tpu_custom_call.1} parent=5 // pred_fallthru
        _
      %p260 = scmp.le.s32.totalorder 1, %s20
      %p261 = scmp.lt.s32.totalorder %s20, 3
      %p262 = pnand %p260, %p261
      %p263 = pneg %p262
      // Predicated region
      $region41: #{tpu_custom_call.1} parent=5 // pred_check
        _
      $region42: #{tpu_custom_call.1} parent=5 // pred_check_branch
        %265 = sbr.rel (%p262) target = $region44
      $region43: #{tpu_custom_call.1} parent=5 // pred_region
        %s266 = ssub.s32 %s20, 1
        %s267 = sand.u32 %s33, 1
        %s268 = scalar_lea.sflag [#allocation3], %s267
        %s269 = sand.u32 %s33, 1
        %s270 = smul.addr %s269, 16
        %s271 = scalar_lea.vmem [#allocation2], %s270
        // Predicated region
        $region45: #{tpu_custom_call.1} parent=43 // pred_check
          %p272 = pneg %p46
        $region46: #{tpu_custom_call.1} parent=43 // pred_check_branch
          %274 = sbr.rel (%p272) target = $region48
        $region47: #{tpu_custom_call.1} parent=43 // pred_region
          %275 = dma.done %s268, 256
        $region48: #{tpu_custom_call.1} parent=43 // pred_fallthru
          _
        // Predicated region
        $region49: #{tpu_custom_call.1} parent=43 // pred_check
          %p276 = pneg %p67
        $region50: #{tpu_custom_call.1} parent=43 // pred_check_branch
          %278 = sbr.rel (%p276) target = $region52
        $region51: #{tpu_custom_call.1} parent=43 // pred_region
          %279 = dma.done [#allocation7], 4096
        $region52: #{tpu_custom_call.1} parent=43 // pred_fallthru
          _
        // Predicated region
        $region53: #{tpu_custom_call.1} parent=43 // pred_check
          %p280 = pneg %p109
        $region54: #{tpu_custom_call.1} parent=43 // pred_check_branch
          %282 = sbr.rel (%p280) target = $region56
        $region55: #{tpu_custom_call.1} parent=43 // pred_region
          %283 = dma.done [#allocation7], 4096
        $region56: #{tpu_custom_call.1} parent=43 // pred_fallthru
          _
        // Predicated region
        $region57: #{tpu_custom_call.1} parent=43 // pred_check
          %p284 = pneg %p151
        $region58: #{tpu_custom_call.1} parent=43 // pred_check_branch
          %286 = sbr.rel (%p284) target = $region60
        $region59: #{tpu_custom_call.1} parent=43 // pred_region
          %287 = dma.done [#allocation5], 32
        $region60: #{tpu_custom_call.1} parent=43 // pred_fallthru
          _
        %288 = sfence
        %s289 = sand.u32 %s33, 1
        %s290 = scalar_lea.sflag [#allocation3], %s289
        %s291 = sand.u32 %s33, 1
        %s292 = smul.addr %s291, 16
        %s293 = scalar_lea.vmem [#allocation2], %s292
        %p294 = pneg %p46
        %p295 = pneg %p43
        %p296 = pneg %p67
        %p297 = pneg %p64
        %p298 = pneg %p88
        %p299 = pneg %p85
        %p300 = pneg %p109
        %p301 = pneg %p106
        %p302 = pneg %p130
        %p303 = pneg %p127
        %p304 = pneg %p151
        %p305 = pneg %p148
        %p306 = pneg %p177
        %p307 = pneg %p174
        %s308 = sand.u32 %s164, 1
        %s309 = scalar_lea.sflag [#allocation4], %s308
        %s310 = sand.u32 %s164, 1
        %s311 = smul.addr %s310, 16
        %s312 = scalar_lea.vmem [#allocation10], %s311
        %s313 = smul.u32 2, %s25
        %s314 = smul.u32 2, %s25
        %v315 = vld [vmem:[%s271] sm:$0xff]
        %v316 = vld [vmem:[%s271 + $0x8] sm:$0xff]
        %v317 = vld [vmem:[#allocation6] sm:$0xff]
        %v318 = vld [vmem:[#allocation6 + $0x8] sm:$0xff]
        %v319 = vld [vmem:[#allocation6 + $0x10] sm:$0xff]
        %v320 = vld [vmem:[#allocation6 + $0x18] sm:$0xff]
        %v321 = vld [vmem:[#allocation6 + $0x20] sm:$0xff]
        %v322 = vld [vmem:[#allocation6 + $0x28] sm:$0xff]
        %v323 = vld [vmem:[#allocation6 + $0x30] sm:$0xff]
        %v324 = vld [vmem:[#allocation6 + $0x38] sm:$0xff]
        %v325 = vld [vmem:[#allocation6 + $0x40] sm:$0xff]
        %v326 = vld [vmem:[#allocation6 + $0x48] sm:$0xff]
        %v327 = vld [vmem:[#allocation6 + $0x50] sm:$0xff]
        %v328 = vld [vmem:[#allocation6 + $0x58] sm:$0xff]
        %v329 = vld [vmem:[#allocation6 + $0x60] sm:$0xff]
        %v330 = vld [vmem:[#allocation6 + $0x68] sm:$0xff]
        %v331 = vld [vmem:[#allocation6 + $0x70] sm:$0xff]
        %v332 = vld [vmem:[#allocation6 + $0x78] sm:$0xff]
        %v333 = vld [vmem:[#allocation6 + $0x80] sm:$0xff]
        %v334 = vld [vmem:[#allocation6 + $0x88] sm:$0xff]
        %v335 = vld [vmem:[#allocation6 + $0x90] sm:$0xff]
        %v336 = vld [vmem:[#allocation6 + $0x98] sm:$0xff]
        %v337 = vld [vmem:[#allocation6 + $0xa0] sm:$0xff]
        %v338 = vld [vmem:[#allocation6 + $0xa8] sm:$0xff]
        %v339 = vld [vmem:[#allocation6 + $0xb0] sm:$0xff]
        %v340 = vld [vmem:[#allocation6 + $0xb8] sm:$0xff]
        %v341 = vld [vmem:[#allocation6 + $0xc0] sm:$0xff]
        %v342 = vld [vmem:[#allocation6 + $0xc8] sm:$0xff]
        %v343 = vld [vmem:[#allocation6 + $0xd0] sm:$0xff]
        %v344 = vld [vmem:[#allocation6 + $0xd8] sm:$0xff]
        %v345 = vld [vmem:[#allocation6 + $0xe0] sm:$0xff]
        %v346 = vld [vmem:[#allocation6 + $0xe8] sm:$0xff]
        %v347 = vld [vmem:[#allocation6 + $0xf0] sm:$0xff]
        %v348 = vld [vmem:[#allocation6 + $0xf8] sm:$0xff]
        %349 = vmatprep.subr.mxu0 %v318
        %350 = vmatpush1.msra.mxu0 %v317
        %351 = vmatprep.subr.mxu0 %v320
        %352 = vmatpush1.msra.mxu0 %v319
        %353 = vmatprep.subr.mxu0 %v322
        %354 = vmatpush1.msra.mxu0 %v321
        %355 = vmatprep.subr.mxu0 %v324
        %356 = vmatpush1.msra.mxu0 %v323
        %357 = vmatprep.subr.mxu0 %v326
        %358 = vmatpush1.msra.mxu0 %v325
        %359 = vmatprep.subr.mxu0 %v328
        %360 = vmatpush1.msra.mxu0 %v327
        %361 = vmatprep.subr.mxu0 %v330
        %362 = vmatpush1.msra.mxu0 %v329
        %363 = vmatprep.subr.mxu0 %v332
        %364 = vmatpush1.msra.mxu0 %v331
        %365 = vmatprep.subr.mxu0 %v334
        %366 = vmatpush1.msra.mxu0 %v333
        %367 = vmatprep.subr.mxu0 %v336
        %368 = vmatpush1.msra.mxu0 %v335
        %369 = vmatprep.subr.mxu0 %v338
        %370 = vmatpush1.msra.mxu0 %v337
        %371 = vmatprep.subr.mxu0 %v340
        %372 = vmatpush1.msra.mxu0 %v339
        %373 = vmatprep.subr.mxu0 %v342
        %374 = vmatpush1.msra.mxu0 %v341
        %375 = vmatprep.subr.mxu0 %v344
        %376 = vmatpush1.msra.mxu0 %v343
        %377 = vmatprep.subr.mxu0 %v346
        %378 = vmatpush1.msra.mxu0 %v345
        %379 = vmatprep.subr.mxu0 %v348
        %380 = vmatpush1.msra.mxu0 %v347
        %381 = vmatprep.subr.mxu0 0.0
        %382 = vmatpush1.msra.mxu0 0.0
        %383 = vmatprep.subr.mxu0 0.0
        %384 = vmatpush1.msra.mxu0 0.0
        %385 = vmatprep.subr.mxu0 0.0
        %386 = vmatpush1.msra.mxu0 0.0
        %387 = vmatprep.subr.mxu0 0.0
        %388 = vmatpush1.msra.mxu0 0.0
        %389 = vmatprep.subr.mxu0 0.0
        %390 = vmatpush1.msra.mxu0 0.0
        %391 = vmatprep.subr.mxu0 0.0
        %392 = vmatpush1.msra.mxu0 0.0
        %393 = vmatprep.subr.mxu0 0.0
        %394 = vmatpush1.msra.mxu0 0.0
        %395 = vmatprep.subr.mxu0 0.0
        %396 = vmatpush1.msra.mxu0 0.0
        %397 = vmatprep.subr.mxu0 0.0
        %398 = vmatpush1.msra.mxu0 0.0
        %399 = vmatprep.subr.mxu0 0.0
        %400 = vmatpush1.msra.mxu0 0.0
        %401 = vmatprep.subr.mxu0 0.0
        %402 = vmatpush1.msra.mxu0 0.0
        %403 = vmatprep.subr.mxu0 0.0
        %404 = vmatpush1.msra.mxu0 0.0
        %405 = vmatprep.subr.mxu0 0.0
        %406 = vmatpush1.msra.mxu0 0.0
        %407 = vmatprep.subr.mxu0 0.0
        %408 = vmatpush1.msra.mxu0 0.0
        %409 = vmatprep.subr.mxu0 0.0
        %410 = vmatpush1.msra.mxu0 0.0
        %411 = vmatprep.subr.mxu0 0.0
        %412 = vmatpush1.msra.mxu0 0.0
        %413 = vmatprep.mubr.f32.mxu0 0.0
        %414 = vmatmul.mubr.f32.gmra.mrb[0].mxu0 %v315
        %v415 = vpop.f32.mrb[0].mxu0
        %v416 = vadd.f32 0.0, %v415
        %v417 = vpop.f32.mrb[0].mxu0
        %v418 = vadd.f32 0.0, %v417
        %419 = vmatprep.mubr.f32.mxu0 0.0
        %420 = vmatmul.mubr.f32.gmra.mrb[0].mxu0 %v316
        %v421 = vpop.f32.mrb[0].mxu0
        %v422 = vadd.f32 0.0, %v421
        %v423 = vpop.f32.mrb[0].mxu0
        %v424 = vadd.f32 0.0, %v423
        %425 = vdwg.mxu0
        %v426 = vld [vmem:[%s2] sm:$0xf]
        %v428 = vlaneseq
        %v429 = vshrl.u32 %v428, 7
        %v430 = vsub.s32 0, %v429
        %v431 = vrot.slane %v426, %v430
        %v432 = vlaneseq
        %v433 = vshrl.u32 %v432, 7
        %v434 = vsub.s32 2, %v433
        %v435 = vrot.slane %v426, %v434
        %v438 = vlaneseq
        %v439 = vshrl.u32 %v438, 7
        %v440 = vsub.s32 0, %v439
        %v441 = vrot.slane %v431, %v440
        %v442 = vlaneseq
        %v443 = vshrl.u32 %v442, 7
        %v444 = vsub.s32 0, %v443
        %v445 = vrot.slane %v435, %v444
        %v446 = vmul.f32 %v416, %v441
        %v447 = vmul.f32 %v418, %v445
        %v448 = vmul.f32 %v422, %v441
        %v449 = vmul.f32 %v424, %v445
        %v450 = vlaneseq
        %v451 = vshrl.u32 %v450, 7
        %v452 = vsub.s32 1, %v451
        %v453 = vrot.slane %v426, %v452
        %v454 = vlaneseq
        %v455 = vshrl.u32 %v454, 7
        %v456 = vsub.s32 3, %v455
        %v457 = vrot.slane %v426, %v456
        %v460 = vlaneseq
        %v461 = vshrl.u32 %v460, 7
        %v462 = vsub.s32 1, %v461
        %v463 = vrot.slane %v453, %v462
        %v464 = vlaneseq
        %v465 = vshrl.u32 %v464, 7
        %v466 = vsub.s32 1, %v465
        %v467 = vrot.slane %v457, %v466
        %v468 = vadd.f32 %v446, %v463
        %v469 = vadd.f32 %v447, %v467
        %v470 = vadd.f32 %v448, %v463
        %v471 = vadd.f32 %v449, %v467
        %s472 = sld [smem:[#allocation9]]
        %s473 = sld [smem:[#allocation9 + $0x80]]
        %v474 = vlaneseq
        %v475 = vshrl.u32 %v474, 7
        %v476 = vsub.s32 0, %v475
        %v477 = vrot.slane %v468, %v476
        %479 = vbcast.lane.b32.xlu0 %v477, 256
        %v480 = vpop.permute.xlu0 %479
        %s482 = sor.u32 256, 8
        %483 = vbcast.lane.b32.xlu0 %v477, %s482
        %v484 = vpop.permute.xlu0 %483
        %v485 = vlaneseq
        %v486 = vshrl.u32 %v485, 7
        %v487 = vsub.s32 1, %v486
        %v488 = vrot.slane %v468, %v487
        %490 = vbcast.lane.b32.xlu0 %v488, 256
        %v491 = vpop.permute.xlu0 %490
        %s493 = sor.u32 256, 8
        %494 = vbcast.lane.b32.xlu0 %v488, %s493
        %v495 = vpop.permute.xlu0 %494
        %v496 = vlaneseq
        %v497 = vshrl.u32 %v496, 7
        %v498 = vsub.s32 2, %v497
        %v499 = vrot.slane %v468, %v498
        %501 = vbcast.lane.b32.xlu0 %v499, 256
        %v502 = vpop.permute.xlu0 %501
        %s504 = sor.u32 256, 8
        %505 = vbcast.lane.b32.xlu0 %v499, %s504
        %v506 = vpop.permute.xlu0 %505
        %v507 = vlaneseq
        %v508 = vshrl.u32 %v507, 7
        %v509 = vsub.s32 3, %v508
        %v510 = vrot.slane %v468, %v509
        %512 = vbcast.lane.b32.xlu0 %v510, 256
        %v513 = vpop.permute.xlu0 %512
        %s515 = sor.u32 256, 8
        %516 = vbcast.lane.b32.xlu0 %v510, %s515
        %v517 = vpop.permute.xlu0 %516
        %v518 = vlaneseq
        %v519 = vshrl.u32 %v518, 7
        %v520 = vsub.s32 4, %v519
        %v521 = vrot.slane %v468, %v520
        %523 = vbcast.lane.b32.xlu0 %v521, 256
        %v524 = vpop.permute.xlu0 %523
        %s526 = sor.u32 256, 8
        %527 = vbcast.lane.b32.xlu0 %v521, %s526
        %v528 = vpop.permute.xlu0 %527
        %v529 = vlaneseq
        %v530 = vshrl.u32 %v529, 7
        %v531 = vsub.s32 5, %v530
        %v532 = vrot.slane %v468, %v531
        %534 = vbcast.lane.b32.xlu0 %v532, 256
        %v535 = vpop.permute.xlu0 %534
        %s537 = sor.u32 256, 8
        %538 = vbcast.lane.b32.xlu0 %v532, %s537
        %v539 = vpop.permute.xlu0 %538
        %v540 = vlaneseq
        %v541 = vshrl.u32 %v540, 7
        %v542 = vsub.s32 6, %v541
        %v543 = vrot.slane %v468, %v542
        %545 = vbcast.lane.b32.xlu0 %v543, 256
        %v546 = vpop.permute.xlu0 %545
        %s548 = sor.u32 256, 8
        %549 = vbcast.lane.b32.xlu0 %v543, %s548
        %v550 = vpop.permute.xlu0 %549
        %v551 = vlaneseq
        %v552 = vshrl.u32 %v551, 7
        %v553 = vsub.s32 7, %v552
        %v554 = vrot.slane %v468, %v553
        %556 = vbcast.lane.b32.xlu0 %v554, 256
        %v557 = vpop.permute.xlu0 %556
        %s559 = sor.u32 256, 8
        %560 = vbcast.lane.b32.xlu0 %v554, %s559
        %v561 = vpop.permute.xlu0 %560
        %v562 = vlaneseq
        %v563 = vshrl.u32 %v562, 7
        %v564 = vsub.s32 0, %v563
        %v565 = vrot.slane %v470, %v564
        %567 = vbcast.lane.b32.xlu0 %v565, 256
        %v568 = vpop.permute.xlu0 %567
        %s570 = sor.u32 256, 8
        %571 = vbcast.lane.b32.xlu0 %v565, %s570
        %v572 = vpop.permute.xlu0 %571
        %v573 = vlaneseq
        %v574 = vshrl.u32 %v573, 7
        %v575 = vsub.s32 1, %v574
        %v576 = vrot.slane %v470, %v575
        %578 = vbcast.lane.b32.xlu0 %v576, 256
        %v579 = vpop.permute.xlu0 %578
        %s581 = sor.u32 256, 8
        %582 = vbcast.lane.b32.xlu0 %v576, %s581
        %v583 = vpop.permute.xlu0 %582
        %v584 = vlaneseq
        %v585 = vshrl.u32 %v584, 7
        %v586 = vsub.s32 2, %v585
        %v587 = vrot.slane %v470, %v586
        %589 = vbcast.lane.b32.xlu0 %v587, 256
        %v590 = vpop.permute.xlu0 %589
        %s592 = sor.u32 256, 8
        %593 = vbcast.lane.b32.xlu0 %v587, %s592
        %v594 = vpop.permute.xlu0 %593
        %v595 = vlaneseq
        %v596 = vshrl.u32 %v595, 7
        %v597 = vsub.s32 3, %v596
        %v598 = vrot.slane %v470, %v597
        %600 = vbcast.lane.b32.xlu0 %v598, 256
        %v601 = vpop.permute.xlu0 %600
        %s603 = sor.u32 256, 8
        %604 = vbcast.lane.b32.xlu0 %v598, %s603
        %v605 = vpop.permute.xlu0 %604
        %v606 = vlaneseq
        %v607 = vshrl.u32 %v606, 7
        %v608 = vsub.s32 4, %v607
        %v609 = vrot.slane %v470, %v608
        %611 = vbcast.lane.b32.xlu0 %v609, 256
        %v612 = vpop.permute.xlu0 %611
        %s614 = sor.u32 256, 8
        %615 = vbcast.lane.b32.xlu0 %v609, %s614
        %v616 = vpop.permute.xlu0 %615
        %v617 = vlaneseq
        %v618 = vshrl.u32 %v617, 7
        %v619 = vsub.s32 5, %v618
        %v620 = vrot.slane %v470, %v619
        %622 = vbcast.lane.b32.xlu0 %v620, 256
        %v623 = vpop.permute.xlu0 %622
        %s625 = sor.u32 256, 8
        %626 = vbcast.lane.b32.xlu0 %v620, %s625
        %v627 = vpop.permute.xlu0 %626
        %v628 = vlaneseq
        %v629 = vshrl.u32 %v628, 7
        %v630 = vsub.s32 6, %v629
        %v631 = vrot.slane %v470, %v630
        %633 = vbcast.lane.b32.xlu0 %v631, 256
        %v634 = vpop.permute.xlu0 %633
        %s636 = sor.u32 256, 8
        %637 = vbcast.lane.b32.xlu0 %v631, %s636
        %v638 = vpop.permute.xlu0 %637
        %v639 = vlaneseq
        %v640 = vshrl.u32 %v639, 7
        %v641 = vsub.s32 7, %v640
        %v642 = vrot.slane %v470, %v641
        %644 = vbcast.lane.b32.xlu0 %v642, 256
        %v645 = vpop.permute.xlu0 %644
        %s647 = sor.u32 256, 8
        %648 = vbcast.lane.b32.xlu0 %v642, %s647
        %v649 = vpop.permute.xlu0 %648
        %s651 = sor.u32 256, 16
        %652 = vbcast.lane.b32.xlu0 %v477, %s651
        %v653 = vpop.permute.xlu0 %652
        %s655 = sor.u32 256, 24
        %656 = vbcast.lane.b32.xlu0 %v477, %s655
        %v657 = vpop.permute.xlu0 %656
        %s659 = sor.u32 256, 16
        %660 = vbcast.lane.b32.xlu0 %v488, %s659
        %v661 = vpop.permute.xlu0 %660
        %s663 = sor.u32 256, 24
        %664 = vbcast.lane.b32.xlu0 %v488, %s663
        %v665 = vpop.permute.xlu0 %664
        %s667 = sor.u32 256, 16
        %668 = vbcast.lane.b32.xlu0 %v499, %s667
        %v669 = vpop.permute.xlu0 %668
        %s671 = sor.u32 256, 24
        %672 = vbcast.lane.b32.xlu0 %v499, %s671
        %v673 = vpop.permute.xlu0 %672
        %s675 = sor.u32 256, 16
        %676 = vbcast.lane.b32.xlu0 %v510, %s675
        %v677 = vpop.permute.xlu0 %676
        %s679 = sor.u32 256, 24
        %680 = vbcast.lane.b32.xlu0 %v510, %s679
        %v681 = vpop.permute.xlu0 %680
        %s683 = sor.u32 256, 16
        %684 = vbcast.lane.b32.xlu0 %v521, %s683
        %v685 = vpop.permute.xlu0 %684
        %s687 = sor.u32 256, 24
        %688 = vbcast.lane.b32.xlu0 %v521, %s687
        %v689 = vpop.permute.xlu0 %688
        %s691 = sor.u32 256, 16
        %692 = vbcast.lane.b32.xlu0 %v532, %s691
        %v693 = vpop.permute.xlu0 %692
        %s695 = sor.u32 256, 24
        %696 = vbcast.lane.b32.xlu0 %v532, %s695
        %v697 = vpop.permute.xlu0 %696
        %s699 = sor.u32 256, 16
        %700 = vbcast.lane.b32.xlu0 %v543, %s699
        %v701 = vpop.permute.xlu0 %700
        %s703 = sor.u32 256, 24
        %704 = vbcast.lane.b32.xlu0 %v543, %s703
        %v705 = vpop.permute.xlu0 %704
        %s707 = sor.u32 256, 16
        %708 = vbcast.lane.b32.xlu0 %v554, %s707
        %v709 = vpop.permute.xlu0 %708
        %s711 = sor.u32 256, 24
        %712 = vbcast.lane.b32.xlu0 %v554, %s711
        %v713 = vpop.permute.xlu0 %712
        %s715 = sor.u32 256, 16
        %716 = vbcast.lane.b32.xlu0 %v565, %s715
        %v717 = vpop.permute.xlu0 %716
        %s719 = sor.u32 256, 24
        %720 = vbcast.lane.b32.xlu0 %v565, %s719
        %v721 = vpop.permute.xlu0 %720
        %s723 = sor.u32 256, 16
        %724 = vbcast.lane.b32.xlu0 %v576, %s723
        %v725 = vpop.permute.xlu0 %724
        %s727 = sor.u32 256, 24
        %728 = vbcast.lane.b32.xlu0 %v576, %s727
        %v729 = vpop.permute.xlu0 %728
        %s731 = sor.u32 256, 16
        %732 = vbcast.lane.b32.xlu0 %v587, %s731
        %v733 = vpop.permute.xlu0 %732
        %s735 = sor.u32 256, 24
        %736 = vbcast.lane.b32.xlu0 %v587, %s735
        %v737 = vpop.permute.xlu0 %736
        %s739 = sor.u32 256, 16
        %740 = vbcast.lane.b32.xlu0 %v598, %s739
        %v741 = vpop.permute.xlu0 %740
        %s743 = sor.u32 256, 24
        %744 = vbcast.lane.b32.xlu0 %v598, %s743
        %v745 = vpop.permute.xlu0 %744
        %s747 = sor.u32 256, 16
        %748 = vbcast.lane.b32.xlu0 %v609, %s747
        %v749 = vpop.permute.xlu0 %748
        %s751 = sor.u32 256, 24
        %752 = vbcast.lane.b32.xlu0 %v609, %s751
        %v753 = vpop.permute.xlu0 %752
        %s755 = sor.u32 256, 16
        %756 = vbcast.lane.b32.xlu0 %v620, %s755
        %v757 = vpop.permute.xlu0 %756
        %s759 = sor.u32 256, 24
        %760 = vbcast.lane.b32.xlu0 %v620, %s759
        %v761 = vpop.permute.xlu0 %760
        %s763 = sor.u32 256, 16
        %764 = vbcast.lane.b32.xlu0 %v631, %s763
        %v765 = vpop.permute.xlu0 %764
        %s767 = sor.u32 256, 24
        %768 = vbcast.lane.b32.xlu0 %v631, %s767
        %v769 = vpop.permute.xlu0 %768
        %s771 = sor.u32 256, 16
        %772 = vbcast.lane.b32.xlu0 %v642, %s771
        %v773 = vpop.permute.xlu0 %772
        %s775 = sor.u32 256, 24
        %776 = vbcast.lane.b32.xlu0 %v642, %s775
        %v777 = vpop.permute.xlu0 %776
        %v780 = vcombine.high %v468, %v468
        %v782 = vunpack.c.l.s4 1966171168
        %v783 = vunpack.c.0.s8 %v782
        %v784 = vlaneseq
        %v785 = vshrl.u32 %v784, 7
        %v786 = vsub.s32 %v783, %v785
        %v787 = vrot.slane %v468, %v786
        %v789 = vunpack.c.l.s4 1966171168
        %v790 = vunpack.c.0.s8 %v789
        %v791 = vlaneseq
        %v792 = vshrl.u32 %v791, 7
        %v793 = vsub.s32 %v790, %v792
        %v794 = vrot.slane %v780, %v793
        %v795 = vcombine.high %v787, %v787
        %v796 = vcombine.high %v794, %v794
        %v798 = vunpack.c.l.s4 1966171168
        %v799 = vunpack.c.0.s8 %v798
        %v800 = vlaneseq
        %v801 = vshrl.u32 %v800, 7
        %v802 = vsub.s32 %v799, %v801
        %v803 = vrot.slane %v787, %v802
        %v805 = vunpack.c.l.s4 1966171168
        %v806 = vunpack.c.0.s8 %v805
        %v807 = vlaneseq
        %v808 = vshrl.u32 %v807, 7
        %v809 = vsub.s32 %v806, %v808
        %v810 = vrot.slane %v794, %v809
        %v812 = vunpack.c.l.s4 1966171168
        %v813 = vunpack.c.0.s8 %v812
        %v814 = vlaneseq
        %v815 = vshrl.u32 %v814, 7
        %v816 = vsub.s32 %v813, %v815
        %v817 = vrot.slane %v795, %v816
        %v819 = vunpack.c.l.s4 1966171168
        %v820 = vunpack.c.0.s8 %v819
        %v821 = vlaneseq
        %v822 = vshrl.u32 %v821, 7
        %v823 = vsub.s32 %v820, %v822
        %v824 = vrot.slane %v796, %v823
        %v825 = vcombine.high %v803, %v803
        %v826 = vcombine.high %v810, %v810
        %v827 = vcombine.high %v817, %v817
        %v828 = vcombine.high %v824, %v824
        %v829 = vcombine.high %v470, %v470
        %v831 = vunpack.c.l.s4 1966171168
        %v832 = vunpack.c.0.s8 %v831
        %v833 = vlaneseq
        %v834 = vshrl.u32 %v833, 7
        %v835 = vsub.s32 %v832, %v834
        %v836 = vrot.slane %v470, %v835
        %v838 = vunpack.c.l.s4 1966171168
        %v839 = vunpack.c.0.s8 %v838
        %v840 = vlaneseq
        %v841 = vshrl.u32 %v840, 7
        %v842 = vsub.s32 %v839, %v841
        %v843 = vrot.slane %v829, %v842
        %v844 = vcombine.high %v836, %v836
        %v845 = vcombine.high %v843, %v843
        %v847 = vunpack.c.l.s4 1966171168
        %v848 = vunpack.c.0.s8 %v847
        %v849 = vlaneseq
        %v850 = vshrl.u32 %v849, 7
        %v851 = vsub.s32 %v848, %v850
        %v852 = vrot.slane %v836, %v851
        %v854 = vunpack.c.l.s4 1966171168
        %v855 = vunpack.c.0.s8 %v854
        %v856 = vlaneseq
        %v857 = vshrl.u32 %v856, 7
        %v858 = vsub.s32 %v855, %v857
        %v859 = vrot.slane %v843, %v858
        %v861 = vunpack.c.l.s4 1966171168
        %v862 = vunpack.c.0.s8 %v861
        %v863 = vlaneseq
        %v864 = vshrl.u32 %v863, 7
        %v865 = vsub.s32 %v862, %v864
        %v866 = vrot.slane %v844, %v865
        %v868 = vunpack.c.l.s4 1966171168
        %v869 = vunpack.c.0.s8 %v868
        %v870 = vlaneseq
        %v871 = vshrl.u32 %v870, 7
        %v872 = vsub.s32 %v869, %v871
        %v873 = vrot.slane %v845, %v872
        %v874 = vcombine.high %v852, %v852
        %v875 = vcombine.high %v859, %v859
        %v876 = vcombine.high %v866, %v866
        %v877 = vcombine.high %v873, %v873
        %v878 = vstv %s472
        %v879 = vmul.f32 %v480, %v878
        %v880 = vmul.f32 %v484, %v878
        %v881 = vmul.f32 %v491, %v878
        %v882 = vmul.f32 %v495, %v878
        %v883 = vmul.f32 %v502, %v878
        %v884 = vmul.f32 %v506, %v878
        %v885 = vmul.f32 %v513, %v878
        %v886 = vmul.f32 %v517, %v878
        %v887 = vmul.f32 %v524, %v878
        %v888 = vmul.f32 %v528, %v878
        %v889 = vmul.f32 %v535, %v878
        %v890 = vmul.f32 %v539, %v878
        %v891 = vmul.f32 %v546, %v878
        %v892 = vmul.f32 %v550, %v878
        %v893 = vmul.f32 %v557, %v878
        %v894 = vmul.f32 %v561, %v878
        %v895 = vmul.f32 %v568, %v878
        %v896 = vmul.f32 %v572, %v878
        %v897 = vmul.f32 %v579, %v878
        %v898 = vmul.f32 %v583, %v878
        %v899 = vmul.f32 %v590, %v878
        %v900 = vmul.f32 %v594, %v878
        %v901 = vmul.f32 %v601, %v878
        %v902 = vmul.f32 %v605, %v878
        %v903 = vmul.f32 %v612, %v878
        %v904 = vmul.f32 %v616, %v878
        %v905 = vmul.f32 %v623, %v878
        %v906 = vmul.f32 %v627, %v878
        %v907 = vmul.f32 %v634, %v878
        %v908 = vmul.f32 %v638, %v878
        %v909 = vmul.f32 %v645, %v878
        %v910 = vmul.f32 %v649, %v878
        %v911 = vlaneseq
        %v912 = vshrl.u32 %v911, 7
        %v913 = vsub.s32 0, %v912
        %v914 = vrot.slane %v803, %v913
        %v915 = vlaneseq
        %v916 = vshrl.u32 %v915, 7
        %v917 = vsub.s32 0, %v916
        %v918 = vrot.slane %v817, %v917
        %v919 = vlaneseq
        %v920 = vshrl.u32 %v919, 7
        %v921 = vsub.s32 0, %v920
        %v922 = vrot.slane %v825, %v921
        %v923 = vlaneseq
        %v924 = vshrl.u32 %v923, 7
        %v925 = vsub.s32 0, %v924
        %v926 = vrot.slane %v827, %v925
        %v927 = vlaneseq
        %v928 = vshrl.u32 %v927, 7
        %v929 = vsub.s32 0, %v928
        %v930 = vrot.slane %v810, %v929
        %v931 = vlaneseq
        %v932 = vshrl.u32 %v931, 7
        %v933 = vsub.s32 0, %v932
        %v934 = vrot.slane %v824, %v933
        %v935 = vlaneseq
        %v936 = vshrl.u32 %v935, 7
        %v937 = vsub.s32 0, %v936
        %v938 = vrot.slane %v826, %v937
        %v939 = vlaneseq
        %v940 = vshrl.u32 %v939, 7
        %v941 = vsub.s32 0, %v940
        %v942 = vrot.slane %v828, %v941
        %v943 = vlaneseq
        %v944 = vshrl.u32 %v943, 7
        %v945 = vsub.s32 0, %v944
        %v946 = vrot.slane %v852, %v945
        %v947 = vlaneseq
        %v948 = vshrl.u32 %v947, 7
        %v949 = vsub.s32 0, %v948
        %v950 = vrot.slane %v866, %v949
        %v951 = vlaneseq
        %v952 = vshrl.u32 %v951, 7
        %v953 = vsub.s32 0, %v952
        %v954 = vrot.slane %v874, %v953
        %v955 = vlaneseq
        %v956 = vshrl.u32 %v955, 7
        %v957 = vsub.s32 0, %v956
        %v958 = vrot.slane %v876, %v957
        %v959 = vlaneseq
        %v960 = vshrl.u32 %v959, 7
        %v961 = vsub.s32 0, %v960
        %v962 = vrot.slane %v859, %v961
        %v963 = vlaneseq
        %v964 = vshrl.u32 %v963, 7
        %v965 = vsub.s32 0, %v964
        %v966 = vrot.slane %v873, %v965
        %v967 = vlaneseq
        %v968 = vshrl.u32 %v967, 7
        %v969 = vsub.s32 0, %v968
        %v970 = vrot.slane %v875, %v969
        %v971 = vlaneseq
        %v972 = vshrl.u32 %v971, 7
        %v973 = vsub.s32 0, %v972
        %v974 = vrot.slane %v877, %v973
        %v991 = vmul.f32 %v879, %v914
        %v992 = vmul.f32 %v880, %v914
        %v993 = vmul.f32 %v881, %v918
        %v994 = vmul.f32 %v882, %v918
        %v995 = vmul.f32 %v883, %v922
        %v996 = vmul.f32 %v884, %v922
        %v997 = vmul.f32 %v885, %v926
        %v998 = vmul.f32 %v886, %v926
        %v999 = vmul.f32 %v887, %v930
        %v1000 = vmul.f32 %v888, %v930
        %v1001 = vmul.f32 %v889, %v934
        %v1002 = vmul.f32 %v890, %v934
        %v1003 = vmul.f32 %v891, %v938
        %v1004 = vmul.f32 %v892, %v938
        %v1005 = vmul.f32 %v893, %v942
        %v1006 = vmul.f32 %v894, %v942
        %v1007 = vmul.f32 %v895, %v946
        %v1008 = vmul.f32 %v896, %v946
        %v1009 = vmul.f32 %v897, %v950
        %v1010 = vmul.f32 %v898, %v950
        %v1011 = vmul.f32 %v899, %v954
        %v1012 = vmul.f32 %v900, %v954
        %v1013 = vmul.f32 %v901, %v958
        %v1014 = vmul.f32 %v902, %v958
        %v1015 = vmul.f32 %v903, %v962
        %v1016 = vmul.f32 %v904, %v962
        %v1017 = vmul.f32 %v905, %v966
        %v1018 = vmul.f32 %v906, %v966
        %v1019 = vmul.f32 %v907, %v970
        %v1020 = vmul.f32 %v908, %v970
        %v1021 = vmul.f32 %v909, %v974
        %v1022 = vmul.f32 %v910, %v974
        %v1023 = vmul.f32 %v653, %v878
        %v1024 = vmul.f32 %v657, %v878
        %v1025 = vmul.f32 %v661, %v878
        %v1026 = vmul.f32 %v665, %v878
        %v1027 = vmul.f32 %v669, %v878
        %v1028 = vmul.f32 %v673, %v878
        %v1029 = vmul.f32 %v677, %v878
        %v1030 = vmul.f32 %v681, %v878
        %v1031 = vmul.f32 %v685, %v878
        %v1032 = vmul.f32 %v689, %v878
        %v1033 = vmul.f32 %v693, %v878
        %v1034 = vmul.f32 %v697, %v878
        %v1035 = vmul.f32 %v701, %v878
        %v1036 = vmul.f32 %v705, %v878
        %v1037 = vmul.f32 %v709, %v878
        %v1038 = vmul.f32 %v713, %v878
        %v1039 = vmul.f32 %v717, %v878
        %v1040 = vmul.f32 %v721, %v878
        %v1041 = vmul.f32 %v725, %v878
        %v1042 = vmul.f32 %v729, %v878
        %v1043 = vmul.f32 %v733, %v878
        %v1044 = vmul.f32 %v737, %v878
        %v1045 = vmul.f32 %v741, %v878
        %v1046 = vmul.f32 %v745, %v878
        %v1047 = vmul.f32 %v749, %v878
        %v1048 = vmul.f32 %v753, %v878
        %v1049 = vmul.f32 %v757, %v878
        %v1050 = vmul.f32 %v761, %v878
        %v1051 = vmul.f32 %v765, %v878
        %v1052 = vmul.f32 %v769, %v878
        %v1053 = vmul.f32 %v773, %v878
        %v1054 = vmul.f32 %v777, %v878
        %v1055 = vmul.f32 %v1023, %v914
        %v1056 = vmul.f32 %v1024, %v914
        %v1057 = vmul.f32 %v1025, %v918
        %v1058 = vmul.f32 %v1026, %v918
        %v1059 = vmul.f32 %v1027, %v922
        %v1060 = vmul.f32 %v1028, %v922
        %v1061 = vmul.f32 %v1029, %v926
        %v1062 = vmul.f32 %v1030, %v926
        %v1063 = vmul.f32 %v1031, %v930
        %v1064 = vmul.f32 %v1032, %v930
        %v1065 = vmul.f32 %v1033, %v934
        %v1066 = vmul.f32 %v1034, %v934
        %v1067 = vmul.f32 %v1035, %v938
        %v1068 = vmul.f32 %v1036, %v938
        %v1069 = vmul.f32 %v1037, %v942
        %v1070 = vmul.f32 %v1038, %v942
        %v1071 = vmul.f32 %v1039, %v946
        %v1072 = vmul.f32 %v1040, %v946
        %v1073 = vmul.f32 %v1041, %v950
        %v1074 = vmul.f32 %v1042, %v950
        %v1075 = vmul.f32 %v1043, %v954
        %v1076 = vmul.f32 %v1044, %v954
        %v1077 = vmul.f32 %v1045, %v958
        %v1078 = vmul.f32 %v1046, %v958
        %v1079 = vmul.f32 %v1047, %v962
        %v1080 = vmul.f32 %v1048, %v962
        %v1081 = vmul.f32 %v1049, %v966
        %v1082 = vmul.f32 %v1050, %v966
        %v1083 = vmul.f32 %v1051, %v970
        %v1084 = vmul.f32 %v1052, %v970
        %v1085 = vmul.f32 %v1053, %v974
        %v1086 = vmul.f32 %v1054, %v974
        %1119 = vrot.lane.b32.xlu0 %v1055, 112
        %v1120 = vpop.permute.xlu0 %1119
        %1121 = vrot.lane.b32.xlu0 %v1056, 112
        %v1122 = vpop.permute.xlu0 %1121
        %1123 = vrot.lane.b32.xlu0 %v1057, 112
        %v1124 = vpop.permute.xlu0 %1123
        %1125 = vrot.lane.b32.xlu0 %v1058, 112
        %v1126 = vpop.permute.xlu0 %1125
        %1127 = vrot.lane.b32.xlu0 %v1059, 112
        %v1128 = vpop.permute.xlu0 %1127
        %1129 = vrot.lane.b32.xlu0 %v1060, 112
        %v1130 = vpop.permute.xlu0 %1129
        %1131 = vrot.lane.b32.xlu0 %v1061, 112
        %v1132 = vpop.permute.xlu0 %1131
        %1133 = vrot.lane.b32.xlu0 %v1062, 112
        %v1134 = vpop.permute.xlu0 %1133
        %1135 = vrot.lane.b32.xlu0 %v1063, 112
        %v1136 = vpop.permute.xlu0 %1135
        %1137 = vrot.lane.b32.xlu0 %v1064, 112
        %v1138 = vpop.permute.xlu0 %1137
        %1139 = vrot.lane.b32.xlu0 %v1065, 112
        %v1140 = vpop.permute.xlu0 %1139
        %1141 = vrot.lane.b32.xlu0 %v1066, 112
        %v1142 = vpop.permute.xlu0 %1141
        %1143 = vrot.lane.b32.xlu0 %v1067, 112
        %v1144 = vpop.permute.xlu0 %1143
        %1145 = vrot.lane.b32.xlu0 %v1068, 112
        %v1146 = vpop.permute.xlu0 %1145
        %1147 = vrot.lane.b32.xlu0 %v1069, 112
        %v1148 = vpop.permute.xlu0 %1147
        %1149 = vrot.lane.b32.xlu0 %v1070, 112
        %v1150 = vpop.permute.xlu0 %1149
        %1151 = vrot.lane.b32.xlu0 %v1071, 112
        %v1152 = vpop.permute.xlu0 %1151
        %1153 = vrot.lane.b32.xlu0 %v1072, 112
        %v1154 = vpop.permute.xlu0 %1153
        %1155 = vrot.lane.b32.xlu0 %v1073, 112
        %v1156 = vpop.permute.xlu0 %1155
        %1157 = vrot.lane.b32.xlu0 %v1074, 112
        %v1158 = vpop.permute.xlu0 %1157
        %1159 = vrot.lane.b32.xlu0 %v1075, 112
        %v1160 = vpop.permute.xlu0 %1159
        %1161 = vrot.lane.b32.xlu0 %v1076, 112
        %v1162 = vpop.permute.xlu0 %1161
        %1163 = vrot.lane.b32.xlu0 %v1077, 112
        %v1164 = vpop.permute.xlu0 %1163
        %1165 = vrot.lane.b32.xlu0 %v1078, 112
        %v1166 = vpop.permute.xlu0 %1165
        %1167 = vrot.lane.b32.xlu0 %v1079, 112
        %v1168 = vpop.permute.xlu0 %1167
        %1169 = vrot.lane.b32.xlu0 %v1080, 112
        %v1170 = vpop.permute.xlu0 %1169
        %1171 = vrot.lane.b32.xlu0 %v1081, 112
        %v1172 = vpop.permute.xlu0 %1171
        %1173 = vrot.lane.b32.xlu0 %v1082, 112
        %v1174 = vpop.permute.xlu0 %1173
        %1175 = vrot.lane.b32.xlu0 %v1083, 112
        %v1176 = vpop.permute.xlu0 %1175
        %1177 = vrot.lane.b32.xlu0 %v1084, 112
        %v1178 = vpop.permute.xlu0 %1177
        %1179 = vrot.lane.b32.xlu0 %v1085, 112
        %v1180 = vpop.permute.xlu0 %1179
        %1181 = vrot.lane.b32.xlu0 %v1086, 112
        %v1182 = vpop.permute.xlu0 %1181
        %v1215 = vadd.f32 %v991, %v1120
        %v1216 = vadd.f32 %v992, %v1122
        %v1217 = vadd.f32 %v993, %v1124
        %v1218 = vadd.f32 %v994, %v1126
        %v1219 = vadd.f32 %v995, %v1128
        %v1220 = vadd.f32 %v996, %v1130
        %v1221 = vadd.f32 %v997, %v1132
        %v1222 = vadd.f32 %v998, %v1134
        %v1223 = vadd.f32 %v999, %v1136
        %v1224 = vadd.f32 %v1000, %v1138
        %v1225 = vadd.f32 %v1001, %v1140
        %v1226 = vadd.f32 %v1002, %v1142
        %v1227 = vadd.f32 %v1003, %v1144
        %v1228 = vadd.f32 %v1004, %v1146
        %v1229 = vadd.f32 %v1005, %v1148
        %v1230 = vadd.f32 %v1006, %v1150
        %v1231 = vadd.f32 %v1007, %v1152
        %v1232 = vadd.f32 %v1008, %v1154
        %v1233 = vadd.f32 %v1009, %v1156
        %v1234 = vadd.f32 %v1010, %v1158
        %v1235 = vadd.f32 %v1011, %v1160
        %v1236 = vadd.f32 %v1012, %v1162
        %v1237 = vadd.f32 %v1013, %v1164
        %v1238 = vadd.f32 %v1014, %v1166
        %v1239 = vadd.f32 %v1015, %v1168
        %v1240 = vadd.f32 %v1016, %v1170
        %v1241 = vadd.f32 %v1017, %v1172
        %v1242 = vadd.f32 %v1018, %v1174
        %v1243 = vadd.f32 %v1019, %v1176
        %v1244 = vadd.f32 %v1020, %v1178
        %v1245 = vadd.f32 %v1021, %v1180
        %v1246 = vadd.f32 %v1022, %v1182
        %v1247 = vld [vmem:[#allocation8] sm:$0xff]
        %v1248 = vld [vmem:[#allocation8 + $0x8] sm:$0xff]
        %v1249 = vmul.f32 %v480, %v1247
        %v1250 = vmul.f32 %v484, %v1248
        %v1251 = vmul.f32 %v491, %v1247
        %v1252 = vmul.f32 %v495, %v1248
        %v1253 = vmul.f32 %v502, %v1247
        %v1254 = vmul.f32 %v506, %v1248
        %v1255 = vmul.f32 %v513, %v1247
        %v1256 = vmul.f32 %v517, %v1248
        %v1257 = vmul.f32 %v524, %v1247
        %v1258 = vmul.f32 %v528, %v1248
        %v1259 = vmul.f32 %v535, %v1247
        %v1260 = vmul.f32 %v539, %v1248
        %v1261 = vmul.f32 %v546, %v1247
        %v1262 = vmul.f32 %v550, %v1248
        %v1263 = vmul.f32 %v557, %v1247
        %v1264 = vmul.f32 %v561, %v1248
        %v1265 = vmul.f32 %v568, %v1247
        %v1266 = vmul.f32 %v572, %v1248
        %v1267 = vmul.f32 %v579, %v1247
        %v1268 = vmul.f32 %v583, %v1248
        %v1269 = vmul.f32 %v590, %v1247
        %v1270 = vmul.f32 %v594, %v1248
        %v1271 = vmul.f32 %v601, %v1247
        %v1272 = vmul.f32 %v605, %v1248
        %v1273 = vmul.f32 %v612, %v1247
        %v1274 = vmul.f32 %v616, %v1248
        %v1275 = vmul.f32 %v623, %v1247
        %v1276 = vmul.f32 %v627, %v1248
        %v1277 = vmul.f32 %v634, %v1247
        %v1278 = vmul.f32 %v638, %v1248
        %v1279 = vmul.f32 %v645, %v1247
        %v1280 = vmul.f32 %v649, %v1248
        %1313 = vrot.lane.b32.xlu0 %v1249, 32
        %v1314 = vpop.permute.xlu0 %1313
        %1315 = vrot.lane.b32.xlu0 %v1250, 32
        %v1316 = vpop.permute.xlu0 %1315
        %1317 = vrot.lane.b32.xlu0 %v1251, 32
        %v1318 = vpop.permute.xlu0 %1317
        %1319 = vrot.lane.b32.xlu0 %v1252, 32
        %v1320 = vpop.permute.xlu0 %1319
        %1321 = vrot.lane.b32.xlu0 %v1253, 32
        %v1322 = vpop.permute.xlu0 %1321
        %1323 = vrot.lane.b32.xlu0 %v1254, 32
        %v1324 = vpop.permute.xlu0 %1323
        %1325 = vrot.lane.b32.xlu0 %v1255, 32
        %v1326 = vpop.permute.xlu0 %1325
        %1327 = vrot.lane.b32.xlu0 %v1256, 32
        %v1328 = vpop.permute.xlu0 %1327
        %1329 = vrot.lane.b32.xlu0 %v1257, 32
        %v1330 = vpop.permute.xlu0 %1329
        %1331 = vrot.lane.b32.xlu0 %v1258, 32
        %v1332 = vpop.permute.xlu0 %1331
        %1333 = vrot.lane.b32.xlu0 %v1259, 32
        %v1334 = vpop.permute.xlu0 %1333
        %1335 = vrot.lane.b32.xlu0 %v1260, 32
        %v1336 = vpop.permute.xlu0 %1335
        %1337 = vrot.lane.b32.xlu0 %v1261, 32
        %v1338 = vpop.permute.xlu0 %1337
        %1339 = vrot.lane.b32.xlu0 %v1262, 32
        %v1340 = vpop.permute.xlu0 %1339
        %1341 = vrot.lane.b32.xlu0 %v1263, 32
        %v1342 = vpop.permute.xlu0 %1341
        %1343 = vrot.lane.b32.xlu0 %v1264, 32
        %v1344 = vpop.permute.xlu0 %1343
        %1345 = vrot.lane.b32.xlu0 %v1265, 32
        %v1346 = vpop.permute.xlu0 %1345
        %1347 = vrot.lane.b32.xlu0 %v1266, 32
        %v1348 = vpop.permute.xlu0 %1347
        %1349 = vrot.lane.b32.xlu0 %v1267, 32
        %v1350 = vpop.permute.xlu0 %1349
        %1351 = vrot.lane.b32.xlu0 %v1268, 32
        %v1352 = vpop.permute.xlu0 %1351
        %1353 = vrot.lane.b32.xlu0 %v1269, 32
        %v1354 = vpop.permute.xlu0 %1353
        %1355 = vrot.lane.b32.xlu0 %v1270, 32
        %v1356 = vpop.permute.xlu0 %1355
        %1357 = vrot.lane.b32.xlu0 %v1271, 32
        %v1358 = vpop.permute.xlu0 %1357
        %1359 = vrot.lane.b32.xlu0 %v1272, 32
        %v1360 = vpop.permute.xlu0 %1359
        %1361 = vrot.lane.b32.xlu0 %v1273, 32
        %v1362 = vpop.permute.xlu0 %1361
        %1363 = vrot.lane.b32.xlu0 %v1274, 32
        %v1364 = vpop.permute.xlu0 %1363
        %1365 = vrot.lane.b32.xlu0 %v1275, 32
        %v1366 = vpop.permute.xlu0 %1365
        %1367 = vrot.lane.b32.xlu0 %v1276, 32
        %v1368 = vpop.permute.xlu0 %1367
        %1369 = vrot.lane.b32.xlu0 %v1277, 32
        %v1370 = vpop.permute.xlu0 %1369
        %1371 = vrot.lane.b32.xlu0 %v1278, 32
        %v1372 = vpop.permute.xlu0 %1371
        %1373 = vrot.lane.b32.xlu0 %v1279, 32
        %v1374 = vpop.permute.xlu0 %1373
        %1375 = vrot.lane.b32.xlu0 %v1280, 32
        %v1376 = vpop.permute.xlu0 %1375
        %v1409 = vadd.f32 %v1215, %v1314
        %v1410 = vadd.f32 %v1216, %v1316
        %v1411 = vadd.f32 %v1217, %v1318
        %v1412 = vadd.f32 %v1218, %v1320
        %v1413 = vadd.f32 %v1219, %v1322
        %v1414 = vadd.f32 %v1220, %v1324
        %v1415 = vadd.f32 %v1221, %v1326
        %v1416 = vadd.f32 %v1222, %v1328
        %v1417 = vadd.f32 %v1223, %v1330
        %v1418 = vadd.f32 %v1224, %v1332
        %v1419 = vadd.f32 %v1225, %v1334
        %v1420 = vadd.f32 %v1226, %v1336
        %v1421 = vadd.f32 %v1227, %v1338
        %v1422 = vadd.f32 %v1228, %v1340
        %v1423 = vadd.f32 %v1229, %v1342
        %v1424 = vadd.f32 %v1230, %v1344
        %v1425 = vadd.f32 %v1231, %v1346
        %v1426 = vadd.f32 %v1232, %v1348
        %v1427 = vadd.f32 %v1233, %v1350
        %v1428 = vadd.f32 %v1234, %v1352
        %v1429 = vadd.f32 %v1235, %v1354
        %v1430 = vadd.f32 %v1236, %v1356
        %v1431 = vadd.f32 %v1237, %v1358
        %v1432 = vadd.f32 %v1238, %v1360
        %v1433 = vadd.f32 %v1239, %v1362
        %v1434 = vadd.f32 %v1240, %v1364
        %v1435 = vadd.f32 %v1241, %v1366
        %v1436 = vadd.f32 %v1242, %v1368
        %v1437 = vadd.f32 %v1243, %v1370
        %v1438 = vadd.f32 %v1244, %v1372
        %v1439 = vadd.f32 %v1245, %v1374
        %v1440 = vadd.f32 %v1246, %v1376
        %s1441 = scalar_lea.vmem [#allocation8], 32
        %v1442 = vld [vmem:[%s1441] sm:$0xff]
        %v1443 = vld [vmem:[%s1441 + $0x8] sm:$0xff]
        %1446 = vrot.lane.b32.xlu0 %v1442, 32
        %v1447 = vpop.permute.xlu0 %1446
        %1448 = vrot.lane.b32.xlu0 %v1443, 32
        %v1449 = vpop.permute.xlu0 %1448
        %v1452 = vmul.f32 %v914, %v1447
        %v1453 = vmul.f32 %v914, %v1449
        %v1454 = vmul.f32 %v918, %v1447
        %v1455 = vmul.f32 %v918, %v1449
        %v1456 = vmul.f32 %v922, %v1447
        %v1457 = vmul.f32 %v922, %v1449
        %v1458 = vmul.f32 %v926, %v1447
        %v1459 = vmul.f32 %v926, %v1449
        %v1460 = vmul.f32 %v930, %v1447
        %v1461 = vmul.f32 %v930, %v1449
        %v1462 = vmul.f32 %v934, %v1447
        %v1463 = vmul.f32 %v934, %v1449
        %v1464 = vmul.f32 %v938, %v1447
        %v1465 = vmul.f32 %v938, %v1449
        %v1466 = vmul.f32 %v942, %v1447
        %v1467 = vmul.f32 %v942, %v1449
        %v1468 = vmul.f32 %v946, %v1447
        %v1469 = vmul.f32 %v946, %v1449
        %v1470 = vmul.f32 %v950, %v1447
        %v1471 = vmul.f32 %v950, %v1449
        %v1472 = vmul.f32 %v954, %v1447
        %v1473 = vmul.f32 %v954, %v1449
        %v1474 = vmul.f32 %v958, %v1447
        %v1475 = vmul.f32 %v958, %v1449
        %v1476 = vmul.f32 %v962, %v1447
        %v1477 = vmul.f32 %v962, %v1449
        %v1478 = vmul.f32 %v966, %v1447
        %v1479 = vmul.f32 %v966, %v1449
        %v1480 = vmul.f32 %v970, %v1447
        %v1481 = vmul.f32 %v970, %v1449
        %v1482 = vmul.f32 %v974, %v1447
        %v1483 = vmul.f32 %v974, %v1449
        %v1484 = vadd.f32 %v1409, %v1452
        %v1485 = vadd.f32 %v1410, %v1453
        %v1486 = vadd.f32 %v1411, %v1454
        %v1487 = vadd.f32 %v1412, %v1455
        %v1488 = vadd.f32 %v1413, %v1456
        %v1489 = vadd.f32 %v1414, %v1457
        %v1490 = vadd.f32 %v1415, %v1458
        %v1491 = vadd.f32 %v1416, %v1459
        %v1492 = vadd.f32 %v1417, %v1460
        %v1493 = vadd.f32 %v1418, %v1461
        %v1494 = vadd.f32 %v1419, %v1462
        %v1495 = vadd.f32 %v1420, %v1463
        %v1496 = vadd.f32 %v1421, %v1464
        %v1497 = vadd.f32 %v1422, %v1465
        %v1498 = vadd.f32 %v1423, %v1466
        %v1499 = vadd.f32 %v1424, %v1467
        %v1500 = vadd.f32 %v1425, %v1468
        %v1501 = vadd.f32 %v1426, %v1469
        %v1502 = vadd.f32 %v1427, %v1470
        %v1503 = vadd.f32 %v1428, %v1471
        %v1504 = vadd.f32 %v1429, %v1472
        %v1505 = vadd.f32 %v1430, %v1473
        %v1506 = vadd.f32 %v1431, %v1474
        %v1507 = vadd.f32 %v1432, %v1475
        %v1508 = vadd.f32 %v1433, %v1476
        %v1509 = vadd.f32 %v1434, %v1477
        %v1510 = vadd.f32 %v1435, %v1478
        %v1511 = vadd.f32 %v1436, %v1479
        %v1512 = vadd.f32 %v1437, %v1480
        %v1513 = vadd.f32 %v1438, %v1481
        %v1514 = vadd.f32 %v1439, %v1482
        %v1515 = vadd.f32 %v1440, %v1483
        %s1516 = scalar_lea.vmem [#allocation8], 16
        %v1517 = vld [vmem:[%s1516] sm:$0xff]
        %v1518 = vld [vmem:[%s1516 + $0x8] sm:$0xff]
        %v1519 = vmul.f32 %v653, %v1517
        %v1520 = vmul.f32 %v657, %v1518
        %v1521 = vmul.f32 %v661, %v1517
        %v1522 = vmul.f32 %v665, %v1518
        %v1523 = vmul.f32 %v669, %v1517
        %v1524 = vmul.f32 %v673, %v1518
        %v1525 = vmul.f32 %v677, %v1517
        %v1526 = vmul.f32 %v681, %v1518
        %v1527 = vmul.f32 %v685, %v1517
        %v1528 = vmul.f32 %v689, %v1518
        %v1529 = vmul.f32 %v693, %v1517
        %v1530 = vmul.f32 %v697, %v1518
        %v1531 = vmul.f32 %v701, %v1517
        %v1532 = vmul.f32 %v705, %v1518
        %v1533 = vmul.f32 %v709, %v1517
        %v1534 = vmul.f32 %v713, %v1518
        %v1535 = vmul.f32 %v717, %v1517
        %v1536 = vmul.f32 %v721, %v1518
        %v1537 = vmul.f32 %v725, %v1517
        %v1538 = vmul.f32 %v729, %v1518
        %v1539 = vmul.f32 %v733, %v1517
        %v1540 = vmul.f32 %v737, %v1518
        %v1541 = vmul.f32 %v741, %v1517
        %v1542 = vmul.f32 %v745, %v1518
        %v1543 = vmul.f32 %v749, %v1517
        %v1544 = vmul.f32 %v753, %v1518
        %v1545 = vmul.f32 %v757, %v1517
        %v1546 = vmul.f32 %v761, %v1518
        %v1547 = vmul.f32 %v765, %v1517
        %v1548 = vmul.f32 %v769, %v1518
        %v1549 = vmul.f32 %v773, %v1517
        %v1550 = vmul.f32 %v777, %v1518
        %1583 = vrot.lane.b32.xlu0 %v1519, 32
        %v1584 = vpop.permute.xlu0 %1583
        %1585 = vrot.lane.b32.xlu0 %v1520, 32
        %v1586 = vpop.permute.xlu0 %1585
        %1587 = vrot.lane.b32.xlu0 %v1521, 32
        %v1588 = vpop.permute.xlu0 %1587
        %1589 = vrot.lane.b32.xlu0 %v1522, 32
        %v1590 = vpop.permute.xlu0 %1589
        %1591 = vrot.lane.b32.xlu0 %v1523, 32
        %v1592 = vpop.permute.xlu0 %1591
        %1593 = vrot.lane.b32.xlu0 %v1524, 32
        %v1594 = vpop.permute.xlu0 %1593
        %1595 = vrot.lane.b32.xlu0 %v1525, 32
        %v1596 = vpop.permute.xlu0 %1595
        %1597 = vrot.lane.b32.xlu0 %v1526, 32
        %v1598 = vpop.permute.xlu0 %1597
        %1599 = vrot.lane.b32.xlu0 %v1527, 32
        %v1600 = vpop.permute.xlu0 %1599
        %1601 = vrot.lane.b32.xlu0 %v1528, 32
        %v1602 = vpop.permute.xlu0 %1601
        %1603 = vrot.lane.b32.xlu0 %v1529, 32
        %v1604 = vpop.permute.xlu0 %1603
        %1605 = vrot.lane.b32.xlu0 %v1530, 32
        %v1606 = vpop.permute.xlu0 %1605
        %1607 = vrot.lane.b32.xlu0 %v1531, 32
        %v1608 = vpop.permute.xlu0 %1607
        %1609 = vrot.lane.b32.xlu0 %v1532, 32
        %v1610 = vpop.permute.xlu0 %1609
        %1611 = vrot.lane.b32.xlu0 %v1533, 32
        %v1612 = vpop.permute.xlu0 %1611
        %1613 = vrot.lane.b32.xlu0 %v1534, 32
        %v1614 = vpop.permute.xlu0 %1613
        %1615 = vrot.lane.b32.xlu0 %v1535, 32
        %v1616 = vpop.permute.xlu0 %1615
        %1617 = vrot.lane.b32.xlu0 %v1536, 32
        %v1618 = vpop.permute.xlu0 %1617
        %1619 = vrot.lane.b32.xlu0 %v1537, 32
        %v1620 = vpop.permute.xlu0 %1619
        %1621 = vrot.lane.b32.xlu0 %v1538, 32
        %v1622 = vpop.permute.xlu0 %1621
        %1623 = vrot.lane.b32.xlu0 %v1539, 32
        %v1624 = vpop.permute.xlu0 %1623
        %1625 = vrot.lane.b32.xlu0 %v1540, 32
        %v1626 = vpop.permute.xlu0 %1625
        %1627 = vrot.lane.b32.xlu0 %v1541, 32
        %v1628 = vpop.permute.xlu0 %1627
        %1629 = vrot.lane.b32.xlu0 %v1542, 32
        %v1630 = vpop.permute.xlu0 %1629
        %1631 = vrot.lane.b32.xlu0 %v1543, 32
        %v1632 = vpop.permute.xlu0 %1631
        %1633 = vrot.lane.b32.xlu0 %v1544, 32
        %v1634 = vpop.permute.xlu0 %1633
        %1635 = vrot.lane.b32.xlu0 %v1545, 32
        %v1636 = vpop.permute.xlu0 %1635
        %1637 = vrot.lane.b32.xlu0 %v1546, 32
        %v1638 = vpop.permute.xlu0 %1637
        %1639 = vrot.lane.b32.xlu0 %v1547, 32
        %v1640 = vpop.permute.xlu0 %1639
        %1641 = vrot.lane.b32.xlu0 %v1548, 32
        %v1642 = vpop.permute.xlu0 %1641
        %1643 = vrot.lane.b32.xlu0 %v1549, 32
        %v1644 = vpop.permute.xlu0 %1643
        %1645 = vrot.lane.b32.xlu0 %v1550, 32
        %v1646 = vpop.permute.xlu0 %1645
        %v1679 = vadd.f32 %v1484, %v1584
        %v1680 = vadd.f32 %v1485, %v1586
        %v1681 = vadd.f32 %v1486, %v1588
        %v1682 = vadd.f32 %v1487, %v1590
        %v1683 = vadd.f32 %v1488, %v1592
        %v1684 = vadd.f32 %v1489, %v1594
        %v1685 = vadd.f32 %v1490, %v1596
        %v1686 = vadd.f32 %v1491, %v1598
        %v1687 = vadd.f32 %v1492, %v1600
        %v1688 = vadd.f32 %v1493, %v1602
        %v1689 = vadd.f32 %v1494, %v1604
        %v1690 = vadd.f32 %v1495, %v1606
        %v1691 = vadd.f32 %v1496, %v1608
        %v1692 = vadd.f32 %v1497, %v1610
        %v1693 = vadd.f32 %v1498, %v1612
        %v1694 = vadd.f32 %v1499, %v1614
        %v1695 = vadd.f32 %v1500, %v1616
        %v1696 = vadd.f32 %v1501, %v1618
        %v1697 = vadd.f32 %v1502, %v1620
        %v1698 = vadd.f32 %v1503, %v1622
        %v1699 = vadd.f32 %v1504, %v1624
        %v1700 = vadd.f32 %v1505, %v1626
        %v1701 = vadd.f32 %v1506, %v1628
        %v1702 = vadd.f32 %v1507, %v1630
        %v1703 = vadd.f32 %v1508, %v1632
        %v1704 = vadd.f32 %v1509, %v1634
        %v1705 = vadd.f32 %v1510, %v1636
        %v1706 = vadd.f32 %v1511, %v1638
        %v1707 = vadd.f32 %v1512, %v1640
        %v1708 = vadd.f32 %v1513, %v1642
        %v1709 = vadd.f32 %v1514, %v1644
        %v1710 = vadd.f32 %v1515, %v1646
        %s1711 = scalar_lea.vmem [#allocation8], 48
        %v1712 = vld [vmem:[%s1711] sm:$0xff]
        %v1713 = vld [vmem:[%s1711 + $0x8] sm:$0xff]
        %1716 = vrot.lane.b32.xlu0 %v1712, 48
        %v1717 = vpop.permute.xlu0 %1716
        %1718 = vrot.lane.b32.xlu0 %v1713, 48
        %v1719 = vpop.permute.xlu0 %1718
        %v1722 = vmul.f32 %v914, %v1717
        %v1723 = vmul.f32 %v914, %v1719
        %v1724 = vmul.f32 %v918, %v1717
        %v1725 = vmul.f32 %v918, %v1719
        %v1726 = vmul.f32 %v922, %v1717
        %v1727 = vmul.f32 %v922, %v1719
        %v1728 = vmul.f32 %v926, %v1717
        %v1729 = vmul.f32 %v926, %v1719
        %v1730 = vmul.f32 %v930, %v1717
        %v1731 = vmul.f32 %v930, %v1719
        %v1732 = vmul.f32 %v934, %v1717
        %v1733 = vmul.f32 %v934, %v1719
        %v1734 = vmul.f32 %v938, %v1717
        %v1735 = vmul.f32 %v938, %v1719
        %v1736 = vmul.f32 %v942, %v1717
        %v1737 = vmul.f32 %v942, %v1719
        %v1738 = vmul.f32 %v946, %v1717
        %v1739 = vmul.f32 %v946, %v1719
        %v1740 = vmul.f32 %v950, %v1717
        %v1741 = vmul.f32 %v950, %v1719
        %v1742 = vmul.f32 %v954, %v1717
        %v1743 = vmul.f32 %v954, %v1719
        %v1744 = vmul.f32 %v958, %v1717
        %v1745 = vmul.f32 %v958, %v1719
        %v1746 = vmul.f32 %v962, %v1717
        %v1747 = vmul.f32 %v962, %v1719
        %v1748 = vmul.f32 %v966, %v1717
        %v1749 = vmul.f32 %v966, %v1719
        %v1750 = vmul.f32 %v970, %v1717
        %v1751 = vmul.f32 %v970, %v1719
        %v1752 = vmul.f32 %v974, %v1717
        %v1753 = vmul.f32 %v974, %v1719
        %1786 = vrot.lane.b32.xlu0 %v1722, 112
        %v1787 = vpop.permute.xlu0 %1786
        %1788 = vrot.lane.b32.xlu0 %v1723, 112
        %v1789 = vpop.permute.xlu0 %1788
        %1790 = vrot.lane.b32.xlu0 %v1724, 112
        %v1791 = vpop.permute.xlu0 %1790
        %1792 = vrot.lane.b32.xlu0 %v1725, 112
        %v1793 = vpop.permute.xlu0 %1792
        %1794 = vrot.lane.b32.xlu0 %v1726, 112
        %v1795 = vpop.permute.xlu0 %1794
        %1796 = vrot.lane.b32.xlu0 %v1727, 112
        %v1797 = vpop.permute.xlu0 %1796
        %1798 = vrot.lane.b32.xlu0 %v1728, 112
        %v1799 = vpop.permute.xlu0 %1798
        %1800 = vrot.lane.b32.xlu0 %v1729, 112
        %v1801 = vpop.permute.xlu0 %1800
        %1802 = vrot.lane.b32.xlu0 %v1730, 112
        %v1803 = vpop.permute.xlu0 %1802
        %1804 = vrot.lane.b32.xlu0 %v1731, 112
        %v1805 = vpop.permute.xlu0 %1804
        %1806 = vrot.lane.b32.xlu0 %v1732, 112
        %v1807 = vpop.permute.xlu0 %1806
        %1808 = vrot.lane.b32.xlu0 %v1733, 112
        %v1809 = vpop.permute.xlu0 %1808
        %1810 = vrot.lane.b32.xlu0 %v1734, 112
        %v1811 = vpop.permute.xlu0 %1810
        %1812 = vrot.lane.b32.xlu0 %v1735, 112
        %v1813 = vpop.permute.xlu0 %1812
        %1814 = vrot.lane.b32.xlu0 %v1736, 112
        %v1815 = vpop.permute.xlu0 %1814
        %1816 = vrot.lane.b32.xlu0 %v1737, 112
        %v1817 = vpop.permute.xlu0 %1816
        %1818 = vrot.lane.b32.xlu0 %v1738, 112
        %v1819 = vpop.permute.xlu0 %1818
        %1820 = vrot.lane.b32.xlu0 %v1739, 112
        %v1821 = vpop.permute.xlu0 %1820
        %1822 = vrot.lane.b32.xlu0 %v1740, 112
        %v1823 = vpop.permute.xlu0 %1822
        %1824 = vrot.lane.b32.xlu0 %v1741, 112
        %v1825 = vpop.permute.xlu0 %1824
        %1826 = vrot.lane.b32.xlu0 %v1742, 112
        %v1827 = vpop.permute.xlu0 %1826
        %1828 = vrot.lane.b32.xlu0 %v1743, 112
        %v1829 = vpop.permute.xlu0 %1828
        %1830 = vrot.lane.b32.xlu0 %v1744, 112
        %v1831 = vpop.permute.xlu0 %1830
        %1832 = vrot.lane.b32.xlu0 %v1745, 112
        %v1833 = vpop.permute.xlu0 %1832
        %1834 = vrot.lane.b32.xlu0 %v1746, 112
        %v1835 = vpop.permute.xlu0 %1834
        %1836 = vrot.lane.b32.xlu0 %v1747, 112
        %v1837 = vpop.permute.xlu0 %1836
        %1838 = vrot.lane.b32.xlu0 %v1748, 112
        %v1839 = vpop.permute.xlu0 %1838
        %1840 = vrot.lane.b32.xlu0 %v1749, 112
        %v1841 = vpop.permute.xlu0 %1840
        %1842 = vrot.lane.b32.xlu0 %v1750, 112
        %v1843 = vpop.permute.xlu0 %1842
        %1844 = vrot.lane.b32.xlu0 %v1751, 112
        %v1845 = vpop.permute.xlu0 %1844
        %1846 = vrot.lane.b32.xlu0 %v1752, 112
        %v1847 = vpop.permute.xlu0 %1846
        %1848 = vrot.lane.b32.xlu0 %v1753, 112
        %v1849 = vpop.permute.xlu0 %1848
        %v1882 = vadd.f32 %v1679, %v1787
        %v1883 = vadd.f32 %v1680, %v1789
        %v1884 = vadd.f32 %v1681, %v1791
        %v1885 = vadd.f32 %v1682, %v1793
        %v1886 = vadd.f32 %v1683, %v1795
        %v1887 = vadd.f32 %v1684, %v1797
        %v1888 = vadd.f32 %v1685, %v1799
        %v1889 = vadd.f32 %v1686, %v1801
        %v1890 = vadd.f32 %v1687, %v1803
        %v1891 = vadd.f32 %v1688, %v1805
        %v1892 = vadd.f32 %v1689, %v1807
        %v1893 = vadd.f32 %v1690, %v1809
        %v1894 = vadd.f32 %v1691, %v1811
        %v1895 = vadd.f32 %v1692, %v1813
        %v1896 = vadd.f32 %v1693, %v1815
        %v1897 = vadd.f32 %v1694, %v1817
        %v1898 = vadd.f32 %v1695, %v1819
        %v1899 = vadd.f32 %v1696, %v1821
        %v1900 = vadd.f32 %v1697, %v1823
        %v1901 = vadd.f32 %v1698, %v1825
        %v1902 = vadd.f32 %v1699, %v1827
        %v1903 = vadd.f32 %v1700, %v1829
        %v1904 = vadd.f32 %v1701, %v1831
        %v1905 = vadd.f32 %v1702, %v1833
        %v1906 = vadd.f32 %v1703, %v1835
        %v1907 = vadd.f32 %v1704, %v1837
        %v1908 = vadd.f32 %v1705, %v1839
        %v1909 = vadd.f32 %v1706, %v1841
        %v1910 = vadd.f32 %v1707, %v1843
        %v1911 = vadd.f32 %v1708, %v1845
        %v1912 = vadd.f32 %v1709, %v1847
        %v1913 = vadd.f32 %v1710, %v1849
        %v1914 = vstv %s473
        %v1915 = vadd.f32 %v1882, %v1914
        %v1916 = vadd.f32 %v1883, %v1914
        %v1917 = vadd.f32 %v1884, %v1914
        %v1918 = vadd.f32 %v1885, %v1914
        %v1919 = vadd.f32 %v1886, %v1914
        %v1920 = vadd.f32 %v1887, %v1914
        %v1921 = vadd.f32 %v1888, %v1914
        %v1922 = vadd.f32 %v1889, %v1914
        %v1923 = vadd.f32 %v1890, %v1914
        %v1924 = vadd.f32 %v1891, %v1914
        %v1925 = vadd.f32 %v1892, %v1914
        %v1926 = vadd.f32 %v1893, %v1914
        %v1927 = vadd.f32 %v1894, %v1914
        %v1928 = vadd.f32 %v1895, %v1914
        %v1929 = vadd.f32 %v1896, %v1914
        %v1930 = vadd.f32 %v1897, %v1914
        %v1931 = vadd.f32 %v1898, %v1914
        %v1932 = vadd.f32 %v1899, %v1914
        %v1933 = vadd.f32 %v1900, %v1914
        %v1934 = vadd.f32 %v1901, %v1914
        %v1935 = vadd.f32 %v1902, %v1914
        %v1936 = vadd.f32 %v1903, %v1914
        %v1937 = vadd.f32 %v1904, %v1914
        %v1938 = vadd.f32 %v1905, %v1914
        %v1939 = vadd.f32 %v1906, %v1914
        %v1940 = vadd.f32 %v1907, %v1914
        %v1941 = vadd.f32 %v1908, %v1914
        %v1942 = vadd.f32 %v1909, %v1914
        %v1943 = vadd.f32 %v1910, %v1914
        %v1944 = vadd.f32 %v1911, %v1914
        %v1945 = vadd.f32 %v1912, %v1914
        %v1946 = vadd.f32 %v1913, %v1914
        %vm1947 = vcmask 392448
        %v1948 = vsel %vm1947, %v1915, -inf
        %1949 = vmax.xlane.f32.xlu0 %v1948
        %v1950 = vpop.xlane.xlu0 %1949
        %v1951 = vsel %vm1947, %v1916, -inf
        %1952 = vmax.xlane.f32.xlu0 %v1951
        %v1953 = vpop.xlane.xlu0 %1952
        %v1954 = vsel %vm1947, %v1917, -inf
        %1955 = vmax.xlane.f32.xlu0 %v1954
        %v1956 = vpop.xlane.xlu0 %1955
        %v1957 = vsel %vm1947, %v1918, -inf
        %1958 = vmax.xlane.f32.xlu0 %v1957
        %v1959 = vpop.xlane.xlu0 %1958
        %v1960 = vsel %vm1947, %v1919, -inf
        %1961 = vmax.xlane.f32.xlu0 %v1960
        %v1962 = vpop.xlane.xlu0 %1961
        %v1963 = vsel %vm1947, %v1920, -inf
        %1964 = vmax.xlane.f32.xlu0 %v1963
        %v1965 = vpop.xlane.xlu0 %1964
        %v1966 = vsel %vm1947, %v1921, -inf
        %1967 = vmax.xlane.f32.xlu0 %v1966
        %v1968 = vpop.xlane.xlu0 %1967
        %v1969 = vsel %vm1947, %v1922, -inf
        %1970 = vmax.xlane.f32.xlu0 %v1969
        %v1971 = vpop.xlane.xlu0 %1970
        %v1972 = vsel %vm1947, %v1923, -inf
        %1973 = vmax.xlane.f32.xlu0 %v1972
        %v1974 = vpop.xlane.xlu0 %1973
        %v1975 = vsel %vm1947, %v1924, -inf
        %1976 = vmax.xlane.f32.xlu0 %v1975
        %v1977 = vpop.xlane.xlu0 %1976
        %v1978 = vsel %vm1947, %v1925, -inf
        %1979 = vmax.xlane.f32.xlu0 %v1978
        %v1980 = vpop.xlane.xlu0 %1979
        %v1981 = vsel %vm1947, %v1926, -inf
        %1982 = vmax.xlane.f32.xlu0 %v1981
        %v1983 = vpop.xlane.xlu0 %1982
        %v1984 = vsel %vm1947, %v1927, -inf
        %1985 = vmax.xlane.f32.xlu0 %v1984
        %v1986 = vpop.xlane.xlu0 %1985
        %v1987 = vsel %vm1947, %v1928, -inf
        %1988 = vmax.xlane.f32.xlu0 %v1987
        %v1989 = vpop.xlane.xlu0 %1988
        %v1990 = vsel %vm1947, %v1929, -inf
        %1991 = vmax.xlane.f32.xlu0 %v1990
        %v1992 = vpop.xlane.xlu0 %1991
        %v1993 = vsel %vm1947, %v1930, -inf
        %1994 = vmax.xlane.f32.xlu0 %v1993
        %v1995 = vpop.xlane.xlu0 %1994
        %v1996 = vsel %vm1947, %v1931, -inf
        %1997 = vmax.xlane.f32.xlu0 %v1996
        %v1998 = vpop.xlane.xlu0 %1997
        %v1999 = vsel %vm1947, %v1932, -inf
        %2000 = vmax.xlane.f32.xlu0 %v1999
        %v2001 = vpop.xlane.xlu0 %2000
        %v2002 = vsel %vm1947, %v1933, -inf
        %2003 = vmax.xlane.f32.xlu0 %v2002
        %v2004 = vpop.xlane.xlu0 %2003
        %v2005 = vsel %vm1947, %v1934, -inf
        %2006 = vmax.xlane.f32.xlu0 %v2005
        %v2007 = vpop.xlane.xlu0 %2006
        %v2008 = vsel %vm1947, %v1935, -inf
        %2009 = vmax.xlane.f32.xlu0 %v2008
        %v2010 = vpop.xlane.xlu0 %2009
        %v2011 = vsel %vm1947, %v1936, -inf
        %2012 = vmax.xlane.f32.xlu0 %v2011
        %v2013 = vpop.xlane.xlu0 %2012
        %v2014 = vsel %vm1947, %v1937, -inf
        %2015 = vmax.xlane.f32.xlu0 %v2014
        %v2016 = vpop.xlane.xlu0 %2015
        %v2017 = vsel %vm1947, %v1938, -inf
        %2018 = vmax.xlane.f32.xlu0 %v2017
        %v2019 = vpop.xlane.xlu0 %2018
        %v2020 = vsel %vm1947, %v1939, -inf
        %2021 = vmax.xlane.f32.xlu0 %v2020
        %v2022 = vpop.xlane.xlu0 %2021
        %v2023 = vsel %vm1947, %v1940, -inf
        %2024 = vmax.xlane.f32.xlu0 %v2023
        %v2025 = vpop.xlane.xlu0 %2024
        %v2026 = vsel %vm1947, %v1941, -inf
        %2027 = vmax.xlane.f32.xlu0 %v2026
        %v2028 = vpop.xlane.xlu0 %2027
        %v2029 = vsel %vm1947, %v1942, -inf
        %2030 = vmax.xlane.f32.xlu0 %v2029
        %v2031 = vpop.xlane.xlu0 %2030
        %v2032 = vsel %vm1947, %v1943, -inf
        %2033 = vmax.xlane.f32.xlu0 %v2032
        %v2034 = vpop.xlane.xlu0 %2033
        %v2035 = vsel %vm1947, %v1944, -inf
        %2036 = vmax.xlane.f32.xlu0 %v2035
        %v2037 = vpop.xlane.xlu0 %2036
        %v2038 = vsel %vm1947, %v1945, -inf
        %2039 = vmax.xlane.f32.xlu0 %v2038
        %v2040 = vpop.xlane.xlu0 %2039
        %v2041 = vsel %vm1947, %v1946, -inf
        %2042 = vmax.xlane.f32.xlu0 %v2041
        %v2043 = vpop.xlane.xlu0 %2042
        %v2044 = vsub.f32 %v1915, %v1950
        %v2045 = vsub.f32 %v1916, %v1953
        %v2046 = vsub.f32 %v1917, %v1956
        %v2047 = vsub.f32 %v1918, %v1959
        %v2048 = vsub.f32 %v1919, %v1962
        %v2049 = vsub.f32 %v1920, %v1965
        %v2050 = vsub.f32 %v1921, %v1968
        %v2051 = vsub.f32 %v1922, %v1971
        %v2052 = vsub.f32 %v1923, %v1974
        %v2053 = vsub.f32 %v1924, %v1977
        %v2054 = vsub.f32 %v1925, %v1980
        %v2055 = vsub.f32 %v1926, %v1983
        %v2056 = vsub.f32 %v1927, %v1986
        %v2057 = vsub.f32 %v1928, %v1989
        %v2058 = vsub.f32 %v1929, %v1992
        %v2059 = vsub.f32 %v1930, %v1995
        %v2060 = vsub.f32 %v1931, %v1998
        %v2061 = vsub.f32 %v1932, %v2001
        %v2062 = vsub.f32 %v1933, %v2004
        %v2063 = vsub.f32 %v1934, %v2007
        %v2064 = vsub.f32 %v1935, %v2010
        %v2065 = vsub.f32 %v1936, %v2013
        %v2066 = vsub.f32 %v1937, %v2016
        %v2067 = vsub.f32 %v1938, %v2019
        %v2068 = vsub.f32 %v1939, %v2022
        %v2069 = vsub.f32 %v1940, %v2025
        %v2070 = vsub.f32 %v1941, %v2028
        %v2071 = vsub.f32 %v1942, %v2031
        %v2072 = vsub.f32 %v1943, %v2034
        %v2073 = vsub.f32 %v1944, %v2037
        %v2074 = vsub.f32 %v1945, %v2040
        %v2075 = vsub.f32 %v1946, %v2043
        %v2076 = vmul.f32 %v2044, 1.442695
        %v2077 = vpow.pop %v2076
        %v2078 = vmul.f32 %v2045, 1.442695
        %v2079 = vpow.pop %v2078
        %v2080 = vmul.f32 %v2046, 1.442695
        %v2081 = vpow.pop %v2080
        %v2082 = vmul.f32 %v2047, 1.442695
        %v2083 = vpow.pop %v2082
        %v2084 = vmul.f32 %v2048, 1.442695
        %v2085 = vpow.pop %v2084
        %v2086 = vmul.f32 %v2049, 1.442695
        %v2087 = vpow.pop %v2086
        %v2088 = vmul.f32 %v2050, 1.442695
        %v2089 = vpow.pop %v2088
        %v2090 = vmul.f32 %v2051, 1.442695
        %v2091 = vpow.pop %v2090
        %v2092 = vmul.f32 %v2052, 1.442695
        %v2093 = vpow.pop %v2092
        %v2094 = vmul.f32 %v2053, 1.442695
        %v2095 = vpow.pop %v2094
        %v2096 = vmul.f32 %v2054, 1.442695
        %v2097 = vpow.pop %v2096
        %v2098 = vmul.f32 %v2055, 1.442695
        %v2099 = vpow.pop %v2098
        %v2100 = vmul.f32 %v2056, 1.442695
        %v2101 = vpow.pop %v2100
        %v2102 = vmul.f32 %v2057, 1.442695
        %v2103 = vpow.pop %v2102
        %v2104 = vmul.f32 %v2058, 1.442695
        %v2105 = vpow.pop %v2104
        %v2106 = vmul.f32 %v2059, 1.442695
        %v2107 = vpow.pop %v2106
        %v2108 = vmul.f32 %v2060, 1.442695
        %v2109 = vpow.pop %v2108
        %v2110 = vmul.f32 %v2061, 1.442695
        %v2111 = vpow.pop %v2110
        %v2112 = vmul.f32 %v2062, 1.442695
        %v2113 = vpow.pop %v2112
        %v2114 = vmul.f32 %v2063, 1.442695
        %v2115 = vpow.pop %v2114
        %v2116 = vmul.f32 %v2064, 1.442695
        %v2117 = vpow.pop %v2116
        %v2118 = vmul.f32 %v2065, 1.442695
        %v2119 = vpow.pop %v2118
        %v2120 = vmul.f32 %v2066, 1.442695
        %v2121 = vpow.pop %v2120
        %v2122 = vmul.f32 %v2067, 1.442695
        %v2123 = vpow.pop %v2122
        %v2124 = vmul.f32 %v2068, 1.442695
        %v2125 = vpow.pop %v2124
        %v2126 = vmul.f32 %v2069, 1.442695
        %v2127 = vpow.pop %v2126
        %v2128 = vmul.f32 %v2070, 1.442695
        %v2129 = vpow.pop %v2128
        %v2130 = vmul.f32 %v2071, 1.442695
        %v2131 = vpow.pop %v2130
        %v2132 = vmul.f32 %v2072, 1.442695
        %v2133 = vpow.pop %v2132
        %v2134 = vmul.f32 %v2073, 1.442695
        %v2135 = vpow.pop %v2134
        %v2136 = vmul.f32 %v2074, 1.442695
        %v2137 = vpow.pop %v2136
        %v2138 = vmul.f32 %v2075, 1.442695
        %v2139 = vpow.pop %v2138
        %2172 = vrot.lane.b32.xlu0 %v2077, 96
        %v2173 = vpop.permute.xlu0 %2172
        %2174 = vrot.lane.b32.xlu0 %v2079, 96
        %v2175 = vpop.permute.xlu0 %2174
        %2176 = vrot.lane.b32.xlu0 %v2081, 96
        %v2177 = vpop.permute.xlu0 %2176
        %2178 = vrot.lane.b32.xlu0 %v2083, 96
        %v2179 = vpop.permute.xlu0 %2178
        %2180 = vrot.lane.b32.xlu0 %v2085, 96
        %v2181 = vpop.permute.xlu0 %2180
        %2182 = vrot.lane.b32.xlu0 %v2087, 96
        %v2183 = vpop.permute.xlu0 %2182
        %2184 = vrot.lane.b32.xlu0 %v2089, 96
        %v2185 = vpop.permute.xlu0 %2184
        %2186 = vrot.lane.b32.xlu0 %v2091, 96
        %v2187 = vpop.permute.xlu0 %2186
        %2188 = vrot.lane.b32.xlu0 %v2093, 96
        %v2189 = vpop.permute.xlu0 %2188
        %2190 = vrot.lane.b32.xlu0 %v2095, 96
        %v2191 = vpop.permute.xlu0 %2190
        %2192 = vrot.lane.b32.xlu0 %v2097, 96
        %v2193 = vpop.permute.xlu0 %2192
        %2194 = vrot.lane.b32.xlu0 %v2099, 96
        %v2195 = vpop.permute.xlu0 %2194
        %2196 = vrot.lane.b32.xlu0 %v2101, 96
        %v2197 = vpop.permute.xlu0 %2196
        %2198 = vrot.lane.b32.xlu0 %v2103, 96
        %v2199 = vpop.permute.xlu0 %2198
        %2200 = vrot.lane.b32.xlu0 %v2105, 96
        %v2201 = vpop.permute.xlu0 %2200
        %2202 = vrot.lane.b32.xlu0 %v2107, 96
        %v2203 = vpop.permute.xlu0 %2202
        %2204 = vrot.lane.b32.xlu0 %v2109, 96
        %v2205 = vpop.permute.xlu0 %2204
        %2206 = vrot.lane.b32.xlu0 %v2111, 96
        %v2207 = vpop.permute.xlu0 %2206
        %2208 = vrot.lane.b32.xlu0 %v2113, 96
        %v2209 = vpop.permute.xlu0 %2208
        %2210 = vrot.lane.b32.xlu0 %v2115, 96
        %v2211 = vpop.permute.xlu0 %2210
        %2212 = vrot.lane.b32.xlu0 %v2117, 96
        %v2213 = vpop.permute.xlu0 %2212
        %2214 = vrot.lane.b32.xlu0 %v2119, 96
        %v2215 = vpop.permute.xlu0 %2214
        %2216 = vrot.lane.b32.xlu0 %v2121, 96
        %v2217 = vpop.permute.xlu0 %2216
        %2218 = vrot.lane.b32.xlu0 %v2123, 96
        %v2219 = vpop.permute.xlu0 %2218
        %2220 = vrot.lane.b32.xlu0 %v2125, 96
        %v2221 = vpop.permute.xlu0 %2220
        %2222 = vrot.lane.b32.xlu0 %v2127, 96
        %v2223 = vpop.permute.xlu0 %2222
        %2224 = vrot.lane.b32.xlu0 %v2129, 96
        %v2225 = vpop.permute.xlu0 %2224
        %2226 = vrot.lane.b32.xlu0 %v2131, 96
        %v2227 = vpop.permute.xlu0 %2226
        %2228 = vrot.lane.b32.xlu0 %v2133, 96
        %v2229 = vpop.permute.xlu0 %2228
        %2230 = vrot.lane.b32.xlu0 %v2135, 96
        %v2231 = vpop.permute.xlu0 %2230
        %2232 = vrot.lane.b32.xlu0 %v2137, 96
        %v2233 = vpop.permute.xlu0 %2232
        %2234 = vrot.lane.b32.xlu0 %v2139, 96
        %v2235 = vpop.permute.xlu0 %2234
        %vm2268 = vcmask 130048
        %v2269 = vsel %vm2268, %v2173, 0.0
        %2270 = vadd.xlane.f32.xlu0 %v2269
        %v2271 = vpop.xlane.xlu0 %2270
        %v2272 = vsel %vm2268, %v2175, 0.0
        %2273 = vadd.xlane.f32.xlu0 %v2272
        %v2274 = vpop.xlane.xlu0 %2273
        %v2275 = vsel %vm2268, %v2177, 0.0
        %2276 = vadd.xlane.f32.xlu0 %v2275
        %v2277 = vpop.xlane.xlu0 %2276
        %v2278 = vsel %vm2268, %v2179, 0.0
        %2279 = vadd.xlane.f32.xlu0 %v2278
        %v2280 = vpop.xlane.xlu0 %2279
        %v2281 = vsel %vm2268, %v2181, 0.0
        %2282 = vadd.xlane.f32.xlu0 %v2281
        %v2283 = vpop.xlane.xlu0 %2282
        %v2284 = vsel %vm2268, %v2183, 0.0
        %2285 = vadd.xlane.f32.xlu0 %v2284
        %v2286 = vpop.xlane.xlu0 %2285
        %v2287 = vsel %vm2268, %v2185, 0.0
        %2288 = vadd.xlane.f32.xlu0 %v2287
        %v2289 = vpop.xlane.xlu0 %2288
        %v2290 = vsel %vm2268, %v2187, 0.0
        %2291 = vadd.xlane.f32.xlu0 %v2290
        %v2292 = vpop.xlane.xlu0 %2291
        %v2293 = vsel %vm2268, %v2189, 0.0
        %2294 = vadd.xlane.f32.xlu0 %v2293
        %v2295 = vpop.xlane.xlu0 %2294
        %v2296 = vsel %vm2268, %v2191, 0.0
        %2297 = vadd.xlane.f32.xlu0 %v2296
        %v2298 = vpop.xlane.xlu0 %2297
        %v2299 = vsel %vm2268, %v2193, 0.0
        %2300 = vadd.xlane.f32.xlu0 %v2299
        %v2301 = vpop.xlane.xlu0 %2300
        %v2302 = vsel %vm2268, %v2195, 0.0
        %2303 = vadd.xlane.f32.xlu0 %v2302
        %v2304 = vpop.xlane.xlu0 %2303
        %v2305 = vsel %vm2268, %v2197, 0.0
        %2306 = vadd.xlane.f32.xlu0 %v2305
        %v2307 = vpop.xlane.xlu0 %2306
        %v2308 = vsel %vm2268, %v2199, 0.0
        %2309 = vadd.xlane.f32.xlu0 %v2308
        %v2310 = vpop.xlane.xlu0 %2309
        %v2311 = vsel %vm2268, %v2201, 0.0
        %2312 = vadd.xlane.f32.xlu0 %v2311
        %v2313 = vpop.xlane.xlu0 %2312
        %v2314 = vsel %vm2268, %v2203, 0.0
        %2315 = vadd.xlane.f32.xlu0 %v2314
        %v2316 = vpop.xlane.xlu0 %2315
        %v2317 = vsel %vm2268, %v2205, 0.0
        %2318 = vadd.xlane.f32.xlu0 %v2317
        %v2319 = vpop.xlane.xlu0 %2318
        %v2320 = vsel %vm2268, %v2207, 0.0
        %2321 = vadd.xlane.f32.xlu0 %v2320
        %v2322 = vpop.xlane.xlu0 %2321
        %v2323 = vsel %vm2268, %v2209, 0.0
        %2324 = vadd.xlane.f32.xlu0 %v2323
        %v2325 = vpop.xlane.xlu0 %2324
        %v2326 = vsel %vm2268, %v2211, 0.0
        %2327 = vadd.xlane.f32.xlu0 %v2326
        %v2328 = vpop.xlane.xlu0 %2327
        %v2329 = vsel %vm2268, %v2213, 0.0
        %2330 = vadd.xlane.f32.xlu0 %v2329
        %v2331 = vpop.xlane.xlu0 %2330
        %v2332 = vsel %vm2268, %v2215, 0.0
        %2333 = vadd.xlane.f32.xlu0 %v2332
        %v2334 = vpop.xlane.xlu0 %2333
        %v2335 = vsel %vm2268, %v2217, 0.0
        %2336 = vadd.xlane.f32.xlu0 %v2335
        %v2337 = vpop.xlane.xlu0 %2336
        %v2338 = vsel %vm2268, %v2219, 0.0
        %2339 = vadd.xlane.f32.xlu0 %v2338
        %v2340 = vpop.xlane.xlu0 %2339
        %v2341 = vsel %vm2268, %v2221, 0.0
        %2342 = vadd.xlane.f32.xlu0 %v2341
        %v2343 = vpop.xlane.xlu0 %2342
        %v2344 = vsel %vm2268, %v2223, 0.0
        %2345 = vadd.xlane.f32.xlu0 %v2344
        %v2346 = vpop.xlane.xlu0 %2345
        %v2347 = vsel %vm2268, %v2225, 0.0
        %2348 = vadd.xlane.f32.xlu0 %v2347
        %v2349 = vpop.xlane.xlu0 %2348
        %v2350 = vsel %vm2268, %v2227, 0.0
        %2351 = vadd.xlane.f32.xlu0 %v2350
        %v2352 = vpop.xlane.xlu0 %2351
        %v2353 = vsel %vm2268, %v2229, 0.0
        %2354 = vadd.xlane.f32.xlu0 %v2353
        %v2355 = vpop.xlane.xlu0 %2354
        %v2356 = vsel %vm2268, %v2231, 0.0
        %2357 = vadd.xlane.f32.xlu0 %v2356
        %v2358 = vpop.xlane.xlu0 %2357
        %v2359 = vsel %vm2268, %v2233, 0.0
        %2360 = vadd.xlane.f32.xlu0 %v2359
        %v2361 = vpop.xlane.xlu0 %2360
        %v2362 = vsel %vm2268, %v2235, 0.0
        %2363 = vadd.xlane.f32.xlu0 %v2362
        %v2364 = vpop.xlane.xlu0 %2363
        %v2365 = vrcp.pop %v2271
        %v2366 = vrcp.pop %v2274
        %v2367 = vrcp.pop %v2277
        %v2368 = vrcp.pop %v2280
        %v2369 = vrcp.pop %v2283
        %v2370 = vrcp.pop %v2286
        %v2371 = vrcp.pop %v2289
        %v2372 = vrcp.pop %v2292
        %v2373 = vrcp.pop %v2295
        %v2374 = vrcp.pop %v2298
        %v2375 = vrcp.pop %v2301
        %v2376 = vrcp.pop %v2304
        %v2377 = vrcp.pop %v2307
        %v2378 = vrcp.pop %v2310
        %v2379 = vrcp.pop %v2313
        %v2380 = vrcp.pop %v2316
        %v2381 = vrcp.pop %v2319
        %v2382 = vrcp.pop %v2322
        %v2383 = vrcp.pop %v2325
        %v2384 = vrcp.pop %v2328
        %v2385 = vrcp.pop %v2331
        %v2386 = vrcp.pop %v2334
        %v2387 = vrcp.pop %v2337
        %v2388 = vrcp.pop %v2340
        %v2389 = vrcp.pop %v2343
        %v2390 = vrcp.pop %v2346
        %v2391 = vrcp.pop %v2349
        %v2392 = vrcp.pop %v2352
        %v2393 = vrcp.pop %v2355
        %v2394 = vrcp.pop %v2358
        %v2395 = vrcp.pop %v2361
        %v2396 = vrcp.pop %v2364
        %v2397 = vmul.f32 %v2271, %v2365
        %v2398 = vmul.f32 %v2274, %v2366
        %v2399 = vmul.f32 %v2277, %v2367
        %v2400 = vmul.f32 %v2280, %v2368
        %v2401 = vmul.f32 %v2283, %v2369
        %v2402 = vmul.f32 %v2286, %v2370
        %v2403 = vmul.f32 %v2289, %v2371
        %v2404 = vmul.f32 %v2292, %v2372
        %v2405 = vmul.f32 %v2295, %v2373
        %v2406 = vmul.f32 %v2298, %v2374
        %v2407 = vmul.f32 %v2301, %v2375
        %v2408 = vmul.f32 %v2304, %v2376
        %v2409 = vmul.f32 %v2307, %v2377
        %v2410 = vmul.f32 %v2310, %v2378
        %v2411 = vmul.f32 %v2313, %v2379
        %v2412 = vmul.f32 %v2316, %v2380
        %v2413 = vmul.f32 %v2319, %v2381
        %v2414 = vmul.f32 %v2322, %v2382
        %v2415 = vmul.f32 %v2325, %v2383
        %v2416 = vmul.f32 %v2328, %v2384
        %v2417 = vmul.f32 %v2331, %v2385
        %v2418 = vmul.f32 %v2334, %v2386
        %v2419 = vmul.f32 %v2337, %v2387
        %v2420 = vmul.f32 %v2340, %v2388
        %v2421 = vmul.f32 %v2343, %v2389
        %v2422 = vmul.f32 %v2346, %v2390
        %v2423 = vmul.f32 %v2349, %v2391
        %v2424 = vmul.f32 %v2352, %v2392
        %v2425 = vmul.f32 %v2355, %v2393
        %v2426 = vmul.f32 %v2358, %v2394
        %v2427 = vmul.f32 %v2361, %v2395
        %v2428 = vmul.f32 %v2364, %v2396
        %v2429 = vsub.f32 2.0, %v2397
        %v2430 = vsub.f32 2.0, %v2398
        %v2431 = vsub.f32 2.0, %v2399
        %v2432 = vsub.f32 2.0, %v2400
        %v2433 = vsub.f32 2.0, %v2401
        %v2434 = vsub.f32 2.0, %v2402
        %v2435 = vsub.f32 2.0, %v2403
        %v2436 = vsub.f32 2.0, %v2404
        %v2437 = vsub.f32 2.0, %v2405
        %v2438 = vsub.f32 2.0, %v2406
        %v2439 = vsub.f32 2.0, %v2407
        %v2440 = vsub.f32 2.0, %v2408
        %v2441 = vsub.f32 2.0, %v2409
        %v2442 = vsub.f32 2.0, %v2410
        %v2443 = vsub.f32 2.0, %v2411
        %v2444 = vsub.f32 2.0, %v2412
        %v2445 = vsub.f32 2.0, %v2413
        %v2446 = vsub.f32 2.0, %v2414
        %v2447 = vsub.f32 2.0, %v2415
        %v2448 = vsub.f32 2.0, %v2416
        %v2449 = vsub.f32 2.0, %v2417
        %v2450 = vsub.f32 2.0, %v2418
        %v2451 = vsub.f32 2.0, %v2419
        %v2452 = vsub.f32 2.0, %v2420
        %v2453 = vsub.f32 2.0, %v2421
        %v2454 = vsub.f32 2.0, %v2422
        %v2455 = vsub.f32 2.0, %v2423
        %v2456 = vsub.f32 2.0, %v2424
        %v2457 = vsub.f32 2.0, %v2425
        %v2458 = vsub.f32 2.0, %v2426
        %v2459 = vsub.f32 2.0, %v2427
        %v2460 = vsub.f32 2.0, %v2428
        %v2461 = vmul.f32 %v2365, %v2429
        %v2462 = vmul.f32 %v2366, %v2430
        %v2463 = vmul.f32 %v2367, %v2431
        %v2464 = vmul.f32 %v2368, %v2432
        %v2465 = vmul.f32 %v2369, %v2433
        %v2466 = vmul.f32 %v2370, %v2434
        %v2467 = vmul.f32 %v2371, %v2435
        %v2468 = vmul.f32 %v2372, %v2436
        %v2469 = vmul.f32 %v2373, %v2437
        %v2470 = vmul.f32 %v2374, %v2438
        %v2471 = vmul.f32 %v2375, %v2439
        %v2472 = vmul.f32 %v2376, %v2440
        %v2473 = vmul.f32 %v2377, %v2441
        %v2474 = vmul.f32 %v2378, %v2442
        %v2475 = vmul.f32 %v2379, %v2443
        %v2476 = vmul.f32 %v2380, %v2444
        %v2477 = vmul.f32 %v2381, %v2445
        %v2478 = vmul.f32 %v2382, %v2446
        %v2479 = vmul.f32 %v2383, %v2447
        %v2480 = vmul.f32 %v2384, %v2448
        %v2481 = vmul.f32 %v2385, %v2449
        %v2482 = vmul.f32 %v2386, %v2450
        %v2483 = vmul.f32 %v2387, %v2451
        %v2484 = vmul.f32 %v2388, %v2452
        %v2485 = vmul.f32 %v2389, %v2453
        %v2486 = vmul.f32 %v2390, %v2454
        %v2487 = vmul.f32 %v2391, %v2455
        %v2488 = vmul.f32 %v2392, %v2456
        %v2489 = vmul.f32 %v2393, %v2457
        %v2490 = vmul.f32 %v2394, %v2458
        %v2491 = vmul.f32 %v2395, %v2459
        %v2492 = vmul.f32 %v2396, %v2460
        %v2493 = vmul.f32 %v2077, %v2461
        %v2494 = vmul.f32 %v2079, %v2462
        %v2495 = vmul.f32 %v2081, %v2463
        %v2496 = vmul.f32 %v2083, %v2464
        %v2497 = vmul.f32 %v2085, %v2465
        %v2498 = vmul.f32 %v2087, %v2466
        %v2499 = vmul.f32 %v2089, %v2467
        %v2500 = vmul.f32 %v2091, %v2468
        %v2501 = vmul.f32 %v2093, %v2469
        %v2502 = vmul.f32 %v2095, %v2470
        %v2503 = vmul.f32 %v2097, %v2471
        %v2504 = vmul.f32 %v2099, %v2472
        %v2505 = vmul.f32 %v2101, %v2473
        %v2506 = vmul.f32 %v2103, %v2474
        %v2507 = vmul.f32 %v2105, %v2475
        %v2508 = vmul.f32 %v2107, %v2476
        %v2509 = vmul.f32 %v2109, %v2477
        %v2510 = vmul.f32 %v2111, %v2478
        %v2511 = vmul.f32 %v2113, %v2479
        %v2512 = vmul.f32 %v2115, %v2480
        %v2513 = vmul.f32 %v2117, %v2481
        %v2514 = vmul.f32 %v2119, %v2482
        %v2515 = vmul.f32 %v2121, %v2483
        %v2516 = vmul.f32 %v2123, %v2484
        %v2517 = vmul.f32 %v2125, %v2485
        %v2518 = vmul.f32 %v2127, %v2486
        %v2519 = vmul.f32 %v2129, %v2487
        %v2520 = vmul.f32 %v2131, %v2488
        %v2521 = vmul.f32 %v2133, %v2489
        %v2522 = vmul.f32 %v2135, %v2490
        %v2523 = vmul.f32 %v2137, %v2491
        %v2524 = vmul.f32 %v2139, %v2492
        %2525 = vrot.lane.b32.xlu0 %v914, 96
        %v2526 = vpop.permute.xlu0 %2525
        %2527 = vrot.lane.b32.xlu0 %v918, 96
        %v2528 = vpop.permute.xlu0 %2527
        %2529 = vrot.lane.b32.xlu0 %v922, 96
        %v2530 = vpop.permute.xlu0 %2529
        %2531 = vrot.lane.b32.xlu0 %v926, 96
        %v2532 = vpop.permute.xlu0 %2531
        %2533 = vrot.lane.b32.xlu0 %v930, 96
        %v2534 = vpop.permute.xlu0 %2533
        %2535 = vrot.lane.b32.xlu0 %v934, 96
        %v2536 = vpop.permute.xlu0 %2535
        %2537 = vrot.lane.b32.xlu0 %v938, 96
        %v2538 = vpop.permute.xlu0 %2537
        %2539 = vrot.lane.b32.xlu0 %v942, 96
        %v2540 = vpop.permute.xlu0 %2539
        %2541 = vrot.lane.b32.xlu0 %v946, 96
        %v2542 = vpop.permute.xlu0 %2541
        %2543 = vrot.lane.b32.xlu0 %v950, 96
        %v2544 = vpop.permute.xlu0 %2543
        %2545 = vrot.lane.b32.xlu0 %v954, 96
        %v2546 = vpop.permute.xlu0 %2545
        %2547 = vrot.lane.b32.xlu0 %v958, 96
        %v2548 = vpop.permute.xlu0 %2547
        %2549 = vrot.lane.b32.xlu0 %v962, 96
        %v2550 = vpop.permute.xlu0 %2549
        %2551 = vrot.lane.b32.xlu0 %v966, 96
        %v2552 = vpop.permute.xlu0 %2551
        %2553 = vrot.lane.b32.xlu0 %v970, 96
        %v2554 = vpop.permute.xlu0 %2553
        %2555 = vrot.lane.b32.xlu0 %v974, 96
        %v2556 = vpop.permute.xlu0 %2555
        %v2573 = vmul.f32 %v2493, %v2526
        %v2574 = vmul.f32 %v2494, %v2526
        %v2575 = vmul.f32 %v2495, %v2528
        %v2576 = vmul.f32 %v2496, %v2528
        %v2577 = vmul.f32 %v2497, %v2530
        %v2578 = vmul.f32 %v2498, %v2530
        %v2579 = vmul.f32 %v2499, %v2532
        %v2580 = vmul.f32 %v2500, %v2532
        %v2581 = vmul.f32 %v2501, %v2534
        %v2582 = vmul.f32 %v2502, %v2534
        %v2583 = vmul.f32 %v2503, %v2536
        %v2584 = vmul.f32 %v2504, %v2536
        %v2585 = vmul.f32 %v2505, %v2538
        %v2586 = vmul.f32 %v2506, %v2538
        %v2587 = vmul.f32 %v2507, %v2540
        %v2588 = vmul.f32 %v2508, %v2540
        %v2589 = vmul.f32 %v2509, %v2542
        %v2590 = vmul.f32 %v2510, %v2542
        %v2591 = vmul.f32 %v2511, %v2544
        %v2592 = vmul.f32 %v2512, %v2544
        %v2593 = vmul.f32 %v2513, %v2546
        %v2594 = vmul.f32 %v2514, %v2546
        %v2595 = vmul.f32 %v2515, %v2548
        %v2596 = vmul.f32 %v2516, %v2548
        %v2597 = vmul.f32 %v2517, %v2550
        %v2598 = vmul.f32 %v2518, %v2550
        %v2599 = vmul.f32 %v2519, %v2552
        %v2600 = vmul.f32 %v2520, %v2552
        %v2601 = vmul.f32 %v2521, %v2554
        %v2602 = vmul.f32 %v2522, %v2554
        %v2603 = vmul.f32 %v2523, %v2556
        %v2604 = vmul.f32 %v2524, %v2556
        %2637 = vrot.lane.b32.xlu0 %v2573, 96
        %v2638 = vpop.permute.xlu0 %2637
        %2639 = vrot.lane.b32.xlu0 %v2574, 96
        %v2640 = vpop.permute.xlu0 %2639
        %2641 = vrot.lane.b32.xlu0 %v2575, 96
        %v2642 = vpop.permute.xlu0 %2641
        %2643 = vrot.lane.b32.xlu0 %v2576, 96
        %v2644 = vpop.permute.xlu0 %2643
        %2645 = vrot.lane.b32.xlu0 %v2577, 96
        %v2646 = vpop.permute.xlu0 %2645
        %2647 = vrot.lane.b32.xlu0 %v2578, 96
        %v2648 = vpop.permute.xlu0 %2647
        %2649 = vrot.lane.b32.xlu0 %v2579, 96
        %v2650 = vpop.permute.xlu0 %2649
        %2651 = vrot.lane.b32.xlu0 %v2580, 96
        %v2652 = vpop.permute.xlu0 %2651
        %2653 = vrot.lane.b32.xlu0 %v2581, 96
        %v2654 = vpop.permute.xlu0 %2653
        %2655 = vrot.lane.b32.xlu0 %v2582, 96
        %v2656 = vpop.permute.xlu0 %2655
        %2657 = vrot.lane.b32.xlu0 %v2583, 96
        %v2658 = vpop.permute.xlu0 %2657
        %2659 = vrot.lane.b32.xlu0 %v2584, 96
        %v2660 = vpop.permute.xlu0 %2659
        %2661 = vrot.lane.b32.xlu0 %v2585, 96
        %v2662 = vpop.permute.xlu0 %2661
        %2663 = vrot.lane.b32.xlu0 %v2586, 96
        %v2664 = vpop.permute.xlu0 %2663
        %2665 = vrot.lane.b32.xlu0 %v2587, 96
        %v2666 = vpop.permute.xlu0 %2665
        %2667 = vrot.lane.b32.xlu0 %v2588, 96
        %v2668 = vpop.permute.xlu0 %2667
        %2669 = vrot.lane.b32.xlu0 %v2589, 96
        %v2670 = vpop.permute.xlu0 %2669
        %2671 = vrot.lane.b32.xlu0 %v2590, 96
        %v2672 = vpop.permute.xlu0 %2671
        %2673 = vrot.lane.b32.xlu0 %v2591, 96
        %v2674 = vpop.permute.xlu0 %2673
        %2675 = vrot.lane.b32.xlu0 %v2592, 96
        %v2676 = vpop.permute.xlu0 %2675
        %2677 = vrot.lane.b32.xlu0 %v2593, 96
        %v2678 = vpop.permute.xlu0 %2677
        %2679 = vrot.lane.b32.xlu0 %v2594, 96
        %v2680 = vpop.permute.xlu0 %2679
        %2681 = vrot.lane.b32.xlu0 %v2595, 96
        %v2682 = vpop.permute.xlu0 %2681
        %2683 = vrot.lane.b32.xlu0 %v2596, 96
        %v2684 = vpop.permute.xlu0 %2683
        %2685 = vrot.lane.b32.xlu0 %v2597, 96
        %v2686 = vpop.permute.xlu0 %2685
        %2687 = vrot.lane.b32.xlu0 %v2598, 96
        %v2688 = vpop.permute.xlu0 %2687
        %2689 = vrot.lane.b32.xlu0 %v2599, 96
        %v2690 = vpop.permute.xlu0 %2689
        %2691 = vrot.lane.b32.xlu0 %v2600, 96
        %v2692 = vpop.permute.xlu0 %2691
        %2693 = vrot.lane.b32.xlu0 %v2601, 96
        %v2694 = vpop.permute.xlu0 %2693
        %2695 = vrot.lane.b32.xlu0 %v2602, 96
        %v2696 = vpop.permute.xlu0 %2695
        %2697 = vrot.lane.b32.xlu0 %v2603, 96
        %v2698 = vpop.permute.xlu0 %2697
        %2699 = vrot.lane.b32.xlu0 %v2604, 96
        %v2700 = vpop.permute.xlu0 %2699
        %v2733 = vsel %vm2268, %v2638, 0.0
        %2734 = vadd.xlane.f32.xlu0 %v2733
        %v2735 = vpop.xlane.xlu0 %2734
        %v2736 = vsel %vm2268, %v2640, 0.0
        %2737 = vadd.xlane.f32.xlu0 %v2736
        %v2738 = vpop.xlane.xlu0 %2737
        %v2739 = vsel %vm2268, %v2642, 0.0
        %2740 = vadd.xlane.f32.xlu0 %v2739
        %v2741 = vpop.xlane.xlu0 %2740
        %v2742 = vsel %vm2268, %v2644, 0.0
        %2743 = vadd.xlane.f32.xlu0 %v2742
        %v2744 = vpop.xlane.xlu0 %2743
        %v2745 = vsel %vm2268, %v2646, 0.0
        %2746 = vadd.xlane.f32.xlu0 %v2745
        %v2747 = vpop.xlane.xlu0 %2746
        %v2748 = vsel %vm2268, %v2648, 0.0
        %2749 = vadd.xlane.f32.xlu0 %v2748
        %v2750 = vpop.xlane.xlu0 %2749
        %v2751 = vsel %vm2268, %v2650, 0.0
        %2752 = vadd.xlane.f32.xlu0 %v2751
        %v2753 = vpop.xlane.xlu0 %2752
        %v2754 = vsel %vm2268, %v2652, 0.0
        %2755 = vadd.xlane.f32.xlu0 %v2754
        %v2756 = vpop.xlane.xlu0 %2755
        %v2757 = vsel %vm2268, %v2654, 0.0
        %2758 = vadd.xlane.f32.xlu0 %v2757
        %v2759 = vpop.xlane.xlu0 %2758
        %v2760 = vsel %vm2268, %v2656, 0.0
        %2761 = vadd.xlane.f32.xlu0 %v2760
        %v2762 = vpop.xlane.xlu0 %2761
        %v2763 = vsel %vm2268, %v2658, 0.0
        %2764 = vadd.xlane.f32.xlu0 %v2763
        %v2765 = vpop.xlane.xlu0 %2764
        %v2766 = vsel %vm2268, %v2660, 0.0
        %2767 = vadd.xlane.f32.xlu0 %v2766
        %v2768 = vpop.xlane.xlu0 %2767
        %v2769 = vsel %vm2268, %v2662, 0.0
        %2770 = vadd.xlane.f32.xlu0 %v2769
        %v2771 = vpop.xlane.xlu0 %2770
        %v2772 = vsel %vm2268, %v2664, 0.0
        %2773 = vadd.xlane.f32.xlu0 %v2772
        %v2774 = vpop.xlane.xlu0 %2773
        %v2775 = vsel %vm2268, %v2666, 0.0
        %2776 = vadd.xlane.f32.xlu0 %v2775
        %v2777 = vpop.xlane.xlu0 %2776
        %v2778 = vsel %vm2268, %v2668, 0.0
        %2779 = vadd.xlane.f32.xlu0 %v2778
        %v2780 = vpop.xlane.xlu0 %2779
        %v2781 = vsel %vm2268, %v2670, 0.0
        %2782 = vadd.xlane.f32.xlu0 %v2781
        %v2783 = vpop.xlane.xlu0 %2782
        %v2784 = vsel %vm2268, %v2672, 0.0
        %2785 = vadd.xlane.f32.xlu0 %v2784
        %v2786 = vpop.xlane.xlu0 %2785
        %v2787 = vsel %vm2268, %v2674, 0.0
        %2788 = vadd.xlane.f32.xlu0 %v2787
        %v2789 = vpop.xlane.xlu0 %2788
        %v2790 = vsel %vm2268, %v2676, 0.0
        %2791 = vadd.xlane.f32.xlu0 %v2790
        %v2792 = vpop.xlane.xlu0 %2791
        %v2793 = vsel %vm2268, %v2678, 0.0
        %2794 = vadd.xlane.f32.xlu0 %v2793
        %v2795 = vpop.xlane.xlu0 %2794
        %v2796 = vsel %vm2268, %v2680, 0.0
        %2797 = vadd.xlane.f32.xlu0 %v2796
        %v2798 = vpop.xlane.xlu0 %2797
        %v2799 = vsel %vm2268, %v2682, 0.0
        %2800 = vadd.xlane.f32.xlu0 %v2799
        %v2801 = vpop.xlane.xlu0 %2800
        %v2802 = vsel %vm2268, %v2684, 0.0
        %2803 = vadd.xlane.f32.xlu0 %v2802
        %v2804 = vpop.xlane.xlu0 %2803
        %v2805 = vsel %vm2268, %v2686, 0.0
        %2806 = vadd.xlane.f32.xlu0 %v2805
        %v2807 = vpop.xlane.xlu0 %2806
        %v2808 = vsel %vm2268, %v2688, 0.0
        %2809 = vadd.xlane.f32.xlu0 %v2808
        %v2810 = vpop.xlane.xlu0 %2809
        %v2811 = vsel %vm2268, %v2690, 0.0
        %2812 = vadd.xlane.f32.xlu0 %v2811
        %v2813 = vpop.xlane.xlu0 %2812
        %v2814 = vsel %vm2268, %v2692, 0.0
        %2815 = vadd.xlane.f32.xlu0 %v2814
        %v2816 = vpop.xlane.xlu0 %2815
        %v2817 = vsel %vm2268, %v2694, 0.0
        %2818 = vadd.xlane.f32.xlu0 %v2817
        %v2819 = vpop.xlane.xlu0 %2818
        %v2820 = vsel %vm2268, %v2696, 0.0
        %2821 = vadd.xlane.f32.xlu0 %v2820
        %v2822 = vpop.xlane.xlu0 %2821
        %v2823 = vsel %vm2268, %v2698, 0.0
        %2824 = vadd.xlane.f32.xlu0 %v2823
        %v2825 = vpop.xlane.xlu0 %2824
        %v2826 = vsel %vm2268, %v2700, 0.0
        %2827 = vadd.xlane.f32.xlu0 %v2826
        %v2828 = vpop.xlane.xlu0 %2827
        %s2829 = scalar_lea.vmem [#allocation8], 64
        %v2830 = vld [vmem:[%s2829] sm:$0xff]
        %v2831 = vld [vmem:[%s2829 + $0x8] sm:$0xff]
        %2834 = vrot.lane.b32.xlu0 %v2830, 32
        %v2835 = vpop.permute.xlu0 %2834
        %2836 = vrot.lane.b32.xlu0 %v2831, 32
        %v2837 = vpop.permute.xlu0 %2836
        %v2840 = vmul.f32 %v2493, %v2835
        %v2841 = vmul.f32 %v2494, %v2837
        %v2842 = vmul.f32 %v2495, %v2835
        %v2843 = vmul.f32 %v2496, %v2837
        %v2844 = vmul.f32 %v2497, %v2835
        %v2845 = vmul.f32 %v2498, %v2837
        %v2846 = vmul.f32 %v2499, %v2835
        %v2847 = vmul.f32 %v2500, %v2837
        %v2848 = vmul.f32 %v2501, %v2835
        %v2849 = vmul.f32 %v2502, %v2837
        %v2850 = vmul.f32 %v2503, %v2835
        %v2851 = vmul.f32 %v2504, %v2837
        %v2852 = vmul.f32 %v2505, %v2835
        %v2853 = vmul.f32 %v2506, %v2837
        %v2854 = vmul.f32 %v2507, %v2835
        %v2855 = vmul.f32 %v2508, %v2837
        %v2856 = vmul.f32 %v2509, %v2835
        %v2857 = vmul.f32 %v2510, %v2837
        %v2858 = vmul.f32 %v2511, %v2835
        %v2859 = vmul.f32 %v2512, %v2837
        %v2860 = vmul.f32 %v2513, %v2835
        %v2861 = vmul.f32 %v2514, %v2837
        %v2862 = vmul.f32 %v2515, %v2835
        %v2863 = vmul.f32 %v2516, %v2837
        %v2864 = vmul.f32 %v2517, %v2835
        %v2865 = vmul.f32 %v2518, %v2837
        %v2866 = vmul.f32 %v2519, %v2835
        %v2867 = vmul.f32 %v2520, %v2837
        %v2868 = vmul.f32 %v2521, %v2835
        %v2869 = vmul.f32 %v2522, %v2837
        %v2870 = vmul.f32 %v2523, %v2835
        %v2871 = vmul.f32 %v2524, %v2837
        %2904 = vrot.lane.b32.xlu0 %v2840, 96
        %v2905 = vpop.permute.xlu0 %2904
        %2906 = vrot.lane.b32.xlu0 %v2841, 96
        %v2907 = vpop.permute.xlu0 %2906
        %2908 = vrot.lane.b32.xlu0 %v2842, 96
        %v2909 = vpop.permute.xlu0 %2908
        %2910 = vrot.lane.b32.xlu0 %v2843, 96
        %v2911 = vpop.permute.xlu0 %2910
        %2912 = vrot.lane.b32.xlu0 %v2844, 96
        %v2913 = vpop.permute.xlu0 %2912
        %2914 = vrot.lane.b32.xlu0 %v2845, 96
        %v2915 = vpop.permute.xlu0 %2914
        %2916 = vrot.lane.b32.xlu0 %v2846, 96
        %v2917 = vpop.permute.xlu0 %2916
        %2918 = vrot.lane.b32.xlu0 %v2847, 96
        %v2919 = vpop.permute.xlu0 %2918
        %2920 = vrot.lane.b32.xlu0 %v2848, 96
        %v2921 = vpop.permute.xlu0 %2920
        %2922 = vrot.lane.b32.xlu0 %v2849, 96
        %v2923 = vpop.permute.xlu0 %2922
        %2924 = vrot.lane.b32.xlu0 %v2850, 96
        %v2925 = vpop.permute.xlu0 %2924
        %2926 = vrot.lane.b32.xlu0 %v2851, 96
        %v2927 = vpop.permute.xlu0 %2926
        %2928 = vrot.lane.b32.xlu0 %v2852, 96
        %v2929 = vpop.permute.xlu0 %2928
        %2930 = vrot.lane.b32.xlu0 %v2853, 96
        %v2931 = vpop.permute.xlu0 %2930
        %2932 = vrot.lane.b32.xlu0 %v2854, 96
        %v2933 = vpop.permute.xlu0 %2932
        %2934 = vrot.lane.b32.xlu0 %v2855, 96
        %v2935 = vpop.permute.xlu0 %2934
        %2936 = vrot.lane.b32.xlu0 %v2856, 96
        %v2937 = vpop.permute.xlu0 %2936
        %2938 = vrot.lane.b32.xlu0 %v2857, 96
        %v2939 = vpop.permute.xlu0 %2938
        %2940 = vrot.lane.b32.xlu0 %v2858, 96
        %v2941 = vpop.permute.xlu0 %2940
        %2942 = vrot.lane.b32.xlu0 %v2859, 96
        %v2943 = vpop.permute.xlu0 %2942
        %2944 = vrot.lane.b32.xlu0 %v2860, 96
        %v2945 = vpop.permute.xlu0 %2944
        %2946 = vrot.lane.b32.xlu0 %v2861, 96
        %v2947 = vpop.permute.xlu0 %2946
        %2948 = vrot.lane.b32.xlu0 %v2862, 96
        %v2949 = vpop.permute.xlu0 %2948
        %2950 = vrot.lane.b32.xlu0 %v2863, 96
        %v2951 = vpop.permute.xlu0 %2950
        %2952 = vrot.lane.b32.xlu0 %v2864, 96
        %v2953 = vpop.permute.xlu0 %2952
        %2954 = vrot.lane.b32.xlu0 %v2865, 96
        %v2955 = vpop.permute.xlu0 %2954
        %2956 = vrot.lane.b32.xlu0 %v2866, 96
        %v2957 = vpop.permute.xlu0 %2956
        %2958 = vrot.lane.b32.xlu0 %v2867, 96
        %v2959 = vpop.permute.xlu0 %2958
        %2960 = vrot.lane.b32.xlu0 %v2868, 96
        %v2961 = vpop.permute.xlu0 %2960
        %2962 = vrot.lane.b32.xlu0 %v2869, 96
        %v2963 = vpop.permute.xlu0 %2962
        %2964 = vrot.lane.b32.xlu0 %v2870, 96
        %v2965 = vpop.permute.xlu0 %2964
        %2966 = vrot.lane.b32.xlu0 %v2871, 96
        %v2967 = vpop.permute.xlu0 %2966
        %v3000 = vsel %vm2268, %v2905, 0.0
        %3001 = vadd.xlane.f32.xlu0 %v3000
        %v3002 = vpop.xlane.xlu0 %3001
        %v3003 = vsel %vm2268, %v2907, 0.0
        %3004 = vadd.xlane.f32.xlu0 %v3003
        %v3005 = vpop.xlane.xlu0 %3004
        %v3006 = vsel %vm2268, %v2909, 0.0
        %3007 = vadd.xlane.f32.xlu0 %v3006
        %v3008 = vpop.xlane.xlu0 %3007
        %v3009 = vsel %vm2268, %v2911, 0.0
        %3010 = vadd.xlane.f32.xlu0 %v3009
        %v3011 = vpop.xlane.xlu0 %3010
        %v3012 = vsel %vm2268, %v2913, 0.0
        %3013 = vadd.xlane.f32.xlu0 %v3012
        %v3014 = vpop.xlane.xlu0 %3013
        %v3015 = vsel %vm2268, %v2915, 0.0
        %3016 = vadd.xlane.f32.xlu0 %v3015
        %v3017 = vpop.xlane.xlu0 %3016
        %v3018 = vsel %vm2268, %v2917, 0.0
        %3019 = vadd.xlane.f32.xlu0 %v3018
        %v3020 = vpop.xlane.xlu0 %3019
        %v3021 = vsel %vm2268, %v2919, 0.0
        %3022 = vadd.xlane.f32.xlu0 %v3021
        %v3023 = vpop.xlane.xlu0 %3022
        %v3024 = vsel %vm2268, %v2921, 0.0
        %3025 = vadd.xlane.f32.xlu0 %v3024
        %v3026 = vpop.xlane.xlu0 %3025
        %v3027 = vsel %vm2268, %v2923, 0.0
        %3028 = vadd.xlane.f32.xlu0 %v3027
        %v3029 = vpop.xlane.xlu0 %3028
        %v3030 = vsel %vm2268, %v2925, 0.0
        %3031 = vadd.xlane.f32.xlu0 %v3030
        %v3032 = vpop.xlane.xlu0 %3031
        %v3033 = vsel %vm2268, %v2927, 0.0
        %3034 = vadd.xlane.f32.xlu0 %v3033
        %v3035 = vpop.xlane.xlu0 %3034
        %v3036 = vsel %vm2268, %v2929, 0.0
        %3037 = vadd.xlane.f32.xlu0 %v3036
        %v3038 = vpop.xlane.xlu0 %3037
        %v3039 = vsel %vm2268, %v2931, 0.0
        %3040 = vadd.xlane.f32.xlu0 %v3039
        %v3041 = vpop.xlane.xlu0 %3040
        %v3042 = vsel %vm2268, %v2933, 0.0
        %3043 = vadd.xlane.f32.xlu0 %v3042
        %v3044 = vpop.xlane.xlu0 %3043
        %v3045 = vsel %vm2268, %v2935, 0.0
        %3046 = vadd.xlane.f32.xlu0 %v3045
        %v3047 = vpop.xlane.xlu0 %3046
        %v3048 = vsel %vm2268, %v2937, 0.0
        %3049 = vadd.xlane.f32.xlu0 %v3048
        %v3050 = vpop.xlane.xlu0 %3049
        %v3051 = vsel %vm2268, %v2939, 0.0
        %3052 = vadd.xlane.f32.xlu0 %v3051
        %v3053 = vpop.xlane.xlu0 %3052
        %v3054 = vsel %vm2268, %v2941, 0.0
        %3055 = vadd.xlane.f32.xlu0 %v3054
        %v3056 = vpop.xlane.xlu0 %3055
        %v3057 = vsel %vm2268, %v2943, 0.0
        %3058 = vadd.xlane.f32.xlu0 %v3057
        %v3059 = vpop.xlane.xlu0 %3058
        %v3060 = vsel %vm2268, %v2945, 0.0
        %3061 = vadd.xlane.f32.xlu0 %v3060
        %v3062 = vpop.xlane.xlu0 %3061
        %v3063 = vsel %vm2268, %v2947, 0.0
        %3064 = vadd.xlane.f32.xlu0 %v3063
        %v3065 = vpop.xlane.xlu0 %3064
        %v3066 = vsel %vm2268, %v2949, 0.0
        %3067 = vadd.xlane.f32.xlu0 %v3066
        %v3068 = vpop.xlane.xlu0 %3067
        %v3069 = vsel %vm2268, %v2951, 0.0
        %3070 = vadd.xlane.f32.xlu0 %v3069
        %v3071 = vpop.xlane.xlu0 %3070
        %v3072 = vsel %vm2268, %v2953, 0.0
        %3073 = vadd.xlane.f32.xlu0 %v3072
        %v3074 = vpop.xlane.xlu0 %3073
        %v3075 = vsel %vm2268, %v2955, 0.0
        %3076 = vadd.xlane.f32.xlu0 %v3075
        %v3077 = vpop.xlane.xlu0 %3076
        %v3078 = vsel %vm2268, %v2957, 0.0
        %3079 = vadd.xlane.f32.xlu0 %v3078
        %v3080 = vpop.xlane.xlu0 %3079
        %v3081 = vsel %vm2268, %v2959, 0.0
        %3082 = vadd.xlane.f32.xlu0 %v3081
        %v3083 = vpop.xlane.xlu0 %3082
        %v3084 = vsel %vm2268, %v2961, 0.0
        %3085 = vadd.xlane.f32.xlu0 %v3084
        %v3086 = vpop.xlane.xlu0 %3085
        %v3087 = vsel %vm2268, %v2963, 0.0
        %3088 = vadd.xlane.f32.xlu0 %v3087
        %v3089 = vpop.xlane.xlu0 %3088
        %v3090 = vsel %vm2268, %v2965, 0.0
        %3091 = vadd.xlane.f32.xlu0 %v3090
        %v3092 = vpop.xlane.xlu0 %3091
        %v3093 = vsel %vm2268, %v2967, 0.0
        %3094 = vadd.xlane.f32.xlu0 %v3093
        %v3095 = vpop.xlane.xlu0 %3094
        %v3096 = vadd.f32 %v2735, %v3002
        %v3097 = vadd.f32 %v2738, %v3005
        %v3098 = vadd.f32 %v2741, %v3008
        %v3099 = vadd.f32 %v2744, %v3011
        %v3100 = vadd.f32 %v2747, %v3014
        %v3101 = vadd.f32 %v2750, %v3017
        %v3102 = vadd.f32 %v2753, %v3020
        %v3103 = vadd.f32 %v2756, %v3023
        %v3104 = vadd.f32 %v2759, %v3026
        %v3105 = vadd.f32 %v2762, %v3029
        %v3106 = vadd.f32 %v2765, %v3032
        %v3107 = vadd.f32 %v2768, %v3035
        %v3108 = vadd.f32 %v2771, %v3038
        %v3109 = vadd.f32 %v2774, %v3041
        %v3110 = vadd.f32 %v2777, %v3044
        %v3111 = vadd.f32 %v2780, %v3047
        %v3112 = vadd.f32 %v2783, %v3050
        %v3113 = vadd.f32 %v2786, %v3053
        %v3114 = vadd.f32 %v2789, %v3056
        %v3115 = vadd.f32 %v2792, %v3059
        %v3116 = vadd.f32 %v2795, %v3062
        %v3117 = vadd.f32 %v2798, %v3065
        %v3118 = vadd.f32 %v2801, %v3068
        %v3119 = vadd.f32 %v2804, %v3071
        %v3120 = vadd.f32 %v2807, %v3074
        %v3121 = vadd.f32 %v2810, %v3077
        %v3122 = vadd.f32 %v2813, %v3080
        %v3123 = vadd.f32 %v2816, %v3083
        %v3124 = vadd.f32 %v2819, %v3086
        %v3125 = vadd.f32 %v2822, %v3089
        %v3126 = vadd.f32 %v2825, %v3092
        %v3127 = vadd.f32 %v2828, %v3095
        %3128 = vrot.lane.b32.xlu0 %v914, 80
        %v3129 = vpop.permute.xlu0 %3128
        %3130 = vrot.lane.b32.xlu0 %v918, 80
        %v3131 = vpop.permute.xlu0 %3130
        %3132 = vrot.lane.b32.xlu0 %v922, 80
        %v3133 = vpop.permute.xlu0 %3132
        %3134 = vrot.lane.b32.xlu0 %v926, 80
        %v3135 = vpop.permute.xlu0 %3134
        %3136 = vrot.lane.b32.xlu0 %v930, 80
        %v3137 = vpop.permute.xlu0 %3136
        %3138 = vrot.lane.b32.xlu0 %v934, 80
        %v3139 = vpop.permute.xlu0 %3138
        %3140 = vrot.lane.b32.xlu0 %v938, 80
        %v3141 = vpop.permute.xlu0 %3140
        %3142 = vrot.lane.b32.xlu0 %v942, 80
        %v3143 = vpop.permute.xlu0 %3142
        %3144 = vrot.lane.b32.xlu0 %v946, 80
        %v3145 = vpop.permute.xlu0 %3144
        %3146 = vrot.lane.b32.xlu0 %v950, 80
        %v3147 = vpop.permute.xlu0 %3146
        %3148 = vrot.lane.b32.xlu0 %v954, 80
        %v3149 = vpop.permute.xlu0 %3148
        %3150 = vrot.lane.b32.xlu0 %v958, 80
        %v3151 = vpop.permute.xlu0 %3150
        %3152 = vrot.lane.b32.xlu0 %v962, 80
        %v3153 = vpop.permute.xlu0 %3152
        %3154 = vrot.lane.b32.xlu0 %v966, 80
        %v3155 = vpop.permute.xlu0 %3154
        %3156 = vrot.lane.b32.xlu0 %v970, 80
        %v3157 = vpop.permute.xlu0 %3156
        %3158 = vrot.lane.b32.xlu0 %v974, 80
        %v3159 = vpop.permute.xlu0 %3158
        %v3176 = vmul.f32 %v2493, %v3129
        %v3177 = vmul.f32 %v2494, %v3129
        %v3178 = vmul.f32 %v2495, %v3131
        %v3179 = vmul.f32 %v2496, %v3131
        %v3180 = vmul.f32 %v2497, %v3133
        %v3181 = vmul.f32 %v2498, %v3133
        %v3182 = vmul.f32 %v2499, %v3135
        %v3183 = vmul.f32 %v2500, %v3135
        %v3184 = vmul.f32 %v2501, %v3137
        %v3185 = vmul.f32 %v2502, %v3137
        %v3186 = vmul.f32 %v2503, %v3139
        %v3187 = vmul.f32 %v2504, %v3139
        %v3188 = vmul.f32 %v2505, %v3141
        %v3189 = vmul.f32 %v2506, %v3141
        %v3190 = vmul.f32 %v2507, %v3143
        %v3191 = vmul.f32 %v2508, %v3143
        %v3192 = vmul.f32 %v2509, %v3145
        %v3193 = vmul.f32 %v2510, %v3145
        %v3194 = vmul.f32 %v2511, %v3147
        %v3195 = vmul.f32 %v2512, %v3147
        %v3196 = vmul.f32 %v2513, %v3149
        %v3197 = vmul.f32 %v2514, %v3149
        %v3198 = vmul.f32 %v2515, %v3151
        %v3199 = vmul.f32 %v2516, %v3151
        %v3200 = vmul.f32 %v2517, %v3153
        %v3201 = vmul.f32 %v2518, %v3153
        %v3202 = vmul.f32 %v2519, %v3155
        %v3203 = vmul.f32 %v2520, %v3155
        %v3204 = vmul.f32 %v2521, %v3157
        %v3205 = vmul.f32 %v2522, %v3157
        %v3206 = vmul.f32 %v2523, %v3159
        %v3207 = vmul.f32 %v2524, %v3159
        %3240 = vrot.lane.b32.xlu0 %v3176, 96
        %v3241 = vpop.permute.xlu0 %3240
        %3242 = vrot.lane.b32.xlu0 %v3177, 96
        %v3243 = vpop.permute.xlu0 %3242
        %3244 = vrot.lane.b32.xlu0 %v3178, 96
        %v3245 = vpop.permute.xlu0 %3244
        %3246 = vrot.lane.b32.xlu0 %v3179, 96
        %v3247 = vpop.permute.xlu0 %3246
        %3248 = vrot.lane.b32.xlu0 %v3180, 96
        %v3249 = vpop.permute.xlu0 %3248
        %3250 = vrot.lane.b32.xlu0 %v3181, 96
        %v3251 = vpop.permute.xlu0 %3250
        %3252 = vrot.lane.b32.xlu0 %v3182, 96
        %v3253 = vpop.permute.xlu0 %3252
        %3254 = vrot.lane.b32.xlu0 %v3183, 96
        %v3255 = vpop.permute.xlu0 %3254
        %3256 = vrot.lane.b32.xlu0 %v3184, 96
        %v3257 = vpop.permute.xlu0 %3256
        %3258 = vrot.lane.b32.xlu0 %v3185, 96
        %v3259 = vpop.permute.xlu0 %3258
        %3260 = vrot.lane.b32.xlu0 %v3186, 96
        %v3261 = vpop.permute.xlu0 %3260
        %3262 = vrot.lane.b32.xlu0 %v3187, 96
        %v3263 = vpop.permute.xlu0 %3262
        %3264 = vrot.lane.b32.xlu0 %v3188, 96
        %v3265 = vpop.permute.xlu0 %3264
        %3266 = vrot.lane.b32.xlu0 %v3189, 96
        %v3267 = vpop.permute.xlu0 %3266
        %3268 = vrot.lane.b32.xlu0 %v3190, 96
        %v3269 = vpop.permute.xlu0 %3268
        %3270 = vrot.lane.b32.xlu0 %v3191, 96
        %v3271 = vpop.permute.xlu0 %3270
        %3272 = vrot.lane.b32.xlu0 %v3192, 96
        %v3273 = vpop.permute.xlu0 %3272
        %3274 = vrot.lane.b32.xlu0 %v3193, 96
        %v3275 = vpop.permute.xlu0 %3274
        %3276 = vrot.lane.b32.xlu0 %v3194, 96
        %v3277 = vpop.permute.xlu0 %3276
        %3278 = vrot.lane.b32.xlu0 %v3195, 96
        %v3279 = vpop.permute.xlu0 %3278
        %3280 = vrot.lane.b32.xlu0 %v3196, 96
        %v3281 = vpop.permute.xlu0 %3280
        %3282 = vrot.lane.b32.xlu0 %v3197, 96
        %v3283 = vpop.permute.xlu0 %3282
        %3284 = vrot.lane.b32.xlu0 %v3198, 96
        %v3285 = vpop.permute.xlu0 %3284
        %3286 = vrot.lane.b32.xlu0 %v3199, 96
        %v3287 = vpop.permute.xlu0 %3286
        %3288 = vrot.lane.b32.xlu0 %v3200, 96
        %v3289 = vpop.permute.xlu0 %3288
        %3290 = vrot.lane.b32.xlu0 %v3201, 96
        %v3291 = vpop.permute.xlu0 %3290
        %3292 = vrot.lane.b32.xlu0 %v3202, 96
        %v3293 = vpop.permute.xlu0 %3292
        %3294 = vrot.lane.b32.xlu0 %v3203, 96
        %v3295 = vpop.permute.xlu0 %3294
        %3296 = vrot.lane.b32.xlu0 %v3204, 96
        %v3297 = vpop.permute.xlu0 %3296
        %3298 = vrot.lane.b32.xlu0 %v3205, 96
        %v3299 = vpop.permute.xlu0 %3298
        %3300 = vrot.lane.b32.xlu0 %v3206, 96
        %v3301 = vpop.permute.xlu0 %3300
        %3302 = vrot.lane.b32.xlu0 %v3207, 96
        %v3303 = vpop.permute.xlu0 %3302
        %v3336 = vsel %vm2268, %v3241, 0.0
        %3337 = vadd.xlane.f32.xlu0 %v3336
        %v3338 = vpop.xlane.xlu0 %3337
        %v3339 = vsel %vm2268, %v3243, 0.0
        %3340 = vadd.xlane.f32.xlu0 %v3339
        %v3341 = vpop.xlane.xlu0 %3340
        %v3342 = vsel %vm2268, %v3245, 0.0
        %3343 = vadd.xlane.f32.xlu0 %v3342
        %v3344 = vpop.xlane.xlu0 %3343
        %v3345 = vsel %vm2268, %v3247, 0.0
        %3346 = vadd.xlane.f32.xlu0 %v3345
        %v3347 = vpop.xlane.xlu0 %3346
        %v3348 = vsel %vm2268, %v3249, 0.0
        %3349 = vadd.xlane.f32.xlu0 %v3348
        %v3350 = vpop.xlane.xlu0 %3349
        %v3351 = vsel %vm2268, %v3251, 0.0
        %3352 = vadd.xlane.f32.xlu0 %v3351
        %v3353 = vpop.xlane.xlu0 %3352
        %v3354 = vsel %vm2268, %v3253, 0.0
        %3355 = vadd.xlane.f32.xlu0 %v3354
        %v3356 = vpop.xlane.xlu0 %3355
        %v3357 = vsel %vm2268, %v3255, 0.0
        %3358 = vadd.xlane.f32.xlu0 %v3357
        %v3359 = vpop.xlane.xlu0 %3358
        %v3360 = vsel %vm2268, %v3257, 0.0
        %3361 = vadd.xlane.f32.xlu0 %v3360
        %v3362 = vpop.xlane.xlu0 %3361
        %v3363 = vsel %vm2268, %v3259, 0.0
        %3364 = vadd.xlane.f32.xlu0 %v3363
        %v3365 = vpop.xlane.xlu0 %3364
        %v3366 = vsel %vm2268, %v3261, 0.0
        %3367 = vadd.xlane.f32.xlu0 %v3366
        %v3368 = vpop.xlane.xlu0 %3367
        %v3369 = vsel %vm2268, %v3263, 0.0
        %3370 = vadd.xlane.f32.xlu0 %v3369
        %v3371 = vpop.xlane.xlu0 %3370
        %v3372 = vsel %vm2268, %v3265, 0.0
        %3373 = vadd.xlane.f32.xlu0 %v3372
        %v3374 = vpop.xlane.xlu0 %3373
        %v3375 = vsel %vm2268, %v3267, 0.0
        %3376 = vadd.xlane.f32.xlu0 %v3375
        %v3377 = vpop.xlane.xlu0 %3376
        %v3378 = vsel %vm2268, %v3269, 0.0
        %3379 = vadd.xlane.f32.xlu0 %v3378
        %v3380 = vpop.xlane.xlu0 %3379
        %v3381 = vsel %vm2268, %v3271, 0.0
        %3382 = vadd.xlane.f32.xlu0 %v3381
        %v3383 = vpop.xlane.xlu0 %3382
        %v3384 = vsel %vm2268, %v3273, 0.0
        %3385 = vadd.xlane.f32.xlu0 %v3384
        %v3386 = vpop.xlane.xlu0 %3385
        %v3387 = vsel %vm2268, %v3275, 0.0
        %3388 = vadd.xlane.f32.xlu0 %v3387
        %v3389 = vpop.xlane.xlu0 %3388
        %v3390 = vsel %vm2268, %v3277, 0.0
        %3391 = vadd.xlane.f32.xlu0 %v3390
        %v3392 = vpop.xlane.xlu0 %3391
        %v3393 = vsel %vm2268, %v3279, 0.0
        %3394 = vadd.xlane.f32.xlu0 %v3393
        %v3395 = vpop.xlane.xlu0 %3394
        %v3396 = vsel %vm2268, %v3281, 0.0
        %3397 = vadd.xlane.f32.xlu0 %v3396
        %v3398 = vpop.xlane.xlu0 %3397
        %v3399 = vsel %vm2268, %v3283, 0.0
        %3400 = vadd.xlane.f32.xlu0 %v3399
        %v3401 = vpop.xlane.xlu0 %3400
        %v3402 = vsel %vm2268, %v3285, 0.0
        %3403 = vadd.xlane.f32.xlu0 %v3402
        %v3404 = vpop.xlane.xlu0 %3403
        %v3405 = vsel %vm2268, %v3287, 0.0
        %3406 = vadd.xlane.f32.xlu0 %v3405
        %v3407 = vpop.xlane.xlu0 %3406
        %v3408 = vsel %vm2268, %v3289, 0.0
        %3409 = vadd.xlane.f32.xlu0 %v3408
        %v3410 = vpop.xlane.xlu0 %3409
        %v3411 = vsel %vm2268, %v3291, 0.0
        %3412 = vadd.xlane.f32.xlu0 %v3411
        %v3413 = vpop.xlane.xlu0 %3412
        %v3414 = vsel %vm2268, %v3293, 0.0
        %3415 = vadd.xlane.f32.xlu0 %v3414
        %v3416 = vpop.xlane.xlu0 %3415
        %v3417 = vsel %vm2268, %v3295, 0.0
        %3418 = vadd.xlane.f32.xlu0 %v3417
        %v3419 = vpop.xlane.xlu0 %3418
        %v3420 = vsel %vm2268, %v3297, 0.0
        %3421 = vadd.xlane.f32.xlu0 %v3420
        %v3422 = vpop.xlane.xlu0 %3421
        %v3423 = vsel %vm2268, %v3299, 0.0
        %3424 = vadd.xlane.f32.xlu0 %v3423
        %v3425 = vpop.xlane.xlu0 %3424
        %v3426 = vsel %vm2268, %v3301, 0.0
        %3427 = vadd.xlane.f32.xlu0 %v3426
        %v3428 = vpop.xlane.xlu0 %3427
        %v3429 = vsel %vm2268, %v3303, 0.0
        %3430 = vadd.xlane.f32.xlu0 %v3429
        %v3431 = vpop.xlane.xlu0 %3430
        %s3432 = scalar_lea.vmem [#allocation8], 80
        %v3433 = vld [vmem:[%s3432] sm:$0xff]
        %v3434 = vld [vmem:[%s3432 + $0x8] sm:$0xff]
        %3437 = vrot.lane.b32.xlu0 %v3433, 32
        %v3438 = vpop.permute.xlu0 %3437
        %3439 = vrot.lane.b32.xlu0 %v3434, 32
        %v3440 = vpop.permute.xlu0 %3439
        %v3443 = vmul.f32 %v2493, %v3438
        %v3444 = vmul.f32 %v2494, %v3440
        %v3445 = vmul.f32 %v2495, %v3438
        %v3446 = vmul.f32 %v2496, %v3440
        %v3447 = vmul.f32 %v2497, %v3438
        %v3448 = vmul.f32 %v2498, %v3440
        %v3449 = vmul.f32 %v2499, %v3438
        %v3450 = vmul.f32 %v2500, %v3440
        %v3451 = vmul.f32 %v2501, %v3438
        %v3452 = vmul.f32 %v2502, %v3440
        %v3453 = vmul.f32 %v2503, %v3438
        %v3454 = vmul.f32 %v2504, %v3440
        %v3455 = vmul.f32 %v2505, %v3438
        %v3456 = vmul.f32 %v2506, %v3440
        %v3457 = vmul.f32 %v2507, %v3438
        %v3458 = vmul.f32 %v2508, %v3440
        %v3459 = vmul.f32 %v2509, %v3438
        %v3460 = vmul.f32 %v2510, %v3440
        %v3461 = vmul.f32 %v2511, %v3438
        %v3462 = vmul.f32 %v2512, %v3440
        %v3463 = vmul.f32 %v2513, %v3438
        %v3464 = vmul.f32 %v2514, %v3440
        %v3465 = vmul.f32 %v2515, %v3438
        %v3466 = vmul.f32 %v2516, %v3440
        %v3467 = vmul.f32 %v2517, %v3438
        %v3468 = vmul.f32 %v2518, %v3440
        %v3469 = vmul.f32 %v2519, %v3438
        %v3470 = vmul.f32 %v2520, %v3440
        %v3471 = vmul.f32 %v2521, %v3438
        %v3472 = vmul.f32 %v2522, %v3440
        %v3473 = vmul.f32 %v2523, %v3438
        %v3474 = vmul.f32 %v2524, %v3440
        %3507 = vrot.lane.b32.xlu0 %v3443, 96
        %v3508 = vpop.permute.xlu0 %3507
        %3509 = vrot.lane.b32.xlu0 %v3444, 96
        %v3510 = vpop.permute.xlu0 %3509
        %3511 = vrot.lane.b32.xlu0 %v3445, 96
        %v3512 = vpop.permute.xlu0 %3511
        %3513 = vrot.lane.b32.xlu0 %v3446, 96
        %v3514 = vpop.permute.xlu0 %3513
        %3515 = vrot.lane.b32.xlu0 %v3447, 96
        %v3516 = vpop.permute.xlu0 %3515
        %3517 = vrot.lane.b32.xlu0 %v3448, 96
        %v3518 = vpop.permute.xlu0 %3517
        %3519 = vrot.lane.b32.xlu0 %v3449, 96
        %v3520 = vpop.permute.xlu0 %3519
        %3521 = vrot.lane.b32.xlu0 %v3450, 96
        %v3522 = vpop.permute.xlu0 %3521
        %3523 = vrot.lane.b32.xlu0 %v3451, 96
        %v3524 = vpop.permute.xlu0 %3523
        %3525 = vrot.lane.b32.xlu0 %v3452, 96
        %v3526 = vpop.permute.xlu0 %3525
        %3527 = vrot.lane.b32.xlu0 %v3453, 96
        %v3528 = vpop.permute.xlu0 %3527
        %3529 = vrot.lane.b32.xlu0 %v3454, 96
        %v3530 = vpop.permute.xlu0 %3529
        %3531 = vrot.lane.b32.xlu0 %v3455, 96
        %v3532 = vpop.permute.xlu0 %3531
        %3533 = vrot.lane.b32.xlu0 %v3456, 96
        %v3534 = vpop.permute.xlu0 %3533
        %3535 = vrot.lane.b32.xlu0 %v3457, 96
        %v3536 = vpop.permute.xlu0 %3535
        %3537 = vrot.lane.b32.xlu0 %v3458, 96
        %v3538 = vpop.permute.xlu0 %3537
        %3539 = vrot.lane.b32.xlu0 %v3459, 96
        %v3540 = vpop.permute.xlu0 %3539
        %3541 = vrot.lane.b32.xlu0 %v3460, 96
        %v3542 = vpop.permute.xlu0 %3541
        %3543 = vrot.lane.b32.xlu0 %v3461, 96
        %v3544 = vpop.permute.xlu0 %3543
        %3545 = vrot.lane.b32.xlu0 %v3462, 96
        %v3546 = vpop.permute.xlu0 %3545
        %3547 = vrot.lane.b32.xlu0 %v3463, 96
        %v3548 = vpop.permute.xlu0 %3547
        %3549 = vrot.lane.b32.xlu0 %v3464, 96
        %v3550 = vpop.permute.xlu0 %3549
        %3551 = vrot.lane.b32.xlu0 %v3465, 96
        %v3552 = vpop.permute.xlu0 %3551
        %3553 = vrot.lane.b32.xlu0 %v3466, 96
        %v3554 = vpop.permute.xlu0 %3553
        %3555 = vrot.lane.b32.xlu0 %v3467, 96
        %v3556 = vpop.permute.xlu0 %3555
        %3557 = vrot.lane.b32.xlu0 %v3468, 96
        %v3558 = vpop.permute.xlu0 %3557
        %3559 = vrot.lane.b32.xlu0 %v3469, 96
        %v3560 = vpop.permute.xlu0 %3559
        %3561 = vrot.lane.b32.xlu0 %v3470, 96
        %v3562 = vpop.permute.xlu0 %3561
        %3563 = vrot.lane.b32.xlu0 %v3471, 96
        %v3564 = vpop.permute.xlu0 %3563
        %3565 = vrot.lane.b32.xlu0 %v3472, 96
        %v3566 = vpop.permute.xlu0 %3565
        %3567 = vrot.lane.b32.xlu0 %v3473, 96
        %v3568 = vpop.permute.xlu0 %3567
        %3569 = vrot.lane.b32.xlu0 %v3474, 96
        %v3570 = vpop.permute.xlu0 %3569
        %v3603 = vsel %vm2268, %v3508, 0.0
        %3604 = vadd.xlane.f32.xlu0 %v3603
        %v3605 = vpop.xlane.xlu0 %3604
        %v3606 = vsel %vm2268, %v3510, 0.0
        %3607 = vadd.xlane.f32.xlu0 %v3606
        %v3608 = vpop.xlane.xlu0 %3607
        %v3609 = vsel %vm2268, %v3512, 0.0
        %3610 = vadd.xlane.f32.xlu0 %v3609
        %v3611 = vpop.xlane.xlu0 %3610
        %v3612 = vsel %vm2268, %v3514, 0.0
        %3613 = vadd.xlane.f32.xlu0 %v3612
        %v3614 = vpop.xlane.xlu0 %3613
        %v3615 = vsel %vm2268, %v3516, 0.0
        %3616 = vadd.xlane.f32.xlu0 %v3615
        %v3617 = vpop.xlane.xlu0 %3616
        %v3618 = vsel %vm2268, %v3518, 0.0
        %3619 = vadd.xlane.f32.xlu0 %v3618
        %v3620 = vpop.xlane.xlu0 %3619
        %v3621 = vsel %vm2268, %v3520, 0.0
        %3622 = vadd.xlane.f32.xlu0 %v3621
        %v3623 = vpop.xlane.xlu0 %3622
        %v3624 = vsel %vm2268, %v3522, 0.0
        %3625 = vadd.xlane.f32.xlu0 %v3624
        %v3626 = vpop.xlane.xlu0 %3625
        %v3627 = vsel %vm2268, %v3524, 0.0
        %3628 = vadd.xlane.f32.xlu0 %v3627
        %v3629 = vpop.xlane.xlu0 %3628
        %v3630 = vsel %vm2268, %v3526, 0.0
        %3631 = vadd.xlane.f32.xlu0 %v3630
        %v3632 = vpop.xlane.xlu0 %3631
        %v3633 = vsel %vm2268, %v3528, 0.0
        %3634 = vadd.xlane.f32.xlu0 %v3633
        %v3635 = vpop.xlane.xlu0 %3634
        %v3636 = vsel %vm2268, %v3530, 0.0
        %3637 = vadd.xlane.f32.xlu0 %v3636
        %v3638 = vpop.xlane.xlu0 %3637
        %v3639 = vsel %vm2268, %v3532, 0.0
        %3640 = vadd.xlane.f32.xlu0 %v3639
        %v3641 = vpop.xlane.xlu0 %3640
        %v3642 = vsel %vm2268, %v3534, 0.0
        %3643 = vadd.xlane.f32.xlu0 %v3642
        %v3644 = vpop.xlane.xlu0 %3643
        %v3645 = vsel %vm2268, %v3536, 0.0
        %3646 = vadd.xlane.f32.xlu0 %v3645
        %v3647 = vpop.xlane.xlu0 %3646
        %v3648 = vsel %vm2268, %v3538, 0.0
        %3649 = vadd.xlane.f32.xlu0 %v3648
        %v3650 = vpop.xlane.xlu0 %3649
        %v3651 = vsel %vm2268, %v3540, 0.0
        %3652 = vadd.xlane.f32.xlu0 %v3651
        %v3653 = vpop.xlane.xlu0 %3652
        %v3654 = vsel %vm2268, %v3542, 0.0
        %3655 = vadd.xlane.f32.xlu0 %v3654
        %v3656 = vpop.xlane.xlu0 %3655
        %v3657 = vsel %vm2268, %v3544, 0.0
        %3658 = vadd.xlane.f32.xlu0 %v3657
        %v3659 = vpop.xlane.xlu0 %3658
        %v3660 = vsel %vm2268, %v3546, 0.0
        %3661 = vadd.xlane.f32.xlu0 %v3660
        %v3662 = vpop.xlane.xlu0 %3661
        %v3663 = vsel %vm2268, %v3548, 0.0
        %3664 = vadd.xlane.f32.xlu0 %v3663
        %v3665 = vpop.xlane.xlu0 %3664
        %v3666 = vsel %vm2268, %v3550, 0.0
        %3667 = vadd.xlane.f32.xlu0 %v3666
        %v3668 = vpop.xlane.xlu0 %3667
        %v3669 = vsel %vm2268, %v3552, 0.0
        %3670 = vadd.xlane.f32.xlu0 %v3669
        %v3671 = vpop.xlane.xlu0 %3670
        %v3672 = vsel %vm2268, %v3554, 0.0
        %3673 = vadd.xlane.f32.xlu0 %v3672
        %v3674 = vpop.xlane.xlu0 %3673
        %v3675 = vsel %vm2268, %v3556, 0.0
        %3676 = vadd.xlane.f32.xlu0 %v3675
        %v3677 = vpop.xlane.xlu0 %3676
        %v3678 = vsel %vm2268, %v3558, 0.0
        %3679 = vadd.xlane.f32.xlu0 %v3678
        %v3680 = vpop.xlane.xlu0 %3679
        %v3681 = vsel %vm2268, %v3560, 0.0
        %3682 = vadd.xlane.f32.xlu0 %v3681
        %v3683 = vpop.xlane.xlu0 %3682
        %v3684 = vsel %vm2268, %v3562, 0.0
        %3685 = vadd.xlane.f32.xlu0 %v3684
        %v3686 = vpop.xlane.xlu0 %3685
        %v3687 = vsel %vm2268, %v3564, 0.0
        %3688 = vadd.xlane.f32.xlu0 %v3687
        %v3689 = vpop.xlane.xlu0 %3688
        %v3690 = vsel %vm2268, %v3566, 0.0
        %3691 = vadd.xlane.f32.xlu0 %v3690
        %v3692 = vpop.xlane.xlu0 %3691
        %v3693 = vsel %vm2268, %v3568, 0.0
        %3694 = vadd.xlane.f32.xlu0 %v3693
        %v3695 = vpop.xlane.xlu0 %3694
        %v3696 = vsel %vm2268, %v3570, 0.0
        %3697 = vadd.xlane.f32.xlu0 %v3696
        %v3698 = vpop.xlane.xlu0 %3697
        %v3699 = vadd.f32 %v3338, %v3605
        %v3700 = vadd.f32 %v3341, %v3608
        %v3701 = vadd.f32 %v3344, %v3611
        %v3702 = vadd.f32 %v3347, %v3614
        %v3703 = vadd.f32 %v3350, %v3617
        %v3704 = vadd.f32 %v3353, %v3620
        %v3705 = vadd.f32 %v3356, %v3623
        %v3706 = vadd.f32 %v3359, %v3626
        %v3707 = vadd.f32 %v3362, %v3629
        %v3708 = vadd.f32 %v3365, %v3632
        %v3709 = vadd.f32 %v3368, %v3635
        %v3710 = vadd.f32 %v3371, %v3638
        %v3711 = vadd.f32 %v3374, %v3641
        %v3712 = vadd.f32 %v3377, %v3644
        %v3713 = vadd.f32 %v3380, %v3647
        %v3714 = vadd.f32 %v3383, %v3650
        %v3715 = vadd.f32 %v3386, %v3653
        %v3716 = vadd.f32 %v3389, %v3656
        %v3717 = vadd.f32 %v3392, %v3659
        %v3718 = vadd.f32 %v3395, %v3662
        %v3719 = vadd.f32 %v3398, %v3665
        %v3720 = vadd.f32 %v3401, %v3668
        %v3721 = vadd.f32 %v3404, %v3671
        %v3722 = vadd.f32 %v3407, %v3674
        %v3723 = vadd.f32 %v3410, %v3677
        %v3724 = vadd.f32 %v3413, %v3680
        %v3725 = vadd.f32 %v3416, %v3683
        %v3726 = vadd.f32 %v3419, %v3686
        %v3727 = vadd.f32 %v3422, %v3689
        %v3728 = vadd.f32 %v3425, %v3692
        %v3729 = vadd.f32 %v3428, %v3695
        %v3730 = vadd.f32 %v3431, %v3698
        %3731 = vrot.lane.b32.xlu0 %v914, 64
        %v3732 = vpop.permute.xlu0 %3731
        %3733 = vrot.lane.b32.xlu0 %v918, 64
        %v3734 = vpop.permute.xlu0 %3733
        %3735 = vrot.lane.b32.xlu0 %v922, 64
        %v3736 = vpop.permute.xlu0 %3735
        %3737 = vrot.lane.b32.xlu0 %v926, 64
        %v3738 = vpop.permute.xlu0 %3737
        %3739 = vrot.lane.b32.xlu0 %v930, 64
        %v3740 = vpop.permute.xlu0 %3739
        %3741 = vrot.lane.b32.xlu0 %v934, 64
        %v3742 = vpop.permute.xlu0 %3741
        %3743 = vrot.lane.b32.xlu0 %v938, 64
        %v3744 = vpop.permute.xlu0 %3743
        %3745 = vrot.lane.b32.xlu0 %v942, 64
        %v3746 = vpop.permute.xlu0 %3745
        %3747 = vrot.lane.b32.xlu0 %v946, 64
        %v3748 = vpop.permute.xlu0 %3747
        %3749 = vrot.lane.b32.xlu0 %v950, 64
        %v3750 = vpop.permute.xlu0 %3749
        %3751 = vrot.lane.b32.xlu0 %v954, 64
        %v3752 = vpop.permute.xlu0 %3751
        %3753 = vrot.lane.b32.xlu0 %v958, 64
        %v3754 = vpop.permute.xlu0 %3753
        %3755 = vrot.lane.b32.xlu0 %v962, 64
        %v3756 = vpop.permute.xlu0 %3755
        %3757 = vrot.lane.b32.xlu0 %v966, 64
        %v3758 = vpop.permute.xlu0 %3757
        %3759 = vrot.lane.b32.xlu0 %v970, 64
        %v3760 = vpop.permute.xlu0 %3759
        %3761 = vrot.lane.b32.xlu0 %v974, 64
        %v3762 = vpop.permute.xlu0 %3761
        %v3779 = vmul.f32 %v2493, %v3732
        %v3780 = vmul.f32 %v2494, %v3732
        %v3781 = vmul.f32 %v2495, %v3734
        %v3782 = vmul.f32 %v2496, %v3734
        %v3783 = vmul.f32 %v2497, %v3736
        %v3784 = vmul.f32 %v2498, %v3736
        %v3785 = vmul.f32 %v2499, %v3738
        %v3786 = vmul.f32 %v2500, %v3738
        %v3787 = vmul.f32 %v2501, %v3740
        %v3788 = vmul.f32 %v2502, %v3740
        %v3789 = vmul.f32 %v2503, %v3742
        %v3790 = vmul.f32 %v2504, %v3742
        %v3791 = vmul.f32 %v2505, %v3744
        %v3792 = vmul.f32 %v2506, %v3744
        %v3793 = vmul.f32 %v2507, %v3746
        %v3794 = vmul.f32 %v2508, %v3746
        %v3795 = vmul.f32 %v2509, %v3748
        %v3796 = vmul.f32 %v2510, %v3748
        %v3797 = vmul.f32 %v2511, %v3750
        %v3798 = vmul.f32 %v2512, %v3750
        %v3799 = vmul.f32 %v2513, %v3752
        %v3800 = vmul.f32 %v2514, %v3752
        %v3801 = vmul.f32 %v2515, %v3754
        %v3802 = vmul.f32 %v2516, %v3754
        %v3803 = vmul.f32 %v2517, %v3756
        %v3804 = vmul.f32 %v2518, %v3756
        %v3805 = vmul.f32 %v2519, %v3758
        %v3806 = vmul.f32 %v2520, %v3758
        %v3807 = vmul.f32 %v2521, %v3760
        %v3808 = vmul.f32 %v2522, %v3760
        %v3809 = vmul.f32 %v2523, %v3762
        %v3810 = vmul.f32 %v2524, %v3762
        %3843 = vrot.lane.b32.xlu0 %v3779, 96
        %v3844 = vpop.permute.xlu0 %3843
        %3845 = vrot.lane.b32.xlu0 %v3780, 96
        %v3846 = vpop.permute.xlu0 %3845
        %3847 = vrot.lane.b32.xlu0 %v3781, 96
        %v3848 = vpop.permute.xlu0 %3847
        %3849 = vrot.lane.b32.xlu0 %v3782, 96
        %v3850 = vpop.permute.xlu0 %3849
        %3851 = vrot.lane.b32.xlu0 %v3783, 96
        %v3852 = vpop.permute.xlu0 %3851
        %3853 = vrot.lane.b32.xlu0 %v3784, 96
        %v3854 = vpop.permute.xlu0 %3853
        %3855 = vrot.lane.b32.xlu0 %v3785, 96
        %v3856 = vpop.permute.xlu0 %3855
        %3857 = vrot.lane.b32.xlu0 %v3786, 96
        %v3858 = vpop.permute.xlu0 %3857
        %3859 = vrot.lane.b32.xlu0 %v3787, 96
        %v3860 = vpop.permute.xlu0 %3859
        %3861 = vrot.lane.b32.xlu0 %v3788, 96
        %v3862 = vpop.permute.xlu0 %3861
        %3863 = vrot.lane.b32.xlu0 %v3789, 96
        %v3864 = vpop.permute.xlu0 %3863
        %3865 = vrot.lane.b32.xlu0 %v3790, 96
        %v3866 = vpop.permute.xlu0 %3865
        %3867 = vrot.lane.b32.xlu0 %v3791, 96
        %v3868 = vpop.permute.xlu0 %3867
        %3869 = vrot.lane.b32.xlu0 %v3792, 96
        %v3870 = vpop.permute.xlu0 %3869
        %3871 = vrot.lane.b32.xlu0 %v3793, 96
        %v3872 = vpop.permute.xlu0 %3871
        %3873 = vrot.lane.b32.xlu0 %v3794, 96
        %v3874 = vpop.permute.xlu0 %3873
        %3875 = vrot.lane.b32.xlu0 %v3795, 96
        %v3876 = vpop.permute.xlu0 %3875
        %3877 = vrot.lane.b32.xlu0 %v3796, 96
        %v3878 = vpop.permute.xlu0 %3877
        %3879 = vrot.lane.b32.xlu0 %v3797, 96
        %v3880 = vpop.permute.xlu0 %3879
        %3881 = vrot.lane.b32.xlu0 %v3798, 96
        %v3882 = vpop.permute.xlu0 %3881
        %3883 = vrot.lane.b32.xlu0 %v3799, 96
        %v3884 = vpop.permute.xlu0 %3883
        %3885 = vrot.lane.b32.xlu0 %v3800, 96
        %v3886 = vpop.permute.xlu0 %3885
        %3887 = vrot.lane.b32.xlu0 %v3801, 96
        %v3888 = vpop.permute.xlu0 %3887
        %3889 = vrot.lane.b32.xlu0 %v3802, 96
        %v3890 = vpop.permute.xlu0 %3889
        %3891 = vrot.lane.b32.xlu0 %v3803, 96
        %v3892 = vpop.permute.xlu0 %3891
        %3893 = vrot.lane.b32.xlu0 %v3804, 96
        %v3894 = vpop.permute.xlu0 %3893
        %3895 = vrot.lane.b32.xlu0 %v3805, 96
        %v3896 = vpop.permute.xlu0 %3895
        %3897 = vrot.lane.b32.xlu0 %v3806, 96
        %v3898 = vpop.permute.xlu0 %3897
        %3899 = vrot.lane.b32.xlu0 %v3807, 96
        %v3900 = vpop.permute.xlu0 %3899
        %3901 = vrot.lane.b32.xlu0 %v3808, 96
        %v3902 = vpop.permute.xlu0 %3901
        %3903 = vrot.lane.b32.xlu0 %v3809, 96
        %v3904 = vpop.permute.xlu0 %3903
        %3905 = vrot.lane.b32.xlu0 %v3810, 96
        %v3906 = vpop.permute.xlu0 %3905
        %v3939 = vsel %vm2268, %v3844, 0.0
        %3940 = vadd.xlane.f32.xlu0 %v3939
        %v3941 = vpop.xlane.xlu0 %3940
        %v3942 = vsel %vm2268, %v3846, 0.0
        %3943 = vadd.xlane.f32.xlu0 %v3942
        %v3944 = vpop.xlane.xlu0 %3943
        %v3945 = vsel %vm2268, %v3848, 0.0
        %3946 = vadd.xlane.f32.xlu0 %v3945
        %v3947 = vpop.xlane.xlu0 %3946
        %v3948 = vsel %vm2268, %v3850, 0.0
        %3949 = vadd.xlane.f32.xlu0 %v3948
        %v3950 = vpop.xlane.xlu0 %3949
        %v3951 = vsel %vm2268, %v3852, 0.0
        %3952 = vadd.xlane.f32.xlu0 %v3951
        %v3953 = vpop.xlane.xlu0 %3952
        %v3954 = vsel %vm2268, %v3854, 0.0
        %3955 = vadd.xlane.f32.xlu0 %v3954
        %v3956 = vpop.xlane.xlu0 %3955
        %v3957 = vsel %vm2268, %v3856, 0.0
        %3958 = vadd.xlane.f32.xlu0 %v3957
        %v3959 = vpop.xlane.xlu0 %3958
        %v3960 = vsel %vm2268, %v3858, 0.0
        %3961 = vadd.xlane.f32.xlu0 %v3960
        %v3962 = vpop.xlane.xlu0 %3961
        %v3963 = vsel %vm2268, %v3860, 0.0
        %3964 = vadd.xlane.f32.xlu0 %v3963
        %v3965 = vpop.xlane.xlu0 %3964
        %v3966 = vsel %vm2268, %v3862, 0.0
        %3967 = vadd.xlane.f32.xlu0 %v3966
        %v3968 = vpop.xlane.xlu0 %3967
        %v3969 = vsel %vm2268, %v3864, 0.0
        %3970 = vadd.xlane.f32.xlu0 %v3969
        %v3971 = vpop.xlane.xlu0 %3970
        %v3972 = vsel %vm2268, %v3866, 0.0
        %3973 = vadd.xlane.f32.xlu0 %v3972
        %v3974 = vpop.xlane.xlu0 %3973
        %v3975 = vsel %vm2268, %v3868, 0.0
        %3976 = vadd.xlane.f32.xlu0 %v3975
        %v3977 = vpop.xlane.xlu0 %3976
        %v3978 = vsel %vm2268, %v3870, 0.0
        %3979 = vadd.xlane.f32.xlu0 %v3978
        %v3980 = vpop.xlane.xlu0 %3979
        %v3981 = vsel %vm2268, %v3872, 0.0
        %3982 = vadd.xlane.f32.xlu0 %v3981
        %v3983 = vpop.xlane.xlu0 %3982
        %v3984 = vsel %vm2268, %v3874, 0.0
        %3985 = vadd.xlane.f32.xlu0 %v3984
        %v3986 = vpop.xlane.xlu0 %3985
        %v3987 = vsel %vm2268, %v3876, 0.0
        %3988 = vadd.xlane.f32.xlu0 %v3987
        %v3989 = vpop.xlane.xlu0 %3988
        %v3990 = vsel %vm2268, %v3878, 0.0
        %3991 = vadd.xlane.f32.xlu0 %v3990
        %v3992 = vpop.xlane.xlu0 %3991
        %v3993 = vsel %vm2268, %v3880, 0.0
        %3994 = vadd.xlane.f32.xlu0 %v3993
        %v3995 = vpop.xlane.xlu0 %3994
        %v3996 = vsel %vm2268, %v3882, 0.0
        %3997 = vadd.xlane.f32.xlu0 %v3996
        %v3998 = vpop.xlane.xlu0 %3997
        %v3999 = vsel %vm2268, %v3884, 0.0
        %4000 = vadd.xlane.f32.xlu0 %v3999
        %v4001 = vpop.xlane.xlu0 %4000
        %v4002 = vsel %vm2268, %v3886, 0.0
        %4003 = vadd.xlane.f32.xlu0 %v4002
        %v4004 = vpop.xlane.xlu0 %4003
        %v4005 = vsel %vm2268, %v3888, 0.0
        %4006 = vadd.xlane.f32.xlu0 %v4005
        %v4007 = vpop.xlane.xlu0 %4006
        %v4008 = vsel %vm2268, %v3890, 0.0
        %4009 = vadd.xlane.f32.xlu0 %v4008
        %v4010 = vpop.xlane.xlu0 %4009
        %v4011 = vsel %vm2268, %v3892, 0.0
        %4012 = vadd.xlane.f32.xlu0 %v4011
        %v4013 = vpop.xlane.xlu0 %4012
        %v4014 = vsel %vm2268, %v3894, 0.0
        %4015 = vadd.xlane.f32.xlu0 %v4014
        %v4016 = vpop.xlane.xlu0 %4015
        %v4017 = vsel %vm2268, %v3896, 0.0
        %4018 = vadd.xlane.f32.xlu0 %v4017
        %v4019 = vpop.xlane.xlu0 %4018
        %v4020 = vsel %vm2268, %v3898, 0.0
        %4021 = vadd.xlane.f32.xlu0 %v4020
        %v4022 = vpop.xlane.xlu0 %4021
        %v4023 = vsel %vm2268, %v3900, 0.0
        %4024 = vadd.xlane.f32.xlu0 %v4023
        %v4025 = vpop.xlane.xlu0 %4024
        %v4026 = vsel %vm2268, %v3902, 0.0
        %4027 = vadd.xlane.f32.xlu0 %v4026
        %v4028 = vpop.xlane.xlu0 %4027
        %v4029 = vsel %vm2268, %v3904, 0.0
        %4030 = vadd.xlane.f32.xlu0 %v4029
        %v4031 = vpop.xlane.xlu0 %4030
        %v4032 = vsel %vm2268, %v3906, 0.0
        %4033 = vadd.xlane.f32.xlu0 %v4032
        %v4034 = vpop.xlane.xlu0 %4033
        %s4035 = scalar_lea.vmem [#allocation8], 96
        %v4036 = vld [vmem:[%s4035] sm:$0xff]
        %v4037 = vld [vmem:[%s4035 + $0x8] sm:$0xff]
        %4040 = vrot.lane.b32.xlu0 %v4036, 32
        %v4041 = vpop.permute.xlu0 %4040
        %4042 = vrot.lane.b32.xlu0 %v4037, 32
        %v4043 = vpop.permute.xlu0 %4042
        %v4046 = vmul.f32 %v2493, %v4041
        %v4047 = vmul.f32 %v2494, %v4043
        %v4048 = vmul.f32 %v2495, %v4041
        %v4049 = vmul.f32 %v2496, %v4043
        %v4050 = vmul.f32 %v2497, %v4041
        %v4051 = vmul.f32 %v2498, %v4043
        %v4052 = vmul.f32 %v2499, %v4041
        %v4053 = vmul.f32 %v2500, %v4043
        %v4054 = vmul.f32 %v2501, %v4041
        %v4055 = vmul.f32 %v2502, %v4043
        %v4056 = vmul.f32 %v2503, %v4041
        %v4057 = vmul.f32 %v2504, %v4043
        %v4058 = vmul.f32 %v2505, %v4041
        %v4059 = vmul.f32 %v2506, %v4043
        %v4060 = vmul.f32 %v2507, %v4041
        %v4061 = vmul.f32 %v2508, %v4043
        %v4062 = vmul.f32 %v2509, %v4041
        %v4063 = vmul.f32 %v2510, %v4043
        %v4064 = vmul.f32 %v2511, %v4041
        %v4065 = vmul.f32 %v2512, %v4043
        %v4066 = vmul.f32 %v2513, %v4041
        %v4067 = vmul.f32 %v2514, %v4043
        %v4068 = vmul.f32 %v2515, %v4041
        %v4069 = vmul.f32 %v2516, %v4043
        %v4070 = vmul.f32 %v2517, %v4041
        %v4071 = vmul.f32 %v2518, %v4043
        %v4072 = vmul.f32 %v2519, %v4041
        %v4073 = vmul.f32 %v2520, %v4043
        %v4074 = vmul.f32 %v2521, %v4041
        %v4075 = vmul.f32 %v2522, %v4043
        %v4076 = vmul.f32 %v2523, %v4041
        %v4077 = vmul.f32 %v2524, %v4043
        %4110 = vrot.lane.b32.xlu0 %v4046, 96
        %v4111 = vpop.permute.xlu0 %4110
        %4112 = vrot.lane.b32.xlu0 %v4047, 96
        %v4113 = vpop.permute.xlu0 %4112
        %4114 = vrot.lane.b32.xlu0 %v4048, 96
        %v4115 = vpop.permute.xlu0 %4114
        %4116 = vrot.lane.b32.xlu0 %v4049, 96
        %v4117 = vpop.permute.xlu0 %4116
        %4118 = vrot.lane.b32.xlu0 %v4050, 96
        %v4119 = vpop.permute.xlu0 %4118
        %4120 = vrot.lane.b32.xlu0 %v4051, 96
        %v4121 = vpop.permute.xlu0 %4120
        %4122 = vrot.lane.b32.xlu0 %v4052, 96
        %v4123 = vpop.permute.xlu0 %4122
        %4124 = vrot.lane.b32.xlu0 %v4053, 96
        %v4125 = vpop.permute.xlu0 %4124
        %4126 = vrot.lane.b32.xlu0 %v4054, 96
        %v4127 = vpop.permute.xlu0 %4126
        %4128 = vrot.lane.b32.xlu0 %v4055, 96
        %v4129 = vpop.permute.xlu0 %4128
        %4130 = vrot.lane.b32.xlu0 %v4056, 96
        %v4131 = vpop.permute.xlu0 %4130
        %4132 = vrot.lane.b32.xlu0 %v4057, 96
        %v4133 = vpop.permute.xlu0 %4132
        %4134 = vrot.lane.b32.xlu0 %v4058, 96
        %v4135 = vpop.permute.xlu0 %4134
        %4136 = vrot.lane.b32.xlu0 %v4059, 96
        %v4137 = vpop.permute.xlu0 %4136
        %4138 = vrot.lane.b32.xlu0 %v4060, 96
        %v4139 = vpop.permute.xlu0 %4138
        %4140 = vrot.lane.b32.xlu0 %v4061, 96
        %v4141 = vpop.permute.xlu0 %4140
        %4142 = vrot.lane.b32.xlu0 %v4062, 96
        %v4143 = vpop.permute.xlu0 %4142
        %4144 = vrot.lane.b32.xlu0 %v4063, 96
        %v4145 = vpop.permute.xlu0 %4144
        %4146 = vrot.lane.b32.xlu0 %v4064, 96
        %v4147 = vpop.permute.xlu0 %4146
        %4148 = vrot.lane.b32.xlu0 %v4065, 96
        %v4149 = vpop.permute.xlu0 %4148
        %4150 = vrot.lane.b32.xlu0 %v4066, 96
        %v4151 = vpop.permute.xlu0 %4150
        %4152 = vrot.lane.b32.xlu0 %v4067, 96
        %v4153 = vpop.permute.xlu0 %4152
        %4154 = vrot.lane.b32.xlu0 %v4068, 96
        %v4155 = vpop.permute.xlu0 %4154
        %4156 = vrot.lane.b32.xlu0 %v4069, 96
        %v4157 = vpop.permute.xlu0 %4156
        %4158 = vrot.lane.b32.xlu0 %v4070, 96
        %v4159 = vpop.permute.xlu0 %4158
        %4160 = vrot.lane.b32.xlu0 %v4071, 96
        %v4161 = vpop.permute.xlu0 %4160
        %4162 = vrot.lane.b32.xlu0 %v4072, 96
        %v4163 = vpop.permute.xlu0 %4162
        %4164 = vrot.lane.b32.xlu0 %v4073, 96
        %v4165 = vpop.permute.xlu0 %4164
        %4166 = vrot.lane.b32.xlu0 %v4074, 96
        %v4167 = vpop.permute.xlu0 %4166
        %4168 = vrot.lane.b32.xlu0 %v4075, 96
        %v4169 = vpop.permute.xlu0 %4168
        %4170 = vrot.lane.b32.xlu0 %v4076, 96
        %v4171 = vpop.permute.xlu0 %4170
        %4172 = vrot.lane.b32.xlu0 %v4077, 96
        %v4173 = vpop.permute.xlu0 %4172
        %v4206 = vsel %vm2268, %v4111, 0.0
        %4207 = vadd.xlane.f32.xlu0 %v4206
        %v4208 = vpop.xlane.xlu0 %4207
        %v4209 = vsel %vm2268, %v4113, 0.0
        %4210 = vadd.xlane.f32.xlu0 %v4209
        %v4211 = vpop.xlane.xlu0 %4210
        %v4212 = vsel %vm2268, %v4115, 0.0
        %4213 = vadd.xlane.f32.xlu0 %v4212
        %v4214 = vpop.xlane.xlu0 %4213
        %v4215 = vsel %vm2268, %v4117, 0.0
        %4216 = vadd.xlane.f32.xlu0 %v4215
        %v4217 = vpop.xlane.xlu0 %4216
        %v4218 = vsel %vm2268, %v4119, 0.0
        %4219 = vadd.xlane.f32.xlu0 %v4218
        %v4220 = vpop.xlane.xlu0 %4219
        %v4221 = vsel %vm2268, %v4121, 0.0
        %4222 = vadd.xlane.f32.xlu0 %v4221
        %v4223 = vpop.xlane.xlu0 %4222
        %v4224 = vsel %vm2268, %v4123, 0.0
        %4225 = vadd.xlane.f32.xlu0 %v4224
        %v4226 = vpop.xlane.xlu0 %4225
        %v4227 = vsel %vm2268, %v4125, 0.0
        %4228 = vadd.xlane.f32.xlu0 %v4227
        %v4229 = vpop.xlane.xlu0 %4228
        %v4230 = vsel %vm2268, %v4127, 0.0
        %4231 = vadd.xlane.f32.xlu0 %v4230
        %v4232 = vpop.xlane.xlu0 %4231
        %v4233 = vsel %vm2268, %v4129, 0.0
        %4234 = vadd.xlane.f32.xlu0 %v4233
        %v4235 = vpop.xlane.xlu0 %4234
        %v4236 = vsel %vm2268, %v4131, 0.0
        %4237 = vadd.xlane.f32.xlu0 %v4236
        %v4238 = vpop.xlane.xlu0 %4237
        %v4239 = vsel %vm2268, %v4133, 0.0
        %4240 = vadd.xlane.f32.xlu0 %v4239
        %v4241 = vpop.xlane.xlu0 %4240
        %v4242 = vsel %vm2268, %v4135, 0.0
        %4243 = vadd.xlane.f32.xlu0 %v4242
        %v4244 = vpop.xlane.xlu0 %4243
        %v4245 = vsel %vm2268, %v4137, 0.0
        %4246 = vadd.xlane.f32.xlu0 %v4245
        %v4247 = vpop.xlane.xlu0 %4246
        %v4248 = vsel %vm2268, %v4139, 0.0
        %4249 = vadd.xlane.f32.xlu0 %v4248
        %v4250 = vpop.xlane.xlu0 %4249
        %v4251 = vsel %vm2268, %v4141, 0.0
        %4252 = vadd.xlane.f32.xlu0 %v4251
        %v4253 = vpop.xlane.xlu0 %4252
        %v4254 = vsel %vm2268, %v4143, 0.0
        %4255 = vadd.xlane.f32.xlu0 %v4254
        %v4256 = vpop.xlane.xlu0 %4255
        %v4257 = vsel %vm2268, %v4145, 0.0
        %4258 = vadd.xlane.f32.xlu0 %v4257
        %v4259 = vpop.xlane.xlu0 %4258
        %v4260 = vsel %vm2268, %v4147, 0.0
        %4261 = vadd.xlane.f32.xlu0 %v4260
        %v4262 = vpop.xlane.xlu0 %4261
        %v4263 = vsel %vm2268, %v4149, 0.0
        %4264 = vadd.xlane.f32.xlu0 %v4263
        %v4265 = vpop.xlane.xlu0 %4264
        %v4266 = vsel %vm2268, %v4151, 0.0
        %4267 = vadd.xlane.f32.xlu0 %v4266
        %v4268 = vpop.xlane.xlu0 %4267
        %v4269 = vsel %vm2268, %v4153, 0.0
        %4270 = vadd.xlane.f32.xlu0 %v4269
        %v4271 = vpop.xlane.xlu0 %4270
        %v4272 = vsel %vm2268, %v4155, 0.0
        %4273 = vadd.xlane.f32.xlu0 %v4272
        %v4274 = vpop.xlane.xlu0 %4273
        %v4275 = vsel %vm2268, %v4157, 0.0
        %4276 = vadd.xlane.f32.xlu0 %v4275
        %v4277 = vpop.xlane.xlu0 %4276
        %v4278 = vsel %vm2268, %v4159, 0.0
        %4279 = vadd.xlane.f32.xlu0 %v4278
        %v4280 = vpop.xlane.xlu0 %4279
        %v4281 = vsel %vm2268, %v4161, 0.0
        %4282 = vadd.xlane.f32.xlu0 %v4281
        %v4283 = vpop.xlane.xlu0 %4282
        %v4284 = vsel %vm2268, %v4163, 0.0
        %4285 = vadd.xlane.f32.xlu0 %v4284
        %v4286 = vpop.xlane.xlu0 %4285
        %v4287 = vsel %vm2268, %v4165, 0.0
        %4288 = vadd.xlane.f32.xlu0 %v4287
        %v4289 = vpop.xlane.xlu0 %4288
        %v4290 = vsel %vm2268, %v4167, 0.0
        %4291 = vadd.xlane.f32.xlu0 %v4290
        %v4292 = vpop.xlane.xlu0 %4291
        %v4293 = vsel %vm2268, %v4169, 0.0
        %4294 = vadd.xlane.f32.xlu0 %v4293
        %v4295 = vpop.xlane.xlu0 %4294
        %v4296 = vsel %vm2268, %v4171, 0.0
        %4297 = vadd.xlane.f32.xlu0 %v4296
        %v4298 = vpop.xlane.xlu0 %4297
        %v4299 = vsel %vm2268, %v4173, 0.0
        %4300 = vadd.xlane.f32.xlu0 %v4299
        %v4301 = vpop.xlane.xlu0 %4300
        %v4302 = vadd.f32 %v3941, %v4208
        %v4303 = vadd.f32 %v3944, %v4211
        %v4304 = vadd.f32 %v3947, %v4214
        %v4305 = vadd.f32 %v3950, %v4217
        %v4306 = vadd.f32 %v3953, %v4220
        %v4307 = vadd.f32 %v3956, %v4223
        %v4308 = vadd.f32 %v3959, %v4226
        %v4309 = vadd.f32 %v3962, %v4229
        %v4310 = vadd.f32 %v3965, %v4232
        %v4311 = vadd.f32 %v3968, %v4235
        %v4312 = vadd.f32 %v3971, %v4238
        %v4313 = vadd.f32 %v3974, %v4241
        %v4314 = vadd.f32 %v3977, %v4244
        %v4315 = vadd.f32 %v3980, %v4247
        %v4316 = vadd.f32 %v3983, %v4250
        %v4317 = vadd.f32 %v3986, %v4253
        %v4318 = vadd.f32 %v3989, %v4256
        %v4319 = vadd.f32 %v3992, %v4259
        %v4320 = vadd.f32 %v3995, %v4262
        %v4321 = vadd.f32 %v3998, %v4265
        %v4322 = vadd.f32 %v4001, %v4268
        %v4323 = vadd.f32 %v4004, %v4271
        %v4324 = vadd.f32 %v4007, %v4274
        %v4325 = vadd.f32 %v4010, %v4277
        %v4326 = vadd.f32 %v4013, %v4280
        %v4327 = vadd.f32 %v4016, %v4283
        %v4328 = vadd.f32 %v4019, %v4286
        %v4329 = vadd.f32 %v4022, %v4289
        %v4330 = vadd.f32 %v4025, %v4292
        %v4331 = vadd.f32 %v4028, %v4295
        %v4332 = vadd.f32 %v4031, %v4298
        %v4333 = vadd.f32 %v4034, %v4301
        %4334 = vrot.lane.b32.xlu0 %v914, 48
        %v4335 = vpop.permute.xlu0 %4334
        %4336 = vrot.lane.b32.xlu0 %v918, 48
        %v4337 = vpop.permute.xlu0 %4336
        %4338 = vrot.lane.b32.xlu0 %v922, 48
        %v4339 = vpop.permute.xlu0 %4338
        %4340 = vrot.lane.b32.xlu0 %v926, 48
        %v4341 = vpop.permute.xlu0 %4340
        %4342 = vrot.lane.b32.xlu0 %v930, 48
        %v4343 = vpop.permute.xlu0 %4342
        %4344 = vrot.lane.b32.xlu0 %v934, 48
        %v4345 = vpop.permute.xlu0 %4344
        %4346 = vrot.lane.b32.xlu0 %v938, 48
        %v4347 = vpop.permute.xlu0 %4346
        %4348 = vrot.lane.b32.xlu0 %v942, 48
        %v4349 = vpop.permute.xlu0 %4348
        %4350 = vrot.lane.b32.xlu0 %v946, 48
        %v4351 = vpop.permute.xlu0 %4350
        %4352 = vrot.lane.b32.xlu0 %v950, 48
        %v4353 = vpop.permute.xlu0 %4352
        %4354 = vrot.lane.b32.xlu0 %v954, 48
        %v4355 = vpop.permute.xlu0 %4354
        %4356 = vrot.lane.b32.xlu0 %v958, 48
        %v4357 = vpop.permute.xlu0 %4356
        %4358 = vrot.lane.b32.xlu0 %v962, 48
        %v4359 = vpop.permute.xlu0 %4358
        %4360 = vrot.lane.b32.xlu0 %v966, 48
        %v4361 = vpop.permute.xlu0 %4360
        %4362 = vrot.lane.b32.xlu0 %v970, 48
        %v4363 = vpop.permute.xlu0 %4362
        %4364 = vrot.lane.b32.xlu0 %v974, 48
        %v4365 = vpop.permute.xlu0 %4364
        %v4382 = vmul.f32 %v2493, %v4335
        %v4383 = vmul.f32 %v2494, %v4335
        %v4384 = vmul.f32 %v2495, %v4337
        %v4385 = vmul.f32 %v2496, %v4337
        %v4386 = vmul.f32 %v2497, %v4339
        %v4387 = vmul.f32 %v2498, %v4339
        %v4388 = vmul.f32 %v2499, %v4341
        %v4389 = vmul.f32 %v2500, %v4341
        %v4390 = vmul.f32 %v2501, %v4343
        %v4391 = vmul.f32 %v2502, %v4343
        %v4392 = vmul.f32 %v2503, %v4345
        %v4393 = vmul.f32 %v2504, %v4345
        %v4394 = vmul.f32 %v2505, %v4347
        %v4395 = vmul.f32 %v2506, %v4347
        %v4396 = vmul.f32 %v2507, %v4349
        %v4397 = vmul.f32 %v2508, %v4349
        %v4398 = vmul.f32 %v2509, %v4351
        %v4399 = vmul.f32 %v2510, %v4351
        %v4400 = vmul.f32 %v2511, %v4353
        %v4401 = vmul.f32 %v2512, %v4353
        %v4402 = vmul.f32 %v2513, %v4355
        %v4403 = vmul.f32 %v2514, %v4355
        %v4404 = vmul.f32 %v2515, %v4357
        %v4405 = vmul.f32 %v2516, %v4357
        %v4406 = vmul.f32 %v2517, %v4359
        %v4407 = vmul.f32 %v2518, %v4359
        %v4408 = vmul.f32 %v2519, %v4361
        %v4409 = vmul.f32 %v2520, %v4361
        %v4410 = vmul.f32 %v2521, %v4363
        %v4411 = vmul.f32 %v2522, %v4363
        %v4412 = vmul.f32 %v2523, %v4365
        %v4413 = vmul.f32 %v2524, %v4365
        %4446 = vrot.lane.b32.xlu0 %v4382, 96
        %v4447 = vpop.permute.xlu0 %4446
        %4448 = vrot.lane.b32.xlu0 %v4383, 96
        %v4449 = vpop.permute.xlu0 %4448
        %4450 = vrot.lane.b32.xlu0 %v4384, 96
        %v4451 = vpop.permute.xlu0 %4450
        %4452 = vrot.lane.b32.xlu0 %v4385, 96
        %v4453 = vpop.permute.xlu0 %4452
        %4454 = vrot.lane.b32.xlu0 %v4386, 96
        %v4455 = vpop.permute.xlu0 %4454
        %4456 = vrot.lane.b32.xlu0 %v4387, 96
        %v4457 = vpop.permute.xlu0 %4456
        %4458 = vrot.lane.b32.xlu0 %v4388, 96
        %v4459 = vpop.permute.xlu0 %4458
        %4460 = vrot.lane.b32.xlu0 %v4389, 96
        %v4461 = vpop.permute.xlu0 %4460
        %4462 = vrot.lane.b32.xlu0 %v4390, 96
        %v4463 = vpop.permute.xlu0 %4462
        %4464 = vrot.lane.b32.xlu0 %v4391, 96
        %v4465 = vpop.permute.xlu0 %4464
        %4466 = vrot.lane.b32.xlu0 %v4392, 96
        %v4467 = vpop.permute.xlu0 %4466
        %4468 = vrot.lane.b32.xlu0 %v4393, 96
        %v4469 = vpop.permute.xlu0 %4468
        %4470 = vrot.lane.b32.xlu0 %v4394, 96
        %v4471 = vpop.permute.xlu0 %4470
        %4472 = vrot.lane.b32.xlu0 %v4395, 96
        %v4473 = vpop.permute.xlu0 %4472
        %4474 = vrot.lane.b32.xlu0 %v4396, 96
        %v4475 = vpop.permute.xlu0 %4474
        %4476 = vrot.lane.b32.xlu0 %v4397, 96
        %v4477 = vpop.permute.xlu0 %4476
        %4478 = vrot.lane.b32.xlu0 %v4398, 96
        %v4479 = vpop.permute.xlu0 %4478
        %4480 = vrot.lane.b32.xlu0 %v4399, 96
        %v4481 = vpop.permute.xlu0 %4480
        %4482 = vrot.lane.b32.xlu0 %v4400, 96
        %v4483 = vpop.permute.xlu0 %4482
        %4484 = vrot.lane.b32.xlu0 %v4401, 96
        %v4485 = vpop.permute.xlu0 %4484
        %4486 = vrot.lane.b32.xlu0 %v4402, 96
        %v4487 = vpop.permute.xlu0 %4486
        %4488 = vrot.lane.b32.xlu0 %v4403, 96
        %v4489 = vpop.permute.xlu0 %4488
        %4490 = vrot.lane.b32.xlu0 %v4404, 96
        %v4491 = vpop.permute.xlu0 %4490
        %4492 = vrot.lane.b32.xlu0 %v4405, 96
        %v4493 = vpop.permute.xlu0 %4492
        %4494 = vrot.lane.b32.xlu0 %v4406, 96
        %v4495 = vpop.permute.xlu0 %4494
        %4496 = vrot.lane.b32.xlu0 %v4407, 96
        %v4497 = vpop.permute.xlu0 %4496
        %4498 = vrot.lane.b32.xlu0 %v4408, 96
        %v4499 = vpop.permute.xlu0 %4498
        %4500 = vrot.lane.b32.xlu0 %v4409, 96
        %v4501 = vpop.permute.xlu0 %4500
        %4502 = vrot.lane.b32.xlu0 %v4410, 96
        %v4503 = vpop.permute.xlu0 %4502
        %4504 = vrot.lane.b32.xlu0 %v4411, 96
        %v4505 = vpop.permute.xlu0 %4504
        %4506 = vrot.lane.b32.xlu0 %v4412, 96
        %v4507 = vpop.permute.xlu0 %4506
        %4508 = vrot.lane.b32.xlu0 %v4413, 96
        %v4509 = vpop.permute.xlu0 %4508
        %v4542 = vsel %vm2268, %v4447, 0.0
        %4543 = vadd.xlane.f32.xlu0 %v4542
        %v4544 = vpop.xlane.xlu0 %4543
        %v4545 = vsel %vm2268, %v4449, 0.0
        %4546 = vadd.xlane.f32.xlu0 %v4545
        %v4547 = vpop.xlane.xlu0 %4546
        %v4548 = vsel %vm2268, %v4451, 0.0
        %4549 = vadd.xlane.f32.xlu0 %v4548
        %v4550 = vpop.xlane.xlu0 %4549
        %v4551 = vsel %vm2268, %v4453, 0.0
        %4552 = vadd.xlane.f32.xlu0 %v4551
        %v4553 = vpop.xlane.xlu0 %4552
        %v4554 = vsel %vm2268, %v4455, 0.0
        %4555 = vadd.xlane.f32.xlu0 %v4554
        %v4556 = vpop.xlane.xlu0 %4555
        %v4557 = vsel %vm2268, %v4457, 0.0
        %4558 = vadd.xlane.f32.xlu0 %v4557
        %v4559 = vpop.xlane.xlu0 %4558
        %v4560 = vsel %vm2268, %v4459, 0.0
        %4561 = vadd.xlane.f32.xlu0 %v4560
        %v4562 = vpop.xlane.xlu0 %4561
        %v4563 = vsel %vm2268, %v4461, 0.0
        %4564 = vadd.xlane.f32.xlu0 %v4563
        %v4565 = vpop.xlane.xlu0 %4564
        %v4566 = vsel %vm2268, %v4463, 0.0
        %4567 = vadd.xlane.f32.xlu0 %v4566
        %v4568 = vpop.xlane.xlu0 %4567
        %v4569 = vsel %vm2268, %v4465, 0.0
        %4570 = vadd.xlane.f32.xlu0 %v4569
        %v4571 = vpop.xlane.xlu0 %4570
        %v4572 = vsel %vm2268, %v4467, 0.0
        %4573 = vadd.xlane.f32.xlu0 %v4572
        %v4574 = vpop.xlane.xlu0 %4573
        %v4575 = vsel %vm2268, %v4469, 0.0
        %4576 = vadd.xlane.f32.xlu0 %v4575
        %v4577 = vpop.xlane.xlu0 %4576
        %v4578 = vsel %vm2268, %v4471, 0.0
        %4579 = vadd.xlane.f32.xlu0 %v4578
        %v4580 = vpop.xlane.xlu0 %4579
        %v4581 = vsel %vm2268, %v4473, 0.0
        %4582 = vadd.xlane.f32.xlu0 %v4581
        %v4583 = vpop.xlane.xlu0 %4582
        %v4584 = vsel %vm2268, %v4475, 0.0
        %4585 = vadd.xlane.f32.xlu0 %v4584
        %v4586 = vpop.xlane.xlu0 %4585
        %v4587 = vsel %vm2268, %v4477, 0.0
        %4588 = vadd.xlane.f32.xlu0 %v4587
        %v4589 = vpop.xlane.xlu0 %4588
        %v4590 = vsel %vm2268, %v4479, 0.0
        %4591 = vadd.xlane.f32.xlu0 %v4590
        %v4592 = vpop.xlane.xlu0 %4591
        %v4593 = vsel %vm2268, %v4481, 0.0
        %4594 = vadd.xlane.f32.xlu0 %v4593
        %v4595 = vpop.xlane.xlu0 %4594
        %v4596 = vsel %vm2268, %v4483, 0.0
        %4597 = vadd.xlane.f32.xlu0 %v4596
        %v4598 = vpop.xlane.xlu0 %4597
        %v4599 = vsel %vm2268, %v4485, 0.0
        %4600 = vadd.xlane.f32.xlu0 %v4599
        %v4601 = vpop.xlane.xlu0 %4600
        %v4602 = vsel %vm2268, %v4487, 0.0
        %4603 = vadd.xlane.f32.xlu0 %v4602
        %v4604 = vpop.xlane.xlu0 %4603
        %v4605 = vsel %vm2268, %v4489, 0.0
        %4606 = vadd.xlane.f32.xlu0 %v4605
        %v4607 = vpop.xlane.xlu0 %4606
        %v4608 = vsel %vm2268, %v4491, 0.0
        %4609 = vadd.xlane.f32.xlu0 %v4608
        %v4610 = vpop.xlane.xlu0 %4609
        %v4611 = vsel %vm2268, %v4493, 0.0
        %4612 = vadd.xlane.f32.xlu0 %v4611
        %v4613 = vpop.xlane.xlu0 %4612
        %v4614 = vsel %vm2268, %v4495, 0.0
        %4615 = vadd.xlane.f32.xlu0 %v4614
        %v4616 = vpop.xlane.xlu0 %4615
        %v4617 = vsel %vm2268, %v4497, 0.0
        %4618 = vadd.xlane.f32.xlu0 %v4617
        %v4619 = vpop.xlane.xlu0 %4618
        %v4620 = vsel %vm2268, %v4499, 0.0
        %4621 = vadd.xlane.f32.xlu0 %v4620
        %v4622 = vpop.xlane.xlu0 %4621
        %v4623 = vsel %vm2268, %v4501, 0.0
        %4624 = vadd.xlane.f32.xlu0 %v4623
        %v4625 = vpop.xlane.xlu0 %4624
        %v4626 = vsel %vm2268, %v4503, 0.0
        %4627 = vadd.xlane.f32.xlu0 %v4626
        %v4628 = vpop.xlane.xlu0 %4627
        %v4629 = vsel %vm2268, %v4505, 0.0
        %4630 = vadd.xlane.f32.xlu0 %v4629
        %v4631 = vpop.xlane.xlu0 %4630
        %v4632 = vsel %vm2268, %v4507, 0.0
        %4633 = vadd.xlane.f32.xlu0 %v4632
        %v4634 = vpop.xlane.xlu0 %4633
        %v4635 = vsel %vm2268, %v4509, 0.0
        %4636 = vadd.xlane.f32.xlu0 %v4635
        %v4637 = vpop.xlane.xlu0 %4636
        %s4638 = scalar_lea.vmem [#allocation8], 112
        %v4639 = vld [vmem:[%s4638] sm:$0xff]
        %v4640 = vld [vmem:[%s4638 + $0x8] sm:$0xff]
        %4643 = vrot.lane.b32.xlu0 %v4639, 32
        %v4644 = vpop.permute.xlu0 %4643
        %4645 = vrot.lane.b32.xlu0 %v4640, 32
        %v4646 = vpop.permute.xlu0 %4645
        %v4649 = vmul.f32 %v2493, %v4644
        %v4650 = vmul.f32 %v2494, %v4646
        %v4651 = vmul.f32 %v2495, %v4644
        %v4652 = vmul.f32 %v2496, %v4646
        %v4653 = vmul.f32 %v2497, %v4644
        %v4654 = vmul.f32 %v2498, %v4646
        %v4655 = vmul.f32 %v2499, %v4644
        %v4656 = vmul.f32 %v2500, %v4646
        %v4657 = vmul.f32 %v2501, %v4644
        %v4658 = vmul.f32 %v2502, %v4646
        %v4659 = vmul.f32 %v2503, %v4644
        %v4660 = vmul.f32 %v2504, %v4646
        %v4661 = vmul.f32 %v2505, %v4644
        %v4662 = vmul.f32 %v2506, %v4646
        %v4663 = vmul.f32 %v2507, %v4644
        %v4664 = vmul.f32 %v2508, %v4646
        %v4665 = vmul.f32 %v2509, %v4644
        %v4666 = vmul.f32 %v2510, %v4646
        %v4667 = vmul.f32 %v2511, %v4644
        %v4668 = vmul.f32 %v2512, %v4646
        %v4669 = vmul.f32 %v2513, %v4644
        %v4670 = vmul.f32 %v2514, %v4646
        %v4671 = vmul.f32 %v2515, %v4644
        %v4672 = vmul.f32 %v2516, %v4646
        %v4673 = vmul.f32 %v2517, %v4644
        %v4674 = vmul.f32 %v2518, %v4646
        %v4675 = vmul.f32 %v2519, %v4644
        %v4676 = vmul.f32 %v2520, %v4646
        %v4677 = vmul.f32 %v2521, %v4644
        %v4678 = vmul.f32 %v2522, %v4646
        %v4679 = vmul.f32 %v2523, %v4644
        %v4680 = vmul.f32 %v2524, %v4646
        %4713 = vrot.lane.b32.xlu0 %v4649, 96
        %v4714 = vpop.permute.xlu0 %4713
        %4715 = vrot.lane.b32.xlu0 %v4650, 96
        %v4716 = vpop.permute.xlu0 %4715
        %4717 = vrot.lane.b32.xlu0 %v4651, 96
        %v4718 = vpop.permute.xlu0 %4717
        %4719 = vrot.lane.b32.xlu0 %v4652, 96
        %v4720 = vpop.permute.xlu0 %4719
        %4721 = vrot.lane.b32.xlu0 %v4653, 96
        %v4722 = vpop.permute.xlu0 %4721
        %4723 = vrot.lane.b32.xlu0 %v4654, 96
        %v4724 = vpop.permute.xlu0 %4723
        %4725 = vrot.lane.b32.xlu0 %v4655, 96
        %v4726 = vpop.permute.xlu0 %4725
        %4727 = vrot.lane.b32.xlu0 %v4656, 96
        %v4728 = vpop.permute.xlu0 %4727
        %4729 = vrot.lane.b32.xlu0 %v4657, 96
        %v4730 = vpop.permute.xlu0 %4729
        %4731 = vrot.lane.b32.xlu0 %v4658, 96
        %v4732 = vpop.permute.xlu0 %4731
        %4733 = vrot.lane.b32.xlu0 %v4659, 96
        %v4734 = vpop.permute.xlu0 %4733
        %4735 = vrot.lane.b32.xlu0 %v4660, 96
        %v4736 = vpop.permute.xlu0 %4735
        %4737 = vrot.lane.b32.xlu0 %v4661, 96
        %v4738 = vpop.permute.xlu0 %4737
        %4739 = vrot.lane.b32.xlu0 %v4662, 96
        %v4740 = vpop.permute.xlu0 %4739
        %4741 = vrot.lane.b32.xlu0 %v4663, 96
        %v4742 = vpop.permute.xlu0 %4741
        %4743 = vrot.lane.b32.xlu0 %v4664, 96
        %v4744 = vpop.permute.xlu0 %4743
        %4745 = vrot.lane.b32.xlu0 %v4665, 96
        %v4746 = vpop.permute.xlu0 %4745
        %4747 = vrot.lane.b32.xlu0 %v4666, 96
        %v4748 = vpop.permute.xlu0 %4747
        %4749 = vrot.lane.b32.xlu0 %v4667, 96
        %v4750 = vpop.permute.xlu0 %4749
        %4751 = vrot.lane.b32.xlu0 %v4668, 96
        %v4752 = vpop.permute.xlu0 %4751
        %4753 = vrot.lane.b32.xlu0 %v4669, 96
        %v4754 = vpop.permute.xlu0 %4753
        %4755 = vrot.lane.b32.xlu0 %v4670, 96
        %v4756 = vpop.permute.xlu0 %4755
        %4757 = vrot.lane.b32.xlu0 %v4671, 96
        %v4758 = vpop.permute.xlu0 %4757
        %4759 = vrot.lane.b32.xlu0 %v4672, 96
        %v4760 = vpop.permute.xlu0 %4759
        %4761 = vrot.lane.b32.xlu0 %v4673, 96
        %v4762 = vpop.permute.xlu0 %4761
        %4763 = vrot.lane.b32.xlu0 %v4674, 96
        %v4764 = vpop.permute.xlu0 %4763
        %4765 = vrot.lane.b32.xlu0 %v4675, 96
        %v4766 = vpop.permute.xlu0 %4765
        %4767 = vrot.lane.b32.xlu0 %v4676, 96
        %v4768 = vpop.permute.xlu0 %4767
        %4769 = vrot.lane.b32.xlu0 %v4677, 96
        %v4770 = vpop.permute.xlu0 %4769
        %4771 = vrot.lane.b32.xlu0 %v4678, 96
        %v4772 = vpop.permute.xlu0 %4771
        %4773 = vrot.lane.b32.xlu0 %v4679, 96
        %v4774 = vpop.permute.xlu0 %4773
        %4775 = vrot.lane.b32.xlu0 %v4680, 96
        %v4776 = vpop.permute.xlu0 %4775
        %v4809 = vsel %vm2268, %v4714, 0.0
        %4810 = vadd.xlane.f32.xlu0 %v4809
        %v4811 = vpop.xlane.xlu0 %4810
        %v4812 = vsel %vm2268, %v4716, 0.0
        %4813 = vadd.xlane.f32.xlu0 %v4812
        %v4814 = vpop.xlane.xlu0 %4813
        %v4815 = vsel %vm2268, %v4718, 0.0
        %4816 = vadd.xlane.f32.xlu0 %v4815
        %v4817 = vpop.xlane.xlu0 %4816
        %v4818 = vsel %vm2268, %v4720, 0.0
        %4819 = vadd.xlane.f32.xlu0 %v4818
        %v4820 = vpop.xlane.xlu0 %4819
        %v4821 = vsel %vm2268, %v4722, 0.0
        %4822 = vadd.xlane.f32.xlu0 %v4821
        %v4823 = vpop.xlane.xlu0 %4822
        %v4824 = vsel %vm2268, %v4724, 0.0
        %4825 = vadd.xlane.f32.xlu0 %v4824
        %v4826 = vpop.xlane.xlu0 %4825
        %v4827 = vsel %vm2268, %v4726, 0.0
        %4828 = vadd.xlane.f32.xlu0 %v4827
        %v4829 = vpop.xlane.xlu0 %4828
        %v4830 = vsel %vm2268, %v4728, 0.0
        %4831 = vadd.xlane.f32.xlu0 %v4830
        %v4832 = vpop.xlane.xlu0 %4831
        %v4833 = vsel %vm2268, %v4730, 0.0
        %4834 = vadd.xlane.f32.xlu0 %v4833
        %v4835 = vpop.xlane.xlu0 %4834
        %v4836 = vsel %vm2268, %v4732, 0.0
        %4837 = vadd.xlane.f32.xlu0 %v4836
        %v4838 = vpop.xlane.xlu0 %4837
        %v4839 = vsel %vm2268, %v4734, 0.0
        %4840 = vadd.xlane.f32.xlu0 %v4839
        %v4841 = vpop.xlane.xlu0 %4840
        %v4842 = vsel %vm2268, %v4736, 0.0
        %4843 = vadd.xlane.f32.xlu0 %v4842
        %v4844 = vpop.xlane.xlu0 %4843
        %v4845 = vsel %vm2268, %v4738, 0.0
        %4846 = vadd.xlane.f32.xlu0 %v4845
        %v4847 = vpop.xlane.xlu0 %4846
        %v4848 = vsel %vm2268, %v4740, 0.0
        %4849 = vadd.xlane.f32.xlu0 %v4848
        %v4850 = vpop.xlane.xlu0 %4849
        %v4851 = vsel %vm2268, %v4742, 0.0
        %4852 = vadd.xlane.f32.xlu0 %v4851
        %v4853 = vpop.xlane.xlu0 %4852
        %v4854 = vsel %vm2268, %v4744, 0.0
        %4855 = vadd.xlane.f32.xlu0 %v4854
        %v4856 = vpop.xlane.xlu0 %4855
        %v4857 = vsel %vm2268, %v4746, 0.0
        %4858 = vadd.xlane.f32.xlu0 %v4857
        %v4859 = vpop.xlane.xlu0 %4858
        %v4860 = vsel %vm2268, %v4748, 0.0
        %4861 = vadd.xlane.f32.xlu0 %v4860
        %v4862 = vpop.xlane.xlu0 %4861
        %v4863 = vsel %vm2268, %v4750, 0.0
        %4864 = vadd.xlane.f32.xlu0 %v4863
        %v4865 = vpop.xlane.xlu0 %4864
        %v4866 = vsel %vm2268, %v4752, 0.0
        %4867 = vadd.xlane.f32.xlu0 %v4866
        %v4868 = vpop.xlane.xlu0 %4867
        %v4869 = vsel %vm2268, %v4754, 0.0
        %4870 = vadd.xlane.f32.xlu0 %v4869
        %v4871 = vpop.xlane.xlu0 %4870
        %v4872 = vsel %vm2268, %v4756, 0.0
        %4873 = vadd.xlane.f32.xlu0 %v4872
        %v4874 = vpop.xlane.xlu0 %4873
        %v4875 = vsel %vm2268, %v4758, 0.0
        %4876 = vadd.xlane.f32.xlu0 %v4875
        %v4877 = vpop.xlane.xlu0 %4876
        %v4878 = vsel %vm2268, %v4760, 0.0
        %4879 = vadd.xlane.f32.xlu0 %v4878
        %v4880 = vpop.xlane.xlu0 %4879
        %v4881 = vsel %vm2268, %v4762, 0.0
        %4882 = vadd.xlane.f32.xlu0 %v4881
        %v4883 = vpop.xlane.xlu0 %4882
        %v4884 = vsel %vm2268, %v4764, 0.0
        %4885 = vadd.xlane.f32.xlu0 %v4884
        %v4886 = vpop.xlane.xlu0 %4885
        %v4887 = vsel %vm2268, %v4766, 0.0
        %4888 = vadd.xlane.f32.xlu0 %v4887
        %v4889 = vpop.xlane.xlu0 %4888
        %v4890 = vsel %vm2268, %v4768, 0.0
        %4891 = vadd.xlane.f32.xlu0 %v4890
        %v4892 = vpop.xlane.xlu0 %4891
        %v4893 = vsel %vm2268, %v4770, 0.0
        %4894 = vadd.xlane.f32.xlu0 %v4893
        %v4895 = vpop.xlane.xlu0 %4894
        %v4896 = vsel %vm2268, %v4772, 0.0
        %4897 = vadd.xlane.f32.xlu0 %v4896
        %v4898 = vpop.xlane.xlu0 %4897
        %v4899 = vsel %vm2268, %v4774, 0.0
        %4900 = vadd.xlane.f32.xlu0 %v4899
        %v4901 = vpop.xlane.xlu0 %4900
        %v4902 = vsel %vm2268, %v4776, 0.0
        %4903 = vadd.xlane.f32.xlu0 %v4902
        %v4904 = vpop.xlane.xlu0 %4903
        %v4905 = vadd.f32 %v4544, %v4811
        %v4906 = vadd.f32 %v4547, %v4814
        %v4907 = vadd.f32 %v4550, %v4817
        %v4908 = vadd.f32 %v4553, %v4820
        %v4909 = vadd.f32 %v4556, %v4823
        %v4910 = vadd.f32 %v4559, %v4826
        %v4911 = vadd.f32 %v4562, %v4829
        %v4912 = vadd.f32 %v4565, %v4832
        %v4913 = vadd.f32 %v4568, %v4835
        %v4914 = vadd.f32 %v4571, %v4838
        %v4915 = vadd.f32 %v4574, %v4841
        %v4916 = vadd.f32 %v4577, %v4844
        %v4917 = vadd.f32 %v4580, %v4847
        %v4918 = vadd.f32 %v4583, %v4850
        %v4919 = vadd.f32 %v4586, %v4853
        %v4920 = vadd.f32 %v4589, %v4856
        %v4921 = vadd.f32 %v4592, %v4859
        %v4922 = vadd.f32 %v4595, %v4862
        %v4923 = vadd.f32 %v4598, %v4865
        %v4924 = vadd.f32 %v4601, %v4868
        %v4925 = vadd.f32 %v4604, %v4871
        %v4926 = vadd.f32 %v4607, %v4874
        %v4927 = vadd.f32 %v4610, %v4877
        %v4928 = vadd.f32 %v4613, %v4880
        %v4929 = vadd.f32 %v4616, %v4883
        %v4930 = vadd.f32 %v4619, %v4886
        %v4931 = vadd.f32 %v4622, %v4889
        %v4932 = vadd.f32 %v4625, %v4892
        %v4933 = vadd.f32 %v4628, %v4895
        %v4934 = vadd.f32 %v4631, %v4898
        %v4935 = vadd.f32 %v4634, %v4901
        %v4936 = vadd.f32 %v4637, %v4904
        %s4937 = sld [smem:[#allocation9 + $0x1]]
        %s4938 = sld [smem:[#allocation9 + $0x81]]
        %v4939 = vlaneseq
        %v4940 = vshrl.u32 %v4939, 7
        %v4941 = vsub.s32 0, %v4940
        %v4942 = vrot.slane %v469, %v4941
        %4944 = vbcast.lane.b32.xlu0 %v4942, 256
        %v4945 = vpop.permute.xlu0 %4944
        %s4947 = sor.u32 256, 8
        %4948 = vbcast.lane.b32.xlu0 %v4942, %s4947
        %v4949 = vpop.permute.xlu0 %4948
        %v4950 = vlaneseq
        %v4951 = vshrl.u32 %v4950, 7
        %v4952 = vsub.s32 1, %v4951
        %v4953 = vrot.slane %v469, %v4952
        %4955 = vbcast.lane.b32.xlu0 %v4953, 256
        %v4956 = vpop.permute.xlu0 %4955
        %s4958 = sor.u32 256, 8
        %4959 = vbcast.lane.b32.xlu0 %v4953, %s4958
        %v4960 = vpop.permute.xlu0 %4959
        %v4961 = vlaneseq
        %v4962 = vshrl.u32 %v4961, 7
        %v4963 = vsub.s32 2, %v4962
        %v4964 = vrot.slane %v469, %v4963
        %4966 = vbcast.lane.b32.xlu0 %v4964, 256
        %v4967 = vpop.permute.xlu0 %4966
        %s4969 = sor.u32 256, 8
        %4970 = vbcast.lane.b32.xlu0 %v4964, %s4969
        %v4971 = vpop.permute.xlu0 %4970
        %v4972 = vlaneseq
        %v4973 = vshrl.u32 %v4972, 7
        %v4974 = vsub.s32 3, %v4973
        %v4975 = vrot.slane %v469, %v4974
        %4977 = vbcast.lane.b32.xlu0 %v4975, 256
        %v4978 = vpop.permute.xlu0 %4977
        %s4980 = sor.u32 256, 8
        %4981 = vbcast.lane.b32.xlu0 %v4975, %s4980
        %v4982 = vpop.permute.xlu0 %4981
        %v4983 = vlaneseq
        %v4984 = vshrl.u32 %v4983, 7
        %v4985 = vsub.s32 4, %v4984
        %v4986 = vrot.slane %v469, %v4985
        %4988 = vbcast.lane.b32.xlu0 %v4986, 256
        %v4989 = vpop.permute.xlu0 %4988
        %s4991 = sor.u32 256, 8
        %4992 = vbcast.lane.b32.xlu0 %v4986, %s4991
        %v4993 = vpop.permute.xlu0 %4992
        %v4994 = vlaneseq
        %v4995 = vshrl.u32 %v4994, 7
        %v4996 = vsub.s32 5, %v4995
        %v4997 = vrot.slane %v469, %v4996
        %4999 = vbcast.lane.b32.xlu0 %v4997, 256
        %v5000 = vpop.permute.xlu0 %4999
        %s5002 = sor.u32 256, 8
        %5003 = vbcast.lane.b32.xlu0 %v4997, %s5002
        %v5004 = vpop.permute.xlu0 %5003
        %v5005 = vlaneseq
        %v5006 = vshrl.u32 %v5005, 7
        %v5007 = vsub.s32 6, %v5006
        %v5008 = vrot.slane %v469, %v5007
        %5010 = vbcast.lane.b32.xlu0 %v5008, 256
        %v5011 = vpop.permute.xlu0 %5010
        %s5013 = sor.u32 256, 8
        %5014 = vbcast.lane.b32.xlu0 %v5008, %s5013
        %v5015 = vpop.permute.xlu0 %5014
        %v5016 = vlaneseq
        %v5017 = vshrl.u32 %v5016, 7
        %v5018 = vsub.s32 7, %v5017
        %v5019 = vrot.slane %v469, %v5018
        %5021 = vbcast.lane.b32.xlu0 %v5019, 256
        %v5022 = vpop.permute.xlu0 %5021
        %s5024 = sor.u32 256, 8
        %5025 = vbcast.lane.b32.xlu0 %v5019, %s5024
        %v5026 = vpop.permute.xlu0 %5025
        %v5027 = vlaneseq
        %v5028 = vshrl.u32 %v5027, 7
        %v5029 = vsub.s32 0, %v5028
        %v5030 = vrot.slane %v471, %v5029
        %5032 = vbcast.lane.b32.xlu0 %v5030, 256
        %v5033 = vpop.permute.xlu0 %5032
        %s5035 = sor.u32 256, 8
        %5036 = vbcast.lane.b32.xlu0 %v5030, %s5035
        %v5037 = vpop.permute.xlu0 %5036
        %v5038 = vlaneseq
        %v5039 = vshrl.u32 %v5038, 7
        %v5040 = vsub.s32 1, %v5039
        %v5041 = vrot.slane %v471, %v5040
        %5043 = vbcast.lane.b32.xlu0 %v5041, 256
        %v5044 = vpop.permute.xlu0 %5043
        %s5046 = sor.u32 256, 8
        %5047 = vbcast.lane.b32.xlu0 %v5041, %s5046
        %v5048 = vpop.permute.xlu0 %5047
        %v5049 = vlaneseq
        %v5050 = vshrl.u32 %v5049, 7
        %v5051 = vsub.s32 2, %v5050
        %v5052 = vrot.slane %v471, %v5051
        %5054 = vbcast.lane.b32.xlu0 %v5052, 256
        %v5055 = vpop.permute.xlu0 %5054
        %s5057 = sor.u32 256, 8
        %5058 = vbcast.lane.b32.xlu0 %v5052, %s5057
        %v5059 = vpop.permute.xlu0 %5058
        %v5060 = vlaneseq
        %v5061 = vshrl.u32 %v5060, 7
        %v5062 = vsub.s32 3, %v5061
        %v5063 = vrot.slane %v471, %v5062
        %5065 = vbcast.lane.b32.xlu0 %v5063, 256
        %v5066 = vpop.permute.xlu0 %5065
        %s5068 = sor.u32 256, 8
        %5069 = vbcast.lane.b32.xlu0 %v5063, %s5068
        %v5070 = vpop.permute.xlu0 %5069
        %v5071 = vlaneseq
        %v5072 = vshrl.u32 %v5071, 7
        %v5073 = vsub.s32 4, %v5072
        %v5074 = vrot.slane %v471, %v5073
        %5076 = vbcast.lane.b32.xlu0 %v5074, 256
        %v5077 = vpop.permute.xlu0 %5076
        %s5079 = sor.u32 256, 8
        %5080 = vbcast.lane.b32.xlu0 %v5074, %s5079
        %v5081 = vpop.permute.xlu0 %5080
        %v5082 = vlaneseq
        %v5083 = vshrl.u32 %v5082, 7
        %v5084 = vsub.s32 5, %v5083
        %v5085 = vrot.slane %v471, %v5084
        %5087 = vbcast.lane.b32.xlu0 %v5085, 256
        %v5088 = vpop.permute.xlu0 %5087
        %s5090 = sor.u32 256, 8
        %5091 = vbcast.lane.b32.xlu0 %v5085, %s5090
        %v5092 = vpop.permute.xlu0 %5091
        %v5093 = vlaneseq
        %v5094 = vshrl.u32 %v5093, 7
        %v5095 = vsub.s32 6, %v5094
        %v5096 = vrot.slane %v471, %v5095
        %5098 = vbcast.lane.b32.xlu0 %v5096, 256
        %v5099 = vpop.permute.xlu0 %5098
        %s5101 = sor.u32 256, 8
        %5102 = vbcast.lane.b32.xlu0 %v5096, %s5101
        %v5103 = vpop.permute.xlu0 %5102
        %v5104 = vlaneseq
        %v5105 = vshrl.u32 %v5104, 7
        %v5106 = vsub.s32 7, %v5105
        %v5107 = vrot.slane %v471, %v5106
        %5109 = vbcast.lane.b32.xlu0 %v5107, 256
        %v5110 = vpop.permute.xlu0 %5109
        %s5112 = sor.u32 256, 8
        %5113 = vbcast.lane.b32.xlu0 %v5107, %s5112
        %v5114 = vpop.permute.xlu0 %5113
        %s5116 = sor.u32 256, 16
        %5117 = vbcast.lane.b32.xlu0 %v4942, %s5116
        %v5118 = vpop.permute.xlu0 %5117
        %s5120 = sor.u32 256, 24
        %5121 = vbcast.lane.b32.xlu0 %v4942, %s5120
        %v5122 = vpop.permute.xlu0 %5121
        %s5124 = sor.u32 256, 16
        %5125 = vbcast.lane.b32.xlu0 %v4953, %s5124
        %v5126 = vpop.permute.xlu0 %5125
        %s5128 = sor.u32 256, 24
        %5129 = vbcast.lane.b32.xlu0 %v4953, %s5128
        %v5130 = vpop.permute.xlu0 %5129
        %s5132 = sor.u32 256, 16
        %5133 = vbcast.lane.b32.xlu0 %v4964, %s5132
        %v5134 = vpop.permute.xlu0 %5133
        %s5136 = sor.u32 256, 24
        %5137 = vbcast.lane.b32.xlu0 %v4964, %s5136
        %v5138 = vpop.permute.xlu0 %5137
        %s5140 = sor.u32 256, 16
        %5141 = vbcast.lane.b32.xlu0 %v4975, %s5140
        %v5142 = vpop.permute.xlu0 %5141
        %s5144 = sor.u32 256, 24
        %5145 = vbcast.lane.b32.xlu0 %v4975, %s5144
        %v5146 = vpop.permute.xlu0 %5145
        %s5148 = sor.u32 256, 16
        %5149 = vbcast.lane.b32.xlu0 %v4986, %s5148
        %v5150 = vpop.permute.xlu0 %5149
        %s5152 = sor.u32 256, 24
        %5153 = vbcast.lane.b32.xlu0 %v4986, %s5152
        %v5154 = vpop.permute.xlu0 %5153
        %s5156 = sor.u32 256, 16
        %5157 = vbcast.lane.b32.xlu0 %v4997, %s5156
        %v5158 = vpop.permute.xlu0 %5157
        %s5160 = sor.u32 256, 24
        %5161 = vbcast.lane.b32.xlu0 %v4997, %s5160
        %v5162 = vpop.permute.xlu0 %5161
        %s5164 = sor.u32 256, 16
        %5165 = vbcast.lane.b32.xlu0 %v5008, %s5164
        %v5166 = vpop.permute.xlu0 %5165
        %s5168 = sor.u32 256, 24
        %5169 = vbcast.lane.b32.xlu0 %v5008, %s5168
        %v5170 = vpop.permute.xlu0 %5169
        %s5172 = sor.u32 256, 16
        %5173 = vbcast.lane.b32.xlu0 %v5019, %s5172
        %v5174 = vpop.permute.xlu0 %5173
        %s5176 = sor.u32 256, 24
        %5177 = vbcast.lane.b32.xlu0 %v5019, %s5176
        %v5178 = vpop.permute.xlu0 %5177
        %s5180 = sor.u32 256, 16
        %5181 = vbcast.lane.b32.xlu0 %v5030, %s5180
        %v5182 = vpop.permute.xlu0 %5181
        %s5184 = sor.u32 256, 24
        %5185 = vbcast.lane.b32.xlu0 %v5030, %s5184
        %v5186 = vpop.permute.xlu0 %5185
        %s5188 = sor.u32 256, 16
        %5189 = vbcast.lane.b32.xlu0 %v5041, %s5188
        %v5190 = vpop.permute.xlu0 %5189
        %s5192 = sor.u32 256, 24
        %5193 = vbcast.lane.b32.xlu0 %v5041, %s5192
        %v5194 = vpop.permute.xlu0 %5193
        %s5196 = sor.u32 256, 16
        %5197 = vbcast.lane.b32.xlu0 %v5052, %s5196
        %v5198 = vpop.permute.xlu0 %5197
        %s5200 = sor.u32 256, 24
        %5201 = vbcast.lane.b32.xlu0 %v5052, %s5200
        %v5202 = vpop.permute.xlu0 %5201
        %s5204 = sor.u32 256, 16
        %5205 = vbcast.lane.b32.xlu0 %v5063, %s5204
        %v5206 = vpop.permute.xlu0 %5205
        %s5208 = sor.u32 256, 24
        %5209 = vbcast.lane.b32.xlu0 %v5063, %s5208
        %v5210 = vpop.permute.xlu0 %5209
        %s5212 = sor.u32 256, 16
        %5213 = vbcast.lane.b32.xlu0 %v5074, %s5212
        %v5214 = vpop.permute.xlu0 %5213
        %s5216 = sor.u32 256, 24
        %5217 = vbcast.lane.b32.xlu0 %v5074, %s5216
        %v5218 = vpop.permute.xlu0 %5217
        %s5220 = sor.u32 256, 16
        %5221 = vbcast.lane.b32.xlu0 %v5085, %s5220
        %v5222 = vpop.permute.xlu0 %5221
        %s5224 = sor.u32 256, 24
        %5225 = vbcast.lane.b32.xlu0 %v5085, %s5224
        %v5226 = vpop.permute.xlu0 %5225
        %s5228 = sor.u32 256, 16
        %5229 = vbcast.lane.b32.xlu0 %v5096, %s5228
        %v5230 = vpop.permute.xlu0 %5229
        %s5232 = sor.u32 256, 24
        %5233 = vbcast.lane.b32.xlu0 %v5096, %s5232
        %v5234 = vpop.permute.xlu0 %5233
        %s5236 = sor.u32 256, 16
        %5237 = vbcast.lane.b32.xlu0 %v5107, %s5236
        %v5238 = vpop.permute.xlu0 %5237
        %s5240 = sor.u32 256, 24
        %5241 = vbcast.lane.b32.xlu0 %v5107, %s5240
        %v5242 = vpop.permute.xlu0 %5241
        %v5245 = vcombine.high %v469, %v469
        %v5247 = vunpack.c.l.s4 1966171168
        %v5248 = vunpack.c.0.s8 %v5247
        %v5249 = vlaneseq
        %v5250 = vshrl.u32 %v5249, 7
        %v5251 = vsub.s32 %v5248, %v5250
        %v5252 = vrot.slane %v469, %v5251
        %v5254 = vunpack.c.l.s4 1966171168
        %v5255 = vunpack.c.0.s8 %v5254
        %v5256 = vlaneseq
        %v5257 = vshrl.u32 %v5256, 7
        %v5258 = vsub.s32 %v5255, %v5257
        %v5259 = vrot.slane %v5245, %v5258
        %v5260 = vcombine.high %v5252, %v5252
        %v5261 = vcombine.high %v5259, %v5259
        %v5263 = vunpack.c.l.s4 1966171168
        %v5264 = vunpack.c.0.s8 %v5263
        %v5265 = vlaneseq
        %v5266 = vshrl.u32 %v5265, 7
        %v5267 = vsub.s32 %v5264, %v5266
        %v5268 = vrot.slane %v5252, %v5267
        %v5270 = vunpack.c.l.s4 1966171168
        %v5271 = vunpack.c.0.s8 %v5270
        %v5272 = vlaneseq
        %v5273 = vshrl.u32 %v5272, 7
        %v5274 = vsub.s32 %v5271, %v5273
        %v5275 = vrot.slane %v5259, %v5274
        %v5277 = vunpack.c.l.s4 1966171168
        %v5278 = vunpack.c.0.s8 %v5277
        %v5279 = vlaneseq
        %v5280 = vshrl.u32 %v5279, 7
        %v5281 = vsub.s32 %v5278, %v5280
        %v5282 = vrot.slane %v5260, %v5281
        %v5284 = vunpack.c.l.s4 1966171168
        %v5285 = vunpack.c.0.s8 %v5284
        %v5286 = vlaneseq
        %v5287 = vshrl.u32 %v5286, 7
        %v5288 = vsub.s32 %v5285, %v5287
        %v5289 = vrot.slane %v5261, %v5288
        %v5290 = vcombine.high %v5268, %v5268
        %v5291 = vcombine.high %v5275, %v5275
        %v5292 = vcombine.high %v5282, %v5282
        %v5293 = vcombine.high %v5289, %v5289
        %v5294 = vcombine.high %v471, %v471
        %v5296 = vunpack.c.l.s4 1966171168
        %v5297 = vunpack.c.0.s8 %v5296
        %v5298 = vlaneseq
        %v5299 = vshrl.u32 %v5298, 7
        %v5300 = vsub.s32 %v5297, %v5299
        %v5301 = vrot.slane %v471, %v5300
        %v5303 = vunpack.c.l.s4 1966171168
        %v5304 = vunpack.c.0.s8 %v5303
        %v5305 = vlaneseq
        %v5306 = vshrl.u32 %v5305, 7
        %v5307 = vsub.s32 %v5304, %v5306
        %v5308 = vrot.slane %v5294, %v5307
        %v5309 = vcombine.high %v5301, %v5301
        %v5310 = vcombine.high %v5308, %v5308
        %v5312 = vunpack.c.l.s4 1966171168
        %v5313 = vunpack.c.0.s8 %v5312
        %v5314 = vlaneseq
        %v5315 = vshrl.u32 %v5314, 7
        %v5316 = vsub.s32 %v5313, %v5315
        %v5317 = vrot.slane %v5301, %v5316
        %v5319 = vunpack.c.l.s4 1966171168
        %v5320 = vunpack.c.0.s8 %v5319
        %v5321 = vlaneseq
        %v5322 = vshrl.u32 %v5321, 7
        %v5323 = vsub.s32 %v5320, %v5322
        %v5324 = vrot.slane %v5308, %v5323
        %v5326 = vunpack.c.l.s4 1966171168
        %v5327 = vunpack.c.0.s8 %v5326
        %v5328 = vlaneseq
        %v5329 = vshrl.u32 %v5328, 7
        %v5330 = vsub.s32 %v5327, %v5329
        %v5331 = vrot.slane %v5309, %v5330
        %v5333 = vunpack.c.l.s4 1966171168
        %v5334 = vunpack.c.0.s8 %v5333
        %v5335 = vlaneseq
        %v5336 = vshrl.u32 %v5335, 7
        %v5337 = vsub.s32 %v5334, %v5336
        %v5338 = vrot.slane %v5310, %v5337
        %v5339 = vcombine.high %v5317, %v5317
        %v5340 = vcombine.high %v5324, %v5324
        %v5341 = vcombine.high %v5331, %v5331
        %v5342 = vcombine.high %v5338, %v5338
        %v5343 = vstv %s4937
        %v5344 = vmul.f32 %v4945, %v5343
        %v5345 = vmul.f32 %v4949, %v5343
        %v5346 = vmul.f32 %v4956, %v5343
        %v5347 = vmul.f32 %v4960, %v5343
        %v5348 = vmul.f32 %v4967, %v5343
        %v5349 = vmul.f32 %v4971, %v5343
        %v5350 = vmul.f32 %v4978, %v5343
        %v5351 = vmul.f32 %v4982, %v5343
        %v5352 = vmul.f32 %v4989, %v5343
        %v5353 = vmul.f32 %v4993, %v5343
        %v5354 = vmul.f32 %v5000, %v5343
        %v5355 = vmul.f32 %v5004, %v5343
        %v5356 = vmul.f32 %v5011, %v5343
        %v5357 = vmul.f32 %v5015, %v5343
        %v5358 = vmul.f32 %v5022, %v5343
        %v5359 = vmul.f32 %v5026, %v5343
        %v5360 = vmul.f32 %v5033, %v5343
        %v5361 = vmul.f32 %v5037, %v5343
        %v5362 = vmul.f32 %v5044, %v5343
        %v5363 = vmul.f32 %v5048, %v5343
        %v5364 = vmul.f32 %v5055, %v5343
        %v5365 = vmul.f32 %v5059, %v5343
        %v5366 = vmul.f32 %v5066, %v5343
        %v5367 = vmul.f32 %v5070, %v5343
        %v5368 = vmul.f32 %v5077, %v5343
        %v5369 = vmul.f32 %v5081, %v5343
        %v5370 = vmul.f32 %v5088, %v5343
        %v5371 = vmul.f32 %v5092, %v5343
        %v5372 = vmul.f32 %v5099, %v5343
        %v5373 = vmul.f32 %v5103, %v5343
        %v5374 = vmul.f32 %v5110, %v5343
        %v5375 = vmul.f32 %v5114, %v5343
        %v5376 = vlaneseq
        %v5377 = vshrl.u32 %v5376, 7
        %v5378 = vsub.s32 0, %v5377
        %v5379 = vrot.slane %v5268, %v5378
        %v5380 = vlaneseq
        %v5381 = vshrl.u32 %v5380, 7
        %v5382 = vsub.s32 0, %v5381
        %v5383 = vrot.slane %v5282, %v5382
        %v5384 = vlaneseq
        %v5385 = vshrl.u32 %v5384, 7
        %v5386 = vsub.s32 0, %v5385
        %v5387 = vrot.slane %v5290, %v5386
        %v5388 = vlaneseq
        %v5389 = vshrl.u32 %v5388, 7
        %v5390 = vsub.s32 0, %v5389
        %v5391 = vrot.slane %v5292, %v5390
        %v5392 = vlaneseq
        %v5393 = vshrl.u32 %v5392, 7
        %v5394 = vsub.s32 0, %v5393
        %v5395 = vrot.slane %v5275, %v5394
        %v5396 = vlaneseq
        %v5397 = vshrl.u32 %v5396, 7
        %v5398 = vsub.s32 0, %v5397
        %v5399 = vrot.slane %v5289, %v5398
        %v5400 = vlaneseq
        %v5401 = vshrl.u32 %v5400, 7
        %v5402 = vsub.s32 0, %v5401
        %v5403 = vrot.slane %v5291, %v5402
        %v5404 = vlaneseq
        %v5405 = vshrl.u32 %v5404, 7
        %v5406 = vsub.s32 0, %v5405
        %v5407 = vrot.slane %v5293, %v5406
        %v5408 = vlaneseq
        %v5409 = vshrl.u32 %v5408, 7
        %v5410 = vsub.s32 0, %v5409
        %v5411 = vrot.slane %v5317, %v5410
        %v5412 = vlaneseq
        %v5413 = vshrl.u32 %v5412, 7
        %v5414 = vsub.s32 0, %v5413
        %v5415 = vrot.slane %v5331, %v5414
        %v5416 = vlaneseq
        %v5417 = vshrl.u32 %v5416, 7
        %v5418 = vsub.s32 0, %v5417
        %v5419 = vrot.slane %v5339, %v5418
        %v5420 = vlaneseq
        %v5421 = vshrl.u32 %v5420, 7
        %v5422 = vsub.s32 0, %v5421
        %v5423 = vrot.slane %v5341, %v5422
        %v5424 = vlaneseq
        %v5425 = vshrl.u32 %v5424, 7
        %v5426 = vsub.s32 0, %v5425
        %v5427 = vrot.slane %v5324, %v5426
        %v5428 = vlaneseq
        %v5429 = vshrl.u32 %v5428, 7
        %v5430 = vsub.s32 0, %v5429
        %v5431 = vrot.slane %v5338, %v5430
        %v5432 = vlaneseq
        %v5433 = vshrl.u32 %v5432, 7
        %v5434 = vsub.s32 0, %v5433
        %v5435 = vrot.slane %v5340, %v5434
        %v5436 = vlaneseq
        %v5437 = vshrl.u32 %v5436, 7
        %v5438 = vsub.s32 0, %v5437
        %v5439 = vrot.slane %v5342, %v5438
        %v5456 = vmul.f32 %v5344, %v5379
        %v5457 = vmul.f32 %v5345, %v5379
        %v5458 = vmul.f32 %v5346, %v5383
        %v5459 = vmul.f32 %v5347, %v5383
        %v5460 = vmul.f32 %v5348, %v5387
        %v5461 = vmul.f32 %v5349, %v5387
        %v5462 = vmul.f32 %v5350, %v5391
        %v5463 = vmul.f32 %v5351, %v5391
        %v5464 = vmul.f32 %v5352, %v5395
        %v5465 = vmul.f32 %v5353, %v5395
        %v5466 = vmul.f32 %v5354, %v5399
        %v5467 = vmul.f32 %v5355, %v5399
        %v5468 = vmul.f32 %v5356, %v5403
        %v5469 = vmul.f32 %v5357, %v5403
        %v5470 = vmul.f32 %v5358, %v5407
        %v5471 = vmul.f32 %v5359, %v5407
        %v5472 = vmul.f32 %v5360, %v5411
        %v5473 = vmul.f32 %v5361, %v5411
        %v5474 = vmul.f32 %v5362, %v5415
        %v5475 = vmul.f32 %v5363, %v5415
        %v5476 = vmul.f32 %v5364, %v5419
        %v5477 = vmul.f32 %v5365, %v5419
        %v5478 = vmul.f32 %v5366, %v5423
        %v5479 = vmul.f32 %v5367, %v5423
        %v5480 = vmul.f32 %v5368, %v5427
        %v5481 = vmul.f32 %v5369, %v5427
        %v5482 = vmul.f32 %v5370, %v5431
        %v5483 = vmul.f32 %v5371, %v5431
        %v5484 = vmul.f32 %v5372, %v5435
        %v5485 = vmul.f32 %v5373, %v5435
        %v5486 = vmul.f32 %v5374, %v5439
        %v5487 = vmul.f32 %v5375, %v5439
        %v5488 = vmul.f32 %v5118, %v5343
        %v5489 = vmul.f32 %v5122, %v5343
        %v5490 = vmul.f32 %v5126, %v5343
        %v5491 = vmul.f32 %v5130, %v5343
        %v5492 = vmul.f32 %v5134, %v5343
        %v5493 = vmul.f32 %v5138, %v5343
        %v5494 = vmul.f32 %v5142, %v5343
        %v5495 = vmul.f32 %v5146, %v5343
        %v5496 = vmul.f32 %v5150, %v5343
        %v5497 = vmul.f32 %v5154, %v5343
        %v5498 = vmul.f32 %v5158, %v5343
        %v5499 = vmul.f32 %v5162, %v5343
        %v5500 = vmul.f32 %v5166, %v5343
        %v5501 = vmul.f32 %v5170, %v5343
        %v5502 = vmul.f32 %v5174, %v5343
        %v5503 = vmul.f32 %v5178, %v5343
        %v5504 = vmul.f32 %v5182, %v5343
        %v5505 = vmul.f32 %v5186, %v5343
        %v5506 = vmul.f32 %v5190, %v5343
        %v5507 = vmul.f32 %v5194, %v5343
        %v5508 = vmul.f32 %v5198, %v5343
        %v5509 = vmul.f32 %v5202, %v5343
        %v5510 = vmul.f32 %v5206, %v5343
        %v5511 = vmul.f32 %v5210, %v5343
        %v5512 = vmul.f32 %v5214, %v5343
        %v5513 = vmul.f32 %v5218, %v5343
        %v5514 = vmul.f32 %v5222, %v5343
        %v5515 = vmul.f32 %v5226, %v5343
        %v5516 = vmul.f32 %v5230, %v5343
        %v5517 = vmul.f32 %v5234, %v5343
        %v5518 = vmul.f32 %v5238, %v5343
        %v5519 = vmul.f32 %v5242, %v5343
        %v5520 = vmul.f32 %v5488, %v5379
        %v5521 = vmul.f32 %v5489, %v5379
        %v5522 = vmul.f32 %v5490, %v5383
        %v5523 = vmul.f32 %v5491, %v5383
        %v5524 = vmul.f32 %v5492, %v5387
        %v5525 = vmul.f32 %v5493, %v5387
        %v5526 = vmul.f32 %v5494, %v5391
        %v5527 = vmul.f32 %v5495, %v5391
        %v5528 = vmul.f32 %v5496, %v5395
        %v5529 = vmul.f32 %v5497, %v5395
        %v5530 = vmul.f32 %v5498, %v5399
        %v5531 = vmul.f32 %v5499, %v5399
        %v5532 = vmul.f32 %v5500, %v5403
        %v5533 = vmul.f32 %v5501, %v5403
        %v5534 = vmul.f32 %v5502, %v5407
        %v5535 = vmul.f32 %v5503, %v5407
        %v5536 = vmul.f32 %v5504, %v5411
        %v5537 = vmul.f32 %v5505, %v5411
        %v5538 = vmul.f32 %v5506, %v5415
        %v5539 = vmul.f32 %v5507, %v5415
        %v5540 = vmul.f32 %v5508, %v5419
        %v5541 = vmul.f32 %v5509, %v5419
        %v5542 = vmul.f32 %v5510, %v5423
        %v5543 = vmul.f32 %v5511, %v5423
        %v5544 = vmul.f32 %v5512, %v5427
        %v5545 = vmul.f32 %v5513, %v5427
        %v5546 = vmul.f32 %v5514, %v5431
        %v5547 = vmul.f32 %v5515, %v5431
        %v5548 = vmul.f32 %v5516, %v5435
        %v5549 = vmul.f32 %v5517, %v5435
        %v5550 = vmul.f32 %v5518, %v5439
        %v5551 = vmul.f32 %v5519, %v5439
        %5584 = vrot.lane.b32.xlu0 %v5520, 112
        %v5585 = vpop.permute.xlu0 %5584
        %5586 = vrot.lane.b32.xlu0 %v5521, 112
        %v5587 = vpop.permute.xlu0 %5586
        %5588 = vrot.lane.b32.xlu0 %v5522, 112
        %v5589 = vpop.permute.xlu0 %5588
        %5590 = vrot.lane.b32.xlu0 %v5523, 112
        %v5591 = vpop.permute.xlu0 %5590
        %5592 = vrot.lane.b32.xlu0 %v5524, 112
        %v5593 = vpop.permute.xlu0 %5592
        %5594 = vrot.lane.b32.xlu0 %v5525, 112
        %v5595 = vpop.permute.xlu0 %5594
        %5596 = vrot.lane.b32.xlu0 %v5526, 112
        %v5597 = vpop.permute.xlu0 %5596
        %5598 = vrot.lane.b32.xlu0 %v5527, 112
        %v5599 = vpop.permute.xlu0 %5598
        %5600 = vrot.lane.b32.xlu0 %v5528, 112
        %v5601 = vpop.permute.xlu0 %5600
        %5602 = vrot.lane.b32.xlu0 %v5529, 112
        %v5603 = vpop.permute.xlu0 %5602
        %5604 = vrot.lane.b32.xlu0 %v5530, 112
        %v5605 = vpop.permute.xlu0 %5604
        %5606 = vrot.lane.b32.xlu0 %v5531, 112
        %v5607 = vpop.permute.xlu0 %5606
        %5608 = vrot.lane.b32.xlu0 %v5532, 112
        %v5609 = vpop.permute.xlu0 %5608
        %5610 = vrot.lane.b32.xlu0 %v5533, 112
        %v5611 = vpop.permute.xlu0 %5610
        %5612 = vrot.lane.b32.xlu0 %v5534, 112
        %v5613 = vpop.permute.xlu0 %5612
        %5614 = vrot.lane.b32.xlu0 %v5535, 112
        %v5615 = vpop.permute.xlu0 %5614
        %5616 = vrot.lane.b32.xlu0 %v5536, 112
        %v5617 = vpop.permute.xlu0 %5616
        %5618 = vrot.lane.b32.xlu0 %v5537, 112
        %v5619 = vpop.permute.xlu0 %5618
        %5620 = vrot.lane.b32.xlu0 %v5538, 112
        %v5621 = vpop.permute.xlu0 %5620
        %5622 = vrot.lane.b32.xlu0 %v5539, 112
        %v5623 = vpop.permute.xlu0 %5622
        %5624 = vrot.lane.b32.xlu0 %v5540, 112
        %v5625 = vpop.permute.xlu0 %5624
        %5626 = vrot.lane.b32.xlu0 %v5541, 112
        %v5627 = vpop.permute.xlu0 %5626
        %5628 = vrot.lane.b32.xlu0 %v5542, 112
        %v5629 = vpop.permute.xlu0 %5628
        %5630 = vrot.lane.b32.xlu0 %v5543, 112
        %v5631 = vpop.permute.xlu0 %5630
        %5632 = vrot.lane.b32.xlu0 %v5544, 112
        %v5633 = vpop.permute.xlu0 %5632
        %5634 = vrot.lane.b32.xlu0 %v5545, 112
        %v5635 = vpop.permute.xlu0 %5634
        %5636 = vrot.lane.b32.xlu0 %v5546, 112
        %v5637 = vpop.permute.xlu0 %5636
        %5638 = vrot.lane.b32.xlu0 %v5547, 112
        %v5639 = vpop.permute.xlu0 %5638
        %5640 = vrot.lane.b32.xlu0 %v5548, 112
        %v5641 = vpop.permute.xlu0 %5640
        %5642 = vrot.lane.b32.xlu0 %v5549, 112
        %v5643 = vpop.permute.xlu0 %5642
        %5644 = vrot.lane.b32.xlu0 %v5550, 112
        %v5645 = vpop.permute.xlu0 %5644
        %5646 = vrot.lane.b32.xlu0 %v5551, 112
        %v5647 = vpop.permute.xlu0 %5646
        %v5680 = vadd.f32 %v5456, %v5585
        %v5681 = vadd.f32 %v5457, %v5587
        %v5682 = vadd.f32 %v5458, %v5589
        %v5683 = vadd.f32 %v5459, %v5591
        %v5684 = vadd.f32 %v5460, %v5593
        %v5685 = vadd.f32 %v5461, %v5595
        %v5686 = vadd.f32 %v5462, %v5597
        %v5687 = vadd.f32 %v5463, %v5599
        %v5688 = vadd.f32 %v5464, %v5601
        %v5689 = vadd.f32 %v5465, %v5603
        %v5690 = vadd.f32 %v5466, %v5605
        %v5691 = vadd.f32 %v5467, %v5607
        %v5692 = vadd.f32 %v5468, %v5609
        %v5693 = vadd.f32 %v5469, %v5611
        %v5694 = vadd.f32 %v5470, %v5613
        %v5695 = vadd.f32 %v5471, %v5615
        %v5696 = vadd.f32 %v5472, %v5617
        %v5697 = vadd.f32 %v5473, %v5619
        %v5698 = vadd.f32 %v5474, %v5621
        %v5699 = vadd.f32 %v5475, %v5623
        %v5700 = vadd.f32 %v5476, %v5625
        %v5701 = vadd.f32 %v5477, %v5627
        %v5702 = vadd.f32 %v5478, %v5629
        %v5703 = vadd.f32 %v5479, %v5631
        %v5704 = vadd.f32 %v5480, %v5633
        %v5705 = vadd.f32 %v5481, %v5635
        %v5706 = vadd.f32 %v5482, %v5637
        %v5707 = vadd.f32 %v5483, %v5639
        %v5708 = vadd.f32 %v5484, %v5641
        %v5709 = vadd.f32 %v5485, %v5643
        %v5710 = vadd.f32 %v5486, %v5645
        %v5711 = vadd.f32 %v5487, %v5647
        %s5712 = scalar_lea.vmem [#allocation8], 128
        %v5713 = vld [vmem:[%s5712] sm:$0xff]
        %v5714 = vld [vmem:[%s5712 + $0x8] sm:$0xff]
        %v5715 = vmul.f32 %v4945, %v5713
        %v5716 = vmul.f32 %v4949, %v5714
        %v5717 = vmul.f32 %v4956, %v5713
        %v5718 = vmul.f32 %v4960, %v5714
        %v5719 = vmul.f32 %v4967, %v5713
        %v5720 = vmul.f32 %v4971, %v5714
        %v5721 = vmul.f32 %v4978, %v5713
        %v5722 = vmul.f32 %v4982, %v5714
        %v5723 = vmul.f32 %v4989, %v5713
        %v5724 = vmul.f32 %v4993, %v5714
        %v5725 = vmul.f32 %v5000, %v5713
        %v5726 = vmul.f32 %v5004, %v5714
        %v5727 = vmul.f32 %v5011, %v5713
        %v5728 = vmul.f32 %v5015, %v5714
        %v5729 = vmul.f32 %v5022, %v5713
        %v5730 = vmul.f32 %v5026, %v5714
        %v5731 = vmul.f32 %v5033, %v5713
        %v5732 = vmul.f32 %v5037, %v5714
        %v5733 = vmul.f32 %v5044, %v5713
        %v5734 = vmul.f32 %v5048, %v5714
        %v5735 = vmul.f32 %v5055, %v5713
        %v5736 = vmul.f32 %v5059, %v5714
        %v5737 = vmul.f32 %v5066, %v5713
        %v5738 = vmul.f32 %v5070, %v5714
        %v5739 = vmul.f32 %v5077, %v5713
        %v5740 = vmul.f32 %v5081, %v5714
        %v5741 = vmul.f32 %v5088, %v5713
        %v5742 = vmul.f32 %v5092, %v5714
        %v5743 = vmul.f32 %v5099, %v5713
        %v5744 = vmul.f32 %v5103, %v5714
        %v5745 = vmul.f32 %v5110, %v5713
        %v5746 = vmul.f32 %v5114, %v5714
        %5779 = vrot.lane.b32.xlu0 %v5715, 32
        %v5780 = vpop.permute.xlu0 %5779
        %5781 = vrot.lane.b32.xlu0 %v5716, 32
        %v5782 = vpop.permute.xlu0 %5781
        %5783 = vrot.lane.b32.xlu0 %v5717, 32
        %v5784 = vpop.permute.xlu0 %5783
        %5785 = vrot.lane.b32.xlu0 %v5718, 32
        %v5786 = vpop.permute.xlu0 %5785
        %5787 = vrot.lane.b32.xlu0 %v5719, 32
        %v5788 = vpop.permute.xlu0 %5787
        %5789 = vrot.lane.b32.xlu0 %v5720, 32
        %v5790 = vpop.permute.xlu0 %5789
        %5791 = vrot.lane.b32.xlu0 %v5721, 32
        %v5792 = vpop.permute.xlu0 %5791
        %5793 = vrot.lane.b32.xlu0 %v5722, 32
        %v5794 = vpop.permute.xlu0 %5793
        %5795 = vrot.lane.b32.xlu0 %v5723, 32
        %v5796 = vpop.permute.xlu0 %5795
        %5797 = vrot.lane.b32.xlu0 %v5724, 32
        %v5798 = vpop.permute.xlu0 %5797
        %5799 = vrot.lane.b32.xlu0 %v5725, 32
        %v5800 = vpop.permute.xlu0 %5799
        %5801 = vrot.lane.b32.xlu0 %v5726, 32
        %v5802 = vpop.permute.xlu0 %5801
        %5803 = vrot.lane.b32.xlu0 %v5727, 32
        %v5804 = vpop.permute.xlu0 %5803
        %5805 = vrot.lane.b32.xlu0 %v5728, 32
        %v5806 = vpop.permute.xlu0 %5805
        %5807 = vrot.lane.b32.xlu0 %v5729, 32
        %v5808 = vpop.permute.xlu0 %5807
        %5809 = vrot.lane.b32.xlu0 %v5730, 32
        %v5810 = vpop.permute.xlu0 %5809
        %5811 = vrot.lane.b32.xlu0 %v5731, 32
        %v5812 = vpop.permute.xlu0 %5811
        %5813 = vrot.lane.b32.xlu0 %v5732, 32
        %v5814 = vpop.permute.xlu0 %5813
        %5815 = vrot.lane.b32.xlu0 %v5733, 32
        %v5816 = vpop.permute.xlu0 %5815
        %5817 = vrot.lane.b32.xlu0 %v5734, 32
        %v5818 = vpop.permute.xlu0 %5817
        %5819 = vrot.lane.b32.xlu0 %v5735, 32
        %v5820 = vpop.permute.xlu0 %5819
        %5821 = vrot.lane.b32.xlu0 %v5736, 32
        %v5822 = vpop.permute.xlu0 %5821
        %5823 = vrot.lane.b32.xlu0 %v5737, 32
        %v5824 = vpop.permute.xlu0 %5823
        %5825 = vrot.lane.b32.xlu0 %v5738, 32
        %v5826 = vpop.permute.xlu0 %5825
        %5827 = vrot.lane.b32.xlu0 %v5739, 32
        %v5828 = vpop.permute.xlu0 %5827
        %5829 = vrot.lane.b32.xlu0 %v5740, 32
        %v5830 = vpop.permute.xlu0 %5829
        %5831 = vrot.lane.b32.xlu0 %v5741, 32
        %v5832 = vpop.permute.xlu0 %5831
        %5833 = vrot.lane.b32.xlu0 %v5742, 32
        %v5834 = vpop.permute.xlu0 %5833
        %5835 = vrot.lane.b32.xlu0 %v5743, 32
        %v5836 = vpop.permute.xlu0 %5835
        %5837 = vrot.lane.b32.xlu0 %v5744, 32
        %v5838 = vpop.permute.xlu0 %5837
        %5839 = vrot.lane.b32.xlu0 %v5745, 32
        %v5840 = vpop.permute.xlu0 %5839
        %5841 = vrot.lane.b32.xlu0 %v5746, 32
        %v5842 = vpop.permute.xlu0 %5841
        %v5875 = vadd.f32 %v5680, %v5780
        %v5876 = vadd.f32 %v5681, %v5782
        %v5877 = vadd.f32 %v5682, %v5784
        %v5878 = vadd.f32 %v5683, %v5786
        %v5879 = vadd.f32 %v5684, %v5788
        %v5880 = vadd.f32 %v5685, %v5790
        %v5881 = vadd.f32 %v5686, %v5792
        %v5882 = vadd.f32 %v5687, %v5794
        %v5883 = vadd.f32 %v5688, %v5796
        %v5884 = vadd.f32 %v5689, %v5798
        %v5885 = vadd.f32 %v5690, %v5800
        %v5886 = vadd.f32 %v5691, %v5802
        %v5887 = vadd.f32 %v5692, %v5804
        %v5888 = vadd.f32 %v5693, %v5806
        %v5889 = vadd.f32 %v5694, %v5808
        %v5890 = vadd.f32 %v5695, %v5810
        %v5891 = vadd.f32 %v5696, %v5812
        %v5892 = vadd.f32 %v5697, %v5814
        %v5893 = vadd.f32 %v5698, %v5816
        %v5894 = vadd.f32 %v5699, %v5818
        %v5895 = vadd.f32 %v5700, %v5820
        %v5896 = vadd.f32 %v5701, %v5822
        %v5897 = vadd.f32 %v5702, %v5824
        %v5898 = vadd.f32 %v5703, %v5826
        %v5899 = vadd.f32 %v5704, %v5828
        %v5900 = vadd.f32 %v5705, %v5830
        %v5901 = vadd.f32 %v5706, %v5832
        %v5902 = vadd.f32 %v5707, %v5834
        %v5903 = vadd.f32 %v5708, %v5836
        %v5904 = vadd.f32 %v5709, %v5838
        %v5905 = vadd.f32 %v5710, %v5840
        %v5906 = vadd.f32 %v5711, %v5842
        %s5907 = scalar_lea.vmem [#allocation8], 160
        %v5908 = vld [vmem:[%s5907] sm:$0xff]
        %v5909 = vld [vmem:[%s5907 + $0x8] sm:$0xff]
        %5912 = vrot.lane.b32.xlu0 %v5908, 32
        %v5913 = vpop.permute.xlu0 %5912
        %5914 = vrot.lane.b32.xlu0 %v5909, 32
        %v5915 = vpop.permute.xlu0 %5914
        %v5918 = vmul.f32 %v5379, %v5913
        %v5919 = vmul.f32 %v5379, %v5915
        %v5920 = vmul.f32 %v5383, %v5913
        %v5921 = vmul.f32 %v5383, %v5915
        %v5922 = vmul.f32 %v5387, %v5913
        %v5923 = vmul.f32 %v5387, %v5915
        %v5924 = vmul.f32 %v5391, %v5913
        %v5925 = vmul.f32 %v5391, %v5915
        %v5926 = vmul.f32 %v5395, %v5913
        %v5927 = vmul.f32 %v5395, %v5915
        %v5928 = vmul.f32 %v5399, %v5913
        %v5929 = vmul.f32 %v5399, %v5915
        %v5930 = vmul.f32 %v5403, %v5913
        %v5931 = vmul.f32 %v5403, %v5915
        %v5932 = vmul.f32 %v5407, %v5913
        %v5933 = vmul.f32 %v5407, %v5915
        %v5934 = vmul.f32 %v5411, %v5913
        %v5935 = vmul.f32 %v5411, %v5915
        %v5936 = vmul.f32 %v5415, %v5913
        %v5937 = vmul.f32 %v5415, %v5915
        %v5938 = vmul.f32 %v5419, %v5913
        %v5939 = vmul.f32 %v5419, %v5915
        %v5940 = vmul.f32 %v5423, %v5913
        %v5941 = vmul.f32 %v5423, %v5915
        %v5942 = vmul.f32 %v5427, %v5913
        %v5943 = vmul.f32 %v5427, %v5915
        %v5944 = vmul.f32 %v5431, %v5913
        %v5945 = vmul.f32 %v5431, %v5915
        %v5946 = vmul.f32 %v5435, %v5913
        %v5947 = vmul.f32 %v5435, %v5915
        %v5948 = vmul.f32 %v5439, %v5913
        %v5949 = vmul.f32 %v5439, %v5915
        %v5950 = vadd.f32 %v5875, %v5918
        %v5951 = vadd.f32 %v5876, %v5919
        %v5952 = vadd.f32 %v5877, %v5920
        %v5953 = vadd.f32 %v5878, %v5921
        %v5954 = vadd.f32 %v5879, %v5922
        %v5955 = vadd.f32 %v5880, %v5923
        %v5956 = vadd.f32 %v5881, %v5924
        %v5957 = vadd.f32 %v5882, %v5925
        %v5958 = vadd.f32 %v5883, %v5926
        %v5959 = vadd.f32 %v5884, %v5927
        %v5960 = vadd.f32 %v5885, %v5928
        %v5961 = vadd.f32 %v5886, %v5929
        %v5962 = vadd.f32 %v5887, %v5930
        %v5963 = vadd.f32 %v5888, %v5931
        %v5964 = vadd.f32 %v5889, %v5932
        %v5965 = vadd.f32 %v5890, %v5933
        %v5966 = vadd.f32 %v5891, %v5934
        %v5967 = vadd.f32 %v5892, %v5935
        %v5968 = vadd.f32 %v5893, %v5936
        %v5969 = vadd.f32 %v5894, %v5937
        %v5970 = vadd.f32 %v5895, %v5938
        %v5971 = vadd.f32 %v5896, %v5939
        %v5972 = vadd.f32 %v5897, %v5940
        %v5973 = vadd.f32 %v5898, %v5941
        %v5974 = vadd.f32 %v5899, %v5942
        %v5975 = vadd.f32 %v5900, %v5943
        %v5976 = vadd.f32 %v5901, %v5944
        %v5977 = vadd.f32 %v5902, %v5945
        %v5978 = vadd.f32 %v5903, %v5946
        %v5979 = vadd.f32 %v5904, %v5947
        %v5980 = vadd.f32 %v5905, %v5948
        %v5981 = vadd.f32 %v5906, %v5949
        %s5982 = scalar_lea.vmem [#allocation8], 144
        %v5983 = vld [vmem:[%s5982] sm:$0xff]
        %v5984 = vld [vmem:[%s5982 + $0x8] sm:$0xff]
        %v5985 = vmul.f32 %v5118, %v5983
        %v5986 = vmul.f32 %v5122, %v5984
        %v5987 = vmul.f32 %v5126, %v5983
        %v5988 = vmul.f32 %v5130, %v5984
        %v5989 = vmul.f32 %v5134, %v5983
        %v5990 = vmul.f32 %v5138, %v5984
        %v5991 = vmul.f32 %v5142, %v5983
        %v5992 = vmul.f32 %v5146, %v5984
        %v5993 = vmul.f32 %v5150, %v5983
        %v5994 = vmul.f32 %v5154, %v5984
        %v5995 = vmul.f32 %v5158, %v5983
        %v5996 = vmul.f32 %v5162, %v5984
        %v5997 = vmul.f32 %v5166, %v5983
        %v5998 = vmul.f32 %v5170, %v5984
        %v5999 = vmul.f32 %v5174, %v5983
        %v6000 = vmul.f32 %v5178, %v5984
        %v6001 = vmul.f32 %v5182, %v5983
        %v6002 = vmul.f32 %v5186, %v5984
        %v6003 = vmul.f32 %v5190, %v5983
        %v6004 = vmul.f32 %v5194, %v5984
        %v6005 = vmul.f32 %v5198, %v5983
        %v6006 = vmul.f32 %v5202, %v5984
        %v6007 = vmul.f32 %v5206, %v5983
        %v6008 = vmul.f32 %v5210, %v5984
        %v6009 = vmul.f32 %v5214, %v5983
        %v6010 = vmul.f32 %v5218, %v5984
        %v6011 = vmul.f32 %v5222, %v5983
        %v6012 = vmul.f32 %v5226, %v5984
        %v6013 = vmul.f32 %v5230, %v5983
        %v6014 = vmul.f32 %v5234, %v5984
        %v6015 = vmul.f32 %v5238, %v5983
        %v6016 = vmul.f32 %v5242, %v5984
        %6049 = vrot.lane.b32.xlu0 %v5985, 32
        %v6050 = vpop.permute.xlu0 %6049
        %6051 = vrot.lane.b32.xlu0 %v5986, 32
        %v6052 = vpop.permute.xlu0 %6051
        %6053 = vrot.lane.b32.xlu0 %v5987, 32
        %v6054 = vpop.permute.xlu0 %6053
        %6055 = vrot.lane.b32.xlu0 %v5988, 32
        %v6056 = vpop.permute.xlu0 %6055
        %6057 = vrot.lane.b32.xlu0 %v5989, 32
        %v6058 = vpop.permute.xlu0 %6057
        %6059 = vrot.lane.b32.xlu0 %v5990, 32
        %v6060 = vpop.permute.xlu0 %6059
        %6061 = vrot.lane.b32.xlu0 %v5991, 32
        %v6062 = vpop.permute.xlu0 %6061
        %6063 = vrot.lane.b32.xlu0 %v5992, 32
        %v6064 = vpop.permute.xlu0 %6063
        %6065 = vrot.lane.b32.xlu0 %v5993, 32
        %v6066 = vpop.permute.xlu0 %6065
        %6067 = vrot.lane.b32.xlu0 %v5994, 32
        %v6068 = vpop.permute.xlu0 %6067
        %6069 = vrot.lane.b32.xlu0 %v5995, 32
        %v6070 = vpop.permute.xlu0 %6069
        %6071 = vrot.lane.b32.xlu0 %v5996, 32
        %v6072 = vpop.permute.xlu0 %6071
        %6073 = vrot.lane.b32.xlu0 %v5997, 32
        %v6074 = vpop.permute.xlu0 %6073
        %6075 = vrot.lane.b32.xlu0 %v5998, 32
        %v6076 = vpop.permute.xlu0 %6075
        %6077 = vrot.lane.b32.xlu0 %v5999, 32
        %v6078 = vpop.permute.xlu0 %6077
        %6079 = vrot.lane.b32.xlu0 %v6000, 32
        %v6080 = vpop.permute.xlu0 %6079
        %6081 = vrot.lane.b32.xlu0 %v6001, 32
        %v6082 = vpop.permute.xlu0 %6081
        %6083 = vrot.lane.b32.xlu0 %v6002, 32
        %v6084 = vpop.permute.xlu0 %6083
        %6085 = vrot.lane.b32.xlu0 %v6003, 32
        %v6086 = vpop.permute.xlu0 %6085
        %6087 = vrot.lane.b32.xlu0 %v6004, 32
        %v6088 = vpop.permute.xlu0 %6087
        %6089 = vrot.lane.b32.xlu0 %v6005, 32
        %v6090 = vpop.permute.xlu0 %6089
        %6091 = vrot.lane.b32.xlu0 %v6006, 32
        %v6092 = vpop.permute.xlu0 %6091
        %6093 = vrot.lane.b32.xlu0 %v6007, 32
        %v6094 = vpop.permute.xlu0 %6093
        %6095 = vrot.lane.b32.xlu0 %v6008, 32
        %v6096 = vpop.permute.xlu0 %6095
        %6097 = vrot.lane.b32.xlu0 %v6009, 32
        %v6098 = vpop.permute.xlu0 %6097
        %6099 = vrot.lane.b32.xlu0 %v6010, 32
        %v6100 = vpop.permute.xlu0 %6099
        %6101 = vrot.lane.b32.xlu0 %v6011, 32
        %v6102 = vpop.permute.xlu0 %6101
        %6103 = vrot.lane.b32.xlu0 %v6012, 32
        %v6104 = vpop.permute.xlu0 %6103
        %6105 = vrot.lane.b32.xlu0 %v6013, 32
        %v6106 = vpop.permute.xlu0 %6105
        %6107 = vrot.lane.b32.xlu0 %v6014, 32
        %v6108 = vpop.permute.xlu0 %6107
        %6109 = vrot.lane.b32.xlu0 %v6015, 32
        %v6110 = vpop.permute.xlu0 %6109
        %6111 = vrot.lane.b32.xlu0 %v6016, 32
        %v6112 = vpop.permute.xlu0 %6111
        %v6145 = vadd.f32 %v5950, %v6050
        %v6146 = vadd.f32 %v5951, %v6052
        %v6147 = vadd.f32 %v5952, %v6054
        %v6148 = vadd.f32 %v5953, %v6056
        %v6149 = vadd.f32 %v5954, %v6058
        %v6150 = vadd.f32 %v5955, %v6060
        %v6151 = vadd.f32 %v5956, %v6062
        %v6152 = vadd.f32 %v5957, %v6064
        %v6153 = vadd.f32 %v5958, %v6066
        %v6154 = vadd.f32 %v5959, %v6068
        %v6155 = vadd.f32 %v5960, %v6070
        %v6156 = vadd.f32 %v5961, %v6072
        %v6157 = vadd.f32 %v5962, %v6074
        %v6158 = vadd.f32 %v5963, %v6076
        %v6159 = vadd.f32 %v5964, %v6078
        %v6160 = vadd.f32 %v5965, %v6080
        %v6161 = vadd.f32 %v5966, %v6082
        %v6162 = vadd.f32 %v5967, %v6084
        %v6163 = vadd.f32 %v5968, %v6086
        %v6164 = vadd.f32 %v5969, %v6088
        %v6165 = vadd.f32 %v5970, %v6090
        %v6166 = vadd.f32 %v5971, %v6092
        %v6167 = vadd.f32 %v5972, %v6094
        %v6168 = vadd.f32 %v5973, %v6096
        %v6169 = vadd.f32 %v5974, %v6098
        %v6170 = vadd.f32 %v5975, %v6100
        %v6171 = vadd.f32 %v5976, %v6102
        %v6172 = vadd.f32 %v5977, %v6104
        %v6173 = vadd.f32 %v5978, %v6106
        %v6174 = vadd.f32 %v5979, %v6108
        %v6175 = vadd.f32 %v5980, %v6110
        %v6176 = vadd.f32 %v5981, %v6112
        %s6177 = scalar_lea.vmem [#allocation8], 176
        %v6178 = vld [vmem:[%s6177] sm:$0xff]
        %v6179 = vld [vmem:[%s6177 + $0x8] sm:$0xff]
        %6182 = vrot.lane.b32.xlu0 %v6178, 48
        %v6183 = vpop.permute.xlu0 %6182
        %6184 = vrot.lane.b32.xlu0 %v6179, 48
        %v6185 = vpop.permute.xlu0 %6184
        %v6188 = vmul.f32 %v5379, %v6183
        %v6189 = vmul.f32 %v5379, %v6185
        %v6190 = vmul.f32 %v5383, %v6183
        %v6191 = vmul.f32 %v5383, %v6185
        %v6192 = vmul.f32 %v5387, %v6183
        %v6193 = vmul.f32 %v5387, %v6185
        %v6194 = vmul.f32 %v5391, %v6183
        %v6195 = vmul.f32 %v5391, %v6185
        %v6196 = vmul.f32 %v5395, %v6183
        %v6197 = vmul.f32 %v5395, %v6185
        %v6198 = vmul.f32 %v5399, %v6183
        %v6199 = vmul.f32 %v5399, %v6185
        %v6200 = vmul.f32 %v5403, %v6183
        %v6201 = vmul.f32 %v5403, %v6185
        %v6202 = vmul.f32 %v5407, %v6183
        %v6203 = vmul.f32 %v5407, %v6185
        %v6204 = vmul.f32 %v5411, %v6183
        %v6205 = vmul.f32 %v5411, %v6185
        %v6206 = vmul.f32 %v5415, %v6183
        %v6207 = vmul.f32 %v5415, %v6185
        %v6208 = vmul.f32 %v5419, %v6183
        %v6209 = vmul.f32 %v5419, %v6185
        %v6210 = vmul.f32 %v5423, %v6183
        %v6211 = vmul.f32 %v5423, %v6185
        %v6212 = vmul.f32 %v5427, %v6183
        %v6213 = vmul.f32 %v5427, %v6185
        %v6214 = vmul.f32 %v5431, %v6183
        %v6215 = vmul.f32 %v5431, %v6185
        %v6216 = vmul.f32 %v5435, %v6183
        %v6217 = vmul.f32 %v5435, %v6185
        %v6218 = vmul.f32 %v5439, %v6183
        %v6219 = vmul.f32 %v5439, %v6185
        %6252 = vrot.lane.b32.xlu0 %v6188, 112
        %v6253 = vpop.permute.xlu0 %6252
        %6254 = vrot.lane.b32.xlu0 %v6189, 112
        %v6255 = vpop.permute.xlu0 %6254
        %6256 = vrot.lane.b32.xlu0 %v6190, 112
        %v6257 = vpop.permute.xlu0 %6256
        %6258 = vrot.lane.b32.xlu0 %v6191, 112
        %v6259 = vpop.permute.xlu0 %6258
        %6260 = vrot.lane.b32.xlu0 %v6192, 112
        %v6261 = vpop.permute.xlu0 %6260
        %6262 = vrot.lane.b32.xlu0 %v6193, 112
        %v6263 = vpop.permute.xlu0 %6262
        %6264 = vrot.lane.b32.xlu0 %v6194, 112
        %v6265 = vpop.permute.xlu0 %6264
        %6266 = vrot.lane.b32.xlu0 %v6195, 112
        %v6267 = vpop.permute.xlu0 %6266
        %6268 = vrot.lane.b32.xlu0 %v6196, 112
        %v6269 = vpop.permute.xlu0 %6268
        %6270 = vrot.lane.b32.xlu0 %v6197, 112
        %v6271 = vpop.permute.xlu0 %6270
        %6272 = vrot.lane.b32.xlu0 %v6198, 112
        %v6273 = vpop.permute.xlu0 %6272
        %6274 = vrot.lane.b32.xlu0 %v6199, 112
        %v6275 = vpop.permute.xlu0 %6274
        %6276 = vrot.lane.b32.xlu0 %v6200, 112
        %v6277 = vpop.permute.xlu0 %6276
        %6278 = vrot.lane.b32.xlu0 %v6201, 112
        %v6279 = vpop.permute.xlu0 %6278
        %6280 = vrot.lane.b32.xlu0 %v6202, 112
        %v6281 = vpop.permute.xlu0 %6280
        %6282 = vrot.lane.b32.xlu0 %v6203, 112
        %v6283 = vpop.permute.xlu0 %6282
        %6284 = vrot.lane.b32.xlu0 %v6204, 112
        %v6285 = vpop.permute.xlu0 %6284
        %6286 = vrot.lane.b32.xlu0 %v6205, 112
        %v6287 = vpop.permute.xlu0 %6286
        %6288 = vrot.lane.b32.xlu0 %v6206, 112
        %v6289 = vpop.permute.xlu0 %6288
        %6290 = vrot.lane.b32.xlu0 %v6207, 112
        %v6291 = vpop.permute.xlu0 %6290
        %6292 = vrot.lane.b32.xlu0 %v6208, 112
        %v6293 = vpop.permute.xlu0 %6292
        %6294 = vrot.lane.b32.xlu0 %v6209, 112
        %v6295 = vpop.permute.xlu0 %6294
        %6296 = vrot.lane.b32.xlu0 %v6210, 112
        %v6297 = vpop.permute.xlu0 %6296
        %6298 = vrot.lane.b32.xlu0 %v6211, 112
        %v6299 = vpop.permute.xlu0 %6298
        %6300 = vrot.lane.b32.xlu0 %v6212, 112
        %v6301 = vpop.permute.xlu0 %6300
        %6302 = vrot.lane.b32.xlu0 %v6213, 112
        %v6303 = vpop.permute.xlu0 %6302
        %6304 = vrot.lane.b32.xlu0 %v6214, 112
        %v6305 = vpop.permute.xlu0 %6304
        %6306 = vrot.lane.b32.xlu0 %v6215, 112
        %v6307 = vpop.permute.xlu0 %6306
        %6308 = vrot.lane.b32.xlu0 %v6216, 112
        %v6309 = vpop.permute.xlu0 %6308
        %6310 = vrot.lane.b32.xlu0 %v6217, 112
        %v6311 = vpop.permute.xlu0 %6310
        %6312 = vrot.lane.b32.xlu0 %v6218, 112
        %v6313 = vpop.permute.xlu0 %6312
        %6314 = vrot.lane.b32.xlu0 %v6219, 112
        %v6315 = vpop.permute.xlu0 %6314
        %v6348 = vadd.f32 %v6145, %v6253
        %v6349 = vadd.f32 %v6146, %v6255
        %v6350 = vadd.f32 %v6147, %v6257
        %v6351 = vadd.f32 %v6148, %v6259
        %v6352 = vadd.f32 %v6149, %v6261
        %v6353 = vadd.f32 %v6150, %v6263
        %v6354 = vadd.f32 %v6151, %v6265
        %v6355 = vadd.f32 %v6152, %v6267
        %v6356 = vadd.f32 %v6153, %v6269
        %v6357 = vadd.f32 %v6154, %v6271
        %v6358 = vadd.f32 %v6155, %v6273
        %v6359 = vadd.f32 %v6156, %v6275
        %v6360 = vadd.f32 %v6157, %v6277
        %v6361 = vadd.f32 %v6158, %v6279
        %v6362 = vadd.f32 %v6159, %v6281
        %v6363 = vadd.f32 %v6160, %v6283
        %v6364 = vadd.f32 %v6161, %v6285
        %v6365 = vadd.f32 %v6162, %v6287
        %v6366 = vadd.f32 %v6163, %v6289
        %v6367 = vadd.f32 %v6164, %v6291
        %v6368 = vadd.f32 %v6165, %v6293
        %v6369 = vadd.f32 %v6166, %v6295
        %v6370 = vadd.f32 %v6167, %v6297
        %v6371 = vadd.f32 %v6168, %v6299
        %v6372 = vadd.f32 %v6169, %v6301
        %v6373 = vadd.f32 %v6170, %v6303
        %v6374 = vadd.f32 %v6171, %v6305
        %v6375 = vadd.f32 %v6172, %v6307
        %v6376 = vadd.f32 %v6173, %v6309
        %v6377 = vadd.f32 %v6174, %v6311
        %v6378 = vadd.f32 %v6175, %v6313
        %v6379 = vadd.f32 %v6176, %v6315
        %v6380 = vstv %s4938
        %v6381 = vadd.f32 %v6348, %v6380
        %v6382 = vadd.f32 %v6349, %v6380
        %v6383 = vadd.f32 %v6350, %v6380
        %v6384 = vadd.f32 %v6351, %v6380
        %v6385 = vadd.f32 %v6352, %v6380
        %v6386 = vadd.f32 %v6353, %v6380
        %v6387 = vadd.f32 %v6354, %v6380
        %v6388 = vadd.f32 %v6355, %v6380
        %v6389 = vadd.f32 %v6356, %v6380
        %v6390 = vadd.f32 %v6357, %v6380
        %v6391 = vadd.f32 %v6358, %v6380
        %v6392 = vadd.f32 %v6359, %v6380
        %v6393 = vadd.f32 %v6360, %v6380
        %v6394 = vadd.f32 %v6361, %v6380
        %v6395 = vadd.f32 %v6362, %v6380
        %v6396 = vadd.f32 %v6363, %v6380
        %v6397 = vadd.f32 %v6364, %v6380
        %v6398 = vadd.f32 %v6365, %v6380
        %v6399 = vadd.f32 %v6366, %v6380
        %v6400 = vadd.f32 %v6367, %v6380
        %v6401 = vadd.f32 %v6368, %v6380
        %v6402 = vadd.f32 %v6369, %v6380
        %v6403 = vadd.f32 %v6370, %v6380
        %v6404 = vadd.f32 %v6371, %v6380
        %v6405 = vadd.f32 %v6372, %v6380
        %v6406 = vadd.f32 %v6373, %v6380
        %v6407 = vadd.f32 %v6374, %v6380
        %v6408 = vadd.f32 %v6375, %v6380
        %v6409 = vadd.f32 %v6376, %v6380
        %v6410 = vadd.f32 %v6377, %v6380
        %v6411 = vadd.f32 %v6378, %v6380
        %v6412 = vadd.f32 %v6379, %v6380
        %v6413 = vsel %vm1947, %v6381, -inf
        %6414 = vmax.xlane.f32.xlu0 %v6413
        %v6415 = vpop.xlane.xlu0 %6414
        %v6416 = vsel %vm1947, %v6382, -inf
        %6417 = vmax.xlane.f32.xlu0 %v6416
        %v6418 = vpop.xlane.xlu0 %6417
        %v6419 = vsel %vm1947, %v6383, -inf
        %6420 = vmax.xlane.f32.xlu0 %v6419
        %v6421 = vpop.xlane.xlu0 %6420
        %v6422 = vsel %vm1947, %v6384, -inf
        %6423 = vmax.xlane.f32.xlu0 %v6422
        %v6424 = vpop.xlane.xlu0 %6423
        %v6425 = vsel %vm1947, %v6385, -inf
        %6426 = vmax.xlane.f32.xlu0 %v6425
        %v6427 = vpop.xlane.xlu0 %6426
        %v6428 = vsel %vm1947, %v6386, -inf
        %6429 = vmax.xlane.f32.xlu0 %v6428
        %v6430 = vpop.xlane.xlu0 %6429
        %v6431 = vsel %vm1947, %v6387, -inf
        %6432 = vmax.xlane.f32.xlu0 %v6431
        %v6433 = vpop.xlane.xlu0 %6432
        %v6434 = vsel %vm1947, %v6388, -inf
        %6435 = vmax.xlane.f32.xlu0 %v6434
        %v6436 = vpop.xlane.xlu0 %6435
        %v6437 = vsel %vm1947, %v6389, -inf
        %6438 = vmax.xlane.f32.xlu0 %v6437
        %v6439 = vpop.xlane.xlu0 %6438
        %v6440 = vsel %vm1947, %v6390, -inf
        %6441 = vmax.xlane.f32.xlu0 %v6440
        %v6442 = vpop.xlane.xlu0 %6441
        %v6443 = vsel %vm1947, %v6391, -inf
        %6444 = vmax.xlane.f32.xlu0 %v6443
        %v6445 = vpop.xlane.xlu0 %6444
        %v6446 = vsel %vm1947, %v6392, -inf
        %6447 = vmax.xlane.f32.xlu0 %v6446
        %v6448 = vpop.xlane.xlu0 %6447
        %v6449 = vsel %vm1947, %v6393, -inf
        %6450 = vmax.xlane.f32.xlu0 %v6449
        %v6451 = vpop.xlane.xlu0 %6450
        %v6452 = vsel %vm1947, %v6394, -inf
        %6453 = vmax.xlane.f32.xlu0 %v6452
        %v6454 = vpop.xlane.xlu0 %6453
        %v6455 = vsel %vm1947, %v6395, -inf
        %6456 = vmax.xlane.f32.xlu0 %v6455
        %v6457 = vpop.xlane.xlu0 %6456
        %v6458 = vsel %vm1947, %v6396, -inf
        %6459 = vmax.xlane.f32.xlu0 %v6458
        %v6460 = vpop.xlane.xlu0 %6459
        %v6461 = vsel %vm1947, %v6397, -inf
        %6462 = vmax.xlane.f32.xlu0 %v6461
        %v6463 = vpop.xlane.xlu0 %6462
        %v6464 = vsel %vm1947, %v6398, -inf
        %6465 = vmax.xlane.f32.xlu0 %v6464
        %v6466 = vpop.xlane.xlu0 %6465
        %v6467 = vsel %vm1947, %v6399, -inf
        %6468 = vmax.xlane.f32.xlu0 %v6467
        %v6469 = vpop.xlane.xlu0 %6468
        %v6470 = vsel %vm1947, %v6400, -inf
        %6471 = vmax.xlane.f32.xlu0 %v6470
        %v6472 = vpop.xlane.xlu0 %6471
        %v6473 = vsel %vm1947, %v6401, -inf
        %6474 = vmax.xlane.f32.xlu0 %v6473
        %v6475 = vpop.xlane.xlu0 %6474
        %v6476 = vsel %vm1947, %v6402, -inf
        %6477 = vmax.xlane.f32.xlu0 %v6476
        %v6478 = vpop.xlane.xlu0 %6477
        %v6479 = vsel %vm1947, %v6403, -inf
        %6480 = vmax.xlane.f32.xlu0 %v6479
        %v6481 = vpop.xlane.xlu0 %6480
        %v6482 = vsel %vm1947, %v6404, -inf
        %6483 = vmax.xlane.f32.xlu0 %v6482
        %v6484 = vpop.xlane.xlu0 %6483
        %v6485 = vsel %vm1947, %v6405, -inf
        %6486 = vmax.xlane.f32.xlu0 %v6485
        %v6487 = vpop.xlane.xlu0 %6486
        %v6488 = vsel %vm1947, %v6406, -inf
        %6489 = vmax.xlane.f32.xlu0 %v6488
        %v6490 = vpop.xlane.xlu0 %6489
        %v6491 = vsel %vm1947, %v6407, -inf
        %6492 = vmax.xlane.f32.xlu0 %v6491
        %v6493 = vpop.xlane.xlu0 %6492
        %v6494 = vsel %vm1947, %v6408, -inf
        %6495 = vmax.xlane.f32.xlu0 %v6494
        %v6496 = vpop.xlane.xlu0 %6495
        %v6497 = vsel %vm1947, %v6409, -inf
        %6498 = vmax.xlane.f32.xlu0 %v6497
        %v6499 = vpop.xlane.xlu0 %6498
        %v6500 = vsel %vm1947, %v6410, -inf
        %6501 = vmax.xlane.f32.xlu0 %v6500
        %v6502 = vpop.xlane.xlu0 %6501
        %v6503 = vsel %vm1947, %v6411, -inf
        %6504 = vmax.xlane.f32.xlu0 %v6503
        %v6505 = vpop.xlane.xlu0 %6504
        %v6506 = vsel %vm1947, %v6412, -inf
        %6507 = vmax.xlane.f32.xlu0 %v6506
        %v6508 = vpop.xlane.xlu0 %6507
        %v6509 = vsub.f32 %v6381, %v6415
        %v6510 = vsub.f32 %v6382, %v6418
        %v6511 = vsub.f32 %v6383, %v6421
        %v6512 = vsub.f32 %v6384, %v6424
        %v6513 = vsub.f32 %v6385, %v6427
        %v6514 = vsub.f32 %v6386, %v6430
        %v6515 = vsub.f32 %v6387, %v6433
        %v6516 = vsub.f32 %v6388, %v6436
        %v6517 = vsub.f32 %v6389, %v6439
        %v6518 = vsub.f32 %v6390, %v6442
        %v6519 = vsub.f32 %v6391, %v6445
        %v6520 = vsub.f32 %v6392, %v6448
        %v6521 = vsub.f32 %v6393, %v6451
        %v6522 = vsub.f32 %v6394, %v6454
        %v6523 = vsub.f32 %v6395, %v6457
        %v6524 = vsub.f32 %v6396, %v6460
        %v6525 = vsub.f32 %v6397, %v6463
        %v6526 = vsub.f32 %v6398, %v6466
        %v6527 = vsub.f32 %v6399, %v6469
        %v6528 = vsub.f32 %v6400, %v6472
        %v6529 = vsub.f32 %v6401, %v6475
        %v6530 = vsub.f32 %v6402, %v6478
        %v6531 = vsub.f32 %v6403, %v6481
        %v6532 = vsub.f32 %v6404, %v6484
        %v6533 = vsub.f32 %v6405, %v6487
        %v6534 = vsub.f32 %v6406, %v6490
        %v6535 = vsub.f32 %v6407, %v6493
        %v6536 = vsub.f32 %v6408, %v6496
        %v6537 = vsub.f32 %v6409, %v6499
        %v6538 = vsub.f32 %v6410, %v6502
        %v6539 = vsub.f32 %v6411, %v6505
        %v6540 = vsub.f32 %v6412, %v6508
        %v6541 = vmul.f32 %v6509, 1.442695
        %v6542 = vpow.pop %v6541
        %v6543 = vmul.f32 %v6510, 1.442695
        %v6544 = vpow.pop %v6543
        %v6545 = vmul.f32 %v6511, 1.442695
        %v6546 = vpow.pop %v6545
        %v6547 = vmul.f32 %v6512, 1.442695
        %v6548 = vpow.pop %v6547
        %v6549 = vmul.f32 %v6513, 1.442695
        %v6550 = vpow.pop %v6549
        %v6551 = vmul.f32 %v6514, 1.442695
        %v6552 = vpow.pop %v6551
        %v6553 = vmul.f32 %v6515, 1.442695
        %v6554 = vpow.pop %v6553
        %v6555 = vmul.f32 %v6516, 1.442695
        %v6556 = vpow.pop %v6555
        %v6557 = vmul.f32 %v6517, 1.442695
        %v6558 = vpow.pop %v6557
        %v6559 = vmul.f32 %v6518, 1.442695
        %v6560 = vpow.pop %v6559
        %v6561 = vmul.f32 %v6519, 1.442695
        %v6562 = vpow.pop %v6561
        %v6563 = vmul.f32 %v6520, 1.442695
        %v6564 = vpow.pop %v6563
        %v6565 = vmul.f32 %v6521, 1.442695
        %v6566 = vpow.pop %v6565
        %v6567 = vmul.f32 %v6522, 1.442695
        %v6568 = vpow.pop %v6567
        %v6569 = vmul.f32 %v6523, 1.442695
        %v6570 = vpow.pop %v6569
        %v6571 = vmul.f32 %v6524, 1.442695
        %v6572 = vpow.pop %v6571
        %v6573 = vmul.f32 %v6525, 1.442695
        %v6574 = vpow.pop %v6573
        %v6575 = vmul.f32 %v6526, 1.442695
        %v6576 = vpow.pop %v6575
        %v6577 = vmul.f32 %v6527, 1.442695
        %v6578 = vpow.pop %v6577
        %v6579 = vmul.f32 %v6528, 1.442695
        %v6580 = vpow.pop %v6579
        %v6581 = vmul.f32 %v6529, 1.442695
        %v6582 = vpow.pop %v6581
        %v6583 = vmul.f32 %v6530, 1.442695
        %v6584 = vpow.pop %v6583
        %v6585 = vmul.f32 %v6531, 1.442695
        %v6586 = vpow.pop %v6585
        %v6587 = vmul.f32 %v6532, 1.442695
        %v6588 = vpow.pop %v6587
        %v6589 = vmul.f32 %v6533, 1.442695
        %v6590 = vpow.pop %v6589
        %v6591 = vmul.f32 %v6534, 1.442695
        %v6592 = vpow.pop %v6591
        %v6593 = vmul.f32 %v6535, 1.442695
        %v6594 = vpow.pop %v6593
        %v6595 = vmul.f32 %v6536, 1.442695
        %v6596 = vpow.pop %v6595
        %v6597 = vmul.f32 %v6537, 1.442695
        %v6598 = vpow.pop %v6597
        %v6599 = vmul.f32 %v6538, 1.442695
        %v6600 = vpow.pop %v6599
        %v6601 = vmul.f32 %v6539, 1.442695
        %v6602 = vpow.pop %v6601
        %v6603 = vmul.f32 %v6540, 1.442695
        %v6604 = vpow.pop %v6603
        %6637 = vrot.lane.b32.xlu0 %v6542, 96
        %v6638 = vpop.permute.xlu0 %6637
        %6639 = vrot.lane.b32.xlu0 %v6544, 96
        %v6640 = vpop.permute.xlu0 %6639
        %6641 = vrot.lane.b32.xlu0 %v6546, 96
        %v6642 = vpop.permute.xlu0 %6641
        %6643 = vrot.lane.b32.xlu0 %v6548, 96
        %v6644 = vpop.permute.xlu0 %6643
        %6645 = vrot.lane.b32.xlu0 %v6550, 96
        %v6646 = vpop.permute.xlu0 %6645
        %6647 = vrot.lane.b32.xlu0 %v6552, 96
        %v6648 = vpop.permute.xlu0 %6647
        %6649 = vrot.lane.b32.xlu0 %v6554, 96
        %v6650 = vpop.permute.xlu0 %6649
        %6651 = vrot.lane.b32.xlu0 %v6556, 96
        %v6652 = vpop.permute.xlu0 %6651
        %6653 = vrot.lane.b32.xlu0 %v6558, 96
        %v6654 = vpop.permute.xlu0 %6653
        %6655 = vrot.lane.b32.xlu0 %v6560, 96
        %v6656 = vpop.permute.xlu0 %6655
        %6657 = vrot.lane.b32.xlu0 %v6562, 96
        %v6658 = vpop.permute.xlu0 %6657
        %6659 = vrot.lane.b32.xlu0 %v6564, 96
        %v6660 = vpop.permute.xlu0 %6659
        %6661 = vrot.lane.b32.xlu0 %v6566, 96
        %v6662 = vpop.permute.xlu0 %6661
        %6663 = vrot.lane.b32.xlu0 %v6568, 96
        %v6664 = vpop.permute.xlu0 %6663
        %6665 = vrot.lane.b32.xlu0 %v6570, 96
        %v6666 = vpop.permute.xlu0 %6665
        %6667 = vrot.lane.b32.xlu0 %v6572, 96
        %v6668 = vpop.permute.xlu0 %6667
        %6669 = vrot.lane.b32.xlu0 %v6574, 96
        %v6670 = vpop.permute.xlu0 %6669
        %6671 = vrot.lane.b32.xlu0 %v6576, 96
        %v6672 = vpop.permute.xlu0 %6671
        %6673 = vrot.lane.b32.xlu0 %v6578, 96
        %v6674 = vpop.permute.xlu0 %6673
        %6675 = vrot.lane.b32.xlu0 %v6580, 96
        %v6676 = vpop.permute.xlu0 %6675
        %6677 = vrot.lane.b32.xlu0 %v6582, 96
        %v6678 = vpop.permute.xlu0 %6677
        %6679 = vrot.lane.b32.xlu0 %v6584, 96
        %v6680 = vpop.permute.xlu0 %6679
        %6681 = vrot.lane.b32.xlu0 %v6586, 96
        %v6682 = vpop.permute.xlu0 %6681
        %6683 = vrot.lane.b32.xlu0 %v6588, 96
        %v6684 = vpop.permute.xlu0 %6683
        %6685 = vrot.lane.b32.xlu0 %v6590, 96
        %v6686 = vpop.permute.xlu0 %6685
        %6687 = vrot.lane.b32.xlu0 %v6592, 96
        %v6688 = vpop.permute.xlu0 %6687
        %6689 = vrot.lane.b32.xlu0 %v6594, 96
        %v6690 = vpop.permute.xlu0 %6689
        %6691 = vrot.lane.b32.xlu0 %v6596, 96
        %v6692 = vpop.permute.xlu0 %6691
        %6693 = vrot.lane.b32.xlu0 %v6598, 96
        %v6694 = vpop.permute.xlu0 %6693
        %6695 = vrot.lane.b32.xlu0 %v6600, 96
        %v6696 = vpop.permute.xlu0 %6695
        %6697 = vrot.lane.b32.xlu0 %v6602, 96
        %v6698 = vpop.permute.xlu0 %6697
        %6699 = vrot.lane.b32.xlu0 %v6604, 96
        %v6700 = vpop.permute.xlu0 %6699
        %v6733 = vsel %vm2268, %v6638, 0.0
        %6734 = vadd.xlane.f32.xlu0 %v6733
        %v6735 = vpop.xlane.xlu0 %6734
        %v6736 = vsel %vm2268, %v6640, 0.0
        %6737 = vadd.xlane.f32.xlu0 %v6736
        %v6738 = vpop.xlane.xlu0 %6737
        %v6739 = vsel %vm2268, %v6642, 0.0
        %6740 = vadd.xlane.f32.xlu0 %v6739
        %v6741 = vpop.xlane.xlu0 %6740
        %v6742 = vsel %vm2268, %v6644, 0.0
        %6743 = vadd.xlane.f32.xlu0 %v6742
        %v6744 = vpop.xlane.xlu0 %6743
        %v6745 = vsel %vm2268, %v6646, 0.0
        %6746 = vadd.xlane.f32.xlu0 %v6745
        %v6747 = vpop.xlane.xlu0 %6746
        %v6748 = vsel %vm2268, %v6648, 0.0
        %6749 = vadd.xlane.f32.xlu0 %v6748
        %v6750 = vpop.xlane.xlu0 %6749
        %v6751 = vsel %vm2268, %v6650, 0.0
        %6752 = vadd.xlane.f32.xlu0 %v6751
        %v6753 = vpop.xlane.xlu0 %6752
        %v6754 = vsel %vm2268, %v6652, 0.0
        %6755 = vadd.xlane.f32.xlu0 %v6754
        %v6756 = vpop.xlane.xlu0 %6755
        %v6757 = vsel %vm2268, %v6654, 0.0
        %6758 = vadd.xlane.f32.xlu0 %v6757
        %v6759 = vpop.xlane.xlu0 %6758
        %v6760 = vsel %vm2268, %v6656, 0.0
        %6761 = vadd.xlane.f32.xlu0 %v6760
        %v6762 = vpop.xlane.xlu0 %6761
        %v6763 = vsel %vm2268, %v6658, 0.0
        %6764 = vadd.xlane.f32.xlu0 %v6763
        %v6765 = vpop.xlane.xlu0 %6764
        %v6766 = vsel %vm2268, %v6660, 0.0
        %6767 = vadd.xlane.f32.xlu0 %v6766
        %v6768 = vpop.xlane.xlu0 %6767
        %v6769 = vsel %vm2268, %v6662, 0.0
        %6770 = vadd.xlane.f32.xlu0 %v6769
        %v6771 = vpop.xlane.xlu0 %6770
        %v6772 = vsel %vm2268, %v6664, 0.0
        %6773 = vadd.xlane.f32.xlu0 %v6772
        %v6774 = vpop.xlane.xlu0 %6773
        %v6775 = vsel %vm2268, %v6666, 0.0
        %6776 = vadd.xlane.f32.xlu0 %v6775
        %v6777 = vpop.xlane.xlu0 %6776
        %v6778 = vsel %vm2268, %v6668, 0.0
        %6779 = vadd.xlane.f32.xlu0 %v6778
        %v6780 = vpop.xlane.xlu0 %6779
        %v6781 = vsel %vm2268, %v6670, 0.0
        %6782 = vadd.xlane.f32.xlu0 %v6781
        %v6783 = vpop.xlane.xlu0 %6782
        %v6784 = vsel %vm2268, %v6672, 0.0
        %6785 = vadd.xlane.f32.xlu0 %v6784
        %v6786 = vpop.xlane.xlu0 %6785
        %v6787 = vsel %vm2268, %v6674, 0.0
        %6788 = vadd.xlane.f32.xlu0 %v6787
        %v6789 = vpop.xlane.xlu0 %6788
        %v6790 = vsel %vm2268, %v6676, 0.0
        %6791 = vadd.xlane.f32.xlu0 %v6790
        %v6792 = vpop.xlane.xlu0 %6791
        %v6793 = vsel %vm2268, %v6678, 0.0
        %6794 = vadd.xlane.f32.xlu0 %v6793
        %v6795 = vpop.xlane.xlu0 %6794
        %v6796 = vsel %vm2268, %v6680, 0.0
        %6797 = vadd.xlane.f32.xlu0 %v6796
        %v6798 = vpop.xlane.xlu0 %6797
        %v6799 = vsel %vm2268, %v6682, 0.0
        %6800 = vadd.xlane.f32.xlu0 %v6799
        %v6801 = vpop.xlane.xlu0 %6800
        %v6802 = vsel %vm2268, %v6684, 0.0
        %6803 = vadd.xlane.f32.xlu0 %v6802
        %v6804 = vpop.xlane.xlu0 %6803
        %v6805 = vsel %vm2268, %v6686, 0.0
        %6806 = vadd.xlane.f32.xlu0 %v6805
        %v6807 = vpop.xlane.xlu0 %6806
        %v6808 = vsel %vm2268, %v6688, 0.0
        %6809 = vadd.xlane.f32.xlu0 %v6808
        %v6810 = vpop.xlane.xlu0 %6809
        %v6811 = vsel %vm2268, %v6690, 0.0
        %6812 = vadd.xlane.f32.xlu0 %v6811
        %v6813 = vpop.xlane.xlu0 %6812
        %v6814 = vsel %vm2268, %v6692, 0.0
        %6815 = vadd.xlane.f32.xlu0 %v6814
        %v6816 = vpop.xlane.xlu0 %6815
        %v6817 = vsel %vm2268, %v6694, 0.0
        %6818 = vadd.xlane.f32.xlu0 %v6817
        %v6819 = vpop.xlane.xlu0 %6818
        %v6820 = vsel %vm2268, %v6696, 0.0
        %6821 = vadd.xlane.f32.xlu0 %v6820
        %v6822 = vpop.xlane.xlu0 %6821
        %v6823 = vsel %vm2268, %v6698, 0.0
        %6824 = vadd.xlane.f32.xlu0 %v6823
        %v6825 = vpop.xlane.xlu0 %6824
        %v6826 = vsel %vm2268, %v6700, 0.0
        %6827 = vadd.xlane.f32.xlu0 %v6826
        %v6828 = vpop.xlane.xlu0 %6827
        %v6829 = vrcp.pop %v6735
        %v6830 = vrcp.pop %v6738
        %v6831 = vrcp.pop %v6741
        %v6832 = vrcp.pop %v6744
        %v6833 = vrcp.pop %v6747
        %v6834 = vrcp.pop %v6750
        %v6835 = vrcp.pop %v6753
        %v6836 = vrcp.pop %v6756
        %v6837 = vrcp.pop %v6759
        %v6838 = vrcp.pop %v6762
        %v6839 = vrcp.pop %v6765
        %v6840 = vrcp.pop %v6768
        %v6841 = vrcp.pop %v6771
        %v6842 = vrcp.pop %v6774
        %v6843 = vrcp.pop %v6777
        %v6844 = vrcp.pop %v6780
        %v6845 = vrcp.pop %v6783
        %v6846 = vrcp.pop %v6786
        %v6847 = vrcp.pop %v6789
        %v6848 = vrcp.pop %v6792
        %v6849 = vrcp.pop %v6795
        %v6850 = vrcp.pop %v6798
        %v6851 = vrcp.pop %v6801
        %v6852 = vrcp.pop %v6804
        %v6853 = vrcp.pop %v6807
        %v6854 = vrcp.pop %v6810
        %v6855 = vrcp.pop %v6813
        %v6856 = vrcp.pop %v6816
        %v6857 = vrcp.pop %v6819
        %v6858 = vrcp.pop %v6822
        %v6859 = vrcp.pop %v6825
        %v6860 = vrcp.pop %v6828
        %v6861 = vmul.f32 %v6735, %v6829
        %v6862 = vmul.f32 %v6738, %v6830
        %v6863 = vmul.f32 %v6741, %v6831
        %v6864 = vmul.f32 %v6744, %v6832
        %v6865 = vmul.f32 %v6747, %v6833
        %v6866 = vmul.f32 %v6750, %v6834
        %v6867 = vmul.f32 %v6753, %v6835
        %v6868 = vmul.f32 %v6756, %v6836
        %v6869 = vmul.f32 %v6759, %v6837
        %v6870 = vmul.f32 %v6762, %v6838
        %v6871 = vmul.f32 %v6765, %v6839
        %v6872 = vmul.f32 %v6768, %v6840
        %v6873 = vmul.f32 %v6771, %v6841
        %v6874 = vmul.f32 %v6774, %v6842
        %v6875 = vmul.f32 %v6777, %v6843
        %v6876 = vmul.f32 %v6780, %v6844
        %v6877 = vmul.f32 %v6783, %v6845
        %v6878 = vmul.f32 %v6786, %v6846
        %v6879 = vmul.f32 %v6789, %v6847
        %v6880 = vmul.f32 %v6792, %v6848
        %v6881 = vmul.f32 %v6795, %v6849
        %v6882 = vmul.f32 %v6798, %v6850
        %v6883 = vmul.f32 %v6801, %v6851
        %v6884 = vmul.f32 %v6804, %v6852
        %v6885 = vmul.f32 %v6807, %v6853
        %v6886 = vmul.f32 %v6810, %v6854
        %v6887 = vmul.f32 %v6813, %v6855
        %v6888 = vmul.f32 %v6816, %v6856
        %v6889 = vmul.f32 %v6819, %v6857
        %v6890 = vmul.f32 %v6822, %v6858
        %v6891 = vmul.f32 %v6825, %v6859
        %v6892 = vmul.f32 %v6828, %v6860
        %v6893 = vsub.f32 2.0, %v6861
        %v6894 = vsub.f32 2.0, %v6862
        %v6895 = vsub.f32 2.0, %v6863
        %v6896 = vsub.f32 2.0, %v6864
        %v6897 = vsub.f32 2.0, %v6865
        %v6898 = vsub.f32 2.0, %v6866
        %v6899 = vsub.f32 2.0, %v6867
        %v6900 = vsub.f32 2.0, %v6868
        %v6901 = vsub.f32 2.0, %v6869
        %v6902 = vsub.f32 2.0, %v6870
        %v6903 = vsub.f32 2.0, %v6871
        %v6904 = vsub.f32 2.0, %v6872
        %v6905 = vsub.f32 2.0, %v6873
        %v6906 = vsub.f32 2.0, %v6874
        %v6907 = vsub.f32 2.0, %v6875
        %v6908 = vsub.f32 2.0, %v6876
        %v6909 = vsub.f32 2.0, %v6877
        %v6910 = vsub.f32 2.0, %v6878
        %v6911 = vsub.f32 2.0, %v6879
        %v6912 = vsub.f32 2.0, %v6880
        %v6913 = vsub.f32 2.0, %v6881
        %v6914 = vsub.f32 2.0, %v6882
        %v6915 = vsub.f32 2.0, %v6883
        %v6916 = vsub.f32 2.0, %v6884
        %v6917 = vsub.f32 2.0, %v6885
        %v6918 = vsub.f32 2.0, %v6886
        %v6919 = vsub.f32 2.0, %v6887
        %v6920 = vsub.f32 2.0, %v6888
        %v6921 = vsub.f32 2.0, %v6889
        %v6922 = vsub.f32 2.0, %v6890
        %v6923 = vsub.f32 2.0, %v6891
        %v6924 = vsub.f32 2.0, %v6892
        %v6925 = vmul.f32 %v6829, %v6893
        %v6926 = vmul.f32 %v6830, %v6894
        %v6927 = vmul.f32 %v6831, %v6895
        %v6928 = vmul.f32 %v6832, %v6896
        %v6929 = vmul.f32 %v6833, %v6897
        %v6930 = vmul.f32 %v6834, %v6898
        %v6931 = vmul.f32 %v6835, %v6899
        %v6932 = vmul.f32 %v6836, %v6900
        %v6933 = vmul.f32 %v6837, %v6901
        %v6934 = vmul.f32 %v6838, %v6902
        %v6935 = vmul.f32 %v6839, %v6903
        %v6936 = vmul.f32 %v6840, %v6904
        %v6937 = vmul.f32 %v6841, %v6905
        %v6938 = vmul.f32 %v6842, %v6906
        %v6939 = vmul.f32 %v6843, %v6907
        %v6940 = vmul.f32 %v6844, %v6908
        %v6941 = vmul.f32 %v6845, %v6909
        %v6942 = vmul.f32 %v6846, %v6910
        %v6943 = vmul.f32 %v6847, %v6911
        %v6944 = vmul.f32 %v6848, %v6912
        %v6945 = vmul.f32 %v6849, %v6913
        %v6946 = vmul.f32 %v6850, %v6914
        %v6947 = vmul.f32 %v6851, %v6915
        %v6948 = vmul.f32 %v6852, %v6916
        %v6949 = vmul.f32 %v6853, %v6917
        %v6950 = vmul.f32 %v6854, %v6918
        %v6951 = vmul.f32 %v6855, %v6919
        %v6952 = vmul.f32 %v6856, %v6920
        %v6953 = vmul.f32 %v6857, %v6921
        %v6954 = vmul.f32 %v6858, %v6922
        %v6955 = vmul.f32 %v6859, %v6923
        %v6956 = vmul.f32 %v6860, %v6924
        %v6957 = vmul.f32 %v6542, %v6925
        %v6958 = vmul.f32 %v6544, %v6926
        %v6959 = vmul.f32 %v6546, %v6927
        %v6960 = vmul.f32 %v6548, %v6928
        %v6961 = vmul.f32 %v6550, %v6929
        %v6962 = vmul.f32 %v6552, %v6930
        %v6963 = vmul.f32 %v6554, %v6931
        %v6964 = vmul.f32 %v6556, %v6932
        %v6965 = vmul.f32 %v6558, %v6933
        %v6966 = vmul.f32 %v6560, %v6934
        %v6967 = vmul.f32 %v6562, %v6935
        %v6968 = vmul.f32 %v6564, %v6936
        %v6969 = vmul.f32 %v6566, %v6937
        %v6970 = vmul.f32 %v6568, %v6938
        %v6971 = vmul.f32 %v6570, %v6939
        %v6972 = vmul.f32 %v6572, %v6940
        %v6973 = vmul.f32 %v6574, %v6941
        %v6974 = vmul.f32 %v6576, %v6942
        %v6975 = vmul.f32 %v6578, %v6943
        %v6976 = vmul.f32 %v6580, %v6944
        %v6977 = vmul.f32 %v6582, %v6945
        %v6978 = vmul.f32 %v6584, %v6946
        %v6979 = vmul.f32 %v6586, %v6947
        %v6980 = vmul.f32 %v6588, %v6948
        %v6981 = vmul.f32 %v6590, %v6949
        %v6982 = vmul.f32 %v6592, %v6950
        %v6983 = vmul.f32 %v6594, %v6951
        %v6984 = vmul.f32 %v6596, %v6952
        %v6985 = vmul.f32 %v6598, %v6953
        %v6986 = vmul.f32 %v6600, %v6954
        %v6987 = vmul.f32 %v6602, %v6955
        %v6988 = vmul.f32 %v6604, %v6956
        %6989 = vrot.lane.b32.xlu0 %v5379, 96
        %v6990 = vpop.permute.xlu0 %6989
        %6991 = vrot.lane.b32.xlu0 %v5383, 96
        %v6992 = vpop.permute.xlu0 %6991
        %6993 = vrot.lane.b32.xlu0 %v5387, 96
        %v6994 = vpop.permute.xlu0 %6993
        %6995 = vrot.lane.b32.xlu0 %v5391, 96
        %v6996 = vpop.permute.xlu0 %6995
        %6997 = vrot.lane.b32.xlu0 %v5395, 96
        %v6998 = vpop.permute.xlu0 %6997
        %6999 = vrot.lane.b32.xlu0 %v5399, 96
        %v7000 = vpop.permute.xlu0 %6999
        %7001 = vrot.lane.b32.xlu0 %v5403, 96
        %v7002 = vpop.permute.xlu0 %7001
        %7003 = vrot.lane.b32.xlu0 %v5407, 96
        %v7004 = vpop.permute.xlu0 %7003
        %7005 = vrot.lane.b32.xlu0 %v5411, 96
        %v7006 = vpop.permute.xlu0 %7005
        %7007 = vrot.lane.b32.xlu0 %v5415, 96
        %v7008 = vpop.permute.xlu0 %7007
        %7009 = vrot.lane.b32.xlu0 %v5419, 96
        %v7010 = vpop.permute.xlu0 %7009
        %7011 = vrot.lane.b32.xlu0 %v5423, 96
        %v7012 = vpop.permute.xlu0 %7011
        %7013 = vrot.lane.b32.xlu0 %v5427, 96
        %v7014 = vpop.permute.xlu0 %7013
        %7015 = vrot.lane.b32.xlu0 %v5431, 96
        %v7016 = vpop.permute.xlu0 %7015
        %7017 = vrot.lane.b32.xlu0 %v5435, 96
        %v7018 = vpop.permute.xlu0 %7017
        %7019 = vrot.lane.b32.xlu0 %v5439, 96
        %v7020 = vpop.permute.xlu0 %7019
        %v7037 = vmul.f32 %v6957, %v6990
        %v7038 = vmul.f32 %v6958, %v6990
        %v7039 = vmul.f32 %v6959, %v6992
        %v7040 = vmul.f32 %v6960, %v6992
        %v7041 = vmul.f32 %v6961, %v6994
        %v7042 = vmul.f32 %v6962, %v6994
        %v7043 = vmul.f32 %v6963, %v6996
        %v7044 = vmul.f32 %v6964, %v6996
        %v7045 = vmul.f32 %v6965, %v6998
        %v7046 = vmul.f32 %v6966, %v6998
        %v7047 = vmul.f32 %v6967, %v7000
        %v7048 = vmul.f32 %v6968, %v7000
        %v7049 = vmul.f32 %v6969, %v7002
        %v7050 = vmul.f32 %v6970, %v7002
        %v7051 = vmul.f32 %v6971, %v7004
        %v7052 = vmul.f32 %v6972, %v7004
        %v7053 = vmul.f32 %v6973, %v7006
        %v7054 = vmul.f32 %v6974, %v7006
        %v7055 = vmul.f32 %v6975, %v7008
        %v7056 = vmul.f32 %v6976, %v7008
        %v7057 = vmul.f32 %v6977, %v7010
        %v7058 = vmul.f32 %v6978, %v7010
        %v7059 = vmul.f32 %v6979, %v7012
        %v7060 = vmul.f32 %v6980, %v7012
        %v7061 = vmul.f32 %v6981, %v7014
        %v7062 = vmul.f32 %v6982, %v7014
        %v7063 = vmul.f32 %v6983, %v7016
        %v7064 = vmul.f32 %v6984, %v7016
        %v7065 = vmul.f32 %v6985, %v7018
        %v7066 = vmul.f32 %v6986, %v7018
        %v7067 = vmul.f32 %v6987, %v7020
        %v7068 = vmul.f32 %v6988, %v7020
        %7101 = vrot.lane.b32.xlu0 %v7037, 96
        %v7102 = vpop.permute.xlu0 %7101
        %7103 = vrot.lane.b32.xlu0 %v7038, 96
        %v7104 = vpop.permute.xlu0 %7103
        %7105 = vrot.lane.b32.xlu0 %v7039, 96
        %v7106 = vpop.permute.xlu0 %7105
        %7107 = vrot.lane.b32.xlu0 %v7040, 96
        %v7108 = vpop.permute.xlu0 %7107
        %7109 = vrot.lane.b32.xlu0 %v7041, 96
        %v7110 = vpop.permute.xlu0 %7109
        %7111 = vrot.lane.b32.xlu0 %v7042, 96
        %v7112 = vpop.permute.xlu0 %7111
        %7113 = vrot.lane.b32.xlu0 %v7043, 96
        %v7114 = vpop.permute.xlu0 %7113
        %7115 = vrot.lane.b32.xlu0 %v7044, 96
        %v7116 = vpop.permute.xlu0 %7115
        %7117 = vrot.lane.b32.xlu0 %v7045, 96
        %v7118 = vpop.permute.xlu0 %7117
        %7119 = vrot.lane.b32.xlu0 %v7046, 96
        %v7120 = vpop.permute.xlu0 %7119
        %7121 = vrot.lane.b32.xlu0 %v7047, 96
        %v7122 = vpop.permute.xlu0 %7121
        %7123 = vrot.lane.b32.xlu0 %v7048, 96
        %v7124 = vpop.permute.xlu0 %7123
        %7125 = vrot.lane.b32.xlu0 %v7049, 96
        %v7126 = vpop.permute.xlu0 %7125
        %7127 = vrot.lane.b32.xlu0 %v7050, 96
        %v7128 = vpop.permute.xlu0 %7127
        %7129 = vrot.lane.b32.xlu0 %v7051, 96
        %v7130 = vpop.permute.xlu0 %7129
        %7131 = vrot.lane.b32.xlu0 %v7052, 96
        %v7132 = vpop.permute.xlu0 %7131
        %7133 = vrot.lane.b32.xlu0 %v7053, 96
        %v7134 = vpop.permute.xlu0 %7133
        %7135 = vrot.lane.b32.xlu0 %v7054, 96
        %v7136 = vpop.permute.xlu0 %7135
        %7137 = vrot.lane.b32.xlu0 %v7055, 96
        %v7138 = vpop.permute.xlu0 %7137
        %7139 = vrot.lane.b32.xlu0 %v7056, 96
        %v7140 = vpop.permute.xlu0 %7139
        %7141 = vrot.lane.b32.xlu0 %v7057, 96
        %v7142 = vpop.permute.xlu0 %7141
        %7143 = vrot.lane.b32.xlu0 %v7058, 96
        %v7144 = vpop.permute.xlu0 %7143
        %7145 = vrot.lane.b32.xlu0 %v7059, 96
        %v7146 = vpop.permute.xlu0 %7145
        %7147 = vrot.lane.b32.xlu0 %v7060, 96
        %v7148 = vpop.permute.xlu0 %7147
        %7149 = vrot.lane.b32.xlu0 %v7061, 96
        %v7150 = vpop.permute.xlu0 %7149
        %7151 = vrot.lane.b32.xlu0 %v7062, 96
        %v7152 = vpop.permute.xlu0 %7151
        %7153 = vrot.lane.b32.xlu0 %v7063, 96
        %v7154 = vpop.permute.xlu0 %7153
        %7155 = vrot.lane.b32.xlu0 %v7064, 96
        %v7156 = vpop.permute.xlu0 %7155
        %7157 = vrot.lane.b32.xlu0 %v7065, 96
        %v7158 = vpop.permute.xlu0 %7157
        %7159 = vrot.lane.b32.xlu0 %v7066, 96
        %v7160 = vpop.permute.xlu0 %7159
        %7161 = vrot.lane.b32.xlu0 %v7067, 96
        %v7162 = vpop.permute.xlu0 %7161
        %7163 = vrot.lane.b32.xlu0 %v7068, 96
        %v7164 = vpop.permute.xlu0 %7163
        %v7197 = vsel %vm2268, %v7102, 0.0
        %7198 = vadd.xlane.f32.xlu0 %v7197
        %v7199 = vpop.xlane.xlu0 %7198
        %v7200 = vsel %vm2268, %v7104, 0.0
        %7201 = vadd.xlane.f32.xlu0 %v7200
        %v7202 = vpop.xlane.xlu0 %7201
        %v7203 = vsel %vm2268, %v7106, 0.0
        %7204 = vadd.xlane.f32.xlu0 %v7203
        %v7205 = vpop.xlane.xlu0 %7204
        %v7206 = vsel %vm2268, %v7108, 0.0
        %7207 = vadd.xlane.f32.xlu0 %v7206
        %v7208 = vpop.xlane.xlu0 %7207
        %v7209 = vsel %vm2268, %v7110, 0.0
        %7210 = vadd.xlane.f32.xlu0 %v7209
        %v7211 = vpop.xlane.xlu0 %7210
        %v7212 = vsel %vm2268, %v7112, 0.0
        %7213 = vadd.xlane.f32.xlu0 %v7212
        %v7214 = vpop.xlane.xlu0 %7213
        %v7215 = vsel %vm2268, %v7114, 0.0
        %7216 = vadd.xlane.f32.xlu0 %v7215
        %v7217 = vpop.xlane.xlu0 %7216
        %v7218 = vsel %vm2268, %v7116, 0.0
        %7219 = vadd.xlane.f32.xlu0 %v7218
        %v7220 = vpop.xlane.xlu0 %7219
        %v7221 = vsel %vm2268, %v7118, 0.0
        %7222 = vadd.xlane.f32.xlu0 %v7221
        %v7223 = vpop.xlane.xlu0 %7222
        %v7224 = vsel %vm2268, %v7120, 0.0
        %7225 = vadd.xlane.f32.xlu0 %v7224
        %v7226 = vpop.xlane.xlu0 %7225
        %v7227 = vsel %vm2268, %v7122, 0.0
        %7228 = vadd.xlane.f32.xlu0 %v7227
        %v7229 = vpop.xlane.xlu0 %7228
        %v7230 = vsel %vm2268, %v7124, 0.0
        %7231 = vadd.xlane.f32.xlu0 %v7230
        %v7232 = vpop.xlane.xlu0 %7231
        %v7233 = vsel %vm2268, %v7126, 0.0
        %7234 = vadd.xlane.f32.xlu0 %v7233
        %v7235 = vpop.xlane.xlu0 %7234
        %v7236 = vsel %vm2268, %v7128, 0.0
        %7237 = vadd.xlane.f32.xlu0 %v7236
        %v7238 = vpop.xlane.xlu0 %7237
        %v7239 = vsel %vm2268, %v7130, 0.0
        %7240 = vadd.xlane.f32.xlu0 %v7239
        %v7241 = vpop.xlane.xlu0 %7240
        %v7242 = vsel %vm2268, %v7132, 0.0
        %7243 = vadd.xlane.f32.xlu0 %v7242
        %v7244 = vpop.xlane.xlu0 %7243
        %v7245 = vsel %vm2268, %v7134, 0.0
        %7246 = vadd.xlane.f32.xlu0 %v7245
        %v7247 = vpop.xlane.xlu0 %7246
        %v7248 = vsel %vm2268, %v7136, 0.0
        %7249 = vadd.xlane.f32.xlu0 %v7248
        %v7250 = vpop.xlane.xlu0 %7249
        %v7251 = vsel %vm2268, %v7138, 0.0
        %7252 = vadd.xlane.f32.xlu0 %v7251
        %v7253 = vpop.xlane.xlu0 %7252
        %v7254 = vsel %vm2268, %v7140, 0.0
        %7255 = vadd.xlane.f32.xlu0 %v7254
        %v7256 = vpop.xlane.xlu0 %7255
        %v7257 = vsel %vm2268, %v7142, 0.0
        %7258 = vadd.xlane.f32.xlu0 %v7257
        %v7259 = vpop.xlane.xlu0 %7258
        %v7260 = vsel %vm2268, %v7144, 0.0
        %7261 = vadd.xlane.f32.xlu0 %v7260
        %v7262 = vpop.xlane.xlu0 %7261
        %v7263 = vsel %vm2268, %v7146, 0.0
        %7264 = vadd.xlane.f32.xlu0 %v7263
        %v7265 = vpop.xlane.xlu0 %7264
        %v7266 = vsel %vm2268, %v7148, 0.0
        %7267 = vadd.xlane.f32.xlu0 %v7266
        %v7268 = vpop.xlane.xlu0 %7267
        %v7269 = vsel %vm2268, %v7150, 0.0
        %7270 = vadd.xlane.f32.xlu0 %v7269
        %v7271 = vpop.xlane.xlu0 %7270
        %v7272 = vsel %vm2268, %v7152, 0.0
        %7273 = vadd.xlane.f32.xlu0 %v7272
        %v7274 = vpop.xlane.xlu0 %7273
        %v7275 = vsel %vm2268, %v7154, 0.0
        %7276 = vadd.xlane.f32.xlu0 %v7275
        %v7277 = vpop.xlane.xlu0 %7276
        %v7278 = vsel %vm2268, %v7156, 0.0
        %7279 = vadd.xlane.f32.xlu0 %v7278
        %v7280 = vpop.xlane.xlu0 %7279
        %v7281 = vsel %vm2268, %v7158, 0.0
        %7282 = vadd.xlane.f32.xlu0 %v7281
        %v7283 = vpop.xlane.xlu0 %7282
        %v7284 = vsel %vm2268, %v7160, 0.0
        %7285 = vadd.xlane.f32.xlu0 %v7284
        %v7286 = vpop.xlane.xlu0 %7285
        %v7287 = vsel %vm2268, %v7162, 0.0
        %7288 = vadd.xlane.f32.xlu0 %v7287
        %v7289 = vpop.xlane.xlu0 %7288
        %v7290 = vsel %vm2268, %v7164, 0.0
        %7291 = vadd.xlane.f32.xlu0 %v7290
        %v7292 = vpop.xlane.xlu0 %7291
        %s7293 = scalar_lea.vmem [#allocation8], 192
        %v7294 = vld [vmem:[%s7293] sm:$0xff]
        %v7295 = vld [vmem:[%s7293 + $0x8] sm:$0xff]
        %7298 = vrot.lane.b32.xlu0 %v7294, 32
        %v7299 = vpop.permute.xlu0 %7298
        %7300 = vrot.lane.b32.xlu0 %v7295, 32
        %v7301 = vpop.permute.xlu0 %7300
        %v7304 = vmul.f32 %v6957, %v7299
        %v7305 = vmul.f32 %v6958, %v7301
        %v7306 = vmul.f32 %v6959, %v7299
        %v7307 = vmul.f32 %v6960, %v7301
        %v7308 = vmul.f32 %v6961, %v7299
        %v7309 = vmul.f32 %v6962, %v7301
        %v7310 = vmul.f32 %v6963, %v7299
        %v7311 = vmul.f32 %v6964, %v7301
        %v7312 = vmul.f32 %v6965, %v7299
        %v7313 = vmul.f32 %v6966, %v7301
        %v7314 = vmul.f32 %v6967, %v7299
        %v7315 = vmul.f32 %v6968, %v7301
        %v7316 = vmul.f32 %v6969, %v7299
        %v7317 = vmul.f32 %v6970, %v7301
        %v7318 = vmul.f32 %v6971, %v7299
        %v7319 = vmul.f32 %v6972, %v7301
        %v7320 = vmul.f32 %v6973, %v7299
        %v7321 = vmul.f32 %v6974, %v7301
        %v7322 = vmul.f32 %v6975, %v7299
        %v7323 = vmul.f32 %v6976, %v7301
        %v7324 = vmul.f32 %v6977, %v7299
        %v7325 = vmul.f32 %v6978, %v7301
        %v7326 = vmul.f32 %v6979, %v7299
        %v7327 = vmul.f32 %v6980, %v7301
        %v7328 = vmul.f32 %v6981, %v7299
        %v7329 = vmul.f32 %v6982, %v7301
        %v7330 = vmul.f32 %v6983, %v7299
        %v7331 = vmul.f32 %v6984, %v7301
        %v7332 = vmul.f32 %v6985, %v7299
        %v7333 = vmul.f32 %v6986, %v7301
        %v7334 = vmul.f32 %v6987, %v7299
        %v7335 = vmul.f32 %v6988, %v7301
        %7368 = vrot.lane.b32.xlu0 %v7304, 96
        %v7369 = vpop.permute.xlu0 %7368
        %7370 = vrot.lane.b32.xlu0 %v7305, 96
        %v7371 = vpop.permute.xlu0 %7370
        %7372 = vrot.lane.b32.xlu0 %v7306, 96
        %v7373 = vpop.permute.xlu0 %7372
        %7374 = vrot.lane.b32.xlu0 %v7307, 96
        %v7375 = vpop.permute.xlu0 %7374
        %7376 = vrot.lane.b32.xlu0 %v7308, 96
        %v7377 = vpop.permute.xlu0 %7376
        %7378 = vrot.lane.b32.xlu0 %v7309, 96
        %v7379 = vpop.permute.xlu0 %7378
        %7380 = vrot.lane.b32.xlu0 %v7310, 96
        %v7381 = vpop.permute.xlu0 %7380
        %7382 = vrot.lane.b32.xlu0 %v7311, 96
        %v7383 = vpop.permute.xlu0 %7382
        %7384 = vrot.lane.b32.xlu0 %v7312, 96
        %v7385 = vpop.permute.xlu0 %7384
        %7386 = vrot.lane.b32.xlu0 %v7313, 96
        %v7387 = vpop.permute.xlu0 %7386
        %7388 = vrot.lane.b32.xlu0 %v7314, 96
        %v7389 = vpop.permute.xlu0 %7388
        %7390 = vrot.lane.b32.xlu0 %v7315, 96
        %v7391 = vpop.permute.xlu0 %7390
        %7392 = vrot.lane.b32.xlu0 %v7316, 96
        %v7393 = vpop.permute.xlu0 %7392
        %7394 = vrot.lane.b32.xlu0 %v7317, 96
        %v7395 = vpop.permute.xlu0 %7394
        %7396 = vrot.lane.b32.xlu0 %v7318, 96
        %v7397 = vpop.permute.xlu0 %7396
        %7398 = vrot.lane.b32.xlu0 %v7319, 96
        %v7399 = vpop.permute.xlu0 %7398
        %7400 = vrot.lane.b32.xlu0 %v7320, 96
        %v7401 = vpop.permute.xlu0 %7400
        %7402 = vrot.lane.b32.xlu0 %v7321, 96
        %v7403 = vpop.permute.xlu0 %7402
        %7404 = vrot.lane.b32.xlu0 %v7322, 96
        %v7405 = vpop.permute.xlu0 %7404
        %7406 = vrot.lane.b32.xlu0 %v7323, 96
        %v7407 = vpop.permute.xlu0 %7406
        %7408 = vrot.lane.b32.xlu0 %v7324, 96
        %v7409 = vpop.permute.xlu0 %7408
        %7410 = vrot.lane.b32.xlu0 %v7325, 96
        %v7411 = vpop.permute.xlu0 %7410
        %7412 = vrot.lane.b32.xlu0 %v7326, 96
        %v7413 = vpop.permute.xlu0 %7412
        %7414 = vrot.lane.b32.xlu0 %v7327, 96
        %v7415 = vpop.permute.xlu0 %7414
        %7416 = vrot.lane.b32.xlu0 %v7328, 96
        %v7417 = vpop.permute.xlu0 %7416
        %7418 = vrot.lane.b32.xlu0 %v7329, 96
        %v7419 = vpop.permute.xlu0 %7418
        %7420 = vrot.lane.b32.xlu0 %v7330, 96
        %v7421 = vpop.permute.xlu0 %7420
        %7422 = vrot.lane.b32.xlu0 %v7331, 96
        %v7423 = vpop.permute.xlu0 %7422
        %7424 = vrot.lane.b32.xlu0 %v7332, 96
        %v7425 = vpop.permute.xlu0 %7424
        %7426 = vrot.lane.b32.xlu0 %v7333, 96
        %v7427 = vpop.permute.xlu0 %7426
        %7428 = vrot.lane.b32.xlu0 %v7334, 96
        %v7429 = vpop.permute.xlu0 %7428
        %7430 = vrot.lane.b32.xlu0 %v7335, 96
        %v7431 = vpop.permute.xlu0 %7430
        %v7464 = vsel %vm2268, %v7369, 0.0
        %7465 = vadd.xlane.f32.xlu0 %v7464
        %v7466 = vpop.xlane.xlu0 %7465
        %v7467 = vsel %vm2268, %v7371, 0.0
        %7468 = vadd.xlane.f32.xlu0 %v7467
        %v7469 = vpop.xlane.xlu0 %7468
        %v7470 = vsel %vm2268, %v7373, 0.0
        %7471 = vadd.xlane.f32.xlu0 %v7470
        %v7472 = vpop.xlane.xlu0 %7471
        %v7473 = vsel %vm2268, %v7375, 0.0
        %7474 = vadd.xlane.f32.xlu0 %v7473
        %v7475 = vpop.xlane.xlu0 %7474
        %v7476 = vsel %vm2268, %v7377, 0.0
        %7477 = vadd.xlane.f32.xlu0 %v7476
        %v7478 = vpop.xlane.xlu0 %7477
        %v7479 = vsel %vm2268, %v7379, 0.0
        %7480 = vadd.xlane.f32.xlu0 %v7479
        %v7481 = vpop.xlane.xlu0 %7480
        %v7482 = vsel %vm2268, %v7381, 0.0
        %7483 = vadd.xlane.f32.xlu0 %v7482
        %v7484 = vpop.xlane.xlu0 %7483
        %v7485 = vsel %vm2268, %v7383, 0.0
        %7486 = vadd.xlane.f32.xlu0 %v7485
        %v7487 = vpop.xlane.xlu0 %7486
        %v7488 = vsel %vm2268, %v7385, 0.0
        %7489 = vadd.xlane.f32.xlu0 %v7488
        %v7490 = vpop.xlane.xlu0 %7489
        %v7491 = vsel %vm2268, %v7387, 0.0
        %7492 = vadd.xlane.f32.xlu0 %v7491
        %v7493 = vpop.xlane.xlu0 %7492
        %v7494 = vsel %vm2268, %v7389, 0.0
        %7495 = vadd.xlane.f32.xlu0 %v7494
        %v7496 = vpop.xlane.xlu0 %7495
        %v7497 = vsel %vm2268, %v7391, 0.0
        %7498 = vadd.xlane.f32.xlu0 %v7497
        %v7499 = vpop.xlane.xlu0 %7498
        %v7500 = vsel %vm2268, %v7393, 0.0
        %7501 = vadd.xlane.f32.xlu0 %v7500
        %v7502 = vpop.xlane.xlu0 %7501
        %v7503 = vsel %vm2268, %v7395, 0.0
        %7504 = vadd.xlane.f32.xlu0 %v7503
        %v7505 = vpop.xlane.xlu0 %7504
        %v7506 = vsel %vm2268, %v7397, 0.0
        %7507 = vadd.xlane.f32.xlu0 %v7506
        %v7508 = vpop.xlane.xlu0 %7507
        %v7509 = vsel %vm2268, %v7399, 0.0
        %7510 = vadd.xlane.f32.xlu0 %v7509
        %v7511 = vpop.xlane.xlu0 %7510
        %v7512 = vsel %vm2268, %v7401, 0.0
        %7513 = vadd.xlane.f32.xlu0 %v7512
        %v7514 = vpop.xlane.xlu0 %7513
        %v7515 = vsel %vm2268, %v7403, 0.0
        %7516 = vadd.xlane.f32.xlu0 %v7515
        %v7517 = vpop.xlane.xlu0 %7516
        %v7518 = vsel %vm2268, %v7405, 0.0
        %7519 = vadd.xlane.f32.xlu0 %v7518
        %v7520 = vpop.xlane.xlu0 %7519
        %v7521 = vsel %vm2268, %v7407, 0.0
        %7522 = vadd.xlane.f32.xlu0 %v7521
        %v7523 = vpop.xlane.xlu0 %7522
        %v7524 = vsel %vm2268, %v7409, 0.0
        %7525 = vadd.xlane.f32.xlu0 %v7524
        %v7526 = vpop.xlane.xlu0 %7525
        %v7527 = vsel %vm2268, %v7411, 0.0
        %7528 = vadd.xlane.f32.xlu0 %v7527
        %v7529 = vpop.xlane.xlu0 %7528
        %v7530 = vsel %vm2268, %v7413, 0.0
        %7531 = vadd.xlane.f32.xlu0 %v7530
        %v7532 = vpop.xlane.xlu0 %7531
        %v7533 = vsel %vm2268, %v7415, 0.0
        %7534 = vadd.xlane.f32.xlu0 %v7533
        %v7535 = vpop.xlane.xlu0 %7534
        %v7536 = vsel %vm2268, %v7417, 0.0
        %7537 = vadd.xlane.f32.xlu0 %v7536
        %v7538 = vpop.xlane.xlu0 %7537
        %v7539 = vsel %vm2268, %v7419, 0.0
        %7540 = vadd.xlane.f32.xlu0 %v7539
        %v7541 = vpop.xlane.xlu0 %7540
        %v7542 = vsel %vm2268, %v7421, 0.0
        %7543 = vadd.xlane.f32.xlu0 %v7542
        %v7544 = vpop.xlane.xlu0 %7543
        %v7545 = vsel %vm2268, %v7423, 0.0
        %7546 = vadd.xlane.f32.xlu0 %v7545
        %v7547 = vpop.xlane.xlu0 %7546
        %v7548 = vsel %vm2268, %v7425, 0.0
        %7549 = vadd.xlane.f32.xlu0 %v7548
        %v7550 = vpop.xlane.xlu0 %7549
        %v7551 = vsel %vm2268, %v7427, 0.0
        %7552 = vadd.xlane.f32.xlu0 %v7551
        %v7553 = vpop.xlane.xlu0 %7552
        %v7554 = vsel %vm2268, %v7429, 0.0
        %7555 = vadd.xlane.f32.xlu0 %v7554
        %v7556 = vpop.xlane.xlu0 %7555
        %v7557 = vsel %vm2268, %v7431, 0.0
        %7558 = vadd.xlane.f32.xlu0 %v7557
        %v7559 = vpop.xlane.xlu0 %7558
        %v7560 = vadd.f32 %v7199, %v7466
        %v7561 = vadd.f32 %v7202, %v7469
        %v7562 = vadd.f32 %v7205, %v7472
        %v7563 = vadd.f32 %v7208, %v7475
        %v7564 = vadd.f32 %v7211, %v7478
        %v7565 = vadd.f32 %v7214, %v7481
        %v7566 = vadd.f32 %v7217, %v7484
        %v7567 = vadd.f32 %v7220, %v7487
        %v7568 = vadd.f32 %v7223, %v7490
        %v7569 = vadd.f32 %v7226, %v7493
        %v7570 = vadd.f32 %v7229, %v7496
        %v7571 = vadd.f32 %v7232, %v7499
        %v7572 = vadd.f32 %v7235, %v7502
        %v7573 = vadd.f32 %v7238, %v7505
        %v7574 = vadd.f32 %v7241, %v7508
        %v7575 = vadd.f32 %v7244, %v7511
        %v7576 = vadd.f32 %v7247, %v7514
        %v7577 = vadd.f32 %v7250, %v7517
        %v7578 = vadd.f32 %v7253, %v7520
        %v7579 = vadd.f32 %v7256, %v7523
        %v7580 = vadd.f32 %v7259, %v7526
        %v7581 = vadd.f32 %v7262, %v7529
        %v7582 = vadd.f32 %v7265, %v7532
        %v7583 = vadd.f32 %v7268, %v7535
        %v7584 = vadd.f32 %v7271, %v7538
        %v7585 = vadd.f32 %v7274, %v7541
        %v7586 = vadd.f32 %v7277, %v7544
        %v7587 = vadd.f32 %v7280, %v7547
        %v7588 = vadd.f32 %v7283, %v7550
        %v7589 = vadd.f32 %v7286, %v7553
        %v7590 = vadd.f32 %v7289, %v7556
        %v7591 = vadd.f32 %v7292, %v7559
        %7592 = vrot.lane.b32.xlu0 %v5379, 80
        %v7593 = vpop.permute.xlu0 %7592
        %7594 = vrot.lane.b32.xlu0 %v5383, 80
        %v7595 = vpop.permute.xlu0 %7594
        %7596 = vrot.lane.b32.xlu0 %v5387, 80
        %v7597 = vpop.permute.xlu0 %7596
        %7598 = vrot.lane.b32.xlu0 %v5391, 80
        %v7599 = vpop.permute.xlu0 %7598
        %7600 = vrot.lane.b32.xlu0 %v5395, 80
        %v7601 = vpop.permute.xlu0 %7600
        %7602 = vrot.lane.b32.xlu0 %v5399, 80
        %v7603 = vpop.permute.xlu0 %7602
        %7604 = vrot.lane.b32.xlu0 %v5403, 80
        %v7605 = vpop.permute.xlu0 %7604
        %7606 = vrot.lane.b32.xlu0 %v5407, 80
        %v7607 = vpop.permute.xlu0 %7606
        %7608 = vrot.lane.b32.xlu0 %v5411, 80
        %v7609 = vpop.permute.xlu0 %7608
        %7610 = vrot.lane.b32.xlu0 %v5415, 80
        %v7611 = vpop.permute.xlu0 %7610
        %7612 = vrot.lane.b32.xlu0 %v5419, 80
        %v7613 = vpop.permute.xlu0 %7612
        %7614 = vrot.lane.b32.xlu0 %v5423, 80
        %v7615 = vpop.permute.xlu0 %7614
        %7616 = vrot.lane.b32.xlu0 %v5427, 80
        %v7617 = vpop.permute.xlu0 %7616
        %7618 = vrot.lane.b32.xlu0 %v5431, 80
        %v7619 = vpop.permute.xlu0 %7618
        %7620 = vrot.lane.b32.xlu0 %v5435, 80
        %v7621 = vpop.permute.xlu0 %7620
        %7622 = vrot.lane.b32.xlu0 %v5439, 80
        %v7623 = vpop.permute.xlu0 %7622
        %v7640 = vmul.f32 %v6957, %v7593
        %v7641 = vmul.f32 %v6958, %v7593
        %v7642 = vmul.f32 %v6959, %v7595
        %v7643 = vmul.f32 %v6960, %v7595
        %v7644 = vmul.f32 %v6961, %v7597
        %v7645 = vmul.f32 %v6962, %v7597
        %v7646 = vmul.f32 %v6963, %v7599
        %v7647 = vmul.f32 %v6964, %v7599
        %v7648 = vmul.f32 %v6965, %v7601
        %v7649 = vmul.f32 %v6966, %v7601
        %v7650 = vmul.f32 %v6967, %v7603
        %v7651 = vmul.f32 %v6968, %v7603
        %v7652 = vmul.f32 %v6969, %v7605
        %v7653 = vmul.f32 %v6970, %v7605
        %v7654 = vmul.f32 %v6971, %v7607
        %v7655 = vmul.f32 %v6972, %v7607
        %v7656 = vmul.f32 %v6973, %v7609
        %v7657 = vmul.f32 %v6974, %v7609
        %v7658 = vmul.f32 %v6975, %v7611
        %v7659 = vmul.f32 %v6976, %v7611
        %v7660 = vmul.f32 %v6977, %v7613
        %v7661 = vmul.f32 %v6978, %v7613
        %v7662 = vmul.f32 %v6979, %v7615
        %v7663 = vmul.f32 %v6980, %v7615
        %v7664 = vmul.f32 %v6981, %v7617
        %v7665 = vmul.f32 %v6982, %v7617
        %v7666 = vmul.f32 %v6983, %v7619
        %v7667 = vmul.f32 %v6984, %v7619
        %v7668 = vmul.f32 %v6985, %v7621
        %v7669 = vmul.f32 %v6986, %v7621
        %v7670 = vmul.f32 %v6987, %v7623
        %v7671 = vmul.f32 %v6988, %v7623
        %7704 = vrot.lane.b32.xlu0 %v7640, 96
        %v7705 = vpop.permute.xlu0 %7704
        %7706 = vrot.lane.b32.xlu0 %v7641, 96
        %v7707 = vpop.permute.xlu0 %7706
        %7708 = vrot.lane.b32.xlu0 %v7642, 96
        %v7709 = vpop.permute.xlu0 %7708
        %7710 = vrot.lane.b32.xlu0 %v7643, 96
        %v7711 = vpop.permute.xlu0 %7710
        %7712 = vrot.lane.b32.xlu0 %v7644, 96
        %v7713 = vpop.permute.xlu0 %7712
        %7714 = vrot.lane.b32.xlu0 %v7645, 96
        %v7715 = vpop.permute.xlu0 %7714
        %7716 = vrot.lane.b32.xlu0 %v7646, 96
        %v7717 = vpop.permute.xlu0 %7716
        %7718 = vrot.lane.b32.xlu0 %v7647, 96
        %v7719 = vpop.permute.xlu0 %7718
        %7720 = vrot.lane.b32.xlu0 %v7648, 96
        %v7721 = vpop.permute.xlu0 %7720
        %7722 = vrot.lane.b32.xlu0 %v7649, 96
        %v7723 = vpop.permute.xlu0 %7722
        %7724 = vrot.lane.b32.xlu0 %v7650, 96
        %v7725 = vpop.permute.xlu0 %7724
        %7726 = vrot.lane.b32.xlu0 %v7651, 96
        %v7727 = vpop.permute.xlu0 %7726
        %7728 = vrot.lane.b32.xlu0 %v7652, 96
        %v7729 = vpop.permute.xlu0 %7728
        %7730 = vrot.lane.b32.xlu0 %v7653, 96
        %v7731 = vpop.permute.xlu0 %7730
        %7732 = vrot.lane.b32.xlu0 %v7654, 96
        %v7733 = vpop.permute.xlu0 %7732
        %7734 = vrot.lane.b32.xlu0 %v7655, 96
        %v7735 = vpop.permute.xlu0 %7734
        %7736 = vrot.lane.b32.xlu0 %v7656, 96
        %v7737 = vpop.permute.xlu0 %7736
        %7738 = vrot.lane.b32.xlu0 %v7657, 96
        %v7739 = vpop.permute.xlu0 %7738
        %7740 = vrot.lane.b32.xlu0 %v7658, 96
        %v7741 = vpop.permute.xlu0 %7740
        %7742 = vrot.lane.b32.xlu0 %v7659, 96
        %v7743 = vpop.permute.xlu0 %7742
        %7744 = vrot.lane.b32.xlu0 %v7660, 96
        %v7745 = vpop.permute.xlu0 %7744
        %7746 = vrot.lane.b32.xlu0 %v7661, 96
        %v7747 = vpop.permute.xlu0 %7746
        %7748 = vrot.lane.b32.xlu0 %v7662, 96
        %v7749 = vpop.permute.xlu0 %7748
        %7750 = vrot.lane.b32.xlu0 %v7663, 96
        %v7751 = vpop.permute.xlu0 %7750
        %7752 = vrot.lane.b32.xlu0 %v7664, 96
        %v7753 = vpop.permute.xlu0 %7752
        %7754 = vrot.lane.b32.xlu0 %v7665, 96
        %v7755 = vpop.permute.xlu0 %7754
        %7756 = vrot.lane.b32.xlu0 %v7666, 96
        %v7757 = vpop.permute.xlu0 %7756
        %7758 = vrot.lane.b32.xlu0 %v7667, 96
        %v7759 = vpop.permute.xlu0 %7758
        %7760 = vrot.lane.b32.xlu0 %v7668, 96
        %v7761 = vpop.permute.xlu0 %7760
        %7762 = vrot.lane.b32.xlu0 %v7669, 96
        %v7763 = vpop.permute.xlu0 %7762
        %7764 = vrot.lane.b32.xlu0 %v7670, 96
        %v7765 = vpop.permute.xlu0 %7764
        %7766 = vrot.lane.b32.xlu0 %v7671, 96
        %v7767 = vpop.permute.xlu0 %7766
        %v7800 = vsel %vm2268, %v7705, 0.0
        %7801 = vadd.xlane.f32.xlu0 %v7800
        %v7802 = vpop.xlane.xlu0 %7801
        %v7803 = vsel %vm2268, %v7707, 0.0
        %7804 = vadd.xlane.f32.xlu0 %v7803
        %v7805 = vpop.xlane.xlu0 %7804
        %v7806 = vsel %vm2268, %v7709, 0.0
        %7807 = vadd.xlane.f32.xlu0 %v7806
        %v7808 = vpop.xlane.xlu0 %7807
        %v7809 = vsel %vm2268, %v7711, 0.0
        %7810 = vadd.xlane.f32.xlu0 %v7809
        %v7811 = vpop.xlane.xlu0 %7810
        %v7812 = vsel %vm2268, %v7713, 0.0
        %7813 = vadd.xlane.f32.xlu0 %v7812
        %v7814 = vpop.xlane.xlu0 %7813
        %v7815 = vsel %vm2268, %v7715, 0.0
        %7816 = vadd.xlane.f32.xlu0 %v7815
        %v7817 = vpop.xlane.xlu0 %7816
        %v7818 = vsel %vm2268, %v7717, 0.0
        %7819 = vadd.xlane.f32.xlu0 %v7818
        %v7820 = vpop.xlane.xlu0 %7819
        %v7821 = vsel %vm2268, %v7719, 0.0
        %7822 = vadd.xlane.f32.xlu0 %v7821
        %v7823 = vpop.xlane.xlu0 %7822
        %v7824 = vsel %vm2268, %v7721, 0.0
        %7825 = vadd.xlane.f32.xlu0 %v7824
        %v7826 = vpop.xlane.xlu0 %7825
        %v7827 = vsel %vm2268, %v7723, 0.0
        %7828 = vadd.xlane.f32.xlu0 %v7827
        %v7829 = vpop.xlane.xlu0 %7828
        %v7830 = vsel %vm2268, %v7725, 0.0
        %7831 = vadd.xlane.f32.xlu0 %v7830
        %v7832 = vpop.xlane.xlu0 %7831
        %v7833 = vsel %vm2268, %v7727, 0.0
        %7834 = vadd.xlane.f32.xlu0 %v7833
        %v7835 = vpop.xlane.xlu0 %7834
        %v7836 = vsel %vm2268, %v7729, 0.0
        %7837 = vadd.xlane.f32.xlu0 %v7836
        %v7838 = vpop.xlane.xlu0 %7837
        %v7839 = vsel %vm2268, %v7731, 0.0
        %7840 = vadd.xlane.f32.xlu0 %v7839
        %v7841 = vpop.xlane.xlu0 %7840
        %v7842 = vsel %vm2268, %v7733, 0.0
        %7843 = vadd.xlane.f32.xlu0 %v7842
        %v7844 = vpop.xlane.xlu0 %7843
        %v7845 = vsel %vm2268, %v7735, 0.0
        %7846 = vadd.xlane.f32.xlu0 %v7845
        %v7847 = vpop.xlane.xlu0 %7846
        %v7848 = vsel %vm2268, %v7737, 0.0
        %7849 = vadd.xlane.f32.xlu0 %v7848
        %v7850 = vpop.xlane.xlu0 %7849
        %v7851 = vsel %vm2268, %v7739, 0.0
        %7852 = vadd.xlane.f32.xlu0 %v7851
        %v7853 = vpop.xlane.xlu0 %7852
        %v7854 = vsel %vm2268, %v7741, 0.0
        %7855 = vadd.xlane.f32.xlu0 %v7854
        %v7856 = vpop.xlane.xlu0 %7855
        %v7857 = vsel %vm2268, %v7743, 0.0
        %7858 = vadd.xlane.f32.xlu0 %v7857
        %v7859 = vpop.xlane.xlu0 %7858
        %v7860 = vsel %vm2268, %v7745, 0.0
        %7861 = vadd.xlane.f32.xlu0 %v7860
        %v7862 = vpop.xlane.xlu0 %7861
        %v7863 = vsel %vm2268, %v7747, 0.0
        %7864 = vadd.xlane.f32.xlu0 %v7863
        %v7865 = vpop.xlane.xlu0 %7864
        %v7866 = vsel %vm2268, %v7749, 0.0
        %7867 = vadd.xlane.f32.xlu0 %v7866
        %v7868 = vpop.xlane.xlu0 %7867
        %v7869 = vsel %vm2268, %v7751, 0.0
        %7870 = vadd.xlane.f32.xlu0 %v7869
        %v7871 = vpop.xlane.xlu0 %7870
        %v7872 = vsel %vm2268, %v7753, 0.0
        %7873 = vadd.xlane.f32.xlu0 %v7872
        %v7874 = vpop.xlane.xlu0 %7873
        %v7875 = vsel %vm2268, %v7755, 0.0
        %7876 = vadd.xlane.f32.xlu0 %v7875
        %v7877 = vpop.xlane.xlu0 %7876
        %v7878 = vsel %vm2268, %v7757, 0.0
        %7879 = vadd.xlane.f32.xlu0 %v7878
        %v7880 = vpop.xlane.xlu0 %7879
        %v7881 = vsel %vm2268, %v7759, 0.0
        %7882 = vadd.xlane.f32.xlu0 %v7881
        %v7883 = vpop.xlane.xlu0 %7882
        %v7884 = vsel %vm2268, %v7761, 0.0
        %7885 = vadd.xlane.f32.xlu0 %v7884
        %v7886 = vpop.xlane.xlu0 %7885
        %v7887 = vsel %vm2268, %v7763, 0.0
        %7888 = vadd.xlane.f32.xlu0 %v7887
        %v7889 = vpop.xlane.xlu0 %7888
        %v7890 = vsel %vm2268, %v7765, 0.0
        %7891 = vadd.xlane.f32.xlu0 %v7890
        %v7892 = vpop.xlane.xlu0 %7891
        %v7893 = vsel %vm2268, %v7767, 0.0
        %7894 = vadd.xlane.f32.xlu0 %v7893
        %v7895 = vpop.xlane.xlu0 %7894
        %s7896 = scalar_lea.vmem [#allocation8], 208
        %v7897 = vld [vmem:[%s7896] sm:$0xff]
        %v7898 = vld [vmem:[%s7896 + $0x8] sm:$0xff]
        %7901 = vrot.lane.b32.xlu0 %v7897, 32
        %v7902 = vpop.permute.xlu0 %7901
        %7903 = vrot.lane.b32.xlu0 %v7898, 32
        %v7904 = vpop.permute.xlu0 %7903
        %v7907 = vmul.f32 %v6957, %v7902
        %v7908 = vmul.f32 %v6958, %v7904
        %v7909 = vmul.f32 %v6959, %v7902
        %v7910 = vmul.f32 %v6960, %v7904
        %v7911 = vmul.f32 %v6961, %v7902
        %v7912 = vmul.f32 %v6962, %v7904
        %v7913 = vmul.f32 %v6963, %v7902
        %v7914 = vmul.f32 %v6964, %v7904
        %v7915 = vmul.f32 %v6965, %v7902
        %v7916 = vmul.f32 %v6966, %v7904
        %v7917 = vmul.f32 %v6967, %v7902
        %v7918 = vmul.f32 %v6968, %v7904
        %v7919 = vmul.f32 %v6969, %v7902
        %v7920 = vmul.f32 %v6970, %v7904
        %v7921 = vmul.f32 %v6971, %v7902
        %v7922 = vmul.f32 %v6972, %v7904
        %v7923 = vmul.f32 %v6973, %v7902
        %v7924 = vmul.f32 %v6974, %v7904
        %v7925 = vmul.f32 %v6975, %v7902
        %v7926 = vmul.f32 %v6976, %v7904
        %v7927 = vmul.f32 %v6977, %v7902
        %v7928 = vmul.f32 %v6978, %v7904
        %v7929 = vmul.f32 %v6979, %v7902
        %v7930 = vmul.f32 %v6980, %v7904
        %v7931 = vmul.f32 %v6981, %v7902
        %v7932 = vmul.f32 %v6982, %v7904
        %v7933 = vmul.f32 %v6983, %v7902
        %v7934 = vmul.f32 %v6984, %v7904
        %v7935 = vmul.f32 %v6985, %v7902
        %v7936 = vmul.f32 %v6986, %v7904
        %v7937 = vmul.f32 %v6987, %v7902
        %v7938 = vmul.f32 %v6988, %v7904
        %7971 = vrot.lane.b32.xlu0 %v7907, 96
        %v7972 = vpop.permute.xlu0 %7971
        %7973 = vrot.lane.b32.xlu0 %v7908, 96
        %v7974 = vpop.permute.xlu0 %7973
        %7975 = vrot.lane.b32.xlu0 %v7909, 96
        %v7976 = vpop.permute.xlu0 %7975
        %7977 = vrot.lane.b32.xlu0 %v7910, 96
        %v7978 = vpop.permute.xlu0 %7977
        %7979 = vrot.lane.b32.xlu0 %v7911, 96
        %v7980 = vpop.permute.xlu0 %7979
        %7981 = vrot.lane.b32.xlu0 %v7912, 96
        %v7982 = vpop.permute.xlu0 %7981
        %7983 = vrot.lane.b32.xlu0 %v7913, 96
        %v7984 = vpop.permute.xlu0 %7983
        %7985 = vrot.lane.b32.xlu0 %v7914, 96
        %v7986 = vpop.permute.xlu0 %7985
        %7987 = vrot.lane.b32.xlu0 %v7915, 96
        %v7988 = vpop.permute.xlu0 %7987
        %7989 = vrot.lane.b32.xlu0 %v7916, 96
        %v7990 = vpop.permute.xlu0 %7989
        %7991 = vrot.lane.b32.xlu0 %v7917, 96
        %v7992 = vpop.permute.xlu0 %7991
        %7993 = vrot.lane.b32.xlu0 %v7918, 96
        %v7994 = vpop.permute.xlu0 %7993
        %7995 = vrot.lane.b32.xlu0 %v7919, 96
        %v7996 = vpop.permute.xlu0 %7995
        %7997 = vrot.lane.b32.xlu0 %v7920, 96
        %v7998 = vpop.permute.xlu0 %7997
        %7999 = vrot.lane.b32.xlu0 %v7921, 96
        %v8000 = vpop.permute.xlu0 %7999
        %8001 = vrot.lane.b32.xlu0 %v7922, 96
        %v8002 = vpop.permute.xlu0 %8001
        %8003 = vrot.lane.b32.xlu0 %v7923, 96
        %v8004 = vpop.permute.xlu0 %8003
        %8005 = vrot.lane.b32.xlu0 %v7924, 96
        %v8006 = vpop.permute.xlu0 %8005
        %8007 = vrot.lane.b32.xlu0 %v7925, 96
        %v8008 = vpop.permute.xlu0 %8007
        %8009 = vrot.lane.b32.xlu0 %v7926, 96
        %v8010 = vpop.permute.xlu0 %8009
        %8011 = vrot.lane.b32.xlu0 %v7927, 96
        %v8012 = vpop.permute.xlu0 %8011
        %8013 = vrot.lane.b32.xlu0 %v7928, 96
        %v8014 = vpop.permute.xlu0 %8013
        %8015 = vrot.lane.b32.xlu0 %v7929, 96
        %v8016 = vpop.permute.xlu0 %8015
        %8017 = vrot.lane.b32.xlu0 %v7930, 96
        %v8018 = vpop.permute.xlu0 %8017
        %8019 = vrot.lane.b32.xlu0 %v7931, 96
        %v8020 = vpop.permute.xlu0 %8019
        %8021 = vrot.lane.b32.xlu0 %v7932, 96
        %v8022 = vpop.permute.xlu0 %8021
        %8023 = vrot.lane.b32.xlu0 %v7933, 96
        %v8024 = vpop.permute.xlu0 %8023
        %8025 = vrot.lane.b32.xlu0 %v7934, 96
        %v8026 = vpop.permute.xlu0 %8025
        %8027 = vrot.lane.b32.xlu0 %v7935, 96
        %v8028 = vpop.permute.xlu0 %8027
        %8029 = vrot.lane.b32.xlu0 %v7936, 96
        %v8030 = vpop.permute.xlu0 %8029
        %8031 = vrot.lane.b32.xlu0 %v7937, 96
        %v8032 = vpop.permute.xlu0 %8031
        %8033 = vrot.lane.b32.xlu0 %v7938, 96
        %v8034 = vpop.permute.xlu0 %8033
        %v8067 = vsel %vm2268, %v7972, 0.0
        %8068 = vadd.xlane.f32.xlu0 %v8067
        %v8069 = vpop.xlane.xlu0 %8068
        %v8070 = vsel %vm2268, %v7974, 0.0
        %8071 = vadd.xlane.f32.xlu0 %v8070
        %v8072 = vpop.xlane.xlu0 %8071
        %v8073 = vsel %vm2268, %v7976, 0.0
        %8074 = vadd.xlane.f32.xlu0 %v8073
        %v8075 = vpop.xlane.xlu0 %8074
        %v8076 = vsel %vm2268, %v7978, 0.0
        %8077 = vadd.xlane.f32.xlu0 %v8076
        %v8078 = vpop.xlane.xlu0 %8077
        %v8079 = vsel %vm2268, %v7980, 0.0
        %8080 = vadd.xlane.f32.xlu0 %v8079
        %v8081 = vpop.xlane.xlu0 %8080
        %v8082 = vsel %vm2268, %v7982, 0.0
        %8083 = vadd.xlane.f32.xlu0 %v8082
        %v8084 = vpop.xlane.xlu0 %8083
        %v8085 = vsel %vm2268, %v7984, 0.0
        %8086 = vadd.xlane.f32.xlu0 %v8085
        %v8087 = vpop.xlane.xlu0 %8086
        %v8088 = vsel %vm2268, %v7986, 0.0
        %8089 = vadd.xlane.f32.xlu0 %v8088
        %v8090 = vpop.xlane.xlu0 %8089
        %v8091 = vsel %vm2268, %v7988, 0.0
        %8092 = vadd.xlane.f32.xlu0 %v8091
        %v8093 = vpop.xlane.xlu0 %8092
        %v8094 = vsel %vm2268, %v7990, 0.0
        %8095 = vadd.xlane.f32.xlu0 %v8094
        %v8096 = vpop.xlane.xlu0 %8095
        %v8097 = vsel %vm2268, %v7992, 0.0
        %8098 = vadd.xlane.f32.xlu0 %v8097
        %v8099 = vpop.xlane.xlu0 %8098
        %v8100 = vsel %vm2268, %v7994, 0.0
        %8101 = vadd.xlane.f32.xlu0 %v8100
        %v8102 = vpop.xlane.xlu0 %8101
        %v8103 = vsel %vm2268, %v7996, 0.0
        %8104 = vadd.xlane.f32.xlu0 %v8103
        %v8105 = vpop.xlane.xlu0 %8104
        %v8106 = vsel %vm2268, %v7998, 0.0
        %8107 = vadd.xlane.f32.xlu0 %v8106
        %v8108 = vpop.xlane.xlu0 %8107
        %v8109 = vsel %vm2268, %v8000, 0.0
        %8110 = vadd.xlane.f32.xlu0 %v8109
        %v8111 = vpop.xlane.xlu0 %8110
        %v8112 = vsel %vm2268, %v8002, 0.0
        %8113 = vadd.xlane.f32.xlu0 %v8112
        %v8114 = vpop.xlane.xlu0 %8113
        %v8115 = vsel %vm2268, %v8004, 0.0
        %8116 = vadd.xlane.f32.xlu0 %v8115
        %v8117 = vpop.xlane.xlu0 %8116
        %v8118 = vsel %vm2268, %v8006, 0.0
        %8119 = vadd.xlane.f32.xlu0 %v8118
        %v8120 = vpop.xlane.xlu0 %8119
        %v8121 = vsel %vm2268, %v8008, 0.0
        %8122 = vadd.xlane.f32.xlu0 %v8121
        %v8123 = vpop.xlane.xlu0 %8122
        %v8124 = vsel %vm2268, %v8010, 0.0
        %8125 = vadd.xlane.f32.xlu0 %v8124
        %v8126 = vpop.xlane.xlu0 %8125
        %v8127 = vsel %vm2268, %v8012, 0.0
        %8128 = vadd.xlane.f32.xlu0 %v8127
        %v8129 = vpop.xlane.xlu0 %8128
        %v8130 = vsel %vm2268, %v8014, 0.0
        %8131 = vadd.xlane.f32.xlu0 %v8130
        %v8132 = vpop.xlane.xlu0 %8131
        %v8133 = vsel %vm2268, %v8016, 0.0
        %8134 = vadd.xlane.f32.xlu0 %v8133
        %v8135 = vpop.xlane.xlu0 %8134
        %v8136 = vsel %vm2268, %v8018, 0.0
        %8137 = vadd.xlane.f32.xlu0 %v8136
        %v8138 = vpop.xlane.xlu0 %8137
        %v8139 = vsel %vm2268, %v8020, 0.0
        %8140 = vadd.xlane.f32.xlu0 %v8139
        %v8141 = vpop.xlane.xlu0 %8140
        %v8142 = vsel %vm2268, %v8022, 0.0
        %8143 = vadd.xlane.f32.xlu0 %v8142
        %v8144 = vpop.xlane.xlu0 %8143
        %v8145 = vsel %vm2268, %v8024, 0.0
        %8146 = vadd.xlane.f32.xlu0 %v8145
        %v8147 = vpop.xlane.xlu0 %8146
        %v8148 = vsel %vm2268, %v8026, 0.0
        %8149 = vadd.xlane.f32.xlu0 %v8148
        %v8150 = vpop.xlane.xlu0 %8149
        %v8151 = vsel %vm2268, %v8028, 0.0
        %8152 = vadd.xlane.f32.xlu0 %v8151
        %v8153 = vpop.xlane.xlu0 %8152
        %v8154 = vsel %vm2268, %v8030, 0.0
        %8155 = vadd.xlane.f32.xlu0 %v8154
        %v8156 = vpop.xlane.xlu0 %8155
        %v8157 = vsel %vm2268, %v8032, 0.0
        %8158 = vadd.xlane.f32.xlu0 %v8157
        %v8159 = vpop.xlane.xlu0 %8158
        %v8160 = vsel %vm2268, %v8034, 0.0
        %8161 = vadd.xlane.f32.xlu0 %v8160
        %v8162 = vpop.xlane.xlu0 %8161
        %v8163 = vadd.f32 %v7802, %v8069
        %v8164 = vadd.f32 %v7805, %v8072
        %v8165 = vadd.f32 %v7808, %v8075
        %v8166 = vadd.f32 %v7811, %v8078
        %v8167 = vadd.f32 %v7814, %v8081
        %v8168 = vadd.f32 %v7817, %v8084
        %v8169 = vadd.f32 %v7820, %v8087
        %v8170 = vadd.f32 %v7823, %v8090
        %v8171 = vadd.f32 %v7826, %v8093
        %v8172 = vadd.f32 %v7829, %v8096
        %v8173 = vadd.f32 %v7832, %v8099
        %v8174 = vadd.f32 %v7835, %v8102
        %v8175 = vadd.f32 %v7838, %v8105
        %v8176 = vadd.f32 %v7841, %v8108
        %v8177 = vadd.f32 %v7844, %v8111
        %v8178 = vadd.f32 %v7847, %v8114
        %v8179 = vadd.f32 %v7850, %v8117
        %v8180 = vadd.f32 %v7853, %v8120
        %v8181 = vadd.f32 %v7856, %v8123
        %v8182 = vadd.f32 %v7859, %v8126
        %v8183 = vadd.f32 %v7862, %v8129
        %v8184 = vadd.f32 %v7865, %v8132
        %v8185 = vadd.f32 %v7868, %v8135
        %v8186 = vadd.f32 %v7871, %v8138
        %v8187 = vadd.f32 %v7874, %v8141
        %v8188 = vadd.f32 %v7877, %v8144
        %v8189 = vadd.f32 %v7880, %v8147
        %v8190 = vadd.f32 %v7883, %v8150
        %v8191 = vadd.f32 %v7886, %v8153
        %v8192 = vadd.f32 %v7889, %v8156
        %v8193 = vadd.f32 %v7892, %v8159
        %v8194 = vadd.f32 %v7895, %v8162
        %8195 = vrot.lane.b32.xlu0 %v5379, 64
        %v8196 = vpop.permute.xlu0 %8195
        %8197 = vrot.lane.b32.xlu0 %v5383, 64
        %v8198 = vpop.permute.xlu0 %8197
        %8199 = vrot.lane.b32.xlu0 %v5387, 64
        %v8200 = vpop.permute.xlu0 %8199
        %8201 = vrot.lane.b32.xlu0 %v5391, 64
        %v8202 = vpop.permute.xlu0 %8201
        %8203 = vrot.lane.b32.xlu0 %v5395, 64
        %v8204 = vpop.permute.xlu0 %8203
        %8205 = vrot.lane.b32.xlu0 %v5399, 64
        %v8206 = vpop.permute.xlu0 %8205
        %8207 = vrot.lane.b32.xlu0 %v5403, 64
        %v8208 = vpop.permute.xlu0 %8207
        %8209 = vrot.lane.b32.xlu0 %v5407, 64
        %v8210 = vpop.permute.xlu0 %8209
        %8211 = vrot.lane.b32.xlu0 %v5411, 64
        %v8212 = vpop.permute.xlu0 %8211
        %8213 = vrot.lane.b32.xlu0 %v5415, 64
        %v8214 = vpop.permute.xlu0 %8213
        %8215 = vrot.lane.b32.xlu0 %v5419, 64
        %v8216 = vpop.permute.xlu0 %8215
        %8217 = vrot.lane.b32.xlu0 %v5423, 64
        %v8218 = vpop.permute.xlu0 %8217
        %8219 = vrot.lane.b32.xlu0 %v5427, 64
        %v8220 = vpop.permute.xlu0 %8219
        %8221 = vrot.lane.b32.xlu0 %v5431, 64
        %v8222 = vpop.permute.xlu0 %8221
        %8223 = vrot.lane.b32.xlu0 %v5435, 64
        %v8224 = vpop.permute.xlu0 %8223
        %8225 = vrot.lane.b32.xlu0 %v5439, 64
        %v8226 = vpop.permute.xlu0 %8225
        %v8243 = vmul.f32 %v6957, %v8196
        %v8244 = vmul.f32 %v6958, %v8196
        %v8245 = vmul.f32 %v6959, %v8198
        %v8246 = vmul.f32 %v6960, %v8198
        %v8247 = vmul.f32 %v6961, %v8200
        %v8248 = vmul.f32 %v6962, %v8200
        %v8249 = vmul.f32 %v6963, %v8202
        %v8250 = vmul.f32 %v6964, %v8202
        %v8251 = vmul.f32 %v6965, %v8204
        %v8252 = vmul.f32 %v6966, %v8204
        %v8253 = vmul.f32 %v6967, %v8206
        %v8254 = vmul.f32 %v6968, %v8206
        %v8255 = vmul.f32 %v6969, %v8208
        %v8256 = vmul.f32 %v6970, %v8208
        %v8257 = vmul.f32 %v6971, %v8210
        %v8258 = vmul.f32 %v6972, %v8210
        %v8259 = vmul.f32 %v6973, %v8212
        %v8260 = vmul.f32 %v6974, %v8212
        %v8261 = vmul.f32 %v6975, %v8214
        %v8262 = vmul.f32 %v6976, %v8214
        %v8263 = vmul.f32 %v6977, %v8216
        %v8264 = vmul.f32 %v6978, %v8216
        %v8265 = vmul.f32 %v6979, %v8218
        %v8266 = vmul.f32 %v6980, %v8218
        %v8267 = vmul.f32 %v6981, %v8220
        %v8268 = vmul.f32 %v6982, %v8220
        %v8269 = vmul.f32 %v6983, %v8222
        %v8270 = vmul.f32 %v6984, %v8222
        %v8271 = vmul.f32 %v6985, %v8224
        %v8272 = vmul.f32 %v6986, %v8224
        %v8273 = vmul.f32 %v6987, %v8226
        %v8274 = vmul.f32 %v6988, %v8226
        %8307 = vrot.lane.b32.xlu0 %v8243, 96
        %v8308 = vpop.permute.xlu0 %8307
        %8309 = vrot.lane.b32.xlu0 %v8244, 96
        %v8310 = vpop.permute.xlu0 %8309
        %8311 = vrot.lane.b32.xlu0 %v8245, 96
        %v8312 = vpop.permute.xlu0 %8311
        %8313 = vrot.lane.b32.xlu0 %v8246, 96
        %v8314 = vpop.permute.xlu0 %8313
        %8315 = vrot.lane.b32.xlu0 %v8247, 96
        %v8316 = vpop.permute.xlu0 %8315
        %8317 = vrot.lane.b32.xlu0 %v8248, 96
        %v8318 = vpop.permute.xlu0 %8317
        %8319 = vrot.lane.b32.xlu0 %v8249, 96
        %v8320 = vpop.permute.xlu0 %8319
        %8321 = vrot.lane.b32.xlu0 %v8250, 96
        %v8322 = vpop.permute.xlu0 %8321
        %8323 = vrot.lane.b32.xlu0 %v8251, 96
        %v8324 = vpop.permute.xlu0 %8323
        %8325 = vrot.lane.b32.xlu0 %v8252, 96
        %v8326 = vpop.permute.xlu0 %8325
        %8327 = vrot.lane.b32.xlu0 %v8253, 96
        %v8328 = vpop.permute.xlu0 %8327
        %8329 = vrot.lane.b32.xlu0 %v8254, 96
        %v8330 = vpop.permute.xlu0 %8329
        %8331 = vrot.lane.b32.xlu0 %v8255, 96
        %v8332 = vpop.permute.xlu0 %8331
        %8333 = vrot.lane.b32.xlu0 %v8256, 96
        %v8334 = vpop.permute.xlu0 %8333
        %8335 = vrot.lane.b32.xlu0 %v8257, 96
        %v8336 = vpop.permute.xlu0 %8335
        %8337 = vrot.lane.b32.xlu0 %v8258, 96
        %v8338 = vpop.permute.xlu0 %8337
        %8339 = vrot.lane.b32.xlu0 %v8259, 96
        %v8340 = vpop.permute.xlu0 %8339
        %8341 = vrot.lane.b32.xlu0 %v8260, 96
        %v8342 = vpop.permute.xlu0 %8341
        %8343 = vrot.lane.b32.xlu0 %v8261, 96
        %v8344 = vpop.permute.xlu0 %8343
        %8345 = vrot.lane.b32.xlu0 %v8262, 96
        %v8346 = vpop.permute.xlu0 %8345
        %8347 = vrot.lane.b32.xlu0 %v8263, 96
        %v8348 = vpop.permute.xlu0 %8347
        %8349 = vrot.lane.b32.xlu0 %v8264, 96
        %v8350 = vpop.permute.xlu0 %8349
        %8351 = vrot.lane.b32.xlu0 %v8265, 96
        %v8352 = vpop.permute.xlu0 %8351
        %8353 = vrot.lane.b32.xlu0 %v8266, 96
        %v8354 = vpop.permute.xlu0 %8353
        %8355 = vrot.lane.b32.xlu0 %v8267, 96
        %v8356 = vpop.permute.xlu0 %8355
        %8357 = vrot.lane.b32.xlu0 %v8268, 96
        %v8358 = vpop.permute.xlu0 %8357
        %8359 = vrot.lane.b32.xlu0 %v8269, 96
        %v8360 = vpop.permute.xlu0 %8359
        %8361 = vrot.lane.b32.xlu0 %v8270, 96
        %v8362 = vpop.permute.xlu0 %8361
        %8363 = vrot.lane.b32.xlu0 %v8271, 96
        %v8364 = vpop.permute.xlu0 %8363
        %8365 = vrot.lane.b32.xlu0 %v8272, 96
        %v8366 = vpop.permute.xlu0 %8365
        %8367 = vrot.lane.b32.xlu0 %v8273, 96
        %v8368 = vpop.permute.xlu0 %8367
        %8369 = vrot.lane.b32.xlu0 %v8274, 96
        %v8370 = vpop.permute.xlu0 %8369
        %v8403 = vsel %vm2268, %v8308, 0.0
        %8404 = vadd.xlane.f32.xlu0 %v8403
        %v8405 = vpop.xlane.xlu0 %8404
        %v8406 = vsel %vm2268, %v8310, 0.0
        %8407 = vadd.xlane.f32.xlu0 %v8406
        %v8408 = vpop.xlane.xlu0 %8407
        %v8409 = vsel %vm2268, %v8312, 0.0
        %8410 = vadd.xlane.f32.xlu0 %v8409
        %v8411 = vpop.xlane.xlu0 %8410
        %v8412 = vsel %vm2268, %v8314, 0.0
        %8413 = vadd.xlane.f32.xlu0 %v8412
        %v8414 = vpop.xlane.xlu0 %8413
        %v8415 = vsel %vm2268, %v8316, 0.0
        %8416 = vadd.xlane.f32.xlu0 %v8415
        %v8417 = vpop.xlane.xlu0 %8416
        %v8418 = vsel %vm2268, %v8318, 0.0
        %8419 = vadd.xlane.f32.xlu0 %v8418
        %v8420 = vpop.xlane.xlu0 %8419
        %v8421 = vsel %vm2268, %v8320, 0.0
        %8422 = vadd.xlane.f32.xlu0 %v8421
        %v8423 = vpop.xlane.xlu0 %8422
        %v8424 = vsel %vm2268, %v8322, 0.0
        %8425 = vadd.xlane.f32.xlu0 %v8424
        %v8426 = vpop.xlane.xlu0 %8425
        %v8427 = vsel %vm2268, %v8324, 0.0
        %8428 = vadd.xlane.f32.xlu0 %v8427
        %v8429 = vpop.xlane.xlu0 %8428
        %v8430 = vsel %vm2268, %v8326, 0.0
        %8431 = vadd.xlane.f32.xlu0 %v8430
        %v8432 = vpop.xlane.xlu0 %8431
        %v8433 = vsel %vm2268, %v8328, 0.0
        %8434 = vadd.xlane.f32.xlu0 %v8433
        %v8435 = vpop.xlane.xlu0 %8434
        %v8436 = vsel %vm2268, %v8330, 0.0
        %8437 = vadd.xlane.f32.xlu0 %v8436
        %v8438 = vpop.xlane.xlu0 %8437
        %v8439 = vsel %vm2268, %v8332, 0.0
        %8440 = vadd.xlane.f32.xlu0 %v8439
        %v8441 = vpop.xlane.xlu0 %8440
        %v8442 = vsel %vm2268, %v8334, 0.0
        %8443 = vadd.xlane.f32.xlu0 %v8442
        %v8444 = vpop.xlane.xlu0 %8443
        %v8445 = vsel %vm2268, %v8336, 0.0
        %8446 = vadd.xlane.f32.xlu0 %v8445
        %v8447 = vpop.xlane.xlu0 %8446
        %v8448 = vsel %vm2268, %v8338, 0.0
        %8449 = vadd.xlane.f32.xlu0 %v8448
        %v8450 = vpop.xlane.xlu0 %8449
        %v8451 = vsel %vm2268, %v8340, 0.0
        %8452 = vadd.xlane.f32.xlu0 %v8451
        %v8453 = vpop.xlane.xlu0 %8452
        %v8454 = vsel %vm2268, %v8342, 0.0
        %8455 = vadd.xlane.f32.xlu0 %v8454
        %v8456 = vpop.xlane.xlu0 %8455
        %v8457 = vsel %vm2268, %v8344, 0.0
        %8458 = vadd.xlane.f32.xlu0 %v8457
        %v8459 = vpop.xlane.xlu0 %8458
        %v8460 = vsel %vm2268, %v8346, 0.0
        %8461 = vadd.xlane.f32.xlu0 %v8460
        %v8462 = vpop.xlane.xlu0 %8461
        %v8463 = vsel %vm2268, %v8348, 0.0
        %8464 = vadd.xlane.f32.xlu0 %v8463
        %v8465 = vpop.xlane.xlu0 %8464
        %v8466 = vsel %vm2268, %v8350, 0.0
        %8467 = vadd.xlane.f32.xlu0 %v8466
        %v8468 = vpop.xlane.xlu0 %8467
        %v8469 = vsel %vm2268, %v8352, 0.0
        %8470 = vadd.xlane.f32.xlu0 %v8469
        %v8471 = vpop.xlane.xlu0 %8470
        %v8472 = vsel %vm2268, %v8354, 0.0
        %8473 = vadd.xlane.f32.xlu0 %v8472
        %v8474 = vpop.xlane.xlu0 %8473
        %v8475 = vsel %vm2268, %v8356, 0.0
        %8476 = vadd.xlane.f32.xlu0 %v8475
        %v8477 = vpop.xlane.xlu0 %8476
        %v8478 = vsel %vm2268, %v8358, 0.0
        %8479 = vadd.xlane.f32.xlu0 %v8478
        %v8480 = vpop.xlane.xlu0 %8479
        %v8481 = vsel %vm2268, %v8360, 0.0
        %8482 = vadd.xlane.f32.xlu0 %v8481
        %v8483 = vpop.xlane.xlu0 %8482
        %v8484 = vsel %vm2268, %v8362, 0.0
        %8485 = vadd.xlane.f32.xlu0 %v8484
        %v8486 = vpop.xlane.xlu0 %8485
        %v8487 = vsel %vm2268, %v8364, 0.0
        %8488 = vadd.xlane.f32.xlu0 %v8487
        %v8489 = vpop.xlane.xlu0 %8488
        %v8490 = vsel %vm2268, %v8366, 0.0
        %8491 = vadd.xlane.f32.xlu0 %v8490
        %v8492 = vpop.xlane.xlu0 %8491
        %v8493 = vsel %vm2268, %v8368, 0.0
        %8494 = vadd.xlane.f32.xlu0 %v8493
        %v8495 = vpop.xlane.xlu0 %8494
        %v8496 = vsel %vm2268, %v8370, 0.0
        %8497 = vadd.xlane.f32.xlu0 %v8496
        %v8498 = vpop.xlane.xlu0 %8497
        %s8499 = scalar_lea.vmem [#allocation8], 224
        %v8500 = vld [vmem:[%s8499] sm:$0xff]
        %v8501 = vld [vmem:[%s8499 + $0x8] sm:$0xff]
        %8504 = vrot.lane.b32.xlu0 %v8500, 32
        %v8505 = vpop.permute.xlu0 %8504
        %8506 = vrot.lane.b32.xlu0 %v8501, 32
        %v8507 = vpop.permute.xlu0 %8506
        %v8510 = vmul.f32 %v6957, %v8505
        %v8511 = vmul.f32 %v6958, %v8507
        %v8512 = vmul.f32 %v6959, %v8505
        %v8513 = vmul.f32 %v6960, %v8507
        %v8514 = vmul.f32 %v6961, %v8505
        %v8515 = vmul.f32 %v6962, %v8507
        %v8516 = vmul.f32 %v6963, %v8505
        %v8517 = vmul.f32 %v6964, %v8507
        %v8518 = vmul.f32 %v6965, %v8505
        %v8519 = vmul.f32 %v6966, %v8507
        %v8520 = vmul.f32 %v6967, %v8505
        %v8521 = vmul.f32 %v6968, %v8507
        %v8522 = vmul.f32 %v6969, %v8505
        %v8523 = vmul.f32 %v6970, %v8507
        %v8524 = vmul.f32 %v6971, %v8505
        %v8525 = vmul.f32 %v6972, %v8507
        %v8526 = vmul.f32 %v6973, %v8505
        %v8527 = vmul.f32 %v6974, %v8507
        %v8528 = vmul.f32 %v6975, %v8505
        %v8529 = vmul.f32 %v6976, %v8507
        %v8530 = vmul.f32 %v6977, %v8505
        %v8531 = vmul.f32 %v6978, %v8507
        %v8532 = vmul.f32 %v6979, %v8505
        %v8533 = vmul.f32 %v6980, %v8507
        %v8534 = vmul.f32 %v6981, %v8505
        %v8535 = vmul.f32 %v6982, %v8507
        %v8536 = vmul.f32 %v6983, %v8505
        %v8537 = vmul.f32 %v6984, %v8507
        %v8538 = vmul.f32 %v6985, %v8505
        %v8539 = vmul.f32 %v6986, %v8507
        %v8540 = vmul.f32 %v6987, %v8505
        %v8541 = vmul.f32 %v6988, %v8507
        %8574 = vrot.lane.b32.xlu0 %v8510, 96
        %v8575 = vpop.permute.xlu0 %8574
        %8576 = vrot.lane.b32.xlu0 %v8511, 96
        %v8577 = vpop.permute.xlu0 %8576
        %8578 = vrot.lane.b32.xlu0 %v8512, 96
        %v8579 = vpop.permute.xlu0 %8578
        %8580 = vrot.lane.b32.xlu0 %v8513, 96
        %v8581 = vpop.permute.xlu0 %8580
        %8582 = vrot.lane.b32.xlu0 %v8514, 96
        %v8583 = vpop.permute.xlu0 %8582
        %8584 = vrot.lane.b32.xlu0 %v8515, 96
        %v8585 = vpop.permute.xlu0 %8584
        %8586 = vrot.lane.b32.xlu0 %v8516, 96
        %v8587 = vpop.permute.xlu0 %8586
        %8588 = vrot.lane.b32.xlu0 %v8517, 96
        %v8589 = vpop.permute.xlu0 %8588
        %8590 = vrot.lane.b32.xlu0 %v8518, 96
        %v8591 = vpop.permute.xlu0 %8590
        %8592 = vrot.lane.b32.xlu0 %v8519, 96
        %v8593 = vpop.permute.xlu0 %8592
        %8594 = vrot.lane.b32.xlu0 %v8520, 96
        %v8595 = vpop.permute.xlu0 %8594
        %8596 = vrot.lane.b32.xlu0 %v8521, 96
        %v8597 = vpop.permute.xlu0 %8596
        %8598 = vrot.lane.b32.xlu0 %v8522, 96
        %v8599 = vpop.permute.xlu0 %8598
        %8600 = vrot.lane.b32.xlu0 %v8523, 96
        %v8601 = vpop.permute.xlu0 %8600
        %8602 = vrot.lane.b32.xlu0 %v8524, 96
        %v8603 = vpop.permute.xlu0 %8602
        %8604 = vrot.lane.b32.xlu0 %v8525, 96
        %v8605 = vpop.permute.xlu0 %8604
        %8606 = vrot.lane.b32.xlu0 %v8526, 96
        %v8607 = vpop.permute.xlu0 %8606
        %8608 = vrot.lane.b32.xlu0 %v8527, 96
        %v8609 = vpop.permute.xlu0 %8608
        %8610 = vrot.lane.b32.xlu0 %v8528, 96
        %v8611 = vpop.permute.xlu0 %8610
        %8612 = vrot.lane.b32.xlu0 %v8529, 96
        %v8613 = vpop.permute.xlu0 %8612
        %8614 = vrot.lane.b32.xlu0 %v8530, 96
        %v8615 = vpop.permute.xlu0 %8614
        %8616 = vrot.lane.b32.xlu0 %v8531, 96
        %v8617 = vpop.permute.xlu0 %8616
        %8618 = vrot.lane.b32.xlu0 %v8532, 96
        %v8619 = vpop.permute.xlu0 %8618
        %8620 = vrot.lane.b32.xlu0 %v8533, 96
        %v8621 = vpop.permute.xlu0 %8620
        %8622 = vrot.lane.b32.xlu0 %v8534, 96
        %v8623 = vpop.permute.xlu0 %8622
        %8624 = vrot.lane.b32.xlu0 %v8535, 96
        %v8625 = vpop.permute.xlu0 %8624
        %8626 = vrot.lane.b32.xlu0 %v8536, 96
        %v8627 = vpop.permute.xlu0 %8626
        %8628 = vrot.lane.b32.xlu0 %v8537, 96
        %v8629 = vpop.permute.xlu0 %8628
        %8630 = vrot.lane.b32.xlu0 %v8538, 96
        %v8631 = vpop.permute.xlu0 %8630
        %8632 = vrot.lane.b32.xlu0 %v8539, 96
        %v8633 = vpop.permute.xlu0 %8632
        %8634 = vrot.lane.b32.xlu0 %v8540, 96
        %v8635 = vpop.permute.xlu0 %8634
        %8636 = vrot.lane.b32.xlu0 %v8541, 96
        %v8637 = vpop.permute.xlu0 %8636
        %v8670 = vsel %vm2268, %v8575, 0.0
        %8671 = vadd.xlane.f32.xlu0 %v8670
        %v8672 = vpop.xlane.xlu0 %8671
        %v8673 = vsel %vm2268, %v8577, 0.0
        %8674 = vadd.xlane.f32.xlu0 %v8673
        %v8675 = vpop.xlane.xlu0 %8674
        %v8676 = vsel %vm2268, %v8579, 0.0
        %8677 = vadd.xlane.f32.xlu0 %v8676
        %v8678 = vpop.xlane.xlu0 %8677
        %v8679 = vsel %vm2268, %v8581, 0.0
        %8680 = vadd.xlane.f32.xlu0 %v8679
        %v8681 = vpop.xlane.xlu0 %8680
        %v8682 = vsel %vm2268, %v8583, 0.0
        %8683 = vadd.xlane.f32.xlu0 %v8682
        %v8684 = vpop.xlane.xlu0 %8683
        %v8685 = vsel %vm2268, %v8585, 0.0
        %8686 = vadd.xlane.f32.xlu0 %v8685
        %v8687 = vpop.xlane.xlu0 %8686
        %v8688 = vsel %vm2268, %v8587, 0.0
        %8689 = vadd.xlane.f32.xlu0 %v8688
        %v8690 = vpop.xlane.xlu0 %8689
        %v8691 = vsel %vm2268, %v8589, 0.0
        %8692 = vadd.xlane.f32.xlu0 %v8691
        %v8693 = vpop.xlane.xlu0 %8692
        %v8694 = vsel %vm2268, %v8591, 0.0
        %8695 = vadd.xlane.f32.xlu0 %v8694
        %v8696 = vpop.xlane.xlu0 %8695
        %v8697 = vsel %vm2268, %v8593, 0.0
        %8698 = vadd.xlane.f32.xlu0 %v8697
        %v8699 = vpop.xlane.xlu0 %8698
        %v8700 = vsel %vm2268, %v8595, 0.0
        %8701 = vadd.xlane.f32.xlu0 %v8700
        %v8702 = vpop.xlane.xlu0 %8701
        %v8703 = vsel %vm2268, %v8597, 0.0
        %8704 = vadd.xlane.f32.xlu0 %v8703
        %v8705 = vpop.xlane.xlu0 %8704
        %v8706 = vsel %vm2268, %v8599, 0.0
        %8707 = vadd.xlane.f32.xlu0 %v8706
        %v8708 = vpop.xlane.xlu0 %8707
        %v8709 = vsel %vm2268, %v8601, 0.0
        %8710 = vadd.xlane.f32.xlu0 %v8709
        %v8711 = vpop.xlane.xlu0 %8710
        %v8712 = vsel %vm2268, %v8603, 0.0
        %8713 = vadd.xlane.f32.xlu0 %v8712
        %v8714 = vpop.xlane.xlu0 %8713
        %v8715 = vsel %vm2268, %v8605, 0.0
        %8716 = vadd.xlane.f32.xlu0 %v8715
        %v8717 = vpop.xlane.xlu0 %8716
        %v8718 = vsel %vm2268, %v8607, 0.0
        %8719 = vadd.xlane.f32.xlu0 %v8718
        %v8720 = vpop.xlane.xlu0 %8719
        %v8721 = vsel %vm2268, %v8609, 0.0
        %8722 = vadd.xlane.f32.xlu0 %v8721
        %v8723 = vpop.xlane.xlu0 %8722
        %v8724 = vsel %vm2268, %v8611, 0.0
        %8725 = vadd.xlane.f32.xlu0 %v8724
        %v8726 = vpop.xlane.xlu0 %8725
        %v8727 = vsel %vm2268, %v8613, 0.0
        %8728 = vadd.xlane.f32.xlu0 %v8727
        %v8729 = vpop.xlane.xlu0 %8728
        %v8730 = vsel %vm2268, %v8615, 0.0
        %8731 = vadd.xlane.f32.xlu0 %v8730
        %v8732 = vpop.xlane.xlu0 %8731
        %v8733 = vsel %vm2268, %v8617, 0.0
        %8734 = vadd.xlane.f32.xlu0 %v8733
        %v8735 = vpop.xlane.xlu0 %8734
        %v8736 = vsel %vm2268, %v8619, 0.0
        %8737 = vadd.xlane.f32.xlu0 %v8736
        %v8738 = vpop.xlane.xlu0 %8737
        %v8739 = vsel %vm2268, %v8621, 0.0
        %8740 = vadd.xlane.f32.xlu0 %v8739
        %v8741 = vpop.xlane.xlu0 %8740
        %v8742 = vsel %vm2268, %v8623, 0.0
        %8743 = vadd.xlane.f32.xlu0 %v8742
        %v8744 = vpop.xlane.xlu0 %8743
        %v8745 = vsel %vm2268, %v8625, 0.0
        %8746 = vadd.xlane.f32.xlu0 %v8745
        %v8747 = vpop.xlane.xlu0 %8746
        %v8748 = vsel %vm2268, %v8627, 0.0
        %8749 = vadd.xlane.f32.xlu0 %v8748
        %v8750 = vpop.xlane.xlu0 %8749
        %v8751 = vsel %vm2268, %v8629, 0.0
        %8752 = vadd.xlane.f32.xlu0 %v8751
        %v8753 = vpop.xlane.xlu0 %8752
        %v8754 = vsel %vm2268, %v8631, 0.0
        %8755 = vadd.xlane.f32.xlu0 %v8754
        %v8756 = vpop.xlane.xlu0 %8755
        %v8757 = vsel %vm2268, %v8633, 0.0
        %8758 = vadd.xlane.f32.xlu0 %v8757
        %v8759 = vpop.xlane.xlu0 %8758
        %v8760 = vsel %vm2268, %v8635, 0.0
        %8761 = vadd.xlane.f32.xlu0 %v8760
        %v8762 = vpop.xlane.xlu0 %8761
        %v8763 = vsel %vm2268, %v8637, 0.0
        %8764 = vadd.xlane.f32.xlu0 %v8763
        %v8765 = vpop.xlane.xlu0 %8764
        %v8766 = vadd.f32 %v8405, %v8672
        %v8767 = vadd.f32 %v8408, %v8675
        %v8768 = vadd.f32 %v8411, %v8678
        %v8769 = vadd.f32 %v8414, %v8681
        %v8770 = vadd.f32 %v8417, %v8684
        %v8771 = vadd.f32 %v8420, %v8687
        %v8772 = vadd.f32 %v8423, %v8690
        %v8773 = vadd.f32 %v8426, %v8693
        %v8774 = vadd.f32 %v8429, %v8696
        %v8775 = vadd.f32 %v8432, %v8699
        %v8776 = vadd.f32 %v8435, %v8702
        %v8777 = vadd.f32 %v8438, %v8705
        %v8778 = vadd.f32 %v8441, %v8708
        %v8779 = vadd.f32 %v8444, %v8711
        %v8780 = vadd.f32 %v8447, %v8714
        %v8781 = vadd.f32 %v8450, %v8717
        %v8782 = vadd.f32 %v8453, %v8720
        %v8783 = vadd.f32 %v8456, %v8723
        %v8784 = vadd.f32 %v8459, %v8726
        %v8785 = vadd.f32 %v8462, %v8729
        %v8786 = vadd.f32 %v8465, %v8732
        %v8787 = vadd.f32 %v8468, %v8735
        %v8788 = vadd.f32 %v8471, %v8738
        %v8789 = vadd.f32 %v8474, %v8741
        %v8790 = vadd.f32 %v8477, %v8744
        %v8791 = vadd.f32 %v8480, %v8747
        %v8792 = vadd.f32 %v8483, %v8750
        %v8793 = vadd.f32 %v8486, %v8753
        %v8794 = vadd.f32 %v8489, %v8756
        %v8795 = vadd.f32 %v8492, %v8759
        %v8796 = vadd.f32 %v8495, %v8762
        %v8797 = vadd.f32 %v8498, %v8765
        %8798 = vrot.lane.b32.xlu0 %v5379, 48
        %v8799 = vpop.permute.xlu0 %8798
        %8800 = vrot.lane.b32.xlu0 %v5383, 48
        %v8801 = vpop.permute.xlu0 %8800
        %8802 = vrot.lane.b32.xlu0 %v5387, 48
        %v8803 = vpop.permute.xlu0 %8802
        %8804 = vrot.lane.b32.xlu0 %v5391, 48
        %v8805 = vpop.permute.xlu0 %8804
        %8806 = vrot.lane.b32.xlu0 %v5395, 48
        %v8807 = vpop.permute.xlu0 %8806
        %8808 = vrot.lane.b32.xlu0 %v5399, 48
        %v8809 = vpop.permute.xlu0 %8808
        %8810 = vrot.lane.b32.xlu0 %v5403, 48
        %v8811 = vpop.permute.xlu0 %8810
        %8812 = vrot.lane.b32.xlu0 %v5407, 48
        %v8813 = vpop.permute.xlu0 %8812
        %8814 = vrot.lane.b32.xlu0 %v5411, 48
        %v8815 = vpop.permute.xlu0 %8814
        %8816 = vrot.lane.b32.xlu0 %v5415, 48
        %v8817 = vpop.permute.xlu0 %8816
        %8818 = vrot.lane.b32.xlu0 %v5419, 48
        %v8819 = vpop.permute.xlu0 %8818
        %8820 = vrot.lane.b32.xlu0 %v5423, 48
        %v8821 = vpop.permute.xlu0 %8820
        %8822 = vrot.lane.b32.xlu0 %v5427, 48
        %v8823 = vpop.permute.xlu0 %8822
        %8824 = vrot.lane.b32.xlu0 %v5431, 48
        %v8825 = vpop.permute.xlu0 %8824
        %8826 = vrot.lane.b32.xlu0 %v5435, 48
        %v8827 = vpop.permute.xlu0 %8826
        %8828 = vrot.lane.b32.xlu0 %v5439, 48
        %v8829 = vpop.permute.xlu0 %8828
        %v8846 = vmul.f32 %v6957, %v8799
        %v8847 = vmul.f32 %v6958, %v8799
        %v8848 = vmul.f32 %v6959, %v8801
        %v8849 = vmul.f32 %v6960, %v8801
        %v8850 = vmul.f32 %v6961, %v8803
        %v8851 = vmul.f32 %v6962, %v8803
        %v8852 = vmul.f32 %v6963, %v8805
        %v8853 = vmul.f32 %v6964, %v8805
        %v8854 = vmul.f32 %v6965, %v8807
        %v8855 = vmul.f32 %v6966, %v8807
        %v8856 = vmul.f32 %v6967, %v8809
        %v8857 = vmul.f32 %v6968, %v8809
        %v8858 = vmul.f32 %v6969, %v8811
        %v8859 = vmul.f32 %v6970, %v8811
        %v8860 = vmul.f32 %v6971, %v8813
        %v8861 = vmul.f32 %v6972, %v8813
        %v8862 = vmul.f32 %v6973, %v8815
        %v8863 = vmul.f32 %v6974, %v8815
        %v8864 = vmul.f32 %v6975, %v8817
        %v8865 = vmul.f32 %v6976, %v8817
        %v8866 = vmul.f32 %v6977, %v8819
        %v8867 = vmul.f32 %v6978, %v8819
        %v8868 = vmul.f32 %v6979, %v8821
        %v8869 = vmul.f32 %v6980, %v8821
        %v8870 = vmul.f32 %v6981, %v8823
        %v8871 = vmul.f32 %v6982, %v8823
        %v8872 = vmul.f32 %v6983, %v8825
        %v8873 = vmul.f32 %v6984, %v8825
        %v8874 = vmul.f32 %v6985, %v8827
        %v8875 = vmul.f32 %v6986, %v8827
        %v8876 = vmul.f32 %v6987, %v8829
        %v8877 = vmul.f32 %v6988, %v8829
        %8910 = vrot.lane.b32.xlu0 %v8846, 96
        %v8911 = vpop.permute.xlu0 %8910
        %8912 = vrot.lane.b32.xlu0 %v8847, 96
        %v8913 = vpop.permute.xlu0 %8912
        %8914 = vrot.lane.b32.xlu0 %v8848, 96
        %v8915 = vpop.permute.xlu0 %8914
        %8916 = vrot.lane.b32.xlu0 %v8849, 96
        %v8917 = vpop.permute.xlu0 %8916
        %8918 = vrot.lane.b32.xlu0 %v8850, 96
        %v8919 = vpop.permute.xlu0 %8918
        %8920 = vrot.lane.b32.xlu0 %v8851, 96
        %v8921 = vpop.permute.xlu0 %8920
        %8922 = vrot.lane.b32.xlu0 %v8852, 96
        %v8923 = vpop.permute.xlu0 %8922
        %8924 = vrot.lane.b32.xlu0 %v8853, 96
        %v8925 = vpop.permute.xlu0 %8924
        %8926 = vrot.lane.b32.xlu0 %v8854, 96
        %v8927 = vpop.permute.xlu0 %8926
        %8928 = vrot.lane.b32.xlu0 %v8855, 96
        %v8929 = vpop.permute.xlu0 %8928
        %8930 = vrot.lane.b32.xlu0 %v8856, 96
        %v8931 = vpop.permute.xlu0 %8930
        %8932 = vrot.lane.b32.xlu0 %v8857, 96
        %v8933 = vpop.permute.xlu0 %8932
        %8934 = vrot.lane.b32.xlu0 %v8858, 96
        %v8935 = vpop.permute.xlu0 %8934
        %8936 = vrot.lane.b32.xlu0 %v8859, 96
        %v8937 = vpop.permute.xlu0 %8936
        %8938 = vrot.lane.b32.xlu0 %v8860, 96
        %v8939 = vpop.permute.xlu0 %8938
        %8940 = vrot.lane.b32.xlu0 %v8861, 96
        %v8941 = vpop.permute.xlu0 %8940
        %8942 = vrot.lane.b32.xlu0 %v8862, 96
        %v8943 = vpop.permute.xlu0 %8942
        %8944 = vrot.lane.b32.xlu0 %v8863, 96
        %v8945 = vpop.permute.xlu0 %8944
        %8946 = vrot.lane.b32.xlu0 %v8864, 96
        %v8947 = vpop.permute.xlu0 %8946
        %8948 = vrot.lane.b32.xlu0 %v8865, 96
        %v8949 = vpop.permute.xlu0 %8948
        %8950 = vrot.lane.b32.xlu0 %v8866, 96
        %v8951 = vpop.permute.xlu0 %8950
        %8952 = vrot.lane.b32.xlu0 %v8867, 96
        %v8953 = vpop.permute.xlu0 %8952
        %8954 = vrot.lane.b32.xlu0 %v8868, 96
        %v8955 = vpop.permute.xlu0 %8954
        %8956 = vrot.lane.b32.xlu0 %v8869, 96
        %v8957 = vpop.permute.xlu0 %8956
        %8958 = vrot.lane.b32.xlu0 %v8870, 96
        %v8959 = vpop.permute.xlu0 %8958
        %8960 = vrot.lane.b32.xlu0 %v8871, 96
        %v8961 = vpop.permute.xlu0 %8960
        %8962 = vrot.lane.b32.xlu0 %v8872, 96
        %v8963 = vpop.permute.xlu0 %8962
        %8964 = vrot.lane.b32.xlu0 %v8873, 96
        %v8965 = vpop.permute.xlu0 %8964
        %8966 = vrot.lane.b32.xlu0 %v8874, 96
        %v8967 = vpop.permute.xlu0 %8966
        %8968 = vrot.lane.b32.xlu0 %v8875, 96
        %v8969 = vpop.permute.xlu0 %8968
        %8970 = vrot.lane.b32.xlu0 %v8876, 96
        %v8971 = vpop.permute.xlu0 %8970
        %8972 = vrot.lane.b32.xlu0 %v8877, 96
        %v8973 = vpop.permute.xlu0 %8972
        %v9006 = vsel %vm2268, %v8911, 0.0
        %9007 = vadd.xlane.f32.xlu0 %v9006
        %v9008 = vpop.xlane.xlu0 %9007
        %v9009 = vsel %vm2268, %v8913, 0.0
        %9010 = vadd.xlane.f32.xlu0 %v9009
        %v9011 = vpop.xlane.xlu0 %9010
        %v9012 = vsel %vm2268, %v8915, 0.0
        %9013 = vadd.xlane.f32.xlu0 %v9012
        %v9014 = vpop.xlane.xlu0 %9013
        %v9015 = vsel %vm2268, %v8917, 0.0
        %9016 = vadd.xlane.f32.xlu0 %v9015
        %v9017 = vpop.xlane.xlu0 %9016
        %v9018 = vsel %vm2268, %v8919, 0.0
        %9019 = vadd.xlane.f32.xlu0 %v9018
        %v9020 = vpop.xlane.xlu0 %9019
        %v9021 = vsel %vm2268, %v8921, 0.0
        %9022 = vadd.xlane.f32.xlu0 %v9021
        %v9023 = vpop.xlane.xlu0 %9022
        %v9024 = vsel %vm2268, %v8923, 0.0
        %9025 = vadd.xlane.f32.xlu0 %v9024
        %v9026 = vpop.xlane.xlu0 %9025
        %v9027 = vsel %vm2268, %v8925, 0.0
        %9028 = vadd.xlane.f32.xlu0 %v9027
        %v9029 = vpop.xlane.xlu0 %9028
        %v9030 = vsel %vm2268, %v8927, 0.0
        %9031 = vadd.xlane.f32.xlu0 %v9030
        %v9032 = vpop.xlane.xlu0 %9031
        %v9033 = vsel %vm2268, %v8929, 0.0
        %9034 = vadd.xlane.f32.xlu0 %v9033
        %v9035 = vpop.xlane.xlu0 %9034
        %v9036 = vsel %vm2268, %v8931, 0.0
        %9037 = vadd.xlane.f32.xlu0 %v9036
        %v9038 = vpop.xlane.xlu0 %9037
        %v9039 = vsel %vm2268, %v8933, 0.0
        %9040 = vadd.xlane.f32.xlu0 %v9039
        %v9041 = vpop.xlane.xlu0 %9040
        %v9042 = vsel %vm2268, %v8935, 0.0
        %9043 = vadd.xlane.f32.xlu0 %v9042
        %v9044 = vpop.xlane.xlu0 %9043
        %v9045 = vsel %vm2268, %v8937, 0.0
        %9046 = vadd.xlane.f32.xlu0 %v9045
        %v9047 = vpop.xlane.xlu0 %9046
        %v9048 = vsel %vm2268, %v8939, 0.0
        %9049 = vadd.xlane.f32.xlu0 %v9048
        %v9050 = vpop.xlane.xlu0 %9049
        %v9051 = vsel %vm2268, %v8941, 0.0
        %9052 = vadd.xlane.f32.xlu0 %v9051
        %v9053 = vpop.xlane.xlu0 %9052
        %v9054 = vsel %vm2268, %v8943, 0.0
        %9055 = vadd.xlane.f32.xlu0 %v9054
        %v9056 = vpop.xlane.xlu0 %9055
        %v9057 = vsel %vm2268, %v8945, 0.0
        %9058 = vadd.xlane.f32.xlu0 %v9057
        %v9059 = vpop.xlane.xlu0 %9058
        %v9060 = vsel %vm2268, %v8947, 0.0
        %9061 = vadd.xlane.f32.xlu0 %v9060
        %v9062 = vpop.xlane.xlu0 %9061
        %v9063 = vsel %vm2268, %v8949, 0.0
        %9064 = vadd.xlane.f32.xlu0 %v9063
        %v9065 = vpop.xlane.xlu0 %9064
        %v9066 = vsel %vm2268, %v8951, 0.0
        %9067 = vadd.xlane.f32.xlu0 %v9066
        %v9068 = vpop.xlane.xlu0 %9067
        %v9069 = vsel %vm2268, %v8953, 0.0
        %9070 = vadd.xlane.f32.xlu0 %v9069
        %v9071 = vpop.xlane.xlu0 %9070
        %v9072 = vsel %vm2268, %v8955, 0.0
        %9073 = vadd.xlane.f32.xlu0 %v9072
        %v9074 = vpop.xlane.xlu0 %9073
        %v9075 = vsel %vm2268, %v8957, 0.0
        %9076 = vadd.xlane.f32.xlu0 %v9075
        %v9077 = vpop.xlane.xlu0 %9076
        %v9078 = vsel %vm2268, %v8959, 0.0
        %9079 = vadd.xlane.f32.xlu0 %v9078
        %v9080 = vpop.xlane.xlu0 %9079
        %v9081 = vsel %vm2268, %v8961, 0.0
        %9082 = vadd.xlane.f32.xlu0 %v9081
        %v9083 = vpop.xlane.xlu0 %9082
        %v9084 = vsel %vm2268, %v8963, 0.0
        %9085 = vadd.xlane.f32.xlu0 %v9084
        %v9086 = vpop.xlane.xlu0 %9085
        %v9087 = vsel %vm2268, %v8965, 0.0
        %9088 = vadd.xlane.f32.xlu0 %v9087
        %v9089 = vpop.xlane.xlu0 %9088
        %v9090 = vsel %vm2268, %v8967, 0.0
        %9091 = vadd.xlane.f32.xlu0 %v9090
        %v9092 = vpop.xlane.xlu0 %9091
        %v9093 = vsel %vm2268, %v8969, 0.0
        %9094 = vadd.xlane.f32.xlu0 %v9093
        %v9095 = vpop.xlane.xlu0 %9094
        %v9096 = vsel %vm2268, %v8971, 0.0
        %9097 = vadd.xlane.f32.xlu0 %v9096
        %v9098 = vpop.xlane.xlu0 %9097
        %v9099 = vsel %vm2268, %v8973, 0.0
        %9100 = vadd.xlane.f32.xlu0 %v9099
        %v9101 = vpop.xlane.xlu0 %9100
        %s9102 = scalar_lea.vmem [#allocation8], 240
        %v9103 = vld [vmem:[%s9102] sm:$0xff]
        %v9104 = vld [vmem:[%s9102 + $0x8] sm:$0xff]
        %9107 = vrot.lane.b32.xlu0 %v9103, 32
        %v9108 = vpop.permute.xlu0 %9107
        %9109 = vrot.lane.b32.xlu0 %v9104, 32
        %v9110 = vpop.permute.xlu0 %9109
        %v9113 = vmul.f32 %v6957, %v9108
        %v9114 = vmul.f32 %v6958, %v9110
        %v9115 = vmul.f32 %v6959, %v9108
        %v9116 = vmul.f32 %v6960, %v9110
        %v9117 = vmul.f32 %v6961, %v9108
        %v9118 = vmul.f32 %v6962, %v9110
        %v9119 = vmul.f32 %v6963, %v9108
        %v9120 = vmul.f32 %v6964, %v9110
        %v9121 = vmul.f32 %v6965, %v9108
        %v9122 = vmul.f32 %v6966, %v9110
        %v9123 = vmul.f32 %v6967, %v9108
        %v9124 = vmul.f32 %v6968, %v9110
        %v9125 = vmul.f32 %v6969, %v9108
        %v9126 = vmul.f32 %v6970, %v9110
        %v9127 = vmul.f32 %v6971, %v9108
        %v9128 = vmul.f32 %v6972, %v9110
        %v9129 = vmul.f32 %v6973, %v9108
        %v9130 = vmul.f32 %v6974, %v9110
        %v9131 = vmul.f32 %v6975, %v9108
        %v9132 = vmul.f32 %v6976, %v9110
        %v9133 = vmul.f32 %v6977, %v9108
        %v9134 = vmul.f32 %v6978, %v9110
        %v9135 = vmul.f32 %v6979, %v9108
        %v9136 = vmul.f32 %v6980, %v9110
        %v9137 = vmul.f32 %v6981, %v9108
        %v9138 = vmul.f32 %v6982, %v9110
        %v9139 = vmul.f32 %v6983, %v9108
        %v9140 = vmul.f32 %v6984, %v9110
        %v9141 = vmul.f32 %v6985, %v9108
        %v9142 = vmul.f32 %v6986, %v9110
        %v9143 = vmul.f32 %v6987, %v9108
        %v9144 = vmul.f32 %v6988, %v9110
        %9177 = vrot.lane.b32.xlu0 %v9113, 96
        %v9178 = vpop.permute.xlu0 %9177
        %9179 = vrot.lane.b32.xlu0 %v9114, 96
        %v9180 = vpop.permute.xlu0 %9179
        %9181 = vrot.lane.b32.xlu0 %v9115, 96
        %v9182 = vpop.permute.xlu0 %9181
        %9183 = vrot.lane.b32.xlu0 %v9116, 96
        %v9184 = vpop.permute.xlu0 %9183
        %9185 = vrot.lane.b32.xlu0 %v9117, 96
        %v9186 = vpop.permute.xlu0 %9185
        %9187 = vrot.lane.b32.xlu0 %v9118, 96
        %v9188 = vpop.permute.xlu0 %9187
        %9189 = vrot.lane.b32.xlu0 %v9119, 96
        %v9190 = vpop.permute.xlu0 %9189
        %9191 = vrot.lane.b32.xlu0 %v9120, 96
        %v9192 = vpop.permute.xlu0 %9191
        %9193 = vrot.lane.b32.xlu0 %v9121, 96
        %v9194 = vpop.permute.xlu0 %9193
        %9195 = vrot.lane.b32.xlu0 %v9122, 96
        %v9196 = vpop.permute.xlu0 %9195
        %9197 = vrot.lane.b32.xlu0 %v9123, 96
        %v9198 = vpop.permute.xlu0 %9197
        %9199 = vrot.lane.b32.xlu0 %v9124, 96
        %v9200 = vpop.permute.xlu0 %9199
        %9201 = vrot.lane.b32.xlu0 %v9125, 96
        %v9202 = vpop.permute.xlu0 %9201
        %9203 = vrot.lane.b32.xlu0 %v9126, 96
        %v9204 = vpop.permute.xlu0 %9203
        %9205 = vrot.lane.b32.xlu0 %v9127, 96
        %v9206 = vpop.permute.xlu0 %9205
        %9207 = vrot.lane.b32.xlu0 %v9128, 96
        %v9208 = vpop.permute.xlu0 %9207
        %9209 = vrot.lane.b32.xlu0 %v9129, 96
        %v9210 = vpop.permute.xlu0 %9209
        %9211 = vrot.lane.b32.xlu0 %v9130, 96
        %v9212 = vpop.permute.xlu0 %9211
        %9213 = vrot.lane.b32.xlu0 %v9131, 96
        %v9214 = vpop.permute.xlu0 %9213
        %9215 = vrot.lane.b32.xlu0 %v9132, 96
        %v9216 = vpop.permute.xlu0 %9215
        %9217 = vrot.lane.b32.xlu0 %v9133, 96
        %v9218 = vpop.permute.xlu0 %9217
        %9219 = vrot.lane.b32.xlu0 %v9134, 96
        %v9220 = vpop.permute.xlu0 %9219
        %9221 = vrot.lane.b32.xlu0 %v9135, 96
        %v9222 = vpop.permute.xlu0 %9221
        %9223 = vrot.lane.b32.xlu0 %v9136, 96
        %v9224 = vpop.permute.xlu0 %9223
        %9225 = vrot.lane.b32.xlu0 %v9137, 96
        %v9226 = vpop.permute.xlu0 %9225
        %9227 = vrot.lane.b32.xlu0 %v9138, 96
        %v9228 = vpop.permute.xlu0 %9227
        %9229 = vrot.lane.b32.xlu0 %v9139, 96
        %v9230 = vpop.permute.xlu0 %9229
        %9231 = vrot.lane.b32.xlu0 %v9140, 96
        %v9232 = vpop.permute.xlu0 %9231
        %9233 = vrot.lane.b32.xlu0 %v9141, 96
        %v9234 = vpop.permute.xlu0 %9233
        %9235 = vrot.lane.b32.xlu0 %v9142, 96
        %v9236 = vpop.permute.xlu0 %9235
        %9237 = vrot.lane.b32.xlu0 %v9143, 96
        %v9238 = vpop.permute.xlu0 %9237
        %9239 = vrot.lane.b32.xlu0 %v9144, 96
        %v9240 = vpop.permute.xlu0 %9239
        %v9273 = vsel %vm2268, %v9178, 0.0
        %9274 = vadd.xlane.f32.xlu0 %v9273
        %v9275 = vpop.xlane.xlu0 %9274
        %v9276 = vsel %vm2268, %v9180, 0.0
        %9277 = vadd.xlane.f32.xlu0 %v9276
        %v9278 = vpop.xlane.xlu0 %9277
        %v9279 = vsel %vm2268, %v9182, 0.0
        %9280 = vadd.xlane.f32.xlu0 %v9279
        %v9281 = vpop.xlane.xlu0 %9280
        %v9282 = vsel %vm2268, %v9184, 0.0
        %9283 = vadd.xlane.f32.xlu0 %v9282
        %v9284 = vpop.xlane.xlu0 %9283
        %v9285 = vsel %vm2268, %v9186, 0.0
        %9286 = vadd.xlane.f32.xlu0 %v9285
        %v9287 = vpop.xlane.xlu0 %9286
        %v9288 = vsel %vm2268, %v9188, 0.0
        %9289 = vadd.xlane.f32.xlu0 %v9288
        %v9290 = vpop.xlane.xlu0 %9289
        %v9291 = vsel %vm2268, %v9190, 0.0
        %9292 = vadd.xlane.f32.xlu0 %v9291
        %v9293 = vpop.xlane.xlu0 %9292
        %v9294 = vsel %vm2268, %v9192, 0.0
        %9295 = vadd.xlane.f32.xlu0 %v9294
        %v9296 = vpop.xlane.xlu0 %9295
        %v9297 = vsel %vm2268, %v9194, 0.0
        %9298 = vadd.xlane.f32.xlu0 %v9297
        %v9299 = vpop.xlane.xlu0 %9298
        %v9300 = vsel %vm2268, %v9196, 0.0
        %9301 = vadd.xlane.f32.xlu0 %v9300
        %v9302 = vpop.xlane.xlu0 %9301
        %v9303 = vsel %vm2268, %v9198, 0.0
        %9304 = vadd.xlane.f32.xlu0 %v9303
        %v9305 = vpop.xlane.xlu0 %9304
        %v9306 = vsel %vm2268, %v9200, 0.0
        %9307 = vadd.xlane.f32.xlu0 %v9306
        %v9308 = vpop.xlane.xlu0 %9307
        %v9309 = vsel %vm2268, %v9202, 0.0
        %9310 = vadd.xlane.f32.xlu0 %v9309
        %v9311 = vpop.xlane.xlu0 %9310
        %v9312 = vsel %vm2268, %v9204, 0.0
        %9313 = vadd.xlane.f32.xlu0 %v9312
        %v9314 = vpop.xlane.xlu0 %9313
        %v9315 = vsel %vm2268, %v9206, 0.0
        %9316 = vadd.xlane.f32.xlu0 %v9315
        %v9317 = vpop.xlane.xlu0 %9316
        %v9318 = vsel %vm2268, %v9208, 0.0
        %9319 = vadd.xlane.f32.xlu0 %v9318
        %v9320 = vpop.xlane.xlu0 %9319
        %v9321 = vsel %vm2268, %v9210, 0.0
        %9322 = vadd.xlane.f32.xlu0 %v9321
        %v9323 = vpop.xlane.xlu0 %9322
        %v9324 = vsel %vm2268, %v9212, 0.0
        %9325 = vadd.xlane.f32.xlu0 %v9324
        %v9326 = vpop.xlane.xlu0 %9325
        %v9327 = vsel %vm2268, %v9214, 0.0
        %9328 = vadd.xlane.f32.xlu0 %v9327
        %v9329 = vpop.xlane.xlu0 %9328
        %v9330 = vsel %vm2268, %v9216, 0.0
        %9331 = vadd.xlane.f32.xlu0 %v9330
        %v9332 = vpop.xlane.xlu0 %9331
        %v9333 = vsel %vm2268, %v9218, 0.0
        %9334 = vadd.xlane.f32.xlu0 %v9333
        %v9335 = vpop.xlane.xlu0 %9334
        %v9336 = vsel %vm2268, %v9220, 0.0
        %9337 = vadd.xlane.f32.xlu0 %v9336
        %v9338 = vpop.xlane.xlu0 %9337
        %v9339 = vsel %vm2268, %v9222, 0.0
        %9340 = vadd.xlane.f32.xlu0 %v9339
        %v9341 = vpop.xlane.xlu0 %9340
        %v9342 = vsel %vm2268, %v9224, 0.0
        %9343 = vadd.xlane.f32.xlu0 %v9342
        %v9344 = vpop.xlane.xlu0 %9343
        %v9345 = vsel %vm2268, %v9226, 0.0
        %9346 = vadd.xlane.f32.xlu0 %v9345
        %v9347 = vpop.xlane.xlu0 %9346
        %v9348 = vsel %vm2268, %v9228, 0.0
        %9349 = vadd.xlane.f32.xlu0 %v9348
        %v9350 = vpop.xlane.xlu0 %9349
        %v9351 = vsel %vm2268, %v9230, 0.0
        %9352 = vadd.xlane.f32.xlu0 %v9351
        %v9353 = vpop.xlane.xlu0 %9352
        %v9354 = vsel %vm2268, %v9232, 0.0
        %9355 = vadd.xlane.f32.xlu0 %v9354
        %v9356 = vpop.xlane.xlu0 %9355
        %v9357 = vsel %vm2268, %v9234, 0.0
        %9358 = vadd.xlane.f32.xlu0 %v9357
        %v9359 = vpop.xlane.xlu0 %9358
        %v9360 = vsel %vm2268, %v9236, 0.0
        %9361 = vadd.xlane.f32.xlu0 %v9360
        %v9362 = vpop.xlane.xlu0 %9361
        %v9363 = vsel %vm2268, %v9238, 0.0
        %9364 = vadd.xlane.f32.xlu0 %v9363
        %v9365 = vpop.xlane.xlu0 %9364
        %v9366 = vsel %vm2268, %v9240, 0.0
        %9367 = vadd.xlane.f32.xlu0 %v9366
        %v9368 = vpop.xlane.xlu0 %9367
        %v9369 = vadd.f32 %v9008, %v9275
        %v9370 = vadd.f32 %v9011, %v9278
        %v9371 = vadd.f32 %v9014, %v9281
        %v9372 = vadd.f32 %v9017, %v9284
        %v9373 = vadd.f32 %v9020, %v9287
        %v9374 = vadd.f32 %v9023, %v9290
        %v9375 = vadd.f32 %v9026, %v9293
        %v9376 = vadd.f32 %v9029, %v9296
        %v9377 = vadd.f32 %v9032, %v9299
        %v9378 = vadd.f32 %v9035, %v9302
        %v9379 = vadd.f32 %v9038, %v9305
        %v9380 = vadd.f32 %v9041, %v9308
        %v9381 = vadd.f32 %v9044, %v9311
        %v9382 = vadd.f32 %v9047, %v9314
        %v9383 = vadd.f32 %v9050, %v9317
        %v9384 = vadd.f32 %v9053, %v9320
        %v9385 = vadd.f32 %v9056, %v9323
        %v9386 = vadd.f32 %v9059, %v9326
        %v9387 = vadd.f32 %v9062, %v9329
        %v9388 = vadd.f32 %v9065, %v9332
        %v9389 = vadd.f32 %v9068, %v9335
        %v9390 = vadd.f32 %v9071, %v9338
        %v9391 = vadd.f32 %v9074, %v9341
        %v9392 = vadd.f32 %v9077, %v9344
        %v9393 = vadd.f32 %v9080, %v9347
        %v9394 = vadd.f32 %v9083, %v9350
        %v9395 = vadd.f32 %v9086, %v9353
        %v9396 = vadd.f32 %v9089, %v9356
        %v9397 = vadd.f32 %v9092, %v9359
        %v9398 = vadd.f32 %v9095, %v9362
        %v9399 = vadd.f32 %v9098, %v9365
        %v9400 = vadd.f32 %v9101, %v9368
        %v9433 = vlaneseq
        %v9434 = vand.u32 %v9433, 127
        %v9435 = vlaneseq
        %v9436 = vshrl.u32 %v9435, 7
        %v9437 = vsub.s32 %v9434, %v9436
        %v9438 = vrot.slane %v3096, %v9437
        %v9439 = vadd.s32 %v9434, 4294967288
        %v9440 = vlaneseq
        %v9441 = vshrl.u32 %v9440, 7
        %v9442 = vsub.s32 %v9439, %v9441
        %v9443 = vrot.slane %v3097, %v9442
        %vm9444 = vcmask 130112
        %v9445 = vsel %vm9444, %v9443, %v9438
        %v9446 = vlaneseq
        %v9447 = vshrl.u32 %v9446, 7
        %v9448 = vsub.s32 %v9434, %v9447
        %v9449 = vrot.slane %v3098, %v9448
        %v9450 = vlaneseq
        %v9451 = vshrl.u32 %v9450, 7
        %v9452 = vsub.s32 %v9439, %v9451
        %v9453 = vrot.slane %v3099, %v9452
        %v9454 = vsel %vm9444, %v9453, %v9449
        %v9455 = vlaneseq
        %v9456 = vshrl.u32 %v9455, 7
        %v9457 = vsub.s32 %v9434, %v9456
        %v9458 = vrot.slane %v3100, %v9457
        %v9459 = vlaneseq
        %v9460 = vshrl.u32 %v9459, 7
        %v9461 = vsub.s32 %v9439, %v9460
        %v9462 = vrot.slane %v3101, %v9461
        %v9463 = vsel %vm9444, %v9462, %v9458
        %v9464 = vlaneseq
        %v9465 = vshrl.u32 %v9464, 7
        %v9466 = vsub.s32 %v9434, %v9465
        %v9467 = vrot.slane %v3102, %v9466
        %v9468 = vlaneseq
        %v9469 = vshrl.u32 %v9468, 7
        %v9470 = vsub.s32 %v9439, %v9469
        %v9471 = vrot.slane %v3103, %v9470
        %v9472 = vsel %vm9444, %v9471, %v9467
        %v9473 = vlaneseq
        %v9474 = vshrl.u32 %v9473, 7
        %v9475 = vsub.s32 %v9434, %v9474
        %v9476 = vrot.slane %v3104, %v9475
        %v9477 = vlaneseq
        %v9478 = vshrl.u32 %v9477, 7
        %v9479 = vsub.s32 %v9439, %v9478
        %v9480 = vrot.slane %v3105, %v9479
        %v9481 = vsel %vm9444, %v9480, %v9476
        %v9482 = vlaneseq
        %v9483 = vshrl.u32 %v9482, 7
        %v9484 = vsub.s32 %v9434, %v9483
        %v9485 = vrot.slane %v3106, %v9484
        %v9486 = vlaneseq
        %v9487 = vshrl.u32 %v9486, 7
        %v9488 = vsub.s32 %v9439, %v9487
        %v9489 = vrot.slane %v3107, %v9488
        %v9490 = vsel %vm9444, %v9489, %v9485
        %v9491 = vlaneseq
        %v9492 = vshrl.u32 %v9491, 7
        %v9493 = vsub.s32 %v9434, %v9492
        %v9494 = vrot.slane %v3108, %v9493
        %v9495 = vlaneseq
        %v9496 = vshrl.u32 %v9495, 7
        %v9497 = vsub.s32 %v9439, %v9496
        %v9498 = vrot.slane %v3109, %v9497
        %v9499 = vsel %vm9444, %v9498, %v9494
        %v9500 = vlaneseq
        %v9501 = vshrl.u32 %v9500, 7
        %v9502 = vsub.s32 %v9434, %v9501
        %v9503 = vrot.slane %v3110, %v9502
        %v9504 = vlaneseq
        %v9505 = vshrl.u32 %v9504, 7
        %v9506 = vsub.s32 %v9439, %v9505
        %v9507 = vrot.slane %v3111, %v9506
        %v9508 = vsel %vm9444, %v9507, %v9503
        %v9509 = vlaneseq
        %v9510 = vshrl.u32 %v9509, 7
        %v9511 = vsub.s32 %v9434, %v9510
        %v9512 = vrot.slane %v3112, %v9511
        %v9513 = vlaneseq
        %v9514 = vshrl.u32 %v9513, 7
        %v9515 = vsub.s32 %v9439, %v9514
        %v9516 = vrot.slane %v3113, %v9515
        %v9517 = vsel %vm9444, %v9516, %v9512
        %v9518 = vlaneseq
        %v9519 = vshrl.u32 %v9518, 7
        %v9520 = vsub.s32 %v9434, %v9519
        %v9521 = vrot.slane %v3114, %v9520
        %v9522 = vlaneseq
        %v9523 = vshrl.u32 %v9522, 7
        %v9524 = vsub.s32 %v9439, %v9523
        %v9525 = vrot.slane %v3115, %v9524
        %v9526 = vsel %vm9444, %v9525, %v9521
        %v9527 = vlaneseq
        %v9528 = vshrl.u32 %v9527, 7
        %v9529 = vsub.s32 %v9434, %v9528
        %v9530 = vrot.slane %v3116, %v9529
        %v9531 = vlaneseq
        %v9532 = vshrl.u32 %v9531, 7
        %v9533 = vsub.s32 %v9439, %v9532
        %v9534 = vrot.slane %v3117, %v9533
        %v9535 = vsel %vm9444, %v9534, %v9530
        %v9536 = vlaneseq
        %v9537 = vshrl.u32 %v9536, 7
        %v9538 = vsub.s32 %v9434, %v9537
        %v9539 = vrot.slane %v3118, %v9538
        %v9540 = vlaneseq
        %v9541 = vshrl.u32 %v9540, 7
        %v9542 = vsub.s32 %v9439, %v9541
        %v9543 = vrot.slane %v3119, %v9542
        %v9544 = vsel %vm9444, %v9543, %v9539
        %v9545 = vlaneseq
        %v9546 = vshrl.u32 %v9545, 7
        %v9547 = vsub.s32 %v9434, %v9546
        %v9548 = vrot.slane %v3120, %v9547
        %v9549 = vlaneseq
        %v9550 = vshrl.u32 %v9549, 7
        %v9551 = vsub.s32 %v9439, %v9550
        %v9552 = vrot.slane %v3121, %v9551
        %v9553 = vsel %vm9444, %v9552, %v9548
        %v9554 = vlaneseq
        %v9555 = vshrl.u32 %v9554, 7
        %v9556 = vsub.s32 %v9434, %v9555
        %v9557 = vrot.slane %v3122, %v9556
        %v9558 = vlaneseq
        %v9559 = vshrl.u32 %v9558, 7
        %v9560 = vsub.s32 %v9439, %v9559
        %v9561 = vrot.slane %v3123, %v9560
        %v9562 = vsel %vm9444, %v9561, %v9557
        %v9563 = vlaneseq
        %v9564 = vshrl.u32 %v9563, 7
        %v9565 = vsub.s32 %v9434, %v9564
        %v9566 = vrot.slane %v3124, %v9565
        %v9567 = vlaneseq
        %v9568 = vshrl.u32 %v9567, 7
        %v9569 = vsub.s32 %v9439, %v9568
        %v9570 = vrot.slane %v3125, %v9569
        %v9571 = vsel %vm9444, %v9570, %v9566
        %v9572 = vlaneseq
        %v9573 = vshrl.u32 %v9572, 7
        %v9574 = vsub.s32 %v9434, %v9573
        %v9575 = vrot.slane %v3126, %v9574
        %v9576 = vlaneseq
        %v9577 = vshrl.u32 %v9576, 7
        %v9578 = vsub.s32 %v9439, %v9577
        %v9579 = vrot.slane %v3127, %v9578
        %v9580 = vsel %vm9444, %v9579, %v9575
        %vm9581 = vcmask 1041409
        %v9582 = vsel %vm9581, %v9454, %v9445
        %vm9583 = vcmask 1042434
        %v9584 = vsel %vm9583, %v9463, %v9582
        %vm9585 = vcmask 1043459
        %v9586 = vsel %vm9585, %v9472, %v9584
        %vm9587 = vcmask 1044484
        %v9588 = vsel %vm9587, %v9481, %v9586
        %vm9589 = vcmask 1045509
        %v9590 = vsel %vm9589, %v9490, %v9588
        %vm9591 = vcmask 1046534
        %v9592 = vsel %vm9591, %v9499, %v9590
        %vm9593 = vcmask 1047559
        %v9594 = vsel %vm9593, %v9508, %v9592
        %v9595 = vsel %vm9581, %v9526, %v9517
        %v9596 = vsel %vm9583, %v9535, %v9595
        %v9597 = vsel %vm9585, %v9544, %v9596
        %v9598 = vsel %vm9587, %v9553, %v9597
        %v9599 = vsel %vm9589, %v9562, %v9598
        %v9600 = vsel %vm9591, %v9571, %v9599
        %v9601 = vsel %vm9593, %v9580, %v9600
        %v9636 = vadd.s32 %v9434, 4294967280
        %v9637 = vlaneseq
        %v9638 = vshrl.u32 %v9637, 7
        %v9639 = vsub.s32 %v9636, %v9638
        %v9640 = vrot.slane %v3699, %v9639
        %v9641 = vadd.s32 %v9434, 4294967272
        %v9642 = vlaneseq
        %v9643 = vshrl.u32 %v9642, 7
        %v9644 = vsub.s32 %v9641, %v9643
        %v9645 = vrot.slane %v3700, %v9644
        %vm9646 = vcmask 261312
        %v9647 = vsel %vm9646, %v9645, %v9640
        %v9648 = vlaneseq
        %v9649 = vshrl.u32 %v9648, 7
        %v9650 = vsub.s32 %v9636, %v9649
        %v9651 = vrot.slane %v3701, %v9650
        %v9652 = vlaneseq
        %v9653 = vshrl.u32 %v9652, 7
        %v9654 = vsub.s32 %v9641, %v9653
        %v9655 = vrot.slane %v3702, %v9654
        %v9656 = vsel %vm9646, %v9655, %v9651
        %v9657 = vlaneseq
        %v9658 = vshrl.u32 %v9657, 7
        %v9659 = vsub.s32 %v9636, %v9658
        %v9660 = vrot.slane %v3703, %v9659
        %v9661 = vlaneseq
        %v9662 = vshrl.u32 %v9661, 7
        %v9663 = vsub.s32 %v9641, %v9662
        %v9664 = vrot.slane %v3704, %v9663
        %v9665 = vsel %vm9646, %v9664, %v9660
        %v9666 = vlaneseq
        %v9667 = vshrl.u32 %v9666, 7
        %v9668 = vsub.s32 %v9636, %v9667
        %v9669 = vrot.slane %v3705, %v9668
        %v9670 = vlaneseq
        %v9671 = vshrl.u32 %v9670, 7
        %v9672 = vsub.s32 %v9641, %v9671
        %v9673 = vrot.slane %v3706, %v9672
        %v9674 = vsel %vm9646, %v9673, %v9669
        %v9675 = vlaneseq
        %v9676 = vshrl.u32 %v9675, 7
        %v9677 = vsub.s32 %v9636, %v9676
        %v9678 = vrot.slane %v3707, %v9677
        %v9679 = vlaneseq
        %v9680 = vshrl.u32 %v9679, 7
        %v9681 = vsub.s32 %v9641, %v9680
        %v9682 = vrot.slane %v3708, %v9681
        %v9683 = vsel %vm9646, %v9682, %v9678
        %v9684 = vlaneseq
        %v9685 = vshrl.u32 %v9684, 7
        %v9686 = vsub.s32 %v9636, %v9685
        %v9687 = vrot.slane %v3709, %v9686
        %v9688 = vlaneseq
        %v9689 = vshrl.u32 %v9688, 7
        %v9690 = vsub.s32 %v9641, %v9689
        %v9691 = vrot.slane %v3710, %v9690
        %v9692 = vsel %vm9646, %v9691, %v9687
        %v9693 = vlaneseq
        %v9694 = vshrl.u32 %v9693, 7
        %v9695 = vsub.s32 %v9636, %v9694
        %v9696 = vrot.slane %v3711, %v9695
        %v9697 = vlaneseq
        %v9698 = vshrl.u32 %v9697, 7
        %v9699 = vsub.s32 %v9641, %v9698
        %v9700 = vrot.slane %v3712, %v9699
        %v9701 = vsel %vm9646, %v9700, %v9696
        %v9702 = vlaneseq
        %v9703 = vshrl.u32 %v9702, 7
        %v9704 = vsub.s32 %v9636, %v9703
        %v9705 = vrot.slane %v3713, %v9704
        %v9706 = vlaneseq
        %v9707 = vshrl.u32 %v9706, 7
        %v9708 = vsub.s32 %v9641, %v9707
        %v9709 = vrot.slane %v3714, %v9708
        %v9710 = vsel %vm9646, %v9709, %v9705
        %v9711 = vlaneseq
        %v9712 = vshrl.u32 %v9711, 7
        %v9713 = vsub.s32 %v9636, %v9712
        %v9714 = vrot.slane %v3715, %v9713
        %v9715 = vlaneseq
        %v9716 = vshrl.u32 %v9715, 7
        %v9717 = vsub.s32 %v9641, %v9716
        %v9718 = vrot.slane %v3716, %v9717
        %v9719 = vsel %vm9646, %v9718, %v9714
        %v9720 = vlaneseq
        %v9721 = vshrl.u32 %v9720, 7
        %v9722 = vsub.s32 %v9636, %v9721
        %v9723 = vrot.slane %v3717, %v9722
        %v9724 = vlaneseq
        %v9725 = vshrl.u32 %v9724, 7
        %v9726 = vsub.s32 %v9641, %v9725
        %v9727 = vrot.slane %v3718, %v9726
        %v9728 = vsel %vm9646, %v9727, %v9723
        %v9729 = vlaneseq
        %v9730 = vshrl.u32 %v9729, 7
        %v9731 = vsub.s32 %v9636, %v9730
        %v9732 = vrot.slane %v3719, %v9731
        %v9733 = vlaneseq
        %v9734 = vshrl.u32 %v9733, 7
        %v9735 = vsub.s32 %v9641, %v9734
        %v9736 = vrot.slane %v3720, %v9735
        %v9737 = vsel %vm9646, %v9736, %v9732
        %v9738 = vlaneseq
        %v9739 = vshrl.u32 %v9738, 7
        %v9740 = vsub.s32 %v9636, %v9739
        %v9741 = vrot.slane %v3721, %v9740
        %v9742 = vlaneseq
        %v9743 = vshrl.u32 %v9742, 7
        %v9744 = vsub.s32 %v9641, %v9743
        %v9745 = vrot.slane %v3722, %v9744
        %v9746 = vsel %vm9646, %v9745, %v9741
        %v9747 = vlaneseq
        %v9748 = vshrl.u32 %v9747, 7
        %v9749 = vsub.s32 %v9636, %v9748
        %v9750 = vrot.slane %v3723, %v9749
        %v9751 = vlaneseq
        %v9752 = vshrl.u32 %v9751, 7
        %v9753 = vsub.s32 %v9641, %v9752
        %v9754 = vrot.slane %v3724, %v9753
        %v9755 = vsel %vm9646, %v9754, %v9750
        %v9756 = vlaneseq
        %v9757 = vshrl.u32 %v9756, 7
        %v9758 = vsub.s32 %v9636, %v9757
        %v9759 = vrot.slane %v3725, %v9758
        %v9760 = vlaneseq
        %v9761 = vshrl.u32 %v9760, 7
        %v9762 = vsub.s32 %v9641, %v9761
        %v9763 = vrot.slane %v3726, %v9762
        %v9764 = vsel %vm9646, %v9763, %v9759
        %v9765 = vlaneseq
        %v9766 = vshrl.u32 %v9765, 7
        %v9767 = vsub.s32 %v9636, %v9766
        %v9768 = vrot.slane %v3727, %v9767
        %v9769 = vlaneseq
        %v9770 = vshrl.u32 %v9769, 7
        %v9771 = vsub.s32 %v9641, %v9770
        %v9772 = vrot.slane %v3728, %v9771
        %v9773 = vsel %vm9646, %v9772, %v9768
        %v9774 = vlaneseq
        %v9775 = vshrl.u32 %v9774, 7
        %v9776 = vsub.s32 %v9636, %v9775
        %v9777 = vrot.slane %v3729, %v9776
        %v9778 = vlaneseq
        %v9779 = vshrl.u32 %v9778, 7
        %v9780 = vsub.s32 %v9641, %v9779
        %v9781 = vrot.slane %v3730, %v9780
        %v9782 = vsel %vm9646, %v9781, %v9777
        %v9783 = vsel %vm9581, %v9656, %v9647
        %v9784 = vsel %vm9583, %v9665, %v9783
        %v9785 = vsel %vm9585, %v9674, %v9784
        %v9786 = vsel %vm9587, %v9683, %v9785
        %v9787 = vsel %vm9589, %v9692, %v9786
        %v9788 = vsel %vm9591, %v9701, %v9787
        %v9789 = vsel %vm9593, %v9710, %v9788
        %v9790 = vsel %vm9581, %v9728, %v9719
        %v9791 = vsel %vm9583, %v9737, %v9790
        %v9792 = vsel %vm9585, %v9746, %v9791
        %v9793 = vsel %vm9587, %v9755, %v9792
        %v9794 = vsel %vm9589, %v9764, %v9793
        %v9795 = vsel %vm9591, %v9773, %v9794
        %v9796 = vsel %vm9593, %v9782, %v9795
        %v9831 = vadd.s32 %v9434, 4294967264
        %v9832 = vlaneseq
        %v9833 = vshrl.u32 %v9832, 7
        %v9834 = vsub.s32 %v9831, %v9833
        %v9835 = vrot.slane %v4302, %v9834
        %v9836 = vadd.s32 %v9434, 4294967256
        %v9837 = vlaneseq
        %v9838 = vshrl.u32 %v9837, 7
        %v9839 = vsub.s32 %v9836, %v9838
        %v9840 = vrot.slane %v4303, %v9839
        %vm9841 = vcmask 392512
        %v9842 = vsel %vm9841, %v9840, %v9835
        %v9843 = vlaneseq
        %v9844 = vshrl.u32 %v9843, 7
        %v9845 = vsub.s32 %v9831, %v9844
        %v9846 = vrot.slane %v4304, %v9845
        %v9847 = vlaneseq
        %v9848 = vshrl.u32 %v9847, 7
        %v9849 = vsub.s32 %v9836, %v9848
        %v9850 = vrot.slane %v4305, %v9849
        %v9851 = vsel %vm9841, %v9850, %v9846
        %v9852 = vlaneseq
        %v9853 = vshrl.u32 %v9852, 7
        %v9854 = vsub.s32 %v9831, %v9853
        %v9855 = vrot.slane %v4306, %v9854
        %v9856 = vlaneseq
        %v9857 = vshrl.u32 %v9856, 7
        %v9858 = vsub.s32 %v9836, %v9857
        %v9859 = vrot.slane %v4307, %v9858
        %v9860 = vsel %vm9841, %v9859, %v9855
        %v9861 = vlaneseq
        %v9862 = vshrl.u32 %v9861, 7
        %v9863 = vsub.s32 %v9831, %v9862
        %v9864 = vrot.slane %v4308, %v9863
        %v9865 = vlaneseq
        %v9866 = vshrl.u32 %v9865, 7
        %v9867 = vsub.s32 %v9836, %v9866
        %v9868 = vrot.slane %v4309, %v9867
        %v9869 = vsel %vm9841, %v9868, %v9864
        %v9870 = vlaneseq
        %v9871 = vshrl.u32 %v9870, 7
        %v9872 = vsub.s32 %v9831, %v9871
        %v9873 = vrot.slane %v4310, %v9872
        %v9874 = vlaneseq
        %v9875 = vshrl.u32 %v9874, 7
        %v9876 = vsub.s32 %v9836, %v9875
        %v9877 = vrot.slane %v4311, %v9876
        %v9878 = vsel %vm9841, %v9877, %v9873
        %v9879 = vlaneseq
        %v9880 = vshrl.u32 %v9879, 7
        %v9881 = vsub.s32 %v9831, %v9880
        %v9882 = vrot.slane %v4312, %v9881
        %v9883 = vlaneseq
        %v9884 = vshrl.u32 %v9883, 7
        %v9885 = vsub.s32 %v9836, %v9884
        %v9886 = vrot.slane %v4313, %v9885
        %v9887 = vsel %vm9841, %v9886, %v9882
        %v9888 = vlaneseq
        %v9889 = vshrl.u32 %v9888, 7
        %v9890 = vsub.s32 %v9831, %v9889
        %v9891 = vrot.slane %v4314, %v9890
        %v9892 = vlaneseq
        %v9893 = vshrl.u32 %v9892, 7
        %v9894 = vsub.s32 %v9836, %v9893
        %v9895 = vrot.slane %v4315, %v9894
        %v9896 = vsel %vm9841, %v9895, %v9891
        %v9897 = vlaneseq
        %v9898 = vshrl.u32 %v9897, 7
        %v9899 = vsub.s32 %v9831, %v9898
        %v9900 = vrot.slane %v4316, %v9899
        %v9901 = vlaneseq
        %v9902 = vshrl.u32 %v9901, 7
        %v9903 = vsub.s32 %v9836, %v9902
        %v9904 = vrot.slane %v4317, %v9903
        %v9905 = vsel %vm9841, %v9904, %v9900
        %v9906 = vlaneseq
        %v9907 = vshrl.u32 %v9906, 7
        %v9908 = vsub.s32 %v9831, %v9907
        %v9909 = vrot.slane %v4318, %v9908
        %v9910 = vlaneseq
        %v9911 = vshrl.u32 %v9910, 7
        %v9912 = vsub.s32 %v9836, %v9911
        %v9913 = vrot.slane %v4319, %v9912
        %v9914 = vsel %vm9841, %v9913, %v9909
        %v9915 = vlaneseq
        %v9916 = vshrl.u32 %v9915, 7
        %v9917 = vsub.s32 %v9831, %v9916
        %v9918 = vrot.slane %v4320, %v9917
        %v9919 = vlaneseq
        %v9920 = vshrl.u32 %v9919, 7
        %v9921 = vsub.s32 %v9836, %v9920
        %v9922 = vrot.slane %v4321, %v9921
        %v9923 = vsel %vm9841, %v9922, %v9918
        %v9924 = vlaneseq
        %v9925 = vshrl.u32 %v9924, 7
        %v9926 = vsub.s32 %v9831, %v9925
        %v9927 = vrot.slane %v4322, %v9926
        %v9928 = vlaneseq
        %v9929 = vshrl.u32 %v9928, 7
        %v9930 = vsub.s32 %v9836, %v9929
        %v9931 = vrot.slane %v4323, %v9930
        %v9932 = vsel %vm9841, %v9931, %v9927
        %v9933 = vlaneseq
        %v9934 = vshrl.u32 %v9933, 7
        %v9935 = vsub.s32 %v9831, %v9934
        %v9936 = vrot.slane %v4324, %v9935
        %v9937 = vlaneseq
        %v9938 = vshrl.u32 %v9937, 7
        %v9939 = vsub.s32 %v9836, %v9938
        %v9940 = vrot.slane %v4325, %v9939
        %v9941 = vsel %vm9841, %v9940, %v9936
        %v9942 = vlaneseq
        %v9943 = vshrl.u32 %v9942, 7
        %v9944 = vsub.s32 %v9831, %v9943
        %v9945 = vrot.slane %v4326, %v9944
        %v9946 = vlaneseq
        %v9947 = vshrl.u32 %v9946, 7
        %v9948 = vsub.s32 %v9836, %v9947
        %v9949 = vrot.slane %v4327, %v9948
        %v9950 = vsel %vm9841, %v9949, %v9945
        %v9951 = vlaneseq
        %v9952 = vshrl.u32 %v9951, 7
        %v9953 = vsub.s32 %v9831, %v9952
        %v9954 = vrot.slane %v4328, %v9953
        %v9955 = vlaneseq
        %v9956 = vshrl.u32 %v9955, 7
        %v9957 = vsub.s32 %v9836, %v9956
        %v9958 = vrot.slane %v4329, %v9957
        %v9959 = vsel %vm9841, %v9958, %v9954
        %v9960 = vlaneseq
        %v9961 = vshrl.u32 %v9960, 7
        %v9962 = vsub.s32 %v9831, %v9961
        %v9963 = vrot.slane %v4330, %v9962
        %v9964 = vlaneseq
        %v9965 = vshrl.u32 %v9964, 7
        %v9966 = vsub.s32 %v9836, %v9965
        %v9967 = vrot.slane %v4331, %v9966
        %v9968 = vsel %vm9841, %v9967, %v9963
        %v9969 = vlaneseq
        %v9970 = vshrl.u32 %v9969, 7
        %v9971 = vsub.s32 %v9831, %v9970
        %v9972 = vrot.slane %v4332, %v9971
        %v9973 = vlaneseq
        %v9974 = vshrl.u32 %v9973, 7
        %v9975 = vsub.s32 %v9836, %v9974
        %v9976 = vrot.slane %v4333, %v9975
        %v9977 = vsel %vm9841, %v9976, %v9972
        %v9978 = vsel %vm9581, %v9851, %v9842
        %v9979 = vsel %vm9583, %v9860, %v9978
        %v9980 = vsel %vm9585, %v9869, %v9979
        %v9981 = vsel %vm9587, %v9878, %v9980
        %v9982 = vsel %vm9589, %v9887, %v9981
        %v9983 = vsel %vm9591, %v9896, %v9982
        %v9984 = vsel %vm9593, %v9905, %v9983
        %v9985 = vsel %vm9581, %v9923, %v9914
        %v9986 = vsel %vm9583, %v9932, %v9985
        %v9987 = vsel %vm9585, %v9941, %v9986
        %v9988 = vsel %vm9587, %v9950, %v9987
        %v9989 = vsel %vm9589, %v9959, %v9988
        %v9990 = vsel %vm9591, %v9968, %v9989
        %v9991 = vsel %vm9593, %v9977, %v9990
        %v10026 = vadd.s32 %v9434, 4294967248
        %v10027 = vlaneseq
        %v10028 = vshrl.u32 %v10027, 7
        %v10029 = vsub.s32 %v10026, %v10028
        %v10030 = vrot.slane %v4905, %v10029
        %v10031 = vadd.s32 %v9434, 4294967240
        %v10032 = vlaneseq
        %v10033 = vshrl.u32 %v10032, 7
        %v10034 = vsub.s32 %v10031, %v10033
        %v10035 = vrot.slane %v4906, %v10034
        %vm10036 = vcmask 523712
        %v10037 = vsel %vm10036, %v10035, %v10030
        %v10038 = vlaneseq
        %v10039 = vshrl.u32 %v10038, 7
        %v10040 = vsub.s32 %v10026, %v10039
        %v10041 = vrot.slane %v4907, %v10040
        %v10042 = vlaneseq
        %v10043 = vshrl.u32 %v10042, 7
        %v10044 = vsub.s32 %v10031, %v10043
        %v10045 = vrot.slane %v4908, %v10044
        %v10046 = vsel %vm10036, %v10045, %v10041
        %v10047 = vlaneseq
        %v10048 = vshrl.u32 %v10047, 7
        %v10049 = vsub.s32 %v10026, %v10048
        %v10050 = vrot.slane %v4909, %v10049
        %v10051 = vlaneseq
        %v10052 = vshrl.u32 %v10051, 7
        %v10053 = vsub.s32 %v10031, %v10052
        %v10054 = vrot.slane %v4910, %v10053
        %v10055 = vsel %vm10036, %v10054, %v10050
        %v10056 = vlaneseq
        %v10057 = vshrl.u32 %v10056, 7
        %v10058 = vsub.s32 %v10026, %v10057
        %v10059 = vrot.slane %v4911, %v10058
        %v10060 = vlaneseq
        %v10061 = vshrl.u32 %v10060, 7
        %v10062 = vsub.s32 %v10031, %v10061
        %v10063 = vrot.slane %v4912, %v10062
        %v10064 = vsel %vm10036, %v10063, %v10059
        %v10065 = vlaneseq
        %v10066 = vshrl.u32 %v10065, 7
        %v10067 = vsub.s32 %v10026, %v10066
        %v10068 = vrot.slane %v4913, %v10067
        %v10069 = vlaneseq
        %v10070 = vshrl.u32 %v10069, 7
        %v10071 = vsub.s32 %v10031, %v10070
        %v10072 = vrot.slane %v4914, %v10071
        %v10073 = vsel %vm10036, %v10072, %v10068
        %v10074 = vlaneseq
        %v10075 = vshrl.u32 %v10074, 7
        %v10076 = vsub.s32 %v10026, %v10075
        %v10077 = vrot.slane %v4915, %v10076
        %v10078 = vlaneseq
        %v10079 = vshrl.u32 %v10078, 7
        %v10080 = vsub.s32 %v10031, %v10079
        %v10081 = vrot.slane %v4916, %v10080
        %v10082 = vsel %vm10036, %v10081, %v10077
        %v10083 = vlaneseq
        %v10084 = vshrl.u32 %v10083, 7
        %v10085 = vsub.s32 %v10026, %v10084
        %v10086 = vrot.slane %v4917, %v10085
        %v10087 = vlaneseq
        %v10088 = vshrl.u32 %v10087, 7
        %v10089 = vsub.s32 %v10031, %v10088
        %v10090 = vrot.slane %v4918, %v10089
        %v10091 = vsel %vm10036, %v10090, %v10086
        %v10092 = vlaneseq
        %v10093 = vshrl.u32 %v10092, 7
        %v10094 = vsub.s32 %v10026, %v10093
        %v10095 = vrot.slane %v4919, %v10094
        %v10096 = vlaneseq
        %v10097 = vshrl.u32 %v10096, 7
        %v10098 = vsub.s32 %v10031, %v10097
        %v10099 = vrot.slane %v4920, %v10098
        %v10100 = vsel %vm10036, %v10099, %v10095
        %v10101 = vlaneseq
        %v10102 = vshrl.u32 %v10101, 7
        %v10103 = vsub.s32 %v10026, %v10102
        %v10104 = vrot.slane %v4921, %v10103
        %v10105 = vlaneseq
        %v10106 = vshrl.u32 %v10105, 7
        %v10107 = vsub.s32 %v10031, %v10106
        %v10108 = vrot.slane %v4922, %v10107
        %v10109 = vsel %vm10036, %v10108, %v10104
        %v10110 = vlaneseq
        %v10111 = vshrl.u32 %v10110, 7
        %v10112 = vsub.s32 %v10026, %v10111
        %v10113 = vrot.slane %v4923, %v10112
        %v10114 = vlaneseq
        %v10115 = vshrl.u32 %v10114, 7
        %v10116 = vsub.s32 %v10031, %v10115
        %v10117 = vrot.slane %v4924, %v10116
        %v10118 = vsel %vm10036, %v10117, %v10113
        %v10119 = vlaneseq
        %v10120 = vshrl.u32 %v10119, 7
        %v10121 = vsub.s32 %v10026, %v10120
        %v10122 = vrot.slane %v4925, %v10121
        %v10123 = vlaneseq
        %v10124 = vshrl.u32 %v10123, 7
        %v10125 = vsub.s32 %v10031, %v10124
        %v10126 = vrot.slane %v4926, %v10125
        %v10127 = vsel %vm10036, %v10126, %v10122
        %v10128 = vlaneseq
        %v10129 = vshrl.u32 %v10128, 7
        %v10130 = vsub.s32 %v10026, %v10129
        %v10131 = vrot.slane %v4927, %v10130
        %v10132 = vlaneseq
        %v10133 = vshrl.u32 %v10132, 7
        %v10134 = vsub.s32 %v10031, %v10133
        %v10135 = vrot.slane %v4928, %v10134
        %v10136 = vsel %vm10036, %v10135, %v10131
        %v10137 = vlaneseq
        %v10138 = vshrl.u32 %v10137, 7
        %v10139 = vsub.s32 %v10026, %v10138
        %v10140 = vrot.slane %v4929, %v10139
        %v10141 = vlaneseq
        %v10142 = vshrl.u32 %v10141, 7
        %v10143 = vsub.s32 %v10031, %v10142
        %v10144 = vrot.slane %v4930, %v10143
        %v10145 = vsel %vm10036, %v10144, %v10140
        %v10146 = vlaneseq
        %v10147 = vshrl.u32 %v10146, 7
        %v10148 = vsub.s32 %v10026, %v10147
        %v10149 = vrot.slane %v4931, %v10148
        %v10150 = vlaneseq
        %v10151 = vshrl.u32 %v10150, 7
        %v10152 = vsub.s32 %v10031, %v10151
        %v10153 = vrot.slane %v4932, %v10152
        %v10154 = vsel %vm10036, %v10153, %v10149
        %v10155 = vlaneseq
        %v10156 = vshrl.u32 %v10155, 7
        %v10157 = vsub.s32 %v10026, %v10156
        %v10158 = vrot.slane %v4933, %v10157
        %v10159 = vlaneseq
        %v10160 = vshrl.u32 %v10159, 7
        %v10161 = vsub.s32 %v10031, %v10160
        %v10162 = vrot.slane %v4934, %v10161
        %v10163 = vsel %vm10036, %v10162, %v10158
        %v10164 = vlaneseq
        %v10165 = vshrl.u32 %v10164, 7
        %v10166 = vsub.s32 %v10026, %v10165
        %v10167 = vrot.slane %v4935, %v10166
        %v10168 = vlaneseq
        %v10169 = vshrl.u32 %v10168, 7
        %v10170 = vsub.s32 %v10031, %v10169
        %v10171 = vrot.slane %v4936, %v10170
        %v10172 = vsel %vm10036, %v10171, %v10167
        %v10173 = vsel %vm9581, %v10046, %v10037
        %v10174 = vsel %vm9583, %v10055, %v10173
        %v10175 = vsel %vm9585, %v10064, %v10174
        %v10176 = vsel %vm9587, %v10073, %v10175
        %v10177 = vsel %vm9589, %v10082, %v10176
        %v10178 = vsel %vm9591, %v10091, %v10177
        %v10179 = vsel %vm9593, %v10100, %v10178
        %v10180 = vsel %vm9581, %v10118, %v10109
        %v10181 = vsel %vm9583, %v10127, %v10180
        %v10182 = vsel %vm9585, %v10136, %v10181
        %v10183 = vsel %vm9587, %v10145, %v10182
        %v10184 = vsel %vm9589, %v10154, %v10183
        %v10185 = vsel %vm9591, %v10163, %v10184
        %v10186 = vsel %vm9593, %v10172, %v10185
        %v10221 = vadd.s32 %v9434, 4294967232
        %v10222 = vlaneseq
        %v10223 = vshrl.u32 %v10222, 7
        %v10224 = vsub.s32 %v10221, %v10223
        %v10225 = vrot.slane %v7560, %v10224
        %v10226 = vadd.s32 %v9434, 4294967224
        %v10227 = vlaneseq
        %v10228 = vshrl.u32 %v10227, 7
        %v10229 = vsub.s32 %v10226, %v10228
        %v10230 = vrot.slane %v7561, %v10229
        %vm10231 = vcmask 654912
        %v10232 = vsel %vm10231, %v10230, %v10225
        %v10233 = vlaneseq
        %v10234 = vshrl.u32 %v10233, 7
        %v10235 = vsub.s32 %v10221, %v10234
        %v10236 = vrot.slane %v7562, %v10235
        %v10237 = vlaneseq
        %v10238 = vshrl.u32 %v10237, 7
        %v10239 = vsub.s32 %v10226, %v10238
        %v10240 = vrot.slane %v7563, %v10239
        %v10241 = vsel %vm10231, %v10240, %v10236
        %v10242 = vlaneseq
        %v10243 = vshrl.u32 %v10242, 7
        %v10244 = vsub.s32 %v10221, %v10243
        %v10245 = vrot.slane %v7564, %v10244
        %v10246 = vlaneseq
        %v10247 = vshrl.u32 %v10246, 7
        %v10248 = vsub.s32 %v10226, %v10247
        %v10249 = vrot.slane %v7565, %v10248
        %v10250 = vsel %vm10231, %v10249, %v10245
        %v10251 = vlaneseq
        %v10252 = vshrl.u32 %v10251, 7
        %v10253 = vsub.s32 %v10221, %v10252
        %v10254 = vrot.slane %v7566, %v10253
        %v10255 = vlaneseq
        %v10256 = vshrl.u32 %v10255, 7
        %v10257 = vsub.s32 %v10226, %v10256
        %v10258 = vrot.slane %v7567, %v10257
        %v10259 = vsel %vm10231, %v10258, %v10254
        %v10260 = vlaneseq
        %v10261 = vshrl.u32 %v10260, 7
        %v10262 = vsub.s32 %v10221, %v10261
        %v10263 = vrot.slane %v7568, %v10262
        %v10264 = vlaneseq
        %v10265 = vshrl.u32 %v10264, 7
        %v10266 = vsub.s32 %v10226, %v10265
        %v10267 = vrot.slane %v7569, %v10266
        %v10268 = vsel %vm10231, %v10267, %v10263
        %v10269 = vlaneseq
        %v10270 = vshrl.u32 %v10269, 7
        %v10271 = vsub.s32 %v10221, %v10270
        %v10272 = vrot.slane %v7570, %v10271
        %v10273 = vlaneseq
        %v10274 = vshrl.u32 %v10273, 7
        %v10275 = vsub.s32 %v10226, %v10274
        %v10276 = vrot.slane %v7571, %v10275
        %v10277 = vsel %vm10231, %v10276, %v10272
        %v10278 = vlaneseq
        %v10279 = vshrl.u32 %v10278, 7
        %v10280 = vsub.s32 %v10221, %v10279
        %v10281 = vrot.slane %v7572, %v10280
        %v10282 = vlaneseq
        %v10283 = vshrl.u32 %v10282, 7
        %v10284 = vsub.s32 %v10226, %v10283
        %v10285 = vrot.slane %v7573, %v10284
        %v10286 = vsel %vm10231, %v10285, %v10281
        %v10287 = vlaneseq
        %v10288 = vshrl.u32 %v10287, 7
        %v10289 = vsub.s32 %v10221, %v10288
        %v10290 = vrot.slane %v7574, %v10289
        %v10291 = vlaneseq
        %v10292 = vshrl.u32 %v10291, 7
        %v10293 = vsub.s32 %v10226, %v10292
        %v10294 = vrot.slane %v7575, %v10293
        %v10295 = vsel %vm10231, %v10294, %v10290
        %v10296 = vlaneseq
        %v10297 = vshrl.u32 %v10296, 7
        %v10298 = vsub.s32 %v10221, %v10297
        %v10299 = vrot.slane %v7576, %v10298
        %v10300 = vlaneseq
        %v10301 = vshrl.u32 %v10300, 7
        %v10302 = vsub.s32 %v10226, %v10301
        %v10303 = vrot.slane %v7577, %v10302
        %v10304 = vsel %vm10231, %v10303, %v10299
        %v10305 = vlaneseq
        %v10306 = vshrl.u32 %v10305, 7
        %v10307 = vsub.s32 %v10221, %v10306
        %v10308 = vrot.slane %v7578, %v10307
        %v10309 = vlaneseq
        %v10310 = vshrl.u32 %v10309, 7
        %v10311 = vsub.s32 %v10226, %v10310
        %v10312 = vrot.slane %v7579, %v10311
        %v10313 = vsel %vm10231, %v10312, %v10308
        %v10314 = vlaneseq
        %v10315 = vshrl.u32 %v10314, 7
        %v10316 = vsub.s32 %v10221, %v10315
        %v10317 = vrot.slane %v7580, %v10316
        %v10318 = vlaneseq
        %v10319 = vshrl.u32 %v10318, 7
        %v10320 = vsub.s32 %v10226, %v10319
        %v10321 = vrot.slane %v7581, %v10320
        %v10322 = vsel %vm10231, %v10321, %v10317
        %v10323 = vlaneseq
        %v10324 = vshrl.u32 %v10323, 7
        %v10325 = vsub.s32 %v10221, %v10324
        %v10326 = vrot.slane %v7582, %v10325
        %v10327 = vlaneseq
        %v10328 = vshrl.u32 %v10327, 7
        %v10329 = vsub.s32 %v10226, %v10328
        %v10330 = vrot.slane %v7583, %v10329
        %v10331 = vsel %vm10231, %v10330, %v10326
        %v10332 = vlaneseq
        %v10333 = vshrl.u32 %v10332, 7
        %v10334 = vsub.s32 %v10221, %v10333
        %v10335 = vrot.slane %v7584, %v10334
        %v10336 = vlaneseq
        %v10337 = vshrl.u32 %v10336, 7
        %v10338 = vsub.s32 %v10226, %v10337
        %v10339 = vrot.slane %v7585, %v10338
        %v10340 = vsel %vm10231, %v10339, %v10335
        %v10341 = vlaneseq
        %v10342 = vshrl.u32 %v10341, 7
        %v10343 = vsub.s32 %v10221, %v10342
        %v10344 = vrot.slane %v7586, %v10343
        %v10345 = vlaneseq
        %v10346 = vshrl.u32 %v10345, 7
        %v10347 = vsub.s32 %v10226, %v10346
        %v10348 = vrot.slane %v7587, %v10347
        %v10349 = vsel %vm10231, %v10348, %v10344
        %v10350 = vlaneseq
        %v10351 = vshrl.u32 %v10350, 7
        %v10352 = vsub.s32 %v10221, %v10351
        %v10353 = vrot.slane %v7588, %v10352
        %v10354 = vlaneseq
        %v10355 = vshrl.u32 %v10354, 7
        %v10356 = vsub.s32 %v10226, %v10355
        %v10357 = vrot.slane %v7589, %v10356
        %v10358 = vsel %vm10231, %v10357, %v10353
        %v10359 = vlaneseq
        %v10360 = vshrl.u32 %v10359, 7
        %v10361 = vsub.s32 %v10221, %v10360
        %v10362 = vrot.slane %v7590, %v10361
        %v10363 = vlaneseq
        %v10364 = vshrl.u32 %v10363, 7
        %v10365 = vsub.s32 %v10226, %v10364
        %v10366 = vrot.slane %v7591, %v10365
        %v10367 = vsel %vm10231, %v10366, %v10362
        %v10368 = vsel %vm9581, %v10241, %v10232
        %v10369 = vsel %vm9583, %v10250, %v10368
        %v10370 = vsel %vm9585, %v10259, %v10369
        %v10371 = vsel %vm9587, %v10268, %v10370
        %v10372 = vsel %vm9589, %v10277, %v10371
        %v10373 = vsel %vm9591, %v10286, %v10372
        %v10374 = vsel %vm9593, %v10295, %v10373
        %v10375 = vsel %vm9581, %v10313, %v10304
        %v10376 = vsel %vm9583, %v10322, %v10375
        %v10377 = vsel %vm9585, %v10331, %v10376
        %v10378 = vsel %vm9587, %v10340, %v10377
        %v10379 = vsel %vm9589, %v10349, %v10378
        %v10380 = vsel %vm9591, %v10358, %v10379
        %v10381 = vsel %vm9593, %v10367, %v10380
        %v10416 = vadd.s32 %v9434, 4294967216
        %v10417 = vlaneseq
        %v10418 = vshrl.u32 %v10417, 7
        %v10419 = vsub.s32 %v10416, %v10418
        %v10420 = vrot.slane %v8163, %v10419
        %v10421 = vadd.s32 %v9434, 4294967208
        %v10422 = vlaneseq
        %v10423 = vshrl.u32 %v10422, 7
        %v10424 = vsub.s32 %v10421, %v10423
        %v10425 = vrot.slane %v8164, %v10424
        %vm10426 = vcmask 786112
        %v10427 = vsel %vm10426, %v10425, %v10420
        %v10428 = vlaneseq
        %v10429 = vshrl.u32 %v10428, 7
        %v10430 = vsub.s32 %v10416, %v10429
        %v10431 = vrot.slane %v8165, %v10430
        %v10432 = vlaneseq
        %v10433 = vshrl.u32 %v10432, 7
        %v10434 = vsub.s32 %v10421, %v10433
        %v10435 = vrot.slane %v8166, %v10434
        %v10436 = vsel %vm10426, %v10435, %v10431
        %v10437 = vlaneseq
        %v10438 = vshrl.u32 %v10437, 7
        %v10439 = vsub.s32 %v10416, %v10438
        %v10440 = vrot.slane %v8167, %v10439
        %v10441 = vlaneseq
        %v10442 = vshrl.u32 %v10441, 7
        %v10443 = vsub.s32 %v10421, %v10442
        %v10444 = vrot.slane %v8168, %v10443
        %v10445 = vsel %vm10426, %v10444, %v10440
        %v10446 = vlaneseq
        %v10447 = vshrl.u32 %v10446, 7
        %v10448 = vsub.s32 %v10416, %v10447
        %v10449 = vrot.slane %v8169, %v10448
        %v10450 = vlaneseq
        %v10451 = vshrl.u32 %v10450, 7
        %v10452 = vsub.s32 %v10421, %v10451
        %v10453 = vrot.slane %v8170, %v10452
        %v10454 = vsel %vm10426, %v10453, %v10449
        %v10455 = vlaneseq
        %v10456 = vshrl.u32 %v10455, 7
        %v10457 = vsub.s32 %v10416, %v10456
        %v10458 = vrot.slane %v8171, %v10457
        %v10459 = vlaneseq
        %v10460 = vshrl.u32 %v10459, 7
        %v10461 = vsub.s32 %v10421, %v10460
        %v10462 = vrot.slane %v8172, %v10461
        %v10463 = vsel %vm10426, %v10462, %v10458
        %v10464 = vlaneseq
        %v10465 = vshrl.u32 %v10464, 7
        %v10466 = vsub.s32 %v10416, %v10465
        %v10467 = vrot.slane %v8173, %v10466
        %v10468 = vlaneseq
        %v10469 = vshrl.u32 %v10468, 7
        %v10470 = vsub.s32 %v10421, %v10469
        %v10471 = vrot.slane %v8174, %v10470
        %v10472 = vsel %vm10426, %v10471, %v10467
        %v10473 = vlaneseq
        %v10474 = vshrl.u32 %v10473, 7
        %v10475 = vsub.s32 %v10416, %v10474
        %v10476 = vrot.slane %v8175, %v10475
        %v10477 = vlaneseq
        %v10478 = vshrl.u32 %v10477, 7
        %v10479 = vsub.s32 %v10421, %v10478
        %v10480 = vrot.slane %v8176, %v10479
        %v10481 = vsel %vm10426, %v10480, %v10476
        %v10482 = vlaneseq
        %v10483 = vshrl.u32 %v10482, 7
        %v10484 = vsub.s32 %v10416, %v10483
        %v10485 = vrot.slane %v8177, %v10484
        %v10486 = vlaneseq
        %v10487 = vshrl.u32 %v10486, 7
        %v10488 = vsub.s32 %v10421, %v10487
        %v10489 = vrot.slane %v8178, %v10488
        %v10490 = vsel %vm10426, %v10489, %v10485
        %v10491 = vlaneseq
        %v10492 = vshrl.u32 %v10491, 7
        %v10493 = vsub.s32 %v10416, %v10492
        %v10494 = vrot.slane %v8179, %v10493
        %v10495 = vlaneseq
        %v10496 = vshrl.u32 %v10495, 7
        %v10497 = vsub.s32 %v10421, %v10496
        %v10498 = vrot.slane %v8180, %v10497
        %v10499 = vsel %vm10426, %v10498, %v10494
        %v10500 = vlaneseq
        %v10501 = vshrl.u32 %v10500, 7
        %v10502 = vsub.s32 %v10416, %v10501
        %v10503 = vrot.slane %v8181, %v10502
        %v10504 = vlaneseq
        %v10505 = vshrl.u32 %v10504, 7
        %v10506 = vsub.s32 %v10421, %v10505
        %v10507 = vrot.slane %v8182, %v10506
        %v10508 = vsel %vm10426, %v10507, %v10503
        %v10509 = vlaneseq
        %v10510 = vshrl.u32 %v10509, 7
        %v10511 = vsub.s32 %v10416, %v10510
        %v10512 = vrot.slane %v8183, %v10511
        %v10513 = vlaneseq
        %v10514 = vshrl.u32 %v10513, 7
        %v10515 = vsub.s32 %v10421, %v10514
        %v10516 = vrot.slane %v8184, %v10515
        %v10517 = vsel %vm10426, %v10516, %v10512
        %v10518 = vlaneseq
        %v10519 = vshrl.u32 %v10518, 7
        %v10520 = vsub.s32 %v10416, %v10519
        %v10521 = vrot.slane %v8185, %v10520
        %v10522 = vlaneseq
        %v10523 = vshrl.u32 %v10522, 7
        %v10524 = vsub.s32 %v10421, %v10523
        %v10525 = vrot.slane %v8186, %v10524
        %v10526 = vsel %vm10426, %v10525, %v10521
        %v10527 = vlaneseq
        %v10528 = vshrl.u32 %v10527, 7
        %v10529 = vsub.s32 %v10416, %v10528
        %v10530 = vrot.slane %v8187, %v10529
        %v10531 = vlaneseq
        %v10532 = vshrl.u32 %v10531, 7
        %v10533 = vsub.s32 %v10421, %v10532
        %v10534 = vrot.slane %v8188, %v10533
        %v10535 = vsel %vm10426, %v10534, %v10530
        %v10536 = vlaneseq
        %v10537 = vshrl.u32 %v10536, 7
        %v10538 = vsub.s32 %v10416, %v10537
        %v10539 = vrot.slane %v8189, %v10538
        %v10540 = vlaneseq
        %v10541 = vshrl.u32 %v10540, 7
        %v10542 = vsub.s32 %v10421, %v10541
        %v10543 = vrot.slane %v8190, %v10542
        %v10544 = vsel %vm10426, %v10543, %v10539
        %v10545 = vlaneseq
        %v10546 = vshrl.u32 %v10545, 7
        %v10547 = vsub.s32 %v10416, %v10546
        %v10548 = vrot.slane %v8191, %v10547
        %v10549 = vlaneseq
        %v10550 = vshrl.u32 %v10549, 7
        %v10551 = vsub.s32 %v10421, %v10550
        %v10552 = vrot.slane %v8192, %v10551
        %v10553 = vsel %vm10426, %v10552, %v10548
        %v10554 = vlaneseq
        %v10555 = vshrl.u32 %v10554, 7
        %v10556 = vsub.s32 %v10416, %v10555
        %v10557 = vrot.slane %v8193, %v10556
        %v10558 = vlaneseq
        %v10559 = vshrl.u32 %v10558, 7
        %v10560 = vsub.s32 %v10421, %v10559
        %v10561 = vrot.slane %v8194, %v10560
        %v10562 = vsel %vm10426, %v10561, %v10557
        %v10563 = vsel %vm9581, %v10436, %v10427
        %v10564 = vsel %vm9583, %v10445, %v10563
        %v10565 = vsel %vm9585, %v10454, %v10564
        %v10566 = vsel %vm9587, %v10463, %v10565
        %v10567 = vsel %vm9589, %v10472, %v10566
        %v10568 = vsel %vm9591, %v10481, %v10567
        %v10569 = vsel %vm9593, %v10490, %v10568
        %v10570 = vsel %vm9581, %v10508, %v10499
        %v10571 = vsel %vm9583, %v10517, %v10570
        %v10572 = vsel %vm9585, %v10526, %v10571
        %v10573 = vsel %vm9587, %v10535, %v10572
        %v10574 = vsel %vm9589, %v10544, %v10573
        %v10575 = vsel %vm9591, %v10553, %v10574
        %v10576 = vsel %vm9593, %v10562, %v10575
        %v10611 = vadd.s32 %v9434, 4294967200
        %v10612 = vlaneseq
        %v10613 = vshrl.u32 %v10612, 7
        %v10614 = vsub.s32 %v10611, %v10613
        %v10615 = vrot.slane %v8766, %v10614
        %v10616 = vadd.s32 %v9434, 4294967192
        %v10617 = vlaneseq
        %v10618 = vshrl.u32 %v10617, 7
        %v10619 = vsub.s32 %v10616, %v10618
        %v10620 = vrot.slane %v8767, %v10619
        %vm10621 = vcmask 917312
        %v10622 = vsel %vm10621, %v10620, %v10615
        %v10623 = vlaneseq
        %v10624 = vshrl.u32 %v10623, 7
        %v10625 = vsub.s32 %v10611, %v10624
        %v10626 = vrot.slane %v8768, %v10625
        %v10627 = vlaneseq
        %v10628 = vshrl.u32 %v10627, 7
        %v10629 = vsub.s32 %v10616, %v10628
        %v10630 = vrot.slane %v8769, %v10629
        %v10631 = vsel %vm10621, %v10630, %v10626
        %v10632 = vlaneseq
        %v10633 = vshrl.u32 %v10632, 7
        %v10634 = vsub.s32 %v10611, %v10633
        %v10635 = vrot.slane %v8770, %v10634
        %v10636 = vlaneseq
        %v10637 = vshrl.u32 %v10636, 7
        %v10638 = vsub.s32 %v10616, %v10637
        %v10639 = vrot.slane %v8771, %v10638
        %v10640 = vsel %vm10621, %v10639, %v10635
        %v10641 = vlaneseq
        %v10642 = vshrl.u32 %v10641, 7
        %v10643 = vsub.s32 %v10611, %v10642
        %v10644 = vrot.slane %v8772, %v10643
        %v10645 = vlaneseq
        %v10646 = vshrl.u32 %v10645, 7
        %v10647 = vsub.s32 %v10616, %v10646
        %v10648 = vrot.slane %v8773, %v10647
        %v10649 = vsel %vm10621, %v10648, %v10644
        %v10650 = vlaneseq
        %v10651 = vshrl.u32 %v10650, 7
        %v10652 = vsub.s32 %v10611, %v10651
        %v10653 = vrot.slane %v8774, %v10652
        %v10654 = vlaneseq
        %v10655 = vshrl.u32 %v10654, 7
        %v10656 = vsub.s32 %v10616, %v10655
        %v10657 = vrot.slane %v8775, %v10656
        %v10658 = vsel %vm10621, %v10657, %v10653
        %v10659 = vlaneseq
        %v10660 = vshrl.u32 %v10659, 7
        %v10661 = vsub.s32 %v10611, %v10660
        %v10662 = vrot.slane %v8776, %v10661
        %v10663 = vlaneseq
        %v10664 = vshrl.u32 %v10663, 7
        %v10665 = vsub.s32 %v10616, %v10664
        %v10666 = vrot.slane %v8777, %v10665
        %v10667 = vsel %vm10621, %v10666, %v10662
        %v10668 = vlaneseq
        %v10669 = vshrl.u32 %v10668, 7
        %v10670 = vsub.s32 %v10611, %v10669
        %v10671 = vrot.slane %v8778, %v10670
        %v10672 = vlaneseq
        %v10673 = vshrl.u32 %v10672, 7
        %v10674 = vsub.s32 %v10616, %v10673
        %v10675 = vrot.slane %v8779, %v10674
        %v10676 = vsel %vm10621, %v10675, %v10671
        %v10677 = vlaneseq
        %v10678 = vshrl.u32 %v10677, 7
        %v10679 = vsub.s32 %v10611, %v10678
        %v10680 = vrot.slane %v8780, %v10679
        %v10681 = vlaneseq
        %v10682 = vshrl.u32 %v10681, 7
        %v10683 = vsub.s32 %v10616, %v10682
        %v10684 = vrot.slane %v8781, %v10683
        %v10685 = vsel %vm10621, %v10684, %v10680
        %v10686 = vlaneseq
        %v10687 = vshrl.u32 %v10686, 7
        %v10688 = vsub.s32 %v10611, %v10687
        %v10689 = vrot.slane %v8782, %v10688
        %v10690 = vlaneseq
        %v10691 = vshrl.u32 %v10690, 7
        %v10692 = vsub.s32 %v10616, %v10691
        %v10693 = vrot.slane %v8783, %v10692
        %v10694 = vsel %vm10621, %v10693, %v10689
        %v10695 = vlaneseq
        %v10696 = vshrl.u32 %v10695, 7
        %v10697 = vsub.s32 %v10611, %v10696
        %v10698 = vrot.slane %v8784, %v10697
        %v10699 = vlaneseq
        %v10700 = vshrl.u32 %v10699, 7
        %v10701 = vsub.s32 %v10616, %v10700
        %v10702 = vrot.slane %v8785, %v10701
        %v10703 = vsel %vm10621, %v10702, %v10698
        %v10704 = vlaneseq
        %v10705 = vshrl.u32 %v10704, 7
        %v10706 = vsub.s32 %v10611, %v10705
        %v10707 = vrot.slane %v8786, %v10706
        %v10708 = vlaneseq
        %v10709 = vshrl.u32 %v10708, 7
        %v10710 = vsub.s32 %v10616, %v10709
        %v10711 = vrot.slane %v8787, %v10710
        %v10712 = vsel %vm10621, %v10711, %v10707
        %v10713 = vlaneseq
        %v10714 = vshrl.u32 %v10713, 7
        %v10715 = vsub.s32 %v10611, %v10714
        %v10716 = vrot.slane %v8788, %v10715
        %v10717 = vlaneseq
        %v10718 = vshrl.u32 %v10717, 7
        %v10719 = vsub.s32 %v10616, %v10718
        %v10720 = vrot.slane %v8789, %v10719
        %v10721 = vsel %vm10621, %v10720, %v10716
        %v10722 = vlaneseq
        %v10723 = vshrl.u32 %v10722, 7
        %v10724 = vsub.s32 %v10611, %v10723
        %v10725 = vrot.slane %v8790, %v10724
        %v10726 = vlaneseq
        %v10727 = vshrl.u32 %v10726, 7
        %v10728 = vsub.s32 %v10616, %v10727
        %v10729 = vrot.slane %v8791, %v10728
        %v10730 = vsel %vm10621, %v10729, %v10725
        %v10731 = vlaneseq
        %v10732 = vshrl.u32 %v10731, 7
        %v10733 = vsub.s32 %v10611, %v10732
        %v10734 = vrot.slane %v8792, %v10733
        %v10735 = vlaneseq
        %v10736 = vshrl.u32 %v10735, 7
        %v10737 = vsub.s32 %v10616, %v10736
        %v10738 = vrot.slane %v8793, %v10737
        %v10739 = vsel %vm10621, %v10738, %v10734
        %v10740 = vlaneseq
        %v10741 = vshrl.u32 %v10740, 7
        %v10742 = vsub.s32 %v10611, %v10741
        %v10743 = vrot.slane %v8794, %v10742
        %v10744 = vlaneseq
        %v10745 = vshrl.u32 %v10744, 7
        %v10746 = vsub.s32 %v10616, %v10745
        %v10747 = vrot.slane %v8795, %v10746
        %v10748 = vsel %vm10621, %v10747, %v10743
        %v10749 = vlaneseq
        %v10750 = vshrl.u32 %v10749, 7
        %v10751 = vsub.s32 %v10611, %v10750
        %v10752 = vrot.slane %v8796, %v10751
        %v10753 = vlaneseq
        %v10754 = vshrl.u32 %v10753, 7
        %v10755 = vsub.s32 %v10616, %v10754
        %v10756 = vrot.slane %v8797, %v10755
        %v10757 = vsel %vm10621, %v10756, %v10752
        %v10758 = vsel %vm9581, %v10631, %v10622
        %v10759 = vsel %vm9583, %v10640, %v10758
        %v10760 = vsel %vm9585, %v10649, %v10759
        %v10761 = vsel %vm9587, %v10658, %v10760
        %v10762 = vsel %vm9589, %v10667, %v10761
        %v10763 = vsel %vm9591, %v10676, %v10762
        %v10764 = vsel %vm9593, %v10685, %v10763
        %v10765 = vsel %vm9581, %v10703, %v10694
        %v10766 = vsel %vm9583, %v10712, %v10765
        %v10767 = vsel %vm9585, %v10721, %v10766
        %v10768 = vsel %vm9587, %v10730, %v10767
        %v10769 = vsel %vm9589, %v10739, %v10768
        %v10770 = vsel %vm9591, %v10748, %v10769
        %v10771 = vsel %vm9593, %v10757, %v10770
        %v10806 = vadd.s32 %v9434, 4294967184
        %v10807 = vlaneseq
        %v10808 = vshrl.u32 %v10807, 7
        %v10809 = vsub.s32 %v10806, %v10808
        %v10810 = vrot.slane %v9369, %v10809
        %v10811 = vadd.s32 %v9434, 4294967176
        %v10812 = vlaneseq
        %v10813 = vshrl.u32 %v10812, 7
        %v10814 = vsub.s32 %v10811, %v10813
        %v10815 = vrot.slane %v9370, %v10814
        %vm10816 = vcmask 1048512
        %v10817 = vsel %vm10816, %v10815, %v10810
        %v10818 = vlaneseq
        %v10819 = vshrl.u32 %v10818, 7
        %v10820 = vsub.s32 %v10806, %v10819
        %v10821 = vrot.slane %v9371, %v10820
        %v10822 = vlaneseq
        %v10823 = vshrl.u32 %v10822, 7
        %v10824 = vsub.s32 %v10811, %v10823
        %v10825 = vrot.slane %v9372, %v10824
        %v10826 = vsel %vm10816, %v10825, %v10821
        %v10827 = vlaneseq
        %v10828 = vshrl.u32 %v10827, 7
        %v10829 = vsub.s32 %v10806, %v10828
        %v10830 = vrot.slane %v9373, %v10829
        %v10831 = vlaneseq
        %v10832 = vshrl.u32 %v10831, 7
        %v10833 = vsub.s32 %v10811, %v10832
        %v10834 = vrot.slane %v9374, %v10833
        %v10835 = vsel %vm10816, %v10834, %v10830
        %v10836 = vlaneseq
        %v10837 = vshrl.u32 %v10836, 7
        %v10838 = vsub.s32 %v10806, %v10837
        %v10839 = vrot.slane %v9375, %v10838
        %v10840 = vlaneseq
        %v10841 = vshrl.u32 %v10840, 7
        %v10842 = vsub.s32 %v10811, %v10841
        %v10843 = vrot.slane %v9376, %v10842
        %v10844 = vsel %vm10816, %v10843, %v10839
        %v10845 = vlaneseq
        %v10846 = vshrl.u32 %v10845, 7
        %v10847 = vsub.s32 %v10806, %v10846
        %v10848 = vrot.slane %v9377, %v10847
        %v10849 = vlaneseq
        %v10850 = vshrl.u32 %v10849, 7
        %v10851 = vsub.s32 %v10811, %v10850
        %v10852 = vrot.slane %v9378, %v10851
        %v10853 = vsel %vm10816, %v10852, %v10848
        %v10854 = vlaneseq
        %v10855 = vshrl.u32 %v10854, 7
        %v10856 = vsub.s32 %v10806, %v10855
        %v10857 = vrot.slane %v9379, %v10856
        %v10858 = vlaneseq
        %v10859 = vshrl.u32 %v10858, 7
        %v10860 = vsub.s32 %v10811, %v10859
        %v10861 = vrot.slane %v9380, %v10860
        %v10862 = vsel %vm10816, %v10861, %v10857
        %v10863 = vlaneseq
        %v10864 = vshrl.u32 %v10863, 7
        %v10865 = vsub.s32 %v10806, %v10864
        %v10866 = vrot.slane %v9381, %v10865
        %v10867 = vlaneseq
        %v10868 = vshrl.u32 %v10867, 7
        %v10869 = vsub.s32 %v10811, %v10868
        %v10870 = vrot.slane %v9382, %v10869
        %v10871 = vsel %vm10816, %v10870, %v10866
        %v10872 = vlaneseq
        %v10873 = vshrl.u32 %v10872, 7
        %v10874 = vsub.s32 %v10806, %v10873
        %v10875 = vrot.slane %v9383, %v10874
        %v10876 = vlaneseq
        %v10877 = vshrl.u32 %v10876, 7
        %v10878 = vsub.s32 %v10811, %v10877
        %v10879 = vrot.slane %v9384, %v10878
        %v10880 = vsel %vm10816, %v10879, %v10875
        %v10881 = vlaneseq
        %v10882 = vshrl.u32 %v10881, 7
        %v10883 = vsub.s32 %v10806, %v10882
        %v10884 = vrot.slane %v9385, %v10883
        %v10885 = vlaneseq
        %v10886 = vshrl.u32 %v10885, 7
        %v10887 = vsub.s32 %v10811, %v10886
        %v10888 = vrot.slane %v9386, %v10887
        %v10889 = vsel %vm10816, %v10888, %v10884
        %v10890 = vlaneseq
        %v10891 = vshrl.u32 %v10890, 7
        %v10892 = vsub.s32 %v10806, %v10891
        %v10893 = vrot.slane %v9387, %v10892
        %v10894 = vlaneseq
        %v10895 = vshrl.u32 %v10894, 7
        %v10896 = vsub.s32 %v10811, %v10895
        %v10897 = vrot.slane %v9388, %v10896
        %v10898 = vsel %vm10816, %v10897, %v10893
        %v10899 = vlaneseq
        %v10900 = vshrl.u32 %v10899, 7
        %v10901 = vsub.s32 %v10806, %v10900
        %v10902 = vrot.slane %v9389, %v10901
        %v10903 = vlaneseq
        %v10904 = vshrl.u32 %v10903, 7
        %v10905 = vsub.s32 %v10811, %v10904
        %v10906 = vrot.slane %v9390, %v10905
        %v10907 = vsel %vm10816, %v10906, %v10902
        %v10908 = vlaneseq
        %v10909 = vshrl.u32 %v10908, 7
        %v10910 = vsub.s32 %v10806, %v10909
        %v10911 = vrot.slane %v9391, %v10910
        %v10912 = vlaneseq
        %v10913 = vshrl.u32 %v10912, 7
        %v10914 = vsub.s32 %v10811, %v10913
        %v10915 = vrot.slane %v9392, %v10914
        %v10916 = vsel %vm10816, %v10915, %v10911
        %v10917 = vlaneseq
        %v10918 = vshrl.u32 %v10917, 7
        %v10919 = vsub.s32 %v10806, %v10918
        %v10920 = vrot.slane %v9393, %v10919
        %v10921 = vlaneseq
        %v10922 = vshrl.u32 %v10921, 7
        %v10923 = vsub.s32 %v10811, %v10922
        %v10924 = vrot.slane %v9394, %v10923
        %v10925 = vsel %vm10816, %v10924, %v10920
        %v10926 = vlaneseq
        %v10927 = vshrl.u32 %v10926, 7
        %v10928 = vsub.s32 %v10806, %v10927
        %v10929 = vrot.slane %v9395, %v10928
        %v10930 = vlaneseq
        %v10931 = vshrl.u32 %v10930, 7
        %v10932 = vsub.s32 %v10811, %v10931
        %v10933 = vrot.slane %v9396, %v10932
        %v10934 = vsel %vm10816, %v10933, %v10929
        %v10935 = vlaneseq
        %v10936 = vshrl.u32 %v10935, 7
        %v10937 = vsub.s32 %v10806, %v10936
        %v10938 = vrot.slane %v9397, %v10937
        %v10939 = vlaneseq
        %v10940 = vshrl.u32 %v10939, 7
        %v10941 = vsub.s32 %v10811, %v10940
        %v10942 = vrot.slane %v9398, %v10941
        %v10943 = vsel %vm10816, %v10942, %v10938
        %v10944 = vlaneseq
        %v10945 = vshrl.u32 %v10944, 7
        %v10946 = vsub.s32 %v10806, %v10945
        %v10947 = vrot.slane %v9399, %v10946
        %v10948 = vlaneseq
        %v10949 = vshrl.u32 %v10948, 7
        %v10950 = vsub.s32 %v10811, %v10949
        %v10951 = vrot.slane %v9400, %v10950
        %v10952 = vsel %vm10816, %v10951, %v10947
        %v10953 = vsel %vm9581, %v10826, %v10817
        %v10954 = vsel %vm9583, %v10835, %v10953
        %v10955 = vsel %vm9585, %v10844, %v10954
        %v10956 = vsel %vm9587, %v10853, %v10955
        %v10957 = vsel %vm9589, %v10862, %v10956
        %v10958 = vsel %vm9591, %v10871, %v10957
        %v10959 = vsel %vm9593, %v10880, %v10958
        %v10960 = vsel %vm9581, %v10898, %v10889
        %v10961 = vsel %vm9583, %v10907, %v10960
        %v10962 = vsel %vm9585, %v10916, %v10961
        %v10963 = vsel %vm9587, %v10925, %v10962
        %v10964 = vsel %vm9589, %v10934, %v10963
        %v10965 = vsel %vm9591, %v10943, %v10964
        %v10966 = vsel %vm9593, %v10952, %v10965
        %v10969 = vsel %vm2268, %v9594, %v9789
        %v10970 = vsel %vm2268, %v9601, %v9796
        %vm10971 = vcmask 261120
        %v10972 = vsel %vm10971, %v10969, %v9984
        %v10973 = vsel %vm10971, %v10970, %v9991
        %vm10974 = vcmask 392192
        %v10975 = vsel %vm10974, %v10972, %v10179
        %v10976 = vsel %vm10974, %v10973, %v10186
        %vm10977 = vcmask 523264
        %v10978 = vsel %vm10977, %v10975, %v10374
        %v10979 = vsel %vm10977, %v10976, %v10381
        %vm10980 = vcmask 654336
        %v10981 = vsel %vm10980, %v10978, %v10569
        %v10982 = vsel %vm10980, %v10979, %v10576
        %vm10983 = vcmask 785408
        %v10984 = vsel %vm10983, %v10981, %v10764
        %v10985 = vsel %vm10983, %v10982, %v10771
        %vm10986 = vcmask 916480
        %v10987 = vsel %vm10986, %v10984, %v10959
        %v10988 = vsel %vm10986, %v10985, %v10966
        %v10989 = vld [vmem:[%s4] sm:$0x1]
        %v10991 = vlaneseq
        %v10992 = vshrl.u32 %v10991, 7
        %v10993 = vsub.s32 0, %v10992
        %v10994 = vrot.slane %v10989, %v10993
        %v10996 = vadd.f32 %v10987, %v10994
        %v10997 = vadd.f32 %v10988, %v10994
        %10998 = vst [vmem:[%s312] sm:$0xff] %v10996
        %10999 = vst [vmem:[%s312 + $0x8] sm:$0xff] %v10997
        %s11000 = sand.u32 %s164, 1
        %s11001 = scalar_lea.sflag [#allocation4], %s11000
        %s11002 = sand.u32 %s164, 1
        %s11003 = smul.addr %s11002, 16
        %s11004 = scalar_lea.vmem [#allocation10], %s11003
        // Predicated region
        $region61: #{tpu_custom_call.1} parent=43 // pred_check
          %p11005 = pneg %p174
        $region62: #{tpu_custom_call.1} parent=43 // pred_check_branch
          %11007 = sbr.rel (%p11005) target = $region64
        $region63: #{tpu_custom_call.1} parent=43 // pred_region
          %s11008 = smul.u32 2, %s25
          %s11010 = ssub.s32 256, 256
          %11011 = vsyncadd %s11001, %s11010
          %s11012 = smul.addr %s11008, 128
          %s11013 = scalar_lea.hbm %s6, %s11012
          %s11014 = sshll.u32 %s11004, 4
          %s11015 = int_to_ptr.vmem [resolvable:$true] %s11014
          %11020 = dma.vmem_to_hbm [thread:$0]  %s11015, 256, %s11013, %s11001, 128, 128, 8
        $region64: #{tpu_custom_call.1} parent=43 // pred_fallthru
          _
      $region44: #{tpu_custom_call.1} parent=5 // pred_fallthru
        _
      %p11021 = scmp.le.s32.totalorder 2, %s20
      // Predicated region
      $region65: #{tpu_custom_call.1} parent=5 // pred_check
        %p11022 = pneg %p11021
      $region66: #{tpu_custom_call.1} parent=5 // pred_check_branch
        %11024 = sbr.rel (%p11022) target = $region68
      $region67: #{tpu_custom_call.1} parent=5 // pred_region
        %s11025 = ssub.s32 %s20, 2
        // Predicated region
        $region69: #{tpu_custom_call.1} parent=67 // pred_check
          %p11026 = pneg %p180
        $region70: #{tpu_custom_call.1} parent=67 // pred_check_branch
          %11028 = sbr.rel (%p11026) target = $region72
        $region71: #{tpu_custom_call.1} parent=67 // pred_region
          %s11029 = sand.u32 %s165, 1
          %s11030 = scalar_lea.sflag [#allocation4], %s11029
          %s11031 = sand.u32 %s165, 1
          %s11032 = smul.addr %s11031, 16
          %s11033 = scalar_lea.vmem [#allocation10], %s11032
          %11034 = dma.done %s11030, 256
        $region72: #{tpu_custom_call.1} parent=67 // pred_fallthru
          _
      $region68: #{tpu_custom_call.1} parent=5 // pred_fallthru
        _
    $region6: #{tpu_custom_call.1} parent=1 // loop_footer
      %s24 = sadd.s32 1, %s20
    $region7: #{tpu_custom_call.1} parent=1 // loop_footer_branch
      %19 = sbr.rel target = $region3
    $region8: #{tpu_custom_call.1} parent=1 // loop_exit
      _
    %11035 = vsyncpa [#allocation3], 1
    %s11036 = scalar_lea.sflag [#allocation3], 1
    %11037 = vsyncpa %s11036, 1
    %11038 = vsyncpa [#allocation7], 1
    %11039 = vsyncpa [#allocation4], 1
    %s11040 = scalar_lea.sflag [#allocation4], 1
    %11041 = vsyncpa %s11040, 1
    %11042 = vsyncpa [#allocation5], 1
    %s11043 = scalar_lea.sflag [#allocation5], 1
    %11044 = vsyncpa %s11043, 1

</llo_original>
